<compile_context>
chip_gen: v7x
topology: tpu7x:2x2x1
jax: 0.10.0
libtpu: 0.0.40
codegen_flags: <defaults>
</compile_context>

<pallas_src>
import functools

import jax
import jax.numpy as jnp
from jax.experimental import pallas as pl
from jax.experimental.pallas import tpu as pltpu

LATENT_DIMS = 128
_VMEM_LIMIT = 32 * 1024 * 1024  # fits comfortably on v5e/v6e (128 MiB) and v7x (64 MiB)


def _round_up(x, m):
    return ((x + m - 1) // m) * m


# ---------------------------------------------------------------------------
# Pallas kernel 1: single-K-step matmul + bias + optional fused ReLU
# (all conv/convT GEMMs and the decoder Linear: whole contraction in one block,
#  so no accumulator scratch / zero-init / read-modify-write is needed)
# ---------------------------------------------------------------------------
def _mm_bias_kernel(a_ref, w_ref, b_ref, o_ref, *, relu):
    a = a_ref[...]
    w = w_ref[...]
    if a.dtype != w.dtype:                      # f32 activations x bf16 weights
        a = a.astype(w.dtype)
    out = jnp.dot(a, w, preferred_element_type=jnp.float32)
    out = out + b_ref[...]                      # broadcasts (1, tn) or (tm, 1)
    if relu:
        out = jnp.maximum(out, 0.0)
    o_ref[...] = out.astype(o_ref.dtype)


def matmul_bias_act(a, w, b, *, relu=False, bias_on="col", tm=8, tn=1024):
    """out = a @ w + b (optional ReLU).  a: [M, K], w: [K, N].
    The contraction dim K is a single (full-dim) block.
    bias_on="col": b is [N] (per output column); bias_on="row": b is [M]."""
    M, K = a.shape
    K2, N = w.shape
    assert K == K2
    Mp, Np = _round_up(M, tm), _round_up(N, tn)

    a_p = jnp.pad(a, ((0, Mp - M), (0, 0)))
    w_p = jnp.pad(w, ((0, 0), (0, Np - N)))
    if bias_on == "col":
        b_p = jnp.pad(b.astype(jnp.float32), (0, Np - N)).reshape(1, Np)
        b_spec = pl.BlockSpec((1, tn), lambda i, j: (0, j))
    else:  # per-output-channel bias, rows = Cout
        b_p = jnp.pad(b.astype(jnp.float32), (0, Mp - M)).reshape(Mp, 1)
        b_spec = pl.BlockSpec((tm, 1), lambda i, j: (i, 0))

    grid = (Mp // tm, Np // tn)
    out = pl.pallas_call(
        functools.partial(_mm_bias_kernel, relu=relu),
        out_shape=jax.ShapeDtypeStruct((Mp, Np), jnp.float32),
        grid_spec=pltpu.PrefetchScalarGridSpec(
            num_scalar_prefetch=0,
            grid=grid,
            in_specs=[
                pl.BlockSpec((tm, K), lambda i, j: (i, 0)),   # K = full array dim
                pl.BlockSpec((K, tn), lambda i, j: (0, j)),
                b_spec,
            ],
            out_specs=pl.BlockSpec((tm, tn), lambda i, j: (i, j)),
        ),
        compiler_params=pltpu.CompilerParams(
            dimension_semantics=("parallel", "parallel"),
            vmem_limit_bytes=_VMEM_LIMIT,
        ),
    )(a_p, w_p, b_p)
    return out[:M, :N]


# ---------------------------------------------------------------------------
# Pallas kernel 2: split-K matmul for the encoder Linear (K = 57600, M = 2).
# Leading "parallel" split axis -> on v7x each TensorCore streams half of the
# big [K, N] weight; per-split f32 accumulator, result written on last K step.
# ---------------------------------------------------------------------------
def _mm_splitk_kernel(a_ref, w_ref, o_ref, acc_ref):
    k = pl.program_id(1)

    @pl.when(k == 0)
    def _():
        acc_ref[...] = jnp.zeros_like(acc_ref)

    a = a_ref[...]
    w = w_ref[...]
    if a.dtype != w.dtype:
        a = a.astype(w.dtype)
    acc_ref[...] += jnp.dot(a, w, preferred_element_type=jnp.float32)

    @pl.when(k == pl.num_programs(1) - 1)
    def _():
        o_ref[...] = acc_ref[...].astype(o_ref.dtype)[None]


def matmul_splitk(a, w, *, n_split=2, tk=3200, tm=8):
    """partial[s] = a @ w[s-th K slice].  Caller sums the n_split partials.
    a: [M, K] (f32, cast to w.dtype per tile in-kernel), w: [K, N] (bf16)."""
    M, K = a.shape
    K2, N = w.shape
    assert K == K2 and K % (n_split * tk) == 0
    nk = K // (n_split * tk)
    Mp = _round_up(M, tm)
    a_p = jnp.pad(a, ((0, Mp - M), (0, 0)))

    partial = pl.pallas_call(
        _mm_splitk_kernel,
        out_shape=jax.ShapeDtypeStruct((n_split, Mp, N), jnp.float32),
        grid_spec=pltpu.PrefetchScalarGridSpec(
            num_scalar_prefetch=0,
            grid=(n_split, nk),
            in_specs=[
                pl.BlockSpec((tm, tk), lambda s, k, nk=nk: (0, s * nk + k)),
                pl.BlockSpec((tk, N), lambda s, k, nk=nk: (s * nk + k, 0)),
            ],
            out_specs=pl.BlockSpec((1, Mp, N), lambda s, k: (s, 0, 0)),
            scratch_shapes=[pltpu.VMEM((Mp, N), jnp.float32)],
        ),
        compiler_params=pltpu.CompilerParams(
            dimension_semantics=("parallel", "arbitrary"),
            vmem_limit_bytes=_VMEM_LIMIT,
        ),
    )(a_p, w)
    return partial  # [n_split, Mp, N]


# ---------------------------------------------------------------------------
# Conv / ConvTranspose via im2col (layout glue) + Pallas matmul.
# GEMM is emitted transposed: [Cout, M] = W[Cout, K] @ patches[K, M], so the
# big spatial dim (M = N*Ho*Wo) sits on lanes and Cout only pads to 8 sublanes.
# ---------------------------------------------------------------------------
def _im2col_km(x, kh=3, kw=3):
    # x: NCHW -> patches [Cin*kh*kw, N*Ho*Wo]; K ordering = (c, ky, kx),
    # matching PyTorch's Conv2d weight layout [Cout, Cin, kh, kw].
    N, C, H, W = x.shape
    Ho, Wo = H - kh + 1, W - kw + 1
    cols = []
    for ky in range(kh):
        for kx in range(kw):
            cols.append(x[:, :, ky:ky + Ho, kx:kx + Wo])    # [N, C, Ho, Wo]
    p = jnp.stack(cols, axis=2)                             # [N, C, kh*kw, Ho, Wo]
    p = p.transpose(1, 2, 0, 3, 4)                          # [C, kh*kw, N, Ho, Wo]
    return p.reshape(C * kh * kw, N * Ho * Wo), (N, Ho, Wo)


def conv2d(x, w, b, *, relu):
    # w: [Cout, Cin, 3, 3] (PyTorch Conv2d layout), valid conv, stride 1.
    Cout, Cin, kh, kw = w.shape
    patches, (N, Ho, Wo) = _im2col_km(x, kh, kw)            # [K, M]
    a = w.reshape(Cout, Cin * kh * kw)                      # [Cout, K]
    y = matmul_bias_act(a, patches, b, relu=relu, bias_on="row",
                        tm=_round_up(Cout, 8), tn=1024)     # [Cout, M]
    return y.reshape(Cout, N, Ho, Wo).transpose(1, 0, 2, 3)  # NCHW


def conv_transpose2d(x, w, b, *, relu):
    # w: [Cin, Cout, 3, 3] (PyTorch ConvTranspose2d layout), stride 1, no padding.
    # Equivalent to zero-padding by k-1 and a valid conv with the spatially
    # flipped, channel-swapped kernel.
    Cin, Cout, kh, kw = w.shape
    x_pad = jnp.pad(x, ((0, 0), (0, 0), (kh - 1, kh - 1), (kw - 1, kw - 1)))
    w_eff = jnp.flip(w, axis=(2, 3)).transpose(1, 0, 2, 3)  # [Cout, Cin, kh, kw]
    return conv2d(x_pad, w_eff, b, relu=relu)


# ---------------------------------------------------------------------------
# Parameters (deterministic synthetic init) and forward pass
# ---------------------------------------------------------------------------
def init_params(key):
    ks = jax.random.split(key, 12)

    def rnd(k, fan_in, shape, dtype=jnp.float32):
        return (jax.random.normal(k, shape, jnp.float32)
                / jnp.sqrt(float(fan_in))).astype(dtype)

    F = 16 * 60 * 60
    return {
        "enc_conv1_w": rnd(ks[0], 1 * 9, (6, 1, 3, 3)),
        "enc_conv1_b": rnd(ks[1], 1 * 9, (6,)),
        "enc_conv2_w": rnd(ks[2], 6 * 9, (16, 6, 3, 3)),
        "enc_conv2_b": rnd(ks[3], 6 * 9, (16,)),
        # FC weights stored pre-transposed ([in, out]) and in bf16 (f32 accum in-kernel)
        "enc_fc_w": rnd(ks[4], F, (F, LATENT_DIMS), jnp.bfloat16),
        "enc_fc_b": rnd(ks[5], F, (LATENT_DIMS,)),
        "dec_fc_w": rnd(ks[6], LATENT_DIMS, (LATENT_DIMS, F), jnp.bfloat16),
        "dec_fc_b": rnd(ks[7], LATENT_DIMS, (F,)),
        "dec_conv2_w": rnd(ks[8], 16 * 9, (16, 6, 3, 3)),   # ConvT2d(16,6,3): [in, out, kh, kw]
        "dec_conv2_b": rnd(ks[9], 16 * 9, (6,)),
        "dec_conv1_w": rnd(ks[10], 6 * 9, (6, 1, 3, 3)),    # ConvT2d(6,1,3)
        "dec_conv1_b": rnd(ks[11], 6 * 9, (1,)),
    }


@jax.jit
def autoencoder_forward(params, x):
    # layout: x is NCHW [N, 1, 64, 64]
    N = x.shape[0]
    # --- Encoder ---
    h = conv2d(x, params["enc_conv1_w"], params["enc_conv1_b"], relu=False)  # [N, 6, 62, 62]
    h = conv2d(h, params["enc_conv2_w"], params["enc_conv2_b"], relu=True)   # [N, 16, 60, 60]
    h = h.reshape(N, 16 * 60 * 60)                                           # torch Flatten (C,H,W order)
    # enc Linear: split-K Pallas matmul (K = 57600, 2 parallel halves, tk = 3200);
    # the two [N,128] partials are summed and the bias added outside (trivially small).
    part = matmul_splitk(h, params["enc_fc_w"], n_split=2, tk=3200, tm=8)
    z = part.sum(axis=0)[:N] + params["enc_fc_b"]                            # [N, 128]
    # --- Decoder ---
    d = matmul_bias_act(z, params["dec_fc_w"], params["dec_fc_b"],
                        relu=False, bias_on="col", tm=8, tn=5760)            # [N, 57600]
    d = d.reshape(N, 16, 60, 60)
    d = conv_transpose2d(d, params["dec_conv2_w"], params["dec_conv2_b"], relu=True)  # [N, 6, 62, 62]
    d = conv_transpose2d(d, params["dec_conv1_w"], params["dec_conv1_b"], relu=True)  # [N, 1, 64, 64]
    return d


if __name__ == "__main__":
    key = jax.random.PRNGKey(0)
    pkey, xkey = jax.random.split(key)
    params = init_params(pkey)
    # Input spatial size is forced to 64x64 by Linear(16*60*60): 64 -3+1 -3+1 = 60.
    x = jax.random.normal(xkey, (2, 1, 64, 64), dtype=jnp.float32)

    out = autoencoder_forward(params, x)
    out = jax.block_until_ready(out)

    assert out.shape == (2, 1, 64, 64), out.shape
    assert out.dtype == jnp.float32
    assert bool(jnp.all(jnp.isfinite(out)))
    assert bool(jnp.all(out >= 0.0))  # final ReLU
    print("KERNEL_OK")
</pallas_src>

<mosaic_0001>
module attributes {stable_mosaic.version = 11 : i64} {
  func.func @_mm_bias_kernel(%arg0: i32, %arg1: i32, %arg2: memref<8x9xf32, #tpu.memory_space<vmem>>, %arg3: memref<9x1024xf32, #tpu.memory_space<vmem>>, %arg4: memref<8x1xf32, #tpu.memory_space<vmem>>, %arg5: memref<8x1024xf32, #tpu.memory_space<vmem>>) attributes {dimension_semantics = [#tpu.dimension_semantics<parallel>, #tpu.dimension_semantics<parallel>], iteration_bounds = array<i64: 1, 8>, scalar_prefetch = 0 : i64, scratch_operands = 0 : i64, tpu.core_type = #tpu.core_type<tc>, window_params = [{transform_indices = @transform_0, window_bounds = array<i64: 8, 9>}, {transform_indices = @transform_1, window_bounds = array<i64: 9, 1024>}, {transform_indices = @transform_2, window_bounds = array<i64: 8, 1>}, {transform_indices = @transform_3, window_bounds = array<i64: 8, 1024>}]} {
    %c0 = arith.constant 0 : index
    %c0_0 = arith.constant 0 : index
    %0 = vector.load %arg2[%c0, %c0_0] : memref<8x9xf32, #tpu.memory_space<vmem>>, vector<8x9xf32>
    %c0_1 = arith.constant 0 : index
    %c0_2 = arith.constant 0 : index
    %1 = vector.load %arg3[%c0_1, %c0_2] : memref<9x1024xf32, #tpu.memory_space<vmem>>, vector<9x1024xf32>
    %cst = arith.constant dense<0.000000e+00> : vector<8x1024xf32>
    %2 = tpu.matmul %0, %1, %cst {dimension_numbers = #tpu.dot_dimension_numbers<[1], [0], [0], [1], [0, 0, 1, 1], [], []>} : vector<8x9xf32>, vector<9x1024xf32>, vector<8x1024xf32> -> vector<8x1024xf32>
    %c0_3 = arith.constant 0 : index
    %c0_4 = arith.constant 0 : index
    %3 = vector.load %arg4[%c0_3, %c0_4] : memref<8x1xf32, #tpu.memory_space<vmem>>, vector<8x1xf32>
    %4 = vector.broadcast %3 : vector<8x1xf32> to vector<8x1024xf32>
    %5 = arith.addf %2, %4 : vector<8x1024xf32>
    %c0_5 = arith.constant 0 : index
    %c0_6 = arith.constant 0 : index
    %6 = vector.load %arg5[%c0_5, %c0_6] : memref<8x1024xf32, #tpu.memory_space<vmem>>, vector<8x1024xf32>
    tpu.vector_store %arg5[%c0_5, %c0_6], %5 {strides = array<i32>} : memref<8x1024xf32, #tpu.memory_space<vmem>>, vector<8x1024xf32>,
    return
  }
  func.func @transform_0(%arg0: i32, %arg1: i32) -> (i32, i32) {
    %c0_i32 = arith.constant 0 : i32
    %c0_i32_0 = arith.constant 0 : i32
    return %arg0, %c0_i32 : i32, i32
  }
  func.func @transform_1(%arg0: i32, %arg1: i32) -> (i32, i32) {
    %c0_i32 = arith.constant 0 : i32
    %c0_i32_0 = arith.constant 0 : i32
    return %c0_i32, %arg1 : i32, i32
  }
  func.func @transform_2(%arg0: i32, %arg1: i32) -> (i32, i32) {
    %c0_i32 = arith.constant 0 : i32
    %c0_i32_0 = arith.constant 0 : i32
    return %arg0, %c0_i32 : i32, i32
  }
  func.func @transform_3(%arg0: i32, %arg1: i32) -> (i32, i32) {
    %c0_i32 = arith.constant 0 : i32
    return %arg0, %arg1 : i32, i32
  }
}

module attributes {stable_mosaic.version = 11 : i64} {
  func.func @_mm_bias_kernel(%arg0: i32, %arg1: i32, %arg2: memref<16x54xf32, #tpu.memory_space<vmem>>, %arg3: memref<54x1024xf32, #tpu.memory_space<vmem>>, %arg4: memref<16x1xf32, #tpu.memory_space<vmem>>, %arg5: memref<16x1024xf32, #tpu.memory_space<vmem>>) attributes {dimension_semantics = [#tpu.dimension_semantics<parallel>, #tpu.dimension_semantics<parallel>], iteration_bounds = array<i64: 1, 8>, scalar_prefetch = 0 : i64, scratch_operands = 0 : i64, tpu.core_type = #tpu.core_type<tc>, window_params = [{transform_indices = @transform_0, window_bounds = array<i64: 16, 54>}, {transform_indices = @transform_1, window_bounds = array<i64: 54, 1024>}, {transform_indices = @transform_2, window_bounds = array<i64: 16, 1>}, {transform_indices = @transform_3, window_bounds = array<i64: 16, 1024>}]} {
    %c0 = arith.constant 0 : index
    %c0_0 = arith.constant 0 : index
    %0 = vector.load %arg2[%c0, %c0_0] : memref<16x54xf32, #tpu.memory_space<vmem>>, vector<16x54xf32>
    %c0_1 = arith.constant 0 : index
    %c0_2 = arith.constant 0 : index
    %1 = vector.load %arg3[%c0_1, %c0_2] : memref<54x1024xf32, #tpu.memory_space<vmem>>, vector<54x1024xf32>
    %cst = arith.constant dense<0.000000e+00> : vector<16x1024xf32>
    %2 = tpu.matmul %0, %1, %cst {dimension_numbers = #tpu.dot_dimension_numbers<[1], [0], [0], [1], [0, 0, 1, 1], [], []>} : vector<16x54xf32>, vector<54x1024xf32>, vector<16x1024xf32> -> vector<16x1024xf32>
    %c0_3 = arith.constant 0 : index
    %c0_4 = arith.constant 0 : index
    %3 = vector.load %arg4[%c0_3, %c0_4] : memref<16x1xf32, #tpu.memory_space<vmem>>, vector<16x1xf32>
    %4 = vector.broadcast %3 : vector<16x1xf32> to vector<16x1024xf32>
    %5 = arith.addf %2, %4 : vector<16x1024xf32>
    %cst_5 = arith.constant 0.000000e+00 : f32
    %6 = vector.broadcast %cst_5 : f32 to vector<16x1024xf32>
    %7 = arith.maximumf %5, %6 : vector<16x1024xf32>
    %c0_6 = arith.constant 0 : index
    %c0_7 = arith.constant 0 : index
    %8 = vector.load %arg5[%c0_6, %c0_7] : memref<16x1024xf32, #tpu.memory_space<vmem>>, vector<16x1024xf32>
    tpu.vector_store %arg5[%c0_6, %c0_7], %7 {strides = array<i32>} : memref<16x1024xf32, #tpu.memory_space<vmem>>, vector<16x1024xf32>,
    return
  }
  func.func @transform_0(%arg0: i32, %arg1: i32) -> (i32, i32) {
    %c0_i32 = arith.constant 0 : i32
    %c0_i32_0 = arith.constant 0 : i32
    return %arg0, %c0_i32 : i32, i32
  }
  func.func @transform_1(%arg0: i32, %arg1: i32) -> (i32, i32) {
    %c0_i32 = arith.constant 0 : i32
    %c0_i32_0 = arith.constant 0 : i32
    return %c0_i32, %arg1 : i32, i32
  }
  func.func @transform_2(%arg0: i32, %arg1: i32) -> (i32, i32) {
    %c0_i32 = arith.constant 0 : i32
    %c0_i32_0 = arith.constant 0 : i32
    return %arg0, %c0_i32 : i32, i32
  }
  func.func @transform_3(%arg0: i32, %arg1: i32) -> (i32, i32) {
    %c0_i32 = arith.constant 0 : i32
    return %arg0, %arg1 : i32, i32
  }
}

module attributes {stable_mosaic.version = 11 : i64} {
  func.func @_mm_splitk_kernel(%arg0: i32, %arg1: i32, %arg2: memref<8x3200xf32, #tpu.memory_space<vmem>>, %arg3: memref<3200x128xbf16, #tpu.memory_space<vmem>>, %arg4: memref<1x8x128xf32, #tpu.memory_space<vmem>>, %arg5: memref<8x128xf32, #tpu.memory_space<vmem>>) attributes {dimension_semantics = [#tpu.dimension_semantics<parallel>, #tpu.dimension_semantics<arbitrary>], iteration_bounds = array<i64: 2, 9>, scalar_prefetch = 0 : i64, scratch_operands = 1 : i64, tpu.core_type = #tpu.core_type<tc>, window_params = [{transform_indices = @transform_0, window_bounds = array<i64: 8, 3200>}, {transform_indices = @transform_1, window_bounds = array<i64: 3200, 128>}, {transform_indices = @transform_2, window_bounds = array<i64: 1, 8, 128>}]} {
    %c0_i32 = arith.constant 0 : i32
    %0 = arith.cmpi eq, %arg1, %c0_i32 : i32
    %1 = arith.extui %0 : i1 to i32
    %c0_i32_0 = arith.constant 0 : i32
    %2 = arith.cmpi ne, %1, %c0_i32_0 : i32
    scf.if %2 {
      %cst_9 = arith.constant 0.000000e+00 : f32
      %13 = vector.broadcast %cst_9 : f32 to vector<8x128xf32>
      %c0_10 = arith.constant 0 : index
      %c0_11 = arith.constant 0 : index
      %14 = vector.load %arg5[%c0_10, %c0_11] : memref<8x128xf32, #tpu.memory_space<vmem>>, vector<8x128xf32>
      tpu.vector_store %arg5[%c0_10, %c0_11], %13 {strides = array<i32>} : memref<8x128xf32, #tpu.memory_space<vmem>>, vector<8x128xf32>,
    } else {
    }
    %c0 = arith.constant 0 : index
    %c0_1 = arith.constant 0 : index
    %3 = vector.load %arg2[%c0, %c0_1] : memref<8x3200xf32, #tpu.memory_space<vmem>>, vector<8x3200xf32>
    %c0_2 = arith.constant 0 : index
    %c0_3 = arith.constant 0 : index
    %4 = vector.load %arg3[%c0_2, %c0_3] : memref<3200x128xbf16, #tpu.memory_space<vmem>>, vector<3200x128xbf16>
    %5 = arith.truncf %3 : vector<8x3200xf32> to vector<8x3200xbf16>
    %c0_4 = arith.constant 0 : index
    %c0_5 = arith.constant 0 : index
    %6 = vector.load %arg5[%c0_4, %c0_5] : memref<8x128xf32, #tpu.memory_space<vmem>>, vector<8x128xf32>
    %cst = arith.constant dense<0.000000e+00> : vector<8x128xf32>
    %7 = tpu.matmul %5, %4, %cst {dimension_numbers = #tpu.dot_dimension_numbers<[1], [0], [0], [1], [0, 0, 1, 1], [], []>} : vector<8x3200xbf16>, vector<3200x128xbf16>, vector<8x128xf32> -> vector<8x128xf32>
    %8 = arith.addf %6, %7 : vector<8x128xf32>
    %c0_6 = arith.constant 0 : index
    %c0_7 = arith.constant 0 : index
    %9 = vector.load %arg5[%c0_6, %c0_7] : memref<8x128xf32, #tpu.memory_space<vmem>>, vector<8x128xf32>
    tpu.vector_store %arg5[%c0_6, %c0_7], %8 {strides = array<i32>} : memref<8x128xf32, #tpu.memory_space<vmem>>, vector<8x128xf32>,
    %c8_i32 = arith.constant 8 : i32
    %10 = arith.cmpi eq, %arg1, %c8_i32 : i32
    %11 = arith.extui %10 : i1 to i32
    %c0_i32_8 = arith.constant 0 : i32
    %12 = arith.cmpi ne, %11, %c0_i32_8 : i32
    scf.if %12 {
      %c0_9 = arith.constant 0 : index
      %c0_10 = arith.constant 0 : index
      %13 = vector.load %arg5[%c0_9, %c0_10] : memref<8x128xf32, #tpu.memory_space<vmem>>, vector<8x128xf32>
      %14 = vector.shape_cast %13 : vector<8x128xf32> to vector<1x8x128xf32>
      %c0_11 = arith.constant 0 : index
      %c0_12 = arith.constant 0 : index
      %c0_13 = arith.constant 0 : index
      %15 = vector.load %arg4[%c0_11, %c0_12, %c0_13] : memref<1x8x128xf32, #tpu.memory_space<vmem>>, vector<1x8x128xf32>
      tpu.vector_store %arg4[%c0_11, %c0_12, %c0_13], %14 {strides = array<i32>} : memref<1x8x128xf32, #tpu.memory_space<vmem>>, vector<1x8x128xf32>,
    } else {
    }
    return
  }
  func.func @transform_0(%arg0: i32, %arg1: i32) -> (i32, i32) {
    %c9_i32 = arith.constant 9 : i32
    %0 = arith.muli %arg0, %c9_i32 : i32
    %1 = arith.addi %0, %arg1 : i32
    %c0_i32 = arith.constant 0 : i32
    %c0_i32_0 = arith.constant 0 : i32
    return %c0_i32, %1 : i32, i32
  }
  func.func @transform_1(%arg0: i32, %arg1: i32) -> (i32, i32) {
    %c9_i32 = arith.constant 9 : i32
    %0 = arith.muli %arg0, %c9_i32 : i32
    %1 = arith.addi %0, %arg1 : i32
    %c0_i32 = arith.constant 0 : i32
    %c0_i32_0 = arith.constant 0 : i32
    return %1, %c0_i32 : i32, i32
  }
  func.func @transform_2(%arg0: i32, %arg1: i32) -> (i32, i32, i32) {
    %c0_i32 = arith.constant 0 : i32
    %c0_i32_0 = arith.constant 0 : i32
    %c0_i32_1 = arith.constant 0 : i32
    return %arg0, %c0_i32, %c0_i32_0 : i32, i32, i32
  }
}

module attributes {stable_mosaic.version = 11 : i64} {
  func.func @_mm_bias_kernel(%arg0: i32, %arg1: i32, %arg2: memref<8x128xf32, #tpu.memory_space<vmem>>, %arg3: memref<128x5760xbf16, #tpu.memory_space<vmem>>, %arg4: memref<1x5760xf32, #tpu.memory_space<vmem>>, %arg5: memref<8x5760xf32, #tpu.memory_space<vmem>>) attributes {dimension_semantics = [#tpu.dimension_semantics<parallel>, #tpu.dimension_semantics<parallel>], iteration_bounds = array<i64: 1, 10>, scalar_prefetch = 0 : i64, scratch_operands = 0 : i64, tpu.core_type = #tpu.core_type<tc>, window_params = [{transform_indices = @transform_0, window_bounds = array<i64: 8, 128>}, {transform_indices = @transform_1, window_bounds = array<i64: 128, 5760>}, {transform_indices = @transform_2, window_bounds = array<i64: 1, 5760>}, {transform_indices = @transform_3, window_bounds = array<i64: 8, 5760>}]} {
    %c0 = arith.constant 0 : index
    %c0_0 = arith.constant 0 : index
    %0 = vector.load %arg2[%c0, %c0_0] : memref<8x128xf32, #tpu.memory_space<vmem>>, vector<8x128xf32>
    %c0_1 = arith.constant 0 : index
    %c0_2 = arith.constant 0 : index
    %1 = vector.load %arg3[%c0_1, %c0_2] : memref<128x5760xbf16, #tpu.memory_space<vmem>>, vector<128x5760xbf16>
    %2 = arith.truncf %0 : vector<8x128xf32> to vector<8x128xbf16>
    %cst = arith.constant dense<0.000000e+00> : vector<8x5760xf32>
    %3 = tpu.matmul %2, %1, %cst {dimension_numbers = #tpu.dot_dimension_numbers<[1], [0], [0], [1], [0, 0, 1, 1], [], []>} : vector<8x128xbf16>, vector<128x5760xbf16>, vector<8x5760xf32> -> vector<8x5760xf32>
    %c0_3 = arith.constant 0 : index
    %c0_4 = arith.constant 0 : index
    %4 = vector.load %arg4[%c0_3, %c0_4] : memref<1x5760xf32, #tpu.memory_space<vmem>>, vector<1x5760xf32>
    %5 = vector.broadcast %4 : vector<1x5760xf32> to vector<8x5760xf32>
    %6 = arith.addf %3, %5 : vector<8x5760xf32>
    %c0_5 = arith.constant 0 : index
    %c0_6 = arith.constant 0 : index
    %7 = vector.load %arg5[%c0_5, %c0_6] : memref<8x5760xf32, #tpu.memory_space<vmem>>, vector<8x5760xf32>
    tpu.vector_store %arg5[%c0_5, %c0_6], %6 {strides = array<i32>} : memref<8x5760xf32, #tpu.memory_space<vmem>>, vector<8x5760xf32>,
    return
  }
  func.func @transform_0(%arg0: i32, %arg1: i32) -> (i32, i32) {
    %c0_i32 = arith.constant 0 : i32
    %c0_i32_0 = arith.constant 0 : i32
    return %arg0, %c0_i32 : i32, i32
  }
  func.func @transform_1(%arg0: i32, %arg1: i32) -> (i32, i32) {
    %c0_i32 = arith.constant 0 : i32
    %c0_i32_0 = arith.constant 0 : i32
    return %c0_i32, %arg1 : i32, i32
  }
  func.func @transform_2(%arg0: i32, %arg1: i32) -> (i32, i32) {
    %c0_i32 = arith.constant 0 : i32
    %c0_i32_0 = arith.constant 0 : i32
    return %c0_i32, %arg1 : i32, i32
  }
  func.func @transform_3(%arg0: i32, %arg1: i32) -> (i32, i32) {
    %c0_i32 = arith.constant 0 : i32
    return %arg0, %arg1 : i32, i32
  }
}

module attributes {stable_mosaic.version = 11 : i64} {
  func.func @_mm_bias_kernel(%arg0: i32, %arg1: i32, %arg2: memref<8x144xf32, #tpu.memory_space<vmem>>, %arg3: memref<144x1024xf32, #tpu.memory_space<vmem>>, %arg4: memref<8x1xf32, #tpu.memory_space<vmem>>, %arg5: memref<8x1024xf32, #tpu.memory_space<vmem>>) attributes {dimension_semantics = [#tpu.dimension_semantics<parallel>, #tpu.dimension_semantics<parallel>], iteration_bounds = array<i64: 1, 8>, scalar_prefetch = 0 : i64, scratch_operands = 0 : i64, tpu.core_type = #tpu.core_type<tc>, window_params = [{transform_indices = @transform_0, window_bounds = array<i64: 8, 144>}, {transform_indices = @transform_1, window_bounds = array<i64: 144, 1024>}, {transform_indices = @transform_2, window_bounds = array<i64: 8, 1>}, {transform_indices = @transform_3, window_bounds = array<i64: 8, 1024>}]} {
    %c0 = arith.constant 0 : index
    %c0_0 = arith.constant 0 : index
    %0 = vector.load %arg2[%c0, %c0_0] : memref<8x144xf32, #tpu.memory_space<vmem>>, vector<8x144xf32>
    %c0_1 = arith.constant 0 : index
    %c0_2 = arith.constant 0 : index
    %1 = vector.load %arg3[%c0_1, %c0_2] : memref<144x1024xf32, #tpu.memory_space<vmem>>, vector<144x1024xf32>
    %cst = arith.constant dense<0.000000e+00> : vector<8x1024xf32>
    %2 = tpu.matmul %0, %1, %cst {dimension_numbers = #tpu.dot_dimension_numbers<[1], [0], [0], [1], [0, 0, 1, 1], [], []>} : vector<8x144xf32>, vector<144x1024xf32>, vector<8x1024xf32> -> vector<8x1024xf32>
    %c0_3 = arith.constant 0 : index
    %c0_4 = arith.constant 0 : index
    %3 = vector.load %arg4[%c0_3, %c0_4] : memref<8x1xf32, #tpu.memory_space<vmem>>, vector<8x1xf32>
    %4 = vector.broadcast %3 : vector<8x1xf32> to vector<8x1024xf32>
    %5 = arith.addf %2, %4 : vector<8x1024xf32>
    %cst_5 = arith.constant 0.000000e+00 : f32
    %6 = vector.broadcast %cst_5 : f32 to vector<8x1024xf32>
    %7 = arith.maximumf %5, %6 : vector<8x1024xf32>
    %c0_6 = arith.constant 0 : index
    %c0_7 = arith.constant 0 : index
    %8 = vector.load %arg5[%c0_6, %c0_7] : memref<8x1024xf32, #tpu.memory_space<vmem>>, vector<8x1024xf32>
    tpu.vector_store %arg5[%c0_6, %c0_7], %7 {strides = array<i32>} : memref<8x1024xf32, #tpu.memory_space<vmem>>, vector<8x1024xf32>,
    return
  }
  func.func @transform_0(%arg0: i32, %arg1: i32) -> (i32, i32) {
    %c0_i32 = arith.constant 0 : i32
    %c0_i32_0 = arith.constant 0 : i32
    return %arg0, %c0_i32 : i32, i32
  }
  func.func @transform_1(%arg0: i32, %arg1: i32) -> (i32, i32) {
    %c0_i32 = arith.constant 0 : i32
    %c0_i32_0 = arith.constant 0 : i32
    return %c0_i32, %arg1 : i32, i32
  }
  func.func @transform_2(%arg0: i32, %arg1: i32) -> (i32, i32) {
    %c0_i32 = arith.constant 0 : i32
    %c0_i32_0 = arith.constant 0 : i32
    return %arg0, %c0_i32 : i32, i32
  }
  func.func @transform_3(%arg0: i32, %arg1: i32) -> (i32, i32) {
    %c0_i32 = arith.constant 0 : i32
    return %arg0, %arg1 : i32, i32
  }
}

module attributes {stable_mosaic.version = 11 : i64} {
  func.func @_mm_bias_kernel(%arg0: i32, %arg1: i32, %arg2: memref<8x54xf32, #tpu.memory_space<vmem>>, %arg3: memref<54x1024xf32, #tpu.memory_space<vmem>>, %arg4: memref<8x1xf32, #tpu.memory_space<vmem>>, %arg5: memref<8x1024xf32, #tpu.memory_space<vmem>>) attributes {dimension_semantics = [#tpu.dimension_semantics<parallel>, #tpu.dimension_semantics<parallel>], iteration_bounds = array<i64: 1, 8>, scalar_prefetch = 0 : i64, scratch_operands = 0 : i64, tpu.core_type = #tpu.core_type<tc>, window_params = [{transform_indices = @transform_0, window_bounds = array<i64: 8, 54>}, {transform_indices = @transform_1, window_bounds = array<i64: 54, 1024>}, {transform_indices = @transform_2, window_bounds = array<i64: 8, 1>}, {transform_indices = @transform_3, window_bounds = array<i64: 8, 1024>}]} {
    %c0 = arith.constant 0 : index
    %c0_0 = arith.constant 0 : index
    %0 = vector.load %arg2[%c0, %c0_0] : memref<8x54xf32, #tpu.memory_space<vmem>>, vector<8x54xf32>
    %c0_1 = arith.constant 0 : index
    %c0_2 = arith.constant 0 : index
    %1 = vector.load %arg3[%c0_1, %c0_2] : memref<54x1024xf32, #tpu.memory_space<vmem>>, vector<54x1024xf32>
    %cst = arith.constant dense<0.000000e+00> : vector<8x1024xf32>
    %2 = tpu.matmul %0, %1, %cst {dimension_numbers = #tpu.dot_dimension_numbers<[1], [0], [0], [1], [0, 0, 1, 1], [], []>} : vector<8x54xf32>, vector<54x1024xf32>, vector<8x1024xf32> -> vector<8x1024xf32>
    %c0_3 = arith.constant 0 : index
    %c0_4 = arith.constant 0 : index
    %3 = vector.load %arg4[%c0_3, %c0_4] : memref<8x1xf32, #tpu.memory_space<vmem>>, vector<8x1xf32>
    %4 = vector.broadcast %3 : vector<8x1xf32> to vector<8x1024xf32>
    %5 = arith.addf %2, %4 : vector<8x1024xf32>
    %cst_5 = arith.constant 0.000000e+00 : f32
    %6 = vector.broadcast %cst_5 : f32 to vector<8x1024xf32>
    %7 = arith.maximumf %5, %6 : vector<8x1024xf32>
    %c0_6 = arith.constant 0 : index
    %c0_7 = arith.constant 0 : index
    %8 = vector.load %arg5[%c0_6, %c0_7] : memref<8x1024xf32, #tpu.memory_space<vmem>>, vector<8x1024xf32>
    tpu.vector_store %arg5[%c0_6, %c0_7], %7 {strides = array<i32>} : memref<8x1024xf32, #tpu.memory_space<vmem>>, vector<8x1024xf32>,
    return
  }
  func.func @transform_0(%arg0: i32, %arg1: i32) -> (i32, i32) {
    %c0_i32 = arith.constant 0 : i32
    %c0_i32_0 = arith.constant 0 : i32
    return %arg0, %c0_i32 : i32, i32
  }
  func.func @transform_1(%arg0: i32, %arg1: i32) -> (i32, i32) {
    %c0_i32 = arith.constant 0 : i32
    %c0_i32_0 = arith.constant 0 : i32
    return %c0_i32, %arg1 : i32, i32
  }
  func.func @transform_2(%arg0: i32, %arg1: i32) -> (i32, i32) {
    %c0_i32 = arith.constant 0 : i32
    %c0_i32_0 = arith.constant 0 : i32
    return %arg0, %c0_i32 : i32, i32
  }
  func.func @transform_3(%arg0: i32, %arg1: i32) -> (i32, i32) {
    %c0_i32 = arith.constant 0 : i32
    return %arg0, %arg1 : i32, i32
  }
}

</mosaic_0001>

<llo_original>
// kernel: autoencoder_forward.6
$region0: #{autoencoder_forward.6}
  #allocation0 [shape = 'u32[]', space=smem, size = 0x4, offset = 0x4, fixed_abs, tag = 'smem constant byte address 0x4 - core index']
  #allocation1 [shape = 'u32[144,128]{1,0:T(1,128)}', space=vmem, size = 0x12000, scoped, tag = 'internal scratch']
  %s0 = inlined_call_operand.vmem [shape: f32[8,9], index: 0, kind: input, shape index: {}]
  %s1 = inlined_call_operand.vmem [shape: f32[9,8192], index: 1, kind: input, shape index: {}]
  %s2 = inlined_call_operand.vmem [shape: f32[8,1], index: 2, kind: input, shape index: {}]
  %s3 = inlined_call_operand.vmem [shape: f32[8,8192], index: 3, kind: output, shape index: {}]
  %s4 = sld [smem:[#allocation0]]
  $region68: #{autoencoder_forward.6} parent=0
    _
  %s6 = ssub.s32 1, %s4
  %s7 = scalar_select 0, %s6, %s4
  $region1: #{autoencoder_forward.6} parent=0
    #allocation2 [shape = 'u8[131072]{0}', space=vmem, size = 0x20000, scoped, tag = 'input window, operand 1']
    loop: start=0, step=1, limit=10
    $region2: #{autoencoder_forward.6} parent=1 // loop_pre_header
      _
    $region3: #{autoencoder_forward.6} parent=1 // loop_header
      %s9 = sphi 0, %s13
      %p10 = scmp.ge.s32.totalorder %s9, 10
      %s16 = sphi 0, %s28
      %s17 = sphi 0, %s24
      %s18 = sphi 0, %s16
      %s19 = sphi 0, %s17
      %s20 = sphi 0, %s18
      %s21 = sphi 0, %s19
      %s31 = sphi 0, %s33
      %s34 = sphi 0, %s31
      %s35 = sphi 0, %s34
      %s51 = sphi 0, %s35
      %s57 = sphi 0, %s59
      %s60 = sphi 0, %s57
      %s61 = sphi 0, %s60
      %s77 = sphi 0, %s61
      %s83 = sphi 0, %s85
      %s86 = sphi 0, %s83
      %s87 = sphi 0, %s86
      %s103 = sphi 0, %s87
      %s111 = sphi 0, %s113
      %s114 = sphi 0, %s111
      %s115 = sphi 0, %s114
      %s131 = sphi 0, %s115
    $region4: #{autoencoder_forward.6} parent=1 // loop_header_branch
      %12 = sbr.rel (%p10) target = $region8
    $region5: #{autoencoder_forward.6} parent=1 // loop_body
      %s14 = ssub.s32 %s9, 1
      %s15 = ssub.s32 %s9, 2
      %s22 = sadd.s32 1, %s17
      %p23 = scmp.ge.s32.totalorder %s22, 8
      %s24 = scalar_select %p23, 0, %s22
      %s25 = sadd.s32 1, %s16
      %s26 = scalar_select %p23, %s25, %s16
      %p27 = scmp.ge.s32.totalorder %s26, 1
      %s28 = scalar_select %p27, 0, %s26
      %s29 = ssub.s32 %s16, %s28
      %p30 = scmp.eq.s32.totalorder %s29, 0
      %s32 = sadd.s32 %s31, 1
      %s33 = scalar_select %p30, %s31, %s32
      %p36 = pneg %p30
      %p37 = scmp.eq.s32.totalorder %s9, 7
      %p38 = por %p36, %p37
      %p39 = scmp.ne.s32.totalorder %s31, %s34
      %p40 = scmp.eq.s32.totalorder %s9, 0
      %p41 = por %p39, %p40
      %p42 = scmp.ne.s32.totalorder %s31, %s34
      %p43 = scmp.eq.s32.totalorder %s14, 7
      %p44 = por %p42, %p43
      %p45 = scmp.ne.s32.totalorder %s34, %s35
      %p46 = scmp.eq.s32.totalorder %s14, 0
      %p47 = por %p45, %p46
      %p48 = scmp.ne.s32.totalorder %s34, %s35
      %p49 = scmp.eq.s32.totalorder %s15, 7
      %p50 = por %p48, %p49
      %p52 = scmp.ne.s32.totalorder %s35, %s51
      %p53 = scmp.eq.s32.totalorder %s15, 0
      %p54 = por %p52, %p53
      %s55 = ssub.s32 %s17, %s24
      %p56 = scmp.eq.s32.totalorder %s55, 0
      %s58 = sadd.s32 %s57, 1
      %s59 = scalar_select %p56, %s57, %s58
      %p62 = pneg %p56
      %p63 = scmp.eq.s32.totalorder %s9, 7
      %p64 = por %p62, %p63
      %p65 = scmp.ne.s32.totalorder %s57, %s60
      %p66 = scmp.eq.s32.totalorder %s9, 0
      %p67 = por %p65, %p66
      %p68 = scmp.ne.s32.totalorder %s57, %s60
      %p69 = scmp.eq.s32.totalorder %s14, 7
      %p70 = por %p68, %p69
      %p71 = scmp.ne.s32.totalorder %s60, %s61
      %p72 = scmp.eq.s32.totalorder %s14, 0
      %p73 = por %p71, %p72
      %p74 = scmp.ne.s32.totalorder %s60, %s61
      %p75 = scmp.eq.s32.totalorder %s15, 7
      %p76 = por %p74, %p75
      %p78 = scmp.ne.s32.totalorder %s61, %s77
      %p79 = scmp.eq.s32.totalorder %s15, 0
      %p80 = por %p78, %p79
      %s81 = ssub.s32 %s16, %s28
      %p82 = scmp.eq.s32.totalorder %s81, 0
      %s84 = sadd.s32 %s83, 1
      %s85 = scalar_select %p82, %s83, %s84
      %p88 = pneg %p82
      %p89 = scmp.eq.s32.totalorder %s9, 7
      %p90 = por %p88, %p89
      %p91 = scmp.ne.s32.totalorder %s83, %s86
      %p92 = scmp.eq.s32.totalorder %s9, 0
      %p93 = por %p91, %p92
      %p94 = scmp.ne.s32.totalorder %s83, %s86
      %p95 = scmp.eq.s32.totalorder %s14, 7
      %p96 = por %p94, %p95
      %p97 = scmp.ne.s32.totalorder %s86, %s87
      %p98 = scmp.eq.s32.totalorder %s14, 0
      %p99 = por %p97, %p98
      %p100 = scmp.ne.s32.totalorder %s86, %s87
      %p101 = scmp.eq.s32.totalorder %s15, 7
      %p102 = por %p100, %p101
      %p104 = scmp.ne.s32.totalorder %s87, %s103
      %p105 = scmp.eq.s32.totalorder %s15, 0
      %p106 = por %p104, %p105
      %s107 = ssub.s32 %s16, %s28
      %s108 = ssub.s32 %s17, %s24
      %s109 = sor.u32 %s107, %s108
      %p110 = scmp.eq.s32.totalorder %s109, 0
      %s112 = sadd.s32 %s111, 1
      %s113 = scalar_select %p110, %s111, %s112
      %p116 = pneg %p110
      %p117 = scmp.eq.s32.totalorder %s9, 7
      %p118 = por %p116, %p117
      %p119 = scmp.ne.s32.totalorder %s111, %s114
      %p120 = scmp.eq.s32.totalorder %s9, 0
      %p121 = por %p119, %p120
      %p122 = scmp.ne.s32.totalorder %s111, %s114
      %p123 = scmp.eq.s32.totalorder %s14, 7
      %p124 = por %p122, %p123
      %p125 = scmp.ne.s32.totalorder %s114, %s115
      %p126 = scmp.eq.s32.totalorder %s14, 0
      %p127 = por %p125, %p126
      %p128 = scmp.ne.s32.totalorder %s114, %s115
      %p129 = scmp.eq.s32.totalorder %s15, 7
      %p130 = por %p128, %p129
      %p132 = scmp.ne.s32.totalorder %s115, %s131
      %p133 = scmp.eq.s32.totalorder %s15, 0
      %p134 = por %p132, %p133
      %p135 = scmp.le.s32.totalorder 1, %s9
      %p136 = scmp.lt.s32.totalorder %s9, 9
      %p137 = pnand %p135, %p136
      %p138 = pneg %p137
      // Predicated region
      $region9: #{autoencoder_forward.6} parent=5 // pred_check
        _
      $region10: #{autoencoder_forward.6} parent=5 // pred_check_branch
        %140 = sbr.rel (%p137) target = $region12
      $region11: #{autoencoder_forward.6} parent=5 // pred_region
        %s141 = ssub.s32 %s9, 1
        // Predicated region
        $region13: #{autoencoder_forward.6} parent=11 // pred_check
          %p142 = pneg %p47
        $region14: #{autoencoder_forward.6} parent=11 // pred_check_branch
          %144 = sbr.rel (%p142) target = $region16
        $region15: #{autoencoder_forward.6} parent=11 // pred_region
          %p145 = scmp.lt.s32.totalorder %s18, 0
          %s146 = scalar_select %p145, %s18, 0
          %s147 = smul.addr %s146, 8
          %s148 = scalar_lea.vmem %s0, %s147
        $region16: #{autoencoder_forward.6} parent=11 // pred_fallthru
          _
        // Predicated region
        $region17: #{autoencoder_forward.6} parent=11 // pred_check
          %p149 = pneg %p99
        $region18: #{autoencoder_forward.6} parent=11 // pred_check_branch
          %151 = sbr.rel (%p149) target = $region20
        $region19: #{autoencoder_forward.6} parent=11 // pred_region
          %p152 = scmp.lt.s32.totalorder %s18, 0
          %s153 = scalar_select %p152, %s18, 0
          %s154 = smul.addr %s153, 8
          %s155 = scalar_lea.vmem %s2, %s154
        $region20: #{autoencoder_forward.6} parent=11 // pred_fallthru
          _
      $region12: #{autoencoder_forward.6} parent=5 // pred_fallthru
        _
      %p156 = scmp.lt.s32.totalorder %s9, 8
      // Predicated region
      $region21: #{autoencoder_forward.6} parent=5 // pred_check
        %p157 = pneg %p156
      $region22: #{autoencoder_forward.6} parent=5 // pred_check_branch
        %159 = sbr.rel (%p157) target = $region24
      $region23: #{autoencoder_forward.6} parent=5 // pred_region
        // Predicated region
        $region25: #{autoencoder_forward.6} parent=23 // pred_check
          %p160 = pneg %p67
        $region26: #{autoencoder_forward.6} parent=23 // pred_check_branch
          %162 = sbr.rel (%p160) target = $region28
        $region27: #{autoencoder_forward.6} parent=23 // pred_region
          %s163 = sand.u32 %s57, 1
          %s164 = sand.u32 %s57, 1
          %s165 = smul.addr %s164, 128
          %s166 = scalar_lea.vmem [#allocation2], %s165
          %s167 = smul.u32 8, %s17
          %s168 = smul.addr %s167, 8
          %s169 = scalar_lea.vmem %s1, %s168
          // Predicated region
          $region29: #{autoencoder_forward.6} parent=27 // pred_check
            _
          $region30: #{autoencoder_forward.6} parent=27 // pred_check_branch
            %171 = sbr.rel (0) target = $region32
          $region31: #{autoencoder_forward.6} parent=27 // pred_region
            // Predicated region
            $region33: #{autoencoder_forward.6} parent=31 // pred_check
              _
            $region34: #{autoencoder_forward.6} parent=31 // pred_check_branch
              %173 = sbr.rel (0) target = $region36
            $region35: #{autoencoder_forward.6} parent=31 // pred_region
              loop: start=0, step=1, limit=1
              $region37: #{autoencoder_forward.6} parent=35 // loop_pre_header
                _
              $region38: #{autoencoder_forward.6} parent=35 // loop_header
                %s175 = sphi 0, %s179
                %p176 = scmp.ge.s32.totalorder %s175, 1
                %s180 = sphi %s169, %s169
                %s181 = sphi %s166, %s166
              $region39: #{autoencoder_forward.6} parent=35 // loop_header_branch
                %178 = sbr.rel (%p176) target = $region43
              $region40: #{autoencoder_forward.6} parent=35 // loop_body
                %v182 = vld [vmem:[%s180] sm:$0xff]
                %183 = vst [vmem:[%s181] sm:$0xff] %v182
                %v184 = vld [vmem:[%s180 + $0x8] sm:$0xff]
                %185 = vst [vmem:[%s181 + $0x8] sm:$0xff] %v184
                %v186 = vld [vmem:[%s180 + $0x10] sm:$0xff]
                %187 = vst [vmem:[%s181 + $0x10] sm:$0xff] %v186
                %v188 = vld [vmem:[%s180 + $0x18] sm:$0xff]
                %189 = vst [vmem:[%s181 + $0x18] sm:$0xff] %v188
                %v190 = vld [vmem:[%s180 + $0x20] sm:$0xff]
                %191 = vst [vmem:[%s181 + $0x20] sm:$0xff] %v190
                %v192 = vld [vmem:[%s180 + $0x28] sm:$0xff]
                %193 = vst [vmem:[%s181 + $0x28] sm:$0xff] %v192
                %v194 = vld [vmem:[%s180 + $0x30] sm:$0xff]
                %195 = vst [vmem:[%s181 + $0x30] sm:$0xff] %v194
                %v196 = vld [vmem:[%s180 + $0x38] sm:$0xff]
                %197 = vst [vmem:[%s181 + $0x38] sm:$0xff] %v196
                %v198 = vld [vmem:[%s180 + $0x200] sm:$0xff]
                %199 = vst [vmem:[%s181 + $0x40] sm:$0xff] %v198
                %v200 = vld [vmem:[%s180 + $0x208] sm:$0xff]
                %201 = vst [vmem:[%s181 + $0x48] sm:$0xff] %v200
                %v202 = vld [vmem:[%s180 + $0x210] sm:$0xff]
                %203 = vst [vmem:[%s181 + $0x50] sm:$0xff] %v202
                %v204 = vld [vmem:[%s180 + $0x218] sm:$0xff]
                %205 = vst [vmem:[%s181 + $0x58] sm:$0xff] %v204
                %v206 = vld [vmem:[%s180 + $0x220] sm:$0xff]
                %207 = vst [vmem:[%s181 + $0x60] sm:$0xff] %v206
                %v208 = vld [vmem:[%s180 + $0x228] sm:$0xff]
                %209 = vst [vmem:[%s181 + $0x68] sm:$0xff] %v208
                %v210 = vld [vmem:[%s180 + $0x230] sm:$0xff]
                %211 = vst [vmem:[%s181 + $0x70] sm:$0xff] %v210
                %v212 = vld [vmem:[%s180 + $0x238] sm:$0xff]
                %213 = vst [vmem:[%s181 + $0x78] sm:$0xff] %v212
              $region41: #{autoencoder_forward.6} parent=35 // loop_footer
                %s179 = sadd.s32 1, %s175
              $region42: #{autoencoder_forward.6} parent=35 // loop_footer_branch
                %174 = sbr.rel target = $region38
              $region43: #{autoencoder_forward.6} parent=35 // loop_exit
                _
            $region36: #{autoencoder_forward.6} parent=31 // pred_fallthru
              _
            // Predicated region
            $region44: #{autoencoder_forward.6} parent=31 // pred_check
              _
            $region45: #{autoencoder_forward.6} parent=31 // pred_check_branch
              %215 = sbr.rel target = $region47
            $region46: #{autoencoder_forward.6} parent=31 // pred_region
              _
            $region47: #{autoencoder_forward.6} parent=31 // pred_fallthru
              _
          $region32: #{autoencoder_forward.6} parent=27 // pred_fallthru
            _
          %216 = vnop
        $region28: #{autoencoder_forward.6} parent=23 // pred_fallthru
          _
      $region24: #{autoencoder_forward.6} parent=5 // pred_fallthru
        _
      %p217 = scmp.le.s32.totalorder 1, %s9
      %p218 = scmp.lt.s32.totalorder %s9, 9
      %p219 = pnand %p217, %p218
      %p220 = pneg %p219
      // Predicated region
      $region48: #{autoencoder_forward.6} parent=5 // pred_check
        _
      $region49: #{autoencoder_forward.6} parent=5 // pred_check_branch
        %222 = sbr.rel (%p219) target = $region51
      $region50: #{autoencoder_forward.6} parent=5 // pred_region
        %s223 = ssub.s32 %s9, 1
        %s224 = sand.u32 %s60, 1
        %s225 = sand.u32 %s60, 1
        %s226 = smul.addr %s225, 128
        %s227 = scalar_lea.vmem [#allocation2], %s226
        // Predicated region
        $region52: #{autoencoder_forward.6} parent=50 // pred_check
          %p228 = pneg %p73
        $region53: #{autoencoder_forward.6} parent=50 // pred_check_branch
          %230 = sbr.rel (%p228) target = $region55
        $region54: #{autoencoder_forward.6} parent=50 // pred_region
          _
        $region55: #{autoencoder_forward.6} parent=50 // pred_fallthru
          _
        %p231 = scmp.lt.s32.totalorder %s18, 0
        %s232 = scalar_select %p231, %s18, 0
        %s233 = smul.addr %s232, 8
        %s234 = scalar_lea.vmem %s0, %s233
        %p235 = pneg %p47
        %p236 = pneg %p44
        %s237 = sand.u32 %s60, 1
        %s238 = sand.u32 %s60, 1
        %s239 = smul.addr %s238, 128
        %s240 = scalar_lea.vmem [#allocation2], %s239
        %p241 = pneg %p73
        %p242 = pneg %p70
        %p243 = scmp.lt.s32.totalorder %s18, 0
        %s244 = scalar_select %p243, %s18, 0
        %s245 = smul.addr %s244, 8
        %s246 = scalar_lea.vmem %s2, %s245
        %p247 = pneg %p99
        %p248 = pneg %p96
        %p249 = pneg %p127
        %p250 = pneg %p124
        %s251 = smul.u32 8, %s19
        %p252 = scmp.lt.s32.totalorder %s18, 0
        %s253 = scalar_select %p252, %s18, 0
        %p254 = scmp.lt.s32.totalorder %s251, 63
        %s255 = scalar_select %p254, %s251, 63
        %s256 = smul.addr %s253, 64
        %s257 = sadd.s32 %s255, %s256
        %s258 = smul.addr %s257, 8
        %s259 = scalar_lea.vmem %s3, %s258
        %p260 = scmp.lt.s32.totalorder %s18, 0
        %s261 = scalar_select %p260, %s18, 0
        %s262 = smul.addr %s261, 8
        %s263 = scalar_lea.vmem %s0, %s262
        %s264 = smul.u32 8, %s19
        %p265 = scmp.lt.s32.totalorder %s18, 0
        %s266 = scalar_select %p265, %s18, 0
        %s267 = smul.addr %s266, 8
        %s268 = scalar_lea.vmem %s2, %s267
        %s269 = smul.u32 8, %s19
        %p270 = scmp.lt.s32.totalorder %s18, 0
        %s271 = scalar_select %p270, %s18, 0
        %p272 = scmp.lt.s32.totalorder %s269, 63
        %s273 = scalar_select %p272, %s269, 63
        %s274 = smul.addr %s271, 64
        %s275 = sadd.s32 %s273, %s274
        %s276 = smul.addr %s275, 8
        %s277 = scalar_lea.vmem %s3, %s276
        %s278 = smul.u32 8, %s19
        %v279 = vld [vmem:[%s263] sm:$0xff]
        %v280 = vld [vmem:[%s227] sm:$0xff]
        %v281 = vld [vmem:[%s227 + $0x8] sm:$0xff]
        %v282 = vld [vmem:[%s227 + $0x10] sm:$0xff]
        %v283 = vld [vmem:[%s227 + $0x18] sm:$0xff]
        %v284 = vld [vmem:[%s227 + $0x20] sm:$0xff]
        %v285 = vld [vmem:[%s227 + $0x28] sm:$0xff]
        %v286 = vld [vmem:[%s227 + $0x30] sm:$0xff]
        %v287 = vld [vmem:[%s227 + $0x38] sm:$0xff]
        %v288 = vld [vmem:[%s227 + $0x40] sm:$0x1]
        %v289 = vld [vmem:[%s227 + $0x48] sm:$0x1]
        %v290 = vld [vmem:[%s227 + $0x50] sm:$0x1]
        %v291 = vld [vmem:[%s227 + $0x58] sm:$0x1]
        %v292 = vld [vmem:[%s227 + $0x60] sm:$0x1]
        %v293 = vld [vmem:[%s227 + $0x68] sm:$0x1]
        %v294 = vld [vmem:[%s227 + $0x70] sm:$0x1]
        %v295 = vld [vmem:[%s227 + $0x78] sm:$0x1]
        %v296 = vld [vmem:[%s268] sm:$0xff]
        %298 = vset.pattern.permute.xlu0 0
        %299 = vperm.xlu0 %298, %v296
        %v300 = vpop.permute.xlu0 %299
        %vm302 = vcmask 72704
        %v304 = vsel %vm302, %v279, 0
        %vm306 = vcmask 1040384
        %v308 = vsel %vm306, %v288, 0
        %v311 = vsel %vm306, %v289, 0
        %v314 = vsel %vm306, %v290, 0
        %v317 = vsel %vm306, %v291, 0
        %v320 = vsel %vm306, %v292, 0
        %v323 = vsel %vm306, %v293, 0
        %v326 = vsel %vm306, %v294, 0
        %v329 = vsel %vm306, %v295, 0
        %331 = vmatprep.subr.mxu0 %v281
        %332 = vmatpush1.msra.mxu0 %v280
        %333 = vmatprep.subr.mxu0 %v311
        %334 = vmatpush1.msra.mxu0 %v308
        %335 = vmatprep.subr.mxu0 0.0
        %336 = vmatpush1.msra.mxu0 0.0
        %337 = vmatprep.subr.mxu0 0.0
        %338 = vmatpush1.msra.mxu0 0.0
        %339 = vmatprep.subr.mxu0 0.0
        %340 = vmatpush1.msra.mxu0 0.0
        %341 = vmatprep.subr.mxu0 0.0
        %342 = vmatpush1.msra.mxu0 0.0
        %343 = vmatprep.subr.mxu0 0.0
        %344 = vmatpush1.msra.mxu0 0.0
        %345 = vmatprep.subr.mxu0 0.0
        %346 = vmatpush1.msra.mxu0 0.0
        %347 = vmatprep.subr.mxu0 0.0
        %348 = vmatpush1.msra.mxu0 0.0
        %349 = vmatprep.subr.mxu0 0.0
        %350 = vmatpush1.msra.mxu0 0.0
        %351 = vmatprep.subr.mxu0 0.0
        %352 = vmatpush1.msra.mxu0 0.0
        %353 = vmatprep.subr.mxu0 0.0
        %354 = vmatpush1.msra.mxu0 0.0
        %355 = vmatprep.subr.mxu0 0.0
        %356 = vmatpush1.msra.mxu0 0.0
        %357 = vmatprep.subr.mxu0 0.0
        %358 = vmatpush1.msra.mxu0 0.0
        %359 = vmatprep.subr.mxu0 0.0
        %360 = vmatpush1.msra.mxu0 0.0
        %361 = vmatprep.subr.mxu0 0.0
        %362 = vmatpush1.msra.mxu0 0.0
        %363 = vmatprep.subr.mxu0 0.0
        %364 = vmatpush1.msra.mxu0 0.0
        %365 = vmatprep.subr.mxu0 0.0
        %366 = vmatpush1.msra.mxu0 0.0
        %367 = vmatprep.subr.mxu0 0.0
        %368 = vmatpush1.msra.mxu0 0.0
        %369 = vmatprep.subr.mxu0 0.0
        %370 = vmatpush1.msra.mxu0 0.0
        %371 = vmatprep.subr.mxu0 0.0
        %372 = vmatpush1.msra.mxu0 0.0
        %373 = vmatprep.subr.mxu0 0.0
        %374 = vmatpush1.msra.mxu0 0.0
        %375 = vmatprep.subr.mxu0 0.0
        %376 = vmatpush1.msra.mxu0 0.0
        %377 = vmatprep.subr.mxu0 0.0
        %378 = vmatpush1.msra.mxu0 0.0
        %379 = vmatprep.subr.mxu0 0.0
        %380 = vmatpush1.msra.mxu0 0.0
        %381 = vmatprep.subr.mxu0 0.0
        %382 = vmatpush1.msra.mxu0 0.0
        %383 = vmatprep.subr.mxu0 0.0
        %384 = vmatpush1.msra.mxu0 0.0
        %385 = vmatprep.subr.mxu0 0.0
        %386 = vmatpush1.msra.mxu0 0.0
        %387 = vmatprep.subr.mxu0 0.0
        %388 = vmatpush1.msra.mxu0 0.0
        %389 = vmatprep.subr.mxu0 0.0
        %390 = vmatpush1.msra.mxu0 0.0
        %391 = vmatprep.subr.mxu0 0.0
        %392 = vmatpush1.msra.mxu0 0.0
        %393 = vmatprep.subr.mxu0 0.0
        %394 = vmatpush1.msra.mxu0 0.0
        %395 = vmatprep.mubr.f32.mxu0 0.0
        %396 = vmatmul.mubr.f32.gmra.mrb[0].mxu0 %v304
        %v397 = vpop.f32.mrb[0].mxu0
        %v398 = vadd.f32 %v300, %v397
        %v399 = vpop.f32.mrb[0].mxu0
        %v400 = vadd.f32 %v300, %v399
        %401 = vdwg.mxu0
        %402 = vmatprep.subr.mxu0 %v283
        %403 = vmatpush1.msra.mxu0 %v282
        %404 = vmatprep.subr.mxu0 %v317
        %405 = vmatpush1.msra.mxu0 %v314
        %406 = vmatprep.subr.mxu0 0.0
        %407 = vmatpush1.msra.mxu0 0.0
        %408 = vmatprep.subr.mxu0 0.0
        %409 = vmatpush1.msra.mxu0 0.0
        %410 = vmatprep.subr.mxu0 0.0
        %411 = vmatpush1.msra.mxu0 0.0
        %412 = vmatprep.subr.mxu0 0.0
        %413 = vmatpush1.msra.mxu0 0.0
        %414 = vmatprep.subr.mxu0 0.0
        %415 = vmatpush1.msra.mxu0 0.0
        %416 = vmatprep.subr.mxu0 0.0
        %417 = vmatpush1.msra.mxu0 0.0
        %418 = vmatprep.subr.mxu0 0.0
        %419 = vmatpush1.msra.mxu0 0.0
        %420 = vmatprep.subr.mxu0 0.0
        %421 = vmatpush1.msra.mxu0 0.0
        %422 = vmatprep.subr.mxu0 0.0
        %423 = vmatpush1.msra.mxu0 0.0
        %424 = vmatprep.subr.mxu0 0.0
        %425 = vmatpush1.msra.mxu0 0.0
        %426 = vmatprep.subr.mxu0 0.0
        %427 = vmatpush1.msra.mxu0 0.0
        %428 = vmatprep.subr.mxu0 0.0
        %429 = vmatpush1.msra.mxu0 0.0
        %430 = vmatprep.subr.mxu0 0.0
        %431 = vmatpush1.msra.mxu0 0.0
        %432 = vmatprep.subr.mxu0 0.0
        %433 = vmatpush1.msra.mxu0 0.0
        %434 = vmatprep.subr.mxu0 0.0
        %435 = vmatpush1.msra.mxu0 0.0
        %436 = vmatprep.subr.mxu0 0.0
        %437 = vmatpush1.msra.mxu0 0.0
        %438 = vmatprep.subr.mxu0 0.0
        %439 = vmatpush1.msra.mxu0 0.0
        %440 = vmatprep.subr.mxu0 0.0
        %441 = vmatpush1.msra.mxu0 0.0
        %442 = vmatprep.subr.mxu0 0.0
        %443 = vmatpush1.msra.mxu0 0.0
        %444 = vmatprep.subr.mxu0 0.0
        %445 = vmatpush1.msra.mxu0 0.0
        %446 = vmatprep.subr.mxu0 0.0
        %447 = vmatpush1.msra.mxu0 0.0
        %448 = vmatprep.subr.mxu0 0.0
        %449 = vmatpush1.msra.mxu0 0.0
        %450 = vmatprep.subr.mxu0 0.0
        %451 = vmatpush1.msra.mxu0 0.0
        %452 = vmatprep.subr.mxu0 0.0
        %453 = vmatpush1.msra.mxu0 0.0
        %454 = vmatprep.subr.mxu0 0.0
        %455 = vmatpush1.msra.mxu0 0.0
        %456 = vmatprep.subr.mxu0 0.0
        %457 = vmatpush1.msra.mxu0 0.0
        %458 = vmatprep.subr.mxu0 0.0
        %459 = vmatpush1.msra.mxu0 0.0
        %460 = vmatprep.subr.mxu0 0.0
        %461 = vmatpush1.msra.mxu0 0.0
        %462 = vmatprep.subr.mxu0 0.0
        %463 = vmatpush1.msra.mxu0 0.0
        %464 = vmatprep.subr.mxu0 0.0
        %465 = vmatpush1.msra.mxu0 0.0
        %466 = vmatprep.mubr.f32.mxu0 0.0
        %467 = vmatmul.mubr.f32.gmra.mrb[0].mxu0 %v304
        %v468 = vpop.f32.mrb[0].mxu0
        %v469 = vadd.f32 %v300, %v468
        %v470 = vpop.f32.mrb[0].mxu0
        %v471 = vadd.f32 %v300, %v470
        %472 = vdwg.mxu0
        %473 = vmatprep.subr.mxu0 %v285
        %474 = vmatpush1.msra.mxu0 %v284
        %475 = vmatprep.subr.mxu0 %v323
        %476 = vmatpush1.msra.mxu0 %v320
        %477 = vmatprep.subr.mxu0 0.0
        %478 = vmatpush1.msra.mxu0 0.0
        %479 = vmatprep.subr.mxu0 0.0
        %480 = vmatpush1.msra.mxu0 0.0
        %481 = vmatprep.subr.mxu0 0.0
        %482 = vmatpush1.msra.mxu0 0.0
        %483 = vmatprep.subr.mxu0 0.0
        %484 = vmatpush1.msra.mxu0 0.0
        %485 = vmatprep.subr.mxu0 0.0
        %486 = vmatpush1.msra.mxu0 0.0
        %487 = vmatprep.subr.mxu0 0.0
        %488 = vmatpush1.msra.mxu0 0.0
        %489 = vmatprep.subr.mxu0 0.0
        %490 = vmatpush1.msra.mxu0 0.0
        %491 = vmatprep.subr.mxu0 0.0
        %492 = vmatpush1.msra.mxu0 0.0
        %493 = vmatprep.subr.mxu0 0.0
        %494 = vmatpush1.msra.mxu0 0.0
        %495 = vmatprep.subr.mxu0 0.0
        %496 = vmatpush1.msra.mxu0 0.0
        %497 = vmatprep.subr.mxu0 0.0
        %498 = vmatpush1.msra.mxu0 0.0
        %499 = vmatprep.subr.mxu0 0.0
        %500 = vmatpush1.msra.mxu0 0.0
        %501 = vmatprep.subr.mxu0 0.0
        %502 = vmatpush1.msra.mxu0 0.0
        %503 = vmatprep.subr.mxu0 0.0
        %504 = vmatpush1.msra.mxu0 0.0
        %505 = vmatprep.subr.mxu0 0.0
        %506 = vmatpush1.msra.mxu0 0.0
        %507 = vmatprep.subr.mxu0 0.0
        %508 = vmatpush1.msra.mxu0 0.0
        %509 = vmatprep.subr.mxu0 0.0
        %510 = vmatpush1.msra.mxu0 0.0
        %511 = vmatprep.subr.mxu0 0.0
        %512 = vmatpush1.msra.mxu0 0.0
        %513 = vmatprep.subr.mxu0 0.0
        %514 = vmatpush1.msra.mxu0 0.0
        %515 = vmatprep.subr.mxu0 0.0
        %516 = vmatpush1.msra.mxu0 0.0
        %517 = vmatprep.subr.mxu0 0.0
        %518 = vmatpush1.msra.mxu0 0.0
        %519 = vmatprep.subr.mxu0 0.0
        %520 = vmatpush1.msra.mxu0 0.0
        %521 = vmatprep.subr.mxu0 0.0
        %522 = vmatpush1.msra.mxu0 0.0
        %523 = vmatprep.subr.mxu0 0.0
        %524 = vmatpush1.msra.mxu0 0.0
        %525 = vmatprep.subr.mxu0 0.0
        %526 = vmatpush1.msra.mxu0 0.0
        %527 = vmatprep.subr.mxu0 0.0
        %528 = vmatpush1.msra.mxu0 0.0
        %529 = vmatprep.subr.mxu0 0.0
        %530 = vmatpush1.msra.mxu0 0.0
        %531 = vmatprep.subr.mxu0 0.0
        %532 = vmatpush1.msra.mxu0 0.0
        %533 = vmatprep.subr.mxu0 0.0
        %534 = vmatpush1.msra.mxu0 0.0
        %535 = vmatprep.subr.mxu0 0.0
        %536 = vmatpush1.msra.mxu0 0.0
        %537 = vmatprep.mubr.f32.mxu0 0.0
        %538 = vmatmul.mubr.f32.gmra.mrb[0].mxu0 %v304
        %v539 = vpop.f32.mrb[0].mxu0
        %v540 = vadd.f32 %v300, %v539
        %v541 = vpop.f32.mrb[0].mxu0
        %v542 = vadd.f32 %v300, %v541
        %543 = vdwg.mxu0
        %544 = vmatprep.subr.mxu0 %v287
        %545 = vmatpush1.msra.mxu0 %v286
        %546 = vmatprep.subr.mxu0 %v329
        %547 = vmatpush1.msra.mxu0 %v326
        %548 = vmatprep.subr.mxu0 0.0
        %549 = vmatpush1.msra.mxu0 0.0
        %550 = vmatprep.subr.mxu0 0.0
        %551 = vmatpush1.msra.mxu0 0.0
        %552 = vmatprep.subr.mxu0 0.0
        %553 = vmatpush1.msra.mxu0 0.0
        %554 = vmatprep.subr.mxu0 0.0
        %555 = vmatpush1.msra.mxu0 0.0
        %556 = vmatprep.subr.mxu0 0.0
        %557 = vmatpush1.msra.mxu0 0.0
        %558 = vmatprep.subr.mxu0 0.0
        %559 = vmatpush1.msra.mxu0 0.0
        %560 = vmatprep.subr.mxu0 0.0
        %561 = vmatpush1.msra.mxu0 0.0
        %562 = vmatprep.subr.mxu0 0.0
        %563 = vmatpush1.msra.mxu0 0.0
        %564 = vmatprep.subr.mxu0 0.0
        %565 = vmatpush1.msra.mxu0 0.0
        %566 = vmatprep.subr.mxu0 0.0
        %567 = vmatpush1.msra.mxu0 0.0
        %568 = vmatprep.subr.mxu0 0.0
        %569 = vmatpush1.msra.mxu0 0.0
        %570 = vmatprep.subr.mxu0 0.0
        %571 = vmatpush1.msra.mxu0 0.0
        %572 = vmatprep.subr.mxu0 0.0
        %573 = vmatpush1.msra.mxu0 0.0
        %574 = vmatprep.subr.mxu0 0.0
        %575 = vmatpush1.msra.mxu0 0.0
        %576 = vmatprep.subr.mxu0 0.0
        %577 = vmatpush1.msra.mxu0 0.0
        %578 = vmatprep.subr.mxu0 0.0
        %579 = vmatpush1.msra.mxu0 0.0
        %580 = vmatprep.subr.mxu0 0.0
        %581 = vmatpush1.msra.mxu0 0.0
        %582 = vmatprep.subr.mxu0 0.0
        %583 = vmatpush1.msra.mxu0 0.0
        %584 = vmatprep.subr.mxu0 0.0
        %585 = vmatpush1.msra.mxu0 0.0
        %586 = vmatprep.subr.mxu0 0.0
        %587 = vmatpush1.msra.mxu0 0.0
        %588 = vmatprep.subr.mxu0 0.0
        %589 = vmatpush1.msra.mxu0 0.0
        %590 = vmatprep.subr.mxu0 0.0
        %591 = vmatpush1.msra.mxu0 0.0
        %592 = vmatprep.subr.mxu0 0.0
        %593 = vmatpush1.msra.mxu0 0.0
        %594 = vmatprep.subr.mxu0 0.0
        %595 = vmatpush1.msra.mxu0 0.0
        %596 = vmatprep.subr.mxu0 0.0
        %597 = vmatpush1.msra.mxu0 0.0
        %598 = vmatprep.subr.mxu0 0.0
        %599 = vmatpush1.msra.mxu0 0.0
        %600 = vmatprep.subr.mxu0 0.0
        %601 = vmatpush1.msra.mxu0 0.0
        %602 = vmatprep.subr.mxu0 0.0
        %603 = vmatpush1.msra.mxu0 0.0
        %604 = vmatprep.subr.mxu0 0.0
        %605 = vmatpush1.msra.mxu0 0.0
        %606 = vmatprep.subr.mxu0 0.0
        %607 = vmatpush1.msra.mxu0 0.0
        %608 = vmatprep.mubr.f32.mxu0 0.0
        %609 = vmatmul.mubr.f32.gmra.mrb[0].mxu0 %v304
        %v610 = vpop.f32.mrb[0].mxu0
        %v611 = vadd.f32 %v300, %v610
        %v612 = vpop.f32.mrb[0].mxu0
        %v613 = vadd.f32 %v300, %v612
        %614 = vdwg.mxu0
        %615 = vst [vmem:[%s277] sm:$0xff] %v398
        %616 = vst [vmem:[%s277 + $0x8] sm:$0xff] %v400
        %617 = vst [vmem:[%s277 + $0x10] sm:$0xff] %v469
        %618 = vst [vmem:[%s277 + $0x18] sm:$0xff] %v471
        %619 = vst [vmem:[%s277 + $0x20] sm:$0xff] %v540
        %620 = vst [vmem:[%s277 + $0x28] sm:$0xff] %v542
        %621 = vst [vmem:[%s277 + $0x30] sm:$0xff] %v611
        %622 = vst [vmem:[%s277 + $0x38] sm:$0xff] %v613
        %s623 = smul.u32 8, %s19
        %p624 = scmp.lt.s32.totalorder %s18, 0
        %s625 = scalar_select %p624, %s18, 0
        %p626 = scmp.lt.s32.totalorder %s623, 63
        %s627 = scalar_select %p626, %s623, 63
        %s628 = smul.addr %s625, 64
        %s629 = sadd.s32 %s627, %s628
        %s630 = smul.addr %s629, 8
        %s631 = scalar_lea.vmem %s3, %s630
        // Predicated region
        $region56: #{autoencoder_forward.6} parent=50 // pred_check
          %p632 = pneg %p124
        $region57: #{autoencoder_forward.6} parent=50 // pred_check_branch
          %634 = sbr.rel (%p632) target = $region59
        $region58: #{autoencoder_forward.6} parent=50 // pred_region
          %s635 = smul.u32 8, %s19
        $region59: #{autoencoder_forward.6} parent=50 // pred_fallthru
          _
      $region51: #{autoencoder_forward.6} parent=5 // pred_fallthru
        _
      %p636 = scmp.le.s32.totalorder 2, %s9
      // Predicated region
      $region60: #{autoencoder_forward.6} parent=5 // pred_check
        %p637 = pneg %p636
      $region61: #{autoencoder_forward.6} parent=5 // pred_check_branch
        %639 = sbr.rel (%p637) target = $region63
      $region62: #{autoencoder_forward.6} parent=5 // pred_region
        %s640 = ssub.s32 %s9, 2
        // Predicated region
        $region64: #{autoencoder_forward.6} parent=62 // pred_check
          %p641 = pneg %p130
        $region65: #{autoencoder_forward.6} parent=62 // pred_check_branch
          %643 = sbr.rel (%p641) target = $region67
        $region66: #{autoencoder_forward.6} parent=62 // pred_region
          %s644 = smul.u32 8, %s21
          %p645 = scmp.lt.s32.totalorder %s20, 0
          %s646 = scalar_select %p645, %s20, 0
          %p647 = scmp.lt.s32.totalorder %s644, 63
          %s648 = scalar_select %p647, %s644, 63
          %s649 = smul.addr %s646, 64
          %s650 = sadd.s32 %s648, %s649
          %s651 = smul.addr %s650, 8
          %s652 = scalar_lea.vmem %s3, %s651
        $region67: #{autoencoder_forward.6} parent=62 // pred_fallthru
          _
      $region63: #{autoencoder_forward.6} parent=5 // pred_fallthru
        _
    $region6: #{autoencoder_forward.6} parent=1 // loop_footer
      %s13 = sadd.s32 1, %s9
    $region7: #{autoencoder_forward.6} parent=1 // loop_footer_branch
      %8 = sbr.rel target = $region3
    $region8: #{autoencoder_forward.6} parent=1 // loop_exit
      _

// kernel: autoencoder_forward.7
$region0: #{autoencoder_forward.7}
  #allocation0 [shape = 'u32[]', space=smem, size = 0x4, offset = 0x4, fixed_abs, tag = 'smem constant byte address 0x4 - core index']
  #allocation1 [shape = 'u32[144,128]{1,0:T(1,128)}', space=vmem, size = 0x12000, scoped, tag = 'internal scratch']
  %s0 = inlined_call_operand.vmem [shape: f32[16,54], index: 0, kind: input, shape index: {}]
  %s1 = inlined_call_operand.vmem [shape: f32[54,8192], index: 1, kind: input, shape index: {}]
  %s2 = inlined_call_operand.vmem [shape: f32[16,1], index: 2, kind: input, shape index: {}]
  %s3 = inlined_call_operand.vmem [shape: f32[16,8192], index: 3, kind: output, shape index: {}]
  %s4 = sld [smem:[#allocation0]]
  $region87: #{autoencoder_forward.7} parent=0
    _
  %s6 = ssub.s32 1, %s4
  %s7 = scalar_select 0, %s6, %s4
  $region1: #{autoencoder_forward.7} parent=0
    #allocation2 [shape = 'u8[458752]{0}', space=vmem, size = 0x70000, scoped, tag = 'input window, operand 1']
    #allocation3 [shape = 'u8[131072]{0}', space=vmem, size = 0x20000, scoped, tag = 'output window, operand 0']
    loop: start=0, step=1, limit=10
    $region2: #{autoencoder_forward.7} parent=1 // loop_pre_header
      _
    $region3: #{autoencoder_forward.7} parent=1 // loop_header
      %s9 = sphi 0, %s13
      %p10 = scmp.ge.s32.totalorder %s9, 10
      %s16 = sphi 0, %s28
      %s17 = sphi 0, %s24
      %s18 = sphi 0, %s16
      %s19 = sphi 0, %s17
      %s20 = sphi 0, %s18
      %s21 = sphi 0, %s19
      %s31 = sphi 0, %s33
      %s34 = sphi 0, %s31
      %s35 = sphi 0, %s34
      %s51 = sphi 0, %s35
      %s57 = sphi 0, %s59
      %s60 = sphi 0, %s57
      %s61 = sphi 0, %s60
      %s77 = sphi 0, %s61
      %s83 = sphi 0, %s85
      %s86 = sphi 0, %s83
      %s87 = sphi 0, %s86
      %s103 = sphi 0, %s87
      %s111 = sphi 0, %s113
      %s114 = sphi 0, %s111
      %s115 = sphi 0, %s114
      %s131 = sphi 0, %s115
    $region4: #{autoencoder_forward.7} parent=1 // loop_header_branch
      %12 = sbr.rel (%p10) target = $region8
    $region5: #{autoencoder_forward.7} parent=1 // loop_body
      %s14 = ssub.s32 %s9, 1
      %s15 = ssub.s32 %s9, 2
      %s22 = sadd.s32 1, %s17
      %p23 = scmp.ge.s32.totalorder %s22, 8
      %s24 = scalar_select %p23, 0, %s22
      %s25 = sadd.s32 1, %s16
      %s26 = scalar_select %p23, %s25, %s16
      %p27 = scmp.ge.s32.totalorder %s26, 1
      %s28 = scalar_select %p27, 0, %s26
      %s29 = ssub.s32 %s16, %s28
      %p30 = scmp.eq.s32.totalorder %s29, 0
      %s32 = sadd.s32 %s31, 1
      %s33 = scalar_select %p30, %s31, %s32
      %p36 = pneg %p30
      %p37 = scmp.eq.s32.totalorder %s9, 7
      %p38 = por %p36, %p37
      %p39 = scmp.ne.s32.totalorder %s31, %s34
      %p40 = scmp.eq.s32.totalorder %s9, 0
      %p41 = por %p39, %p40
      %p42 = scmp.ne.s32.totalorder %s31, %s34
      %p43 = scmp.eq.s32.totalorder %s14, 7
      %p44 = por %p42, %p43
      %p45 = scmp.ne.s32.totalorder %s34, %s35
      %p46 = scmp.eq.s32.totalorder %s14, 0
      %p47 = por %p45, %p46
      %p48 = scmp.ne.s32.totalorder %s34, %s35
      %p49 = scmp.eq.s32.totalorder %s15, 7
      %p50 = por %p48, %p49
      %p52 = scmp.ne.s32.totalorder %s35, %s51
      %p53 = scmp.eq.s32.totalorder %s15, 0
      %p54 = por %p52, %p53
      %s55 = ssub.s32 %s17, %s24
      %p56 = scmp.eq.s32.totalorder %s55, 0
      %s58 = sadd.s32 %s57, 1
      %s59 = scalar_select %p56, %s57, %s58
      %p62 = pneg %p56
      %p63 = scmp.eq.s32.totalorder %s9, 7
      %p64 = por %p62, %p63
      %p65 = scmp.ne.s32.totalorder %s57, %s60
      %p66 = scmp.eq.s32.totalorder %s9, 0
      %p67 = por %p65, %p66
      %p68 = scmp.ne.s32.totalorder %s57, %s60
      %p69 = scmp.eq.s32.totalorder %s14, 7
      %p70 = por %p68, %p69
      %p71 = scmp.ne.s32.totalorder %s60, %s61
      %p72 = scmp.eq.s32.totalorder %s14, 0
      %p73 = por %p71, %p72
      %p74 = scmp.ne.s32.totalorder %s60, %s61
      %p75 = scmp.eq.s32.totalorder %s15, 7
      %p76 = por %p74, %p75
      %p78 = scmp.ne.s32.totalorder %s61, %s77
      %p79 = scmp.eq.s32.totalorder %s15, 0
      %p80 = por %p78, %p79
      %s81 = ssub.s32 %s16, %s28
      %p82 = scmp.eq.s32.totalorder %s81, 0
      %s84 = sadd.s32 %s83, 1
      %s85 = scalar_select %p82, %s83, %s84
      %p88 = pneg %p82
      %p89 = scmp.eq.s32.totalorder %s9, 7
      %p90 = por %p88, %p89
      %p91 = scmp.ne.s32.totalorder %s83, %s86
      %p92 = scmp.eq.s32.totalorder %s9, 0
      %p93 = por %p91, %p92
      %p94 = scmp.ne.s32.totalorder %s83, %s86
      %p95 = scmp.eq.s32.totalorder %s14, 7
      %p96 = por %p94, %p95
      %p97 = scmp.ne.s32.totalorder %s86, %s87
      %p98 = scmp.eq.s32.totalorder %s14, 0
      %p99 = por %p97, %p98
      %p100 = scmp.ne.s32.totalorder %s86, %s87
      %p101 = scmp.eq.s32.totalorder %s15, 7
      %p102 = por %p100, %p101
      %p104 = scmp.ne.s32.totalorder %s87, %s103
      %p105 = scmp.eq.s32.totalorder %s15, 0
      %p106 = por %p104, %p105
      %s107 = ssub.s32 %s16, %s28
      %s108 = ssub.s32 %s17, %s24
      %s109 = sor.u32 %s107, %s108
      %p110 = scmp.eq.s32.totalorder %s109, 0
      %s112 = sadd.s32 %s111, 1
      %s113 = scalar_select %p110, %s111, %s112
      %p116 = pneg %p110
      %p117 = scmp.eq.s32.totalorder %s9, 7
      %p118 = por %p116, %p117
      %p119 = scmp.ne.s32.totalorder %s111, %s114
      %p120 = scmp.eq.s32.totalorder %s9, 0
      %p121 = por %p119, %p120
      %p122 = scmp.ne.s32.totalorder %s111, %s114
      %p123 = scmp.eq.s32.totalorder %s14, 7
      %p124 = por %p122, %p123
      %p125 = scmp.ne.s32.totalorder %s114, %s115
      %p126 = scmp.eq.s32.totalorder %s14, 0
      %p127 = por %p125, %p126
      %p128 = scmp.ne.s32.totalorder %s114, %s115
      %p129 = scmp.eq.s32.totalorder %s15, 7
      %p130 = por %p128, %p129
      %p132 = scmp.ne.s32.totalorder %s115, %s131
      %p133 = scmp.eq.s32.totalorder %s15, 0
      %p134 = por %p132, %p133
      %p135 = scmp.le.s32.totalorder 1, %s9
      %p136 = scmp.lt.s32.totalorder %s9, 9
      %p137 = pnand %p135, %p136
      %p138 = pneg %p137
      // Predicated region
      $region9: #{autoencoder_forward.7} parent=5 // pred_check
        _
      $region10: #{autoencoder_forward.7} parent=5 // pred_check_branch
        %140 = sbr.rel (%p137) target = $region12
      $region11: #{autoencoder_forward.7} parent=5 // pred_region
        %s141 = ssub.s32 %s9, 1
        // Predicated region
        $region13: #{autoencoder_forward.7} parent=11 // pred_check
          %p142 = pneg %p47
        $region14: #{autoencoder_forward.7} parent=11 // pred_check_branch
          %144 = sbr.rel (%p142) target = $region16
        $region15: #{autoencoder_forward.7} parent=11 // pred_region
          %s145 = smul.u32 2, %s18
          %p146 = scmp.lt.s32.totalorder %s145, 1
          %s147 = scalar_select %p146, %s145, 1
          %s148 = smul.addr %s147, 8
          %s149 = scalar_lea.vmem %s0, %s148
          %s150 = smul.u32 2, %s18
        $region16: #{autoencoder_forward.7} parent=11 // pred_fallthru
          _
        // Predicated region
        $region17: #{autoencoder_forward.7} parent=11 // pred_check
          %p151 = pneg %p99
        $region18: #{autoencoder_forward.7} parent=11 // pred_check_branch
          %153 = sbr.rel (%p151) target = $region20
        $region19: #{autoencoder_forward.7} parent=11 // pred_region
          %s154 = smul.u32 2, %s18
          %p155 = scmp.lt.s32.totalorder %s154, 1
          %s156 = scalar_select %p155, %s154, 1
          %s157 = smul.addr %s156, 8
          %s158 = scalar_lea.vmem %s2, %s157
          %s159 = smul.u32 2, %s18
        $region20: #{autoencoder_forward.7} parent=11 // pred_fallthru
          _
      $region12: #{autoencoder_forward.7} parent=5 // pred_fallthru
        _
      %p160 = scmp.lt.s32.totalorder %s9, 8
      // Predicated region
      $region21: #{autoencoder_forward.7} parent=5 // pred_check
        %p161 = pneg %p160
      $region22: #{autoencoder_forward.7} parent=5 // pred_check_branch
        %163 = sbr.rel (%p161) target = $region24
      $region23: #{autoencoder_forward.7} parent=5 // pred_region
        // Predicated region
        $region25: #{autoencoder_forward.7} parent=23 // pred_check
          %p164 = pneg %p67
        $region26: #{autoencoder_forward.7} parent=23 // pred_check_branch
          %166 = sbr.rel (%p164) target = $region28
        $region27: #{autoencoder_forward.7} parent=23 // pred_region
          %s167 = sand.u32 %s57, 1
          %s168 = sand.u32 %s57, 1
          %s169 = smul.addr %s168, 448
          %s170 = scalar_lea.vmem [#allocation2], %s169
          %s171 = smul.u32 8, %s17
          %s172 = smul.addr %s171, 8
          %s173 = scalar_lea.vmem %s1, %s172
          // Predicated region
          $region29: #{autoencoder_forward.7} parent=27 // pred_check
            _
          $region30: #{autoencoder_forward.7} parent=27 // pred_check_branch
            %175 = sbr.rel (0) target = $region32
          $region31: #{autoencoder_forward.7} parent=27 // pred_region
            // Predicated region
            $region33: #{autoencoder_forward.7} parent=31 // pred_check
              _
            $region34: #{autoencoder_forward.7} parent=31 // pred_check_branch
              %177 = sbr.rel (0) target = $region36
            $region35: #{autoencoder_forward.7} parent=31 // pred_region
              loop: start=0, step=1, limit=1
              $region37: #{autoencoder_forward.7} parent=35 // loop_pre_header
                _
              $region38: #{autoencoder_forward.7} parent=35 // loop_header
                %s179 = sphi 0, %s183
                %p180 = scmp.ge.s32.totalorder %s179, 1
                %s184 = sphi %s173, %s173
                %s185 = sphi %s170, %s170
              $region39: #{autoencoder_forward.7} parent=35 // loop_header_branch
                %182 = sbr.rel (%p180) target = $region43
              $region40: #{autoencoder_forward.7} parent=35 // loop_body
                %v186 = vld [vmem:[%s184] sm:$0xff]
                %187 = vst [vmem:[%s185] sm:$0xff] %v186
                %v188 = vld [vmem:[%s184 + $0x8] sm:$0xff]
                %189 = vst [vmem:[%s185 + $0x8] sm:$0xff] %v188
                %v190 = vld [vmem:[%s184 + $0x10] sm:$0xff]
                %191 = vst [vmem:[%s185 + $0x10] sm:$0xff] %v190
                %v192 = vld [vmem:[%s184 + $0x18] sm:$0xff]
                %193 = vst [vmem:[%s185 + $0x18] sm:$0xff] %v192
                %v194 = vld [vmem:[%s184 + $0x20] sm:$0xff]
                %195 = vst [vmem:[%s185 + $0x20] sm:$0xff] %v194
                %v196 = vld [vmem:[%s184 + $0x28] sm:$0xff]
                %197 = vst [vmem:[%s185 + $0x28] sm:$0xff] %v196
                %v198 = vld [vmem:[%s184 + $0x30] sm:$0xff]
                %199 = vst [vmem:[%s185 + $0x30] sm:$0xff] %v198
                %v200 = vld [vmem:[%s184 + $0x38] sm:$0xff]
                %201 = vst [vmem:[%s185 + $0x38] sm:$0xff] %v200
                %v202 = vld [vmem:[%s184 + $0x200] sm:$0xff]
                %203 = vst [vmem:[%s185 + $0x40] sm:$0xff] %v202
                %v204 = vld [vmem:[%s184 + $0x208] sm:$0xff]
                %205 = vst [vmem:[%s185 + $0x48] sm:$0xff] %v204
                %v206 = vld [vmem:[%s184 + $0x210] sm:$0xff]
                %207 = vst [vmem:[%s185 + $0x50] sm:$0xff] %v206
                %v208 = vld [vmem:[%s184 + $0x218] sm:$0xff]
                %209 = vst [vmem:[%s185 + $0x58] sm:$0xff] %v208
                %v210 = vld [vmem:[%s184 + $0x220] sm:$0xff]
                %211 = vst [vmem:[%s185 + $0x60] sm:$0xff] %v210
                %v212 = vld [vmem:[%s184 + $0x228] sm:$0xff]
                %213 = vst [vmem:[%s185 + $0x68] sm:$0xff] %v212
                %v214 = vld [vmem:[%s184 + $0x230] sm:$0xff]
                %215 = vst [vmem:[%s185 + $0x70] sm:$0xff] %v214
                %v216 = vld [vmem:[%s184 + $0x238] sm:$0xff]
                %217 = vst [vmem:[%s185 + $0x78] sm:$0xff] %v216
                %v218 = vld [vmem:[%s184 + $0x400] sm:$0xff]
                %219 = vst [vmem:[%s185 + $0x80] sm:$0xff] %v218
                %v220 = vld [vmem:[%s184 + $0x408] sm:$0xff]
                %221 = vst [vmem:[%s185 + $0x88] sm:$0xff] %v220
                %v222 = vld [vmem:[%s184 + $0x410] sm:$0xff]
                %223 = vst [vmem:[%s185 + $0x90] sm:$0xff] %v222
                %v224 = vld [vmem:[%s184 + $0x418] sm:$0xff]
                %225 = vst [vmem:[%s185 + $0x98] sm:$0xff] %v224
                %v226 = vld [vmem:[%s184 + $0x420] sm:$0xff]
                %227 = vst [vmem:[%s185 + $0xa0] sm:$0xff] %v226
                %v228 = vld [vmem:[%s184 + $0x428] sm:$0xff]
                %229 = vst [vmem:[%s185 + $0xa8] sm:$0xff] %v228
                %v230 = vld [vmem:[%s184 + $0x430] sm:$0xff]
                %231 = vst [vmem:[%s185 + $0xb0] sm:$0xff] %v230
                %v232 = vld [vmem:[%s184 + $0x438] sm:$0xff]
                %233 = vst [vmem:[%s185 + $0xb8] sm:$0xff] %v232
                %v234 = vld [vmem:[%s184 + $0x600] sm:$0xff]
                %235 = vst [vmem:[%s185 + $0xc0] sm:$0xff] %v234
                %v236 = vld [vmem:[%s184 + $0x608] sm:$0xff]
                %237 = vst [vmem:[%s185 + $0xc8] sm:$0xff] %v236
                %v238 = vld [vmem:[%s184 + $0x610] sm:$0xff]
                %239 = vst [vmem:[%s185 + $0xd0] sm:$0xff] %v238
                %v240 = vld [vmem:[%s184 + $0x618] sm:$0xff]
                %241 = vst [vmem:[%s185 + $0xd8] sm:$0xff] %v240
                %v242 = vld [vmem:[%s184 + $0x620] sm:$0xff]
                %243 = vst [vmem:[%s185 + $0xe0] sm:$0xff] %v242
                %v244 = vld [vmem:[%s184 + $0x628] sm:$0xff]
                %245 = vst [vmem:[%s185 + $0xe8] sm:$0xff] %v244
                %v246 = vld [vmem:[%s184 + $0x630] sm:$0xff]
                %247 = vst [vmem:[%s185 + $0xf0] sm:$0xff] %v246
                %v248 = vld [vmem:[%s184 + $0x638] sm:$0xff]
                %249 = vst [vmem:[%s185 + $0xf8] sm:$0xff] %v248
                %v250 = vld [vmem:[%s184 + $0x800] sm:$0xff]
                %251 = vst [vmem:[%s185 + $0x100] sm:$0xff] %v250
                %v252 = vld [vmem:[%s184 + $0x808] sm:$0xff]
                %253 = vst [vmem:[%s185 + $0x108] sm:$0xff] %v252
                %v254 = vld [vmem:[%s184 + $0x810] sm:$0xff]
                %255 = vst [vmem:[%s185 + $0x110] sm:$0xff] %v254
                %v256 = vld [vmem:[%s184 + $0x818] sm:$0xff]
                %257 = vst [vmem:[%s185 + $0x118] sm:$0xff] %v256
                %v258 = vld [vmem:[%s184 + $0x820] sm:$0xff]
                %259 = vst [vmem:[%s185 + $0x120] sm:$0xff] %v258
                %v260 = vld [vmem:[%s184 + $0x828] sm:$0xff]
                %261 = vst [vmem:[%s185 + $0x128] sm:$0xff] %v260
                %v262 = vld [vmem:[%s184 + $0x830] sm:$0xff]
                %263 = vst [vmem:[%s185 + $0x130] sm:$0xff] %v262
                %v264 = vld [vmem:[%s184 + $0x838] sm:$0xff]
                %265 = vst [vmem:[%s185 + $0x138] sm:$0xff] %v264
                %v266 = vld [vmem:[%s184 + $0xa00] sm:$0xff]
                %267 = vst [vmem:[%s185 + $0x140] sm:$0xff] %v266
                %v268 = vld [vmem:[%s184 + $0xa08] sm:$0xff]
                %269 = vst [vmem:[%s185 + $0x148] sm:$0xff] %v268
                %v270 = vld [vmem:[%s184 + $0xa10] sm:$0xff]
                %271 = vst [vmem:[%s185 + $0x150] sm:$0xff] %v270
                %v272 = vld [vmem:[%s184 + $0xa18] sm:$0xff]
                %273 = vst [vmem:[%s185 + $0x158] sm:$0xff] %v272
                %v274 = vld [vmem:[%s184 + $0xa20] sm:$0xff]
                %275 = vst [vmem:[%s185 + $0x160] sm:$0xff] %v274
                %v276 = vld [vmem:[%s184 + $0xa28] sm:$0xff]
                %277 = vst [vmem:[%s185 + $0x168] sm:$0xff] %v276
                %v278 = vld [vmem:[%s184 + $0xa30] sm:$0xff]
                %279 = vst [vmem:[%s185 + $0x170] sm:$0xff] %v278
                %v280 = vld [vmem:[%s184 + $0xa38] sm:$0xff]
                %281 = vst [vmem:[%s185 + $0x178] sm:$0xff] %v280
                %v282 = vld [vmem:[%s184 + $0xc00] sm:$0xff]
                %283 = vst [vmem:[%s185 + $0x180] sm:$0xff] %v282
                %v284 = vld [vmem:[%s184 + $0xc08] sm:$0xff]
                %285 = vst [vmem:[%s185 + $0x188] sm:$0xff] %v284
                %v286 = vld [vmem:[%s184 + $0xc10] sm:$0xff]
                %287 = vst [vmem:[%s185 + $0x190] sm:$0xff] %v286
                %v288 = vld [vmem:[%s184 + $0xc18] sm:$0xff]
                %289 = vst [vmem:[%s185 + $0x198] sm:$0xff] %v288
                %v290 = vld [vmem:[%s184 + $0xc20] sm:$0xff]
                %291 = vst [vmem:[%s185 + $0x1a0] sm:$0xff] %v290
                %v292 = vld [vmem:[%s184 + $0xc28] sm:$0xff]
                %293 = vst [vmem:[%s185 + $0x1a8] sm:$0xff] %v292
                %v294 = vld [vmem:[%s184 + $0xc30] sm:$0xff]
                %295 = vst [vmem:[%s185 + $0x1b0] sm:$0xff] %v294
                %v296 = vld [vmem:[%s184 + $0xc38] sm:$0xff]
                %297 = vst [vmem:[%s185 + $0x1b8] sm:$0xff] %v296
              $region41: #{autoencoder_forward.7} parent=35 // loop_footer
                %s183 = sadd.s32 1, %s179
              $region42: #{autoencoder_forward.7} parent=35 // loop_footer_branch
                %178 = sbr.rel target = $region38
              $region43: #{autoencoder_forward.7} parent=35 // loop_exit
                _
            $region36: #{autoencoder_forward.7} parent=31 // pred_fallthru
              _
            // Predicated region
            $region44: #{autoencoder_forward.7} parent=31 // pred_check
              _
            $region45: #{autoencoder_forward.7} parent=31 // pred_check_branch
              %299 = sbr.rel target = $region47
            $region46: #{autoencoder_forward.7} parent=31 // pred_region
              _
            $region47: #{autoencoder_forward.7} parent=31 // pred_fallthru
              _
          $region32: #{autoencoder_forward.7} parent=27 // pred_fallthru
            _
          %300 = vnop
        $region28: #{autoencoder_forward.7} parent=23 // pred_fallthru
          _
      $region24: #{autoencoder_forward.7} parent=5 // pred_fallthru
        _
      %p301 = scmp.le.s32.totalorder 1, %s9
      %p302 = scmp.lt.s32.totalorder %s9, 9
      %p303 = pnand %p301, %p302
      %p304 = pneg %p303
      // Predicated region
      $region48: #{autoencoder_forward.7} parent=5 // pred_check
        _
      $region49: #{autoencoder_forward.7} parent=5 // pred_check_branch
        %306 = sbr.rel (%p303) target = $region51
      $region50: #{autoencoder_forward.7} parent=5 // pred_region
        %s307 = ssub.s32 %s9, 1
        %s308 = sand.u32 %s60, 1
        %s309 = sand.u32 %s60, 1
        %s310 = smul.addr %s309, 448
        %s311 = scalar_lea.vmem [#allocation2], %s310
        // Predicated region
        $region52: #{autoencoder_forward.7} parent=50 // pred_check
          %p312 = pneg %p73
        $region53: #{autoencoder_forward.7} parent=50 // pred_check_branch
          %314 = sbr.rel (%p312) target = $region55
        $region54: #{autoencoder_forward.7} parent=50 // pred_region
          _
        $region55: #{autoencoder_forward.7} parent=50 // pred_fallthru
          _
        %s315 = smul.u32 2, %s18
        %p316 = scmp.lt.s32.totalorder %s315, 1
        %s317 = scalar_select %p316, %s315, 1
        %s318 = smul.addr %s317, 8
        %s319 = scalar_lea.vmem %s0, %s318
        %p320 = pneg %p47
        %p321 = pneg %p44
        %s322 = sand.u32 %s60, 1
        %s323 = sand.u32 %s60, 1
        %s324 = smul.addr %s323, 448
        %s325 = scalar_lea.vmem [#allocation2], %s324
        %p326 = pneg %p73
        %p327 = pneg %p70
        %s328 = smul.u32 2, %s18
        %p329 = scmp.lt.s32.totalorder %s328, 1
        %s330 = scalar_select %p329, %s328, 1
        %s331 = smul.addr %s330, 8
        %s332 = scalar_lea.vmem %s2, %s331
        %p333 = pneg %p99
        %p334 = pneg %p96
        %p335 = pneg %p127
        %p336 = pneg %p124
        %s337 = sand.u32 %s114, 1
        %s338 = sand.u32 %s114, 1
        %s339 = smul.addr %s338, 128
        %s340 = scalar_lea.vmem [#allocation3], %s339
        %s341 = smul.u32 2, %s18
        %p342 = scmp.lt.s32.totalorder %s341, 1
        %s343 = scalar_select %p342, %s341, 1
        %s344 = smul.addr %s343, 8
        %s345 = scalar_lea.vmem %s0, %s344
        %s346 = smul.u32 2, %s18
        %s347 = smul.u32 8, %s19
        %s348 = smul.u32 2, %s18
        %p349 = scmp.lt.s32.totalorder %s348, 1
        %s350 = scalar_select %p349, %s348, 1
        %s351 = smul.addr %s350, 8
        %s352 = scalar_lea.vmem %s2, %s351
        %s353 = smul.u32 2, %s18
        %s354 = smul.u32 2, %s18
        %s355 = smul.u32 8, %s19
        %v356 = vld [vmem:[%s345] sm:$0xff]
        %v357 = vld [vmem:[%s345 + $0x8] sm:$0xff]
        %v358 = vld [vmem:[%s311] sm:$0xff]
        %v359 = vld [vmem:[%s311 + $0x8] sm:$0xff]
        %v360 = vld [vmem:[%s311 + $0x10] sm:$0xff]
        %v361 = vld [vmem:[%s311 + $0x18] sm:$0xff]
        %v362 = vld [vmem:[%s311 + $0x20] sm:$0xff]
        %v363 = vld [vmem:[%s311 + $0x28] sm:$0xff]
        %v364 = vld [vmem:[%s311 + $0x30] sm:$0xff]
        %v365 = vld [vmem:[%s311 + $0x38] sm:$0xff]
        %v366 = vld [vmem:[%s311 + $0x40] sm:$0xff]
        %v367 = vld [vmem:[%s311 + $0x48] sm:$0xff]
        %v368 = vld [vmem:[%s311 + $0x50] sm:$0xff]
        %v369 = vld [vmem:[%s311 + $0x58] sm:$0xff]
        %v370 = vld [vmem:[%s311 + $0x60] sm:$0xff]
        %v371 = vld [vmem:[%s311 + $0x68] sm:$0xff]
        %v372 = vld [vmem:[%s311 + $0x70] sm:$0xff]
        %v373 = vld [vmem:[%s311 + $0x78] sm:$0xff]
        %v374 = vld [vmem:[%s311 + $0x80] sm:$0xff]
        %v375 = vld [vmem:[%s311 + $0x88] sm:$0xff]
        %v376 = vld [vmem:[%s311 + $0x90] sm:$0xff]
        %v377 = vld [vmem:[%s311 + $0x98] sm:$0xff]
        %v378 = vld [vmem:[%s311 + $0xa0] sm:$0xff]
        %v379 = vld [vmem:[%s311 + $0xa8] sm:$0xff]
        %v380 = vld [vmem:[%s311 + $0xb0] sm:$0xff]
        %v381 = vld [vmem:[%s311 + $0xb8] sm:$0xff]
        %v382 = vld [vmem:[%s311 + $0xc0] sm:$0xff]
        %v383 = vld [vmem:[%s311 + $0xc8] sm:$0xff]
        %v384 = vld [vmem:[%s311 + $0xd0] sm:$0xff]
        %v385 = vld [vmem:[%s311 + $0xd8] sm:$0xff]
        %v386 = vld [vmem:[%s311 + $0xe0] sm:$0xff]
        %v387 = vld [vmem:[%s311 + $0xe8] sm:$0xff]
        %v388 = vld [vmem:[%s311 + $0xf0] sm:$0xff]
        %v389 = vld [vmem:[%s311 + $0xf8] sm:$0xff]
        %v390 = vld [vmem:[%s311 + $0x100] sm:$0xff]
        %v391 = vld [vmem:[%s311 + $0x108] sm:$0xff]
        %v392 = vld [vmem:[%s311 + $0x110] sm:$0xff]
        %v393 = vld [vmem:[%s311 + $0x118] sm:$0xff]
        %v394 = vld [vmem:[%s311 + $0x120] sm:$0xff]
        %v395 = vld [vmem:[%s311 + $0x128] sm:$0xff]
        %v396 = vld [vmem:[%s311 + $0x130] sm:$0xff]
        %v397 = vld [vmem:[%s311 + $0x138] sm:$0xff]
        %v398 = vld [vmem:[%s311 + $0x140] sm:$0xff]
        %v399 = vld [vmem:[%s311 + $0x148] sm:$0xff]
        %v400 = vld [vmem:[%s311 + $0x150] sm:$0xff]
        %v401 = vld [vmem:[%s311 + $0x158] sm:$0xff]
        %v402 = vld [vmem:[%s311 + $0x160] sm:$0xff]
        %v403 = vld [vmem:[%s311 + $0x168] sm:$0xff]
        %v404 = vld [vmem:[%s311 + $0x170] sm:$0xff]
        %v405 = vld [vmem:[%s311 + $0x178] sm:$0xff]
        %v406 = vld [vmem:[%s311 + $0x180] sm:$0x3f]
        %v407 = vld [vmem:[%s311 + $0x188] sm:$0x3f]
        %v408 = vld [vmem:[%s311 + $0x190] sm:$0x3f]
        %v409 = vld [vmem:[%s311 + $0x198] sm:$0x3f]
        %v410 = vld [vmem:[%s311 + $0x1a0] sm:$0x3f]
        %v411 = vld [vmem:[%s311 + $0x1a8] sm:$0x3f]
        %v412 = vld [vmem:[%s311 + $0x1b0] sm:$0x3f]
        %v413 = vld [vmem:[%s311 + $0x1b8] sm:$0x3f]
        %v414 = vld [vmem:[%s352] sm:$0xff]
        %v415 = vld [vmem:[%s352 + $0x8] sm:$0xff]
        %417 = vset.pattern.permute.xlu0 0
        %418 = vperm.xlu0 %417, %v414
        %v419 = vpop.permute.xlu0 %418
        %422 = vset.pattern.permute.xlu0 0
        %423 = vperm.xlu0 %422, %v415
        %v424 = vpop.permute.xlu0 %423
        %vm426 = vcmask 441344
        %v428 = vsel %vm426, %v356, 0
        %v431 = vsel %vm426, %v357, 0
        %vm433 = vcmask 1045504
        %v435 = vsel %vm433, %v406, 0
        %v438 = vsel %vm433, %v407, 0
        %v441 = vsel %vm433, %v408, 0
        %v444 = vsel %vm433, %v409, 0
        %v447 = vsel %vm433, %v410, 0
        %v450 = vsel %vm433, %v411, 0
        %v453 = vsel %vm433, %v412, 0
        %v456 = vsel %vm433, %v413, 0
        %458 = vmatprep.subr.mxu0 %v359
        %459 = vmatpush1.msra.mxu0 %v358
        %460 = vmatprep.subr.mxu0 %v367
        %461 = vmatpush1.msra.mxu0 %v366
        %462 = vmatprep.subr.mxu0 %v375
        %463 = vmatpush1.msra.mxu0 %v374
        %464 = vmatprep.subr.mxu0 %v383
        %465 = vmatpush1.msra.mxu0 %v382
        %466 = vmatprep.subr.mxu0 %v391
        %467 = vmatpush1.msra.mxu0 %v390
        %468 = vmatprep.subr.mxu0 %v399
        %469 = vmatpush1.msra.mxu0 %v398
        %470 = vmatprep.subr.mxu0 %v438
        %471 = vmatpush1.msra.mxu0 %v435
        %472 = vmatprep.subr.mxu0 0.0
        %473 = vmatpush1.msra.mxu0 0.0
        %474 = vmatprep.subr.mxu0 0.0
        %475 = vmatpush1.msra.mxu0 0.0
        %476 = vmatprep.subr.mxu0 0.0
        %477 = vmatpush1.msra.mxu0 0.0
        %478 = vmatprep.subr.mxu0 0.0
        %479 = vmatpush1.msra.mxu0 0.0
        %480 = vmatprep.subr.mxu0 0.0
        %481 = vmatpush1.msra.mxu0 0.0
        %482 = vmatprep.subr.mxu0 0.0
        %483 = vmatpush1.msra.mxu0 0.0
        %484 = vmatprep.subr.mxu0 0.0
        %485 = vmatpush1.msra.mxu0 0.0
        %486 = vmatprep.subr.mxu0 0.0
        %487 = vmatpush1.msra.mxu0 0.0
        %488 = vmatprep.subr.mxu0 0.0
        %489 = vmatpush1.msra.mxu0 0.0
        %490 = vmatprep.subr.mxu0 0.0
        %491 = vmatpush1.msra.mxu0 0.0
        %492 = vmatprep.subr.mxu0 0.0
        %493 = vmatpush1.msra.mxu0 0.0
        %494 = vmatprep.subr.mxu0 0.0
        %495 = vmatpush1.msra.mxu0 0.0
        %496 = vmatprep.subr.mxu0 0.0
        %497 = vmatpush1.msra.mxu0 0.0
        %498 = vmatprep.subr.mxu0 0.0
        %499 = vmatpush1.msra.mxu0 0.0
        %500 = vmatprep.subr.mxu0 0.0
        %501 = vmatpush1.msra.mxu0 0.0
        %502 = vmatprep.subr.mxu0 0.0
        %503 = vmatpush1.msra.mxu0 0.0
        %504 = vmatprep.subr.mxu0 0.0
        %505 = vmatpush1.msra.mxu0 0.0
        %506 = vmatprep.subr.mxu0 0.0
        %507 = vmatpush1.msra.mxu0 0.0
        %508 = vmatprep.subr.mxu0 0.0
        %509 = vmatpush1.msra.mxu0 0.0
        %510 = vmatprep.subr.mxu0 0.0
        %511 = vmatpush1.msra.mxu0 0.0
        %512 = vmatprep.subr.mxu0 0.0
        %513 = vmatpush1.msra.mxu0 0.0
        %514 = vmatprep.subr.mxu0 0.0
        %515 = vmatpush1.msra.mxu0 0.0
        %516 = vmatprep.subr.mxu0 0.0
        %517 = vmatpush1.msra.mxu0 0.0
        %518 = vmatprep.subr.mxu0 0.0
        %519 = vmatpush1.msra.mxu0 0.0
        %520 = vmatprep.subr.mxu0 0.0
        %521 = vmatpush1.msra.mxu0 0.0
        %522 = vmatprep.mubr.f32.mxu0 0.0
        %523 = vmatmul.mubr.f32.gmra.mrb[0].mxu0 %v428
        %v524 = vpop.f32.mrb[0].mxu0
        %v525 = vadd.f32 %v419, %v524
        %v526 = vpop.f32.mrb[0].mxu0
        %v527 = vadd.f32 %v419, %v526
        %528 = vmatprep.mubr.f32.mxu0 0.0
        %529 = vmatmul.mubr.f32.gmra.mrb[0].mxu0 %v431
        %v530 = vpop.f32.mrb[0].mxu0
        %v531 = vadd.f32 %v424, %v530
        %v532 = vpop.f32.mrb[0].mxu0
        %v533 = vadd.f32 %v424, %v532
        %534 = vdwg.mxu0
        %535 = vmatprep.subr.mxu0 %v361
        %536 = vmatpush1.msra.mxu0 %v360
        %537 = vmatprep.subr.mxu0 %v369
        %538 = vmatpush1.msra.mxu0 %v368
        %539 = vmatprep.subr.mxu0 %v377
        %540 = vmatpush1.msra.mxu0 %v376
        %541 = vmatprep.subr.mxu0 %v385
        %542 = vmatpush1.msra.mxu0 %v384
        %543 = vmatprep.subr.mxu0 %v393
        %544 = vmatpush1.msra.mxu0 %v392
        %545 = vmatprep.subr.mxu0 %v401
        %546 = vmatpush1.msra.mxu0 %v400
        %547 = vmatprep.subr.mxu0 %v444
        %548 = vmatpush1.msra.mxu0 %v441
        %549 = vmatprep.subr.mxu0 0.0
        %550 = vmatpush1.msra.mxu0 0.0
        %551 = vmatprep.subr.mxu0 0.0
        %552 = vmatpush1.msra.mxu0 0.0
        %553 = vmatprep.subr.mxu0 0.0
        %554 = vmatpush1.msra.mxu0 0.0
        %555 = vmatprep.subr.mxu0 0.0
        %556 = vmatpush1.msra.mxu0 0.0
        %557 = vmatprep.subr.mxu0 0.0
        %558 = vmatpush1.msra.mxu0 0.0
        %559 = vmatprep.subr.mxu0 0.0
        %560 = vmatpush1.msra.mxu0 0.0
        %561 = vmatprep.subr.mxu0 0.0
        %562 = vmatpush1.msra.mxu0 0.0
        %563 = vmatprep.subr.mxu0 0.0
        %564 = vmatpush1.msra.mxu0 0.0
        %565 = vmatprep.subr.mxu0 0.0
        %566 = vmatpush1.msra.mxu0 0.0
        %567 = vmatprep.subr.mxu0 0.0
        %568 = vmatpush1.msra.mxu0 0.0
        %569 = vmatprep.subr.mxu0 0.0
        %570 = vmatpush1.msra.mxu0 0.0
        %571 = vmatprep.subr.mxu0 0.0
        %572 = vmatpush1.msra.mxu0 0.0
        %573 = vmatprep.subr.mxu0 0.0
        %574 = vmatpush1.msra.mxu0 0.0
        %575 = vmatprep.subr.mxu0 0.0
        %576 = vmatpush1.msra.mxu0 0.0
        %577 = vmatprep.subr.mxu0 0.0
        %578 = vmatpush1.msra.mxu0 0.0
        %579 = vmatprep.subr.mxu0 0.0
        %580 = vmatpush1.msra.mxu0 0.0
        %581 = vmatprep.subr.mxu0 0.0
        %582 = vmatpush1.msra.mxu0 0.0
        %583 = vmatprep.subr.mxu0 0.0
        %584 = vmatpush1.msra.mxu0 0.0
        %585 = vmatprep.subr.mxu0 0.0
        %586 = vmatpush1.msra.mxu0 0.0
        %587 = vmatprep.subr.mxu0 0.0
        %588 = vmatpush1.msra.mxu0 0.0
        %589 = vmatprep.subr.mxu0 0.0
        %590 = vmatpush1.msra.mxu0 0.0
        %591 = vmatprep.subr.mxu0 0.0
        %592 = vmatpush1.msra.mxu0 0.0
        %593 = vmatprep.subr.mxu0 0.0
        %594 = vmatpush1.msra.mxu0 0.0
        %595 = vmatprep.subr.mxu0 0.0
        %596 = vmatpush1.msra.mxu0 0.0
        %597 = vmatprep.subr.mxu0 0.0
        %598 = vmatpush1.msra.mxu0 0.0
        %599 = vmatprep.mubr.f32.mxu0 0.0
        %600 = vmatmul.mubr.f32.gmra.mrb[0].mxu0 %v428
        %v601 = vpop.f32.mrb[0].mxu0
        %v602 = vadd.f32 %v419, %v601
        %v603 = vpop.f32.mrb[0].mxu0
        %v604 = vadd.f32 %v419, %v603
        %605 = vmatprep.mubr.f32.mxu0 0.0
        %606 = vmatmul.mubr.f32.gmra.mrb[0].mxu0 %v431
        %v607 = vpop.f32.mrb[0].mxu0
        %v608 = vadd.f32 %v424, %v607
        %v609 = vpop.f32.mrb[0].mxu0
        %v610 = vadd.f32 %v424, %v609
        %611 = vdwg.mxu0
        %612 = vmatprep.subr.mxu0 %v363
        %613 = vmatpush1.msra.mxu0 %v362
        %614 = vmatprep.subr.mxu0 %v371
        %615 = vmatpush1.msra.mxu0 %v370
        %616 = vmatprep.subr.mxu0 %v379
        %617 = vmatpush1.msra.mxu0 %v378
        %618 = vmatprep.subr.mxu0 %v387
        %619 = vmatpush1.msra.mxu0 %v386
        %620 = vmatprep.subr.mxu0 %v395
        %621 = vmatpush1.msra.mxu0 %v394
        %622 = vmatprep.subr.mxu0 %v403
        %623 = vmatpush1.msra.mxu0 %v402
        %624 = vmatprep.subr.mxu0 %v450
        %625 = vmatpush1.msra.mxu0 %v447
        %626 = vmatprep.subr.mxu0 0.0
        %627 = vmatpush1.msra.mxu0 0.0
        %628 = vmatprep.subr.mxu0 0.0
        %629 = vmatpush1.msra.mxu0 0.0
        %630 = vmatprep.subr.mxu0 0.0
        %631 = vmatpush1.msra.mxu0 0.0
        %632 = vmatprep.subr.mxu0 0.0
        %633 = vmatpush1.msra.mxu0 0.0
        %634 = vmatprep.subr.mxu0 0.0
        %635 = vmatpush1.msra.mxu0 0.0
        %636 = vmatprep.subr.mxu0 0.0
        %637 = vmatpush1.msra.mxu0 0.0
        %638 = vmatprep.subr.mxu0 0.0
        %639 = vmatpush1.msra.mxu0 0.0
        %640 = vmatprep.subr.mxu0 0.0
        %641 = vmatpush1.msra.mxu0 0.0
        %642 = vmatprep.subr.mxu0 0.0
        %643 = vmatpush1.msra.mxu0 0.0
        %644 = vmatprep.subr.mxu0 0.0
        %645 = vmatpush1.msra.mxu0 0.0
        %646 = vmatprep.subr.mxu0 0.0
        %647 = vmatpush1.msra.mxu0 0.0
        %648 = vmatprep.subr.mxu0 0.0
        %649 = vmatpush1.msra.mxu0 0.0
        %650 = vmatprep.subr.mxu0 0.0
        %651 = vmatpush1.msra.mxu0 0.0
        %652 = vmatprep.subr.mxu0 0.0
        %653 = vmatpush1.msra.mxu0 0.0
        %654 = vmatprep.subr.mxu0 0.0
        %655 = vmatpush1.msra.mxu0 0.0
        %656 = vmatprep.subr.mxu0 0.0
        %657 = vmatpush1.msra.mxu0 0.0
        %658 = vmatprep.subr.mxu0 0.0
        %659 = vmatpush1.msra.mxu0 0.0
        %660 = vmatprep.subr.mxu0 0.0
        %661 = vmatpush1.msra.mxu0 0.0
        %662 = vmatprep.subr.mxu0 0.0
        %663 = vmatpush1.msra.mxu0 0.0
        %664 = vmatprep.subr.mxu0 0.0
        %665 = vmatpush1.msra.mxu0 0.0
        %666 = vmatprep.subr.mxu0 0.0
        %667 = vmatpush1.msra.mxu0 0.0
        %668 = vmatprep.subr.mxu0 0.0
        %669 = vmatpush1.msra.mxu0 0.0
        %670 = vmatprep.subr.mxu0 0.0
        %671 = vmatpush1.msra.mxu0 0.0
        %672 = vmatprep.subr.mxu0 0.0
        %673 = vmatpush1.msra.mxu0 0.0
        %674 = vmatprep.subr.mxu0 0.0
        %675 = vmatpush1.msra.mxu0 0.0
        %676 = vmatprep.mubr.f32.mxu0 0.0
        %677 = vmatmul.mubr.f32.gmra.mrb[0].mxu0 %v428
        %v678 = vpop.f32.mrb[0].mxu0
        %v679 = vadd.f32 %v419, %v678
        %v680 = vpop.f32.mrb[0].mxu0
        %v681 = vadd.f32 %v419, %v680
        %682 = vmatprep.mubr.f32.mxu0 0.0
        %683 = vmatmul.mubr.f32.gmra.mrb[0].mxu0 %v431
        %v684 = vpop.f32.mrb[0].mxu0
        %v685 = vadd.f32 %v424, %v684
        %v686 = vpop.f32.mrb[0].mxu0
        %v687 = vadd.f32 %v424, %v686
        %688 = vdwg.mxu0
        %689 = vmatprep.subr.mxu0 %v365
        %690 = vmatpush1.msra.mxu0 %v364
        %691 = vmatprep.subr.mxu0 %v373
        %692 = vmatpush1.msra.mxu0 %v372
        %693 = vmatprep.subr.mxu0 %v381
        %694 = vmatpush1.msra.mxu0 %v380
        %695 = vmatprep.subr.mxu0 %v389
        %696 = vmatpush1.msra.mxu0 %v388
        %697 = vmatprep.subr.mxu0 %v397
        %698 = vmatpush1.msra.mxu0 %v396
        %699 = vmatprep.subr.mxu0 %v405
        %700 = vmatpush1.msra.mxu0 %v404
        %701 = vmatprep.subr.mxu0 %v456
        %702 = vmatpush1.msra.mxu0 %v453
        %703 = vmatprep.subr.mxu0 0.0
        %704 = vmatpush1.msra.mxu0 0.0
        %705 = vmatprep.subr.mxu0 0.0
        %706 = vmatpush1.msra.mxu0 0.0
        %707 = vmatprep.subr.mxu0 0.0
        %708 = vmatpush1.msra.mxu0 0.0
        %709 = vmatprep.subr.mxu0 0.0
        %710 = vmatpush1.msra.mxu0 0.0
        %711 = vmatprep.subr.mxu0 0.0
        %712 = vmatpush1.msra.mxu0 0.0
        %713 = vmatprep.subr.mxu0 0.0
        %714 = vmatpush1.msra.mxu0 0.0
        %715 = vmatprep.subr.mxu0 0.0
        %716 = vmatpush1.msra.mxu0 0.0
        %717 = vmatprep.subr.mxu0 0.0
        %718 = vmatpush1.msra.mxu0 0.0
        %719 = vmatprep.subr.mxu0 0.0
        %720 = vmatpush1.msra.mxu0 0.0
        %721 = vmatprep.subr.mxu0 0.0
        %722 = vmatpush1.msra.mxu0 0.0
        %723 = vmatprep.subr.mxu0 0.0
        %724 = vmatpush1.msra.mxu0 0.0
        %725 = vmatprep.subr.mxu0 0.0
        %726 = vmatpush1.msra.mxu0 0.0
        %727 = vmatprep.subr.mxu0 0.0
        %728 = vmatpush1.msra.mxu0 0.0
        %729 = vmatprep.subr.mxu0 0.0
        %730 = vmatpush1.msra.mxu0 0.0
        %731 = vmatprep.subr.mxu0 0.0
        %732 = vmatpush1.msra.mxu0 0.0
        %733 = vmatprep.subr.mxu0 0.0
        %734 = vmatpush1.msra.mxu0 0.0
        %735 = vmatprep.subr.mxu0 0.0
        %736 = vmatpush1.msra.mxu0 0.0
        %737 = vmatprep.subr.mxu0 0.0
        %738 = vmatpush1.msra.mxu0 0.0
        %739 = vmatprep.subr.mxu0 0.0
        %740 = vmatpush1.msra.mxu0 0.0
        %741 = vmatprep.subr.mxu0 0.0
        %742 = vmatpush1.msra.mxu0 0.0
        %743 = vmatprep.subr.mxu0 0.0
        %744 = vmatpush1.msra.mxu0 0.0
        %745 = vmatprep.subr.mxu0 0.0
        %746 = vmatpush1.msra.mxu0 0.0
        %747 = vmatprep.subr.mxu0 0.0
        %748 = vmatpush1.msra.mxu0 0.0
        %749 = vmatprep.subr.mxu0 0.0
        %750 = vmatpush1.msra.mxu0 0.0
        %751 = vmatprep.subr.mxu0 0.0
        %752 = vmatpush1.msra.mxu0 0.0
        %753 = vmatprep.mubr.f32.mxu0 0.0
        %754 = vmatmul.mubr.f32.gmra.mrb[0].mxu0 %v428
        %v755 = vpop.f32.mrb[0].mxu0
        %v756 = vadd.f32 %v419, %v755
        %v757 = vpop.f32.mrb[0].mxu0
        %v758 = vadd.f32 %v419, %v757
        %759 = vmatprep.mubr.f32.mxu0 0.0
        %760 = vmatmul.mubr.f32.gmra.mrb[0].mxu0 %v431
        %v761 = vpop.f32.mrb[0].mxu0
        %v762 = vadd.f32 %v424, %v761
        %v763 = vpop.f32.mrb[0].mxu0
        %v764 = vadd.f32 %v424, %v763
        %765 = vdwg.mxu0
        %v766 = vmax.f32 %v525, 0.0
        %v767 = vmax.f32 %v527, 0.0
        %v768 = vmax.f32 %v602, 0.0
        %v769 = vmax.f32 %v604, 0.0
        %v770 = vmax.f32 %v679, 0.0
        %v771 = vmax.f32 %v681, 0.0
        %v772 = vmax.f32 %v756, 0.0
        %v773 = vmax.f32 %v758, 0.0
        %v774 = vmax.f32 %v531, 0.0
        %v775 = vmax.f32 %v533, 0.0
        %v776 = vmax.f32 %v608, 0.0
        %v777 = vmax.f32 %v610, 0.0
        %v778 = vmax.f32 %v685, 0.0
        %v779 = vmax.f32 %v687, 0.0
        %v780 = vmax.f32 %v762, 0.0
        %v781 = vmax.f32 %v764, 0.0
        %782 = vst [vmem:[%s340] sm:$0xff] %v766
        %783 = vst [vmem:[%s340 + $0x8] sm:$0xff] %v767
        %784 = vst [vmem:[%s340 + $0x10] sm:$0xff] %v768
        %785 = vst [vmem:[%s340 + $0x18] sm:$0xff] %v769
        %786 = vst [vmem:[%s340 + $0x20] sm:$0xff] %v770
        %787 = vst [vmem:[%s340 + $0x28] sm:$0xff] %v771
        %788 = vst [vmem:[%s340 + $0x30] sm:$0xff] %v772
        %789 = vst [vmem:[%s340 + $0x38] sm:$0xff] %v773
        %790 = vst [vmem:[%s340 + $0x40] sm:$0xff] %v774
        %791 = vst [vmem:[%s340 + $0x48] sm:$0xff] %v775
        %792 = vst [vmem:[%s340 + $0x50] sm:$0xff] %v776
        %793 = vst [vmem:[%s340 + $0x58] sm:$0xff] %v777
        %794 = vst [vmem:[%s340 + $0x60] sm:$0xff] %v778
        %795 = vst [vmem:[%s340 + $0x68] sm:$0xff] %v779
        %796 = vst [vmem:[%s340 + $0x70] sm:$0xff] %v780
        %797 = vst [vmem:[%s340 + $0x78] sm:$0xff] %v781
        %s798 = sand.u32 %s114, 1
        %s799 = sand.u32 %s114, 1
        %s800 = smul.addr %s799, 128
        %s801 = scalar_lea.vmem [#allocation3], %s800
        // Predicated region
        $region56: #{autoencoder_forward.7} parent=50 // pred_check
          %p802 = pneg %p124
        $region57: #{autoencoder_forward.7} parent=50 // pred_check_branch
          %804 = sbr.rel (%p802) target = $region59
        $region58: #{autoencoder_forward.7} parent=50 // pred_region
          %s805 = smul.u32 2, %s18
          %s806 = smul.u32 8, %s19
          %s807 = smul.addr %s805, 64
          %s808 = sadd.s32 %s806, %s807
          %s809 = smul.addr %s808, 8
          %s810 = scalar_lea.vmem %s3, %s809
          // Predicated region
          $region60: #{autoencoder_forward.7} parent=58 // pred_check
            _
          $region61: #{autoencoder_forward.7} parent=58 // pred_check_branch
            %812 = sbr.rel (0) target = $region63
          $region62: #{autoencoder_forward.7} parent=58 // pred_region
            // Predicated region
            $region64: #{autoencoder_forward.7} parent=62 // pred_check
              _
            $region65: #{autoencoder_forward.7} parent=62 // pred_check_branch
              %814 = sbr.rel (0) target = $region67
            $region66: #{autoencoder_forward.7} parent=62 // pred_region
              loop: start=0, step=1, limit=1
              $region68: #{autoencoder_forward.7} parent=66 // loop_pre_header
                _
              $region69: #{autoencoder_forward.7} parent=66 // loop_header
                %s816 = sphi 0, %s820
                %p817 = scmp.ge.s32.totalorder %s816, 1
                %s821 = sphi %s801, %s801
                %s822 = sphi %s810, %s810
              $region70: #{autoencoder_forward.7} parent=66 // loop_header_branch
                %819 = sbr.rel (%p817) target = $region74
              $region71: #{autoencoder_forward.7} parent=66 // loop_body
                %v823 = vld [vmem:[%s821] sm:$0xff]
                %824 = vst [vmem:[%s822] sm:$0xff] %v823
                %v825 = vld [vmem:[%s821 + $0x8] sm:$0xff]
                %826 = vst [vmem:[%s822 + $0x8] sm:$0xff] %v825
                %v827 = vld [vmem:[%s821 + $0x10] sm:$0xff]
                %828 = vst [vmem:[%s822 + $0x10] sm:$0xff] %v827
                %v829 = vld [vmem:[%s821 + $0x18] sm:$0xff]
                %830 = vst [vmem:[%s822 + $0x18] sm:$0xff] %v829
                %v831 = vld [vmem:[%s821 + $0x20] sm:$0xff]
                %832 = vst [vmem:[%s822 + $0x20] sm:$0xff] %v831
                %v833 = vld [vmem:[%s821 + $0x28] sm:$0xff]
                %834 = vst [vmem:[%s822 + $0x28] sm:$0xff] %v833
                %v835 = vld [vmem:[%s821 + $0x30] sm:$0xff]
                %836 = vst [vmem:[%s822 + $0x30] sm:$0xff] %v835
                %v837 = vld [vmem:[%s821 + $0x38] sm:$0xff]
                %838 = vst [vmem:[%s822 + $0x38] sm:$0xff] %v837
                %v839 = vld [vmem:[%s821 + $0x40] sm:$0xff]
                %840 = vst [vmem:[%s822 + $0x200] sm:$0xff] %v839
                %v841 = vld [vmem:[%s821 + $0x48] sm:$0xff]
                %842 = vst [vmem:[%s822 + $0x208] sm:$0xff] %v841
                %v843 = vld [vmem:[%s821 + $0x50] sm:$0xff]
                %844 = vst [vmem:[%s822 + $0x210] sm:$0xff] %v843
                %v845 = vld [vmem:[%s821 + $0x58] sm:$0xff]
                %846 = vst [vmem:[%s822 + $0x218] sm:$0xff] %v845
                %v847 = vld [vmem:[%s821 + $0x60] sm:$0xff]
                %848 = vst [vmem:[%s822 + $0x220] sm:$0xff] %v847
                %v849 = vld [vmem:[%s821 + $0x68] sm:$0xff]
                %850 = vst [vmem:[%s822 + $0x228] sm:$0xff] %v849
                %v851 = vld [vmem:[%s821 + $0x70] sm:$0xff]
                %852 = vst [vmem:[%s822 + $0x230] sm:$0xff] %v851
                %v853 = vld [vmem:[%s821 + $0x78] sm:$0xff]
                %854 = vst [vmem:[%s822 + $0x238] sm:$0xff] %v853
              $region72: #{autoencoder_forward.7} parent=66 // loop_footer
                %s820 = sadd.s32 1, %s816
              $region73: #{autoencoder_forward.7} parent=66 // loop_footer_branch
                %815 = sbr.rel target = $region69
              $region74: #{autoencoder_forward.7} parent=66 // loop_exit
                _
            $region67: #{autoencoder_forward.7} parent=62 // pred_fallthru
              _
            // Predicated region
            $region75: #{autoencoder_forward.7} parent=62 // pred_check
              _
            $region76: #{autoencoder_forward.7} parent=62 // pred_check_branch
              %856 = sbr.rel target = $region78
            $region77: #{autoencoder_forward.7} parent=62 // pred_region
              _
            $region78: #{autoencoder_forward.7} parent=62 // pred_fallthru
              _
          $region63: #{autoencoder_forward.7} parent=58 // pred_fallthru
            _
          %857 = vnop
        $region59: #{autoencoder_forward.7} parent=50 // pred_fallthru
          _
      $region51: #{autoencoder_forward.7} parent=5 // pred_fallthru
        _
      %p858 = scmp.le.s32.totalorder 2, %s9
      // Predicated region
      $region79: #{autoencoder_forward.7} parent=5 // pred_check
        %p859 = pneg %p858
      $region80: #{autoencoder_forward.7} parent=5 // pred_check_branch
        %861 = sbr.rel (%p859) target = $region82
      $region81: #{autoencoder_forward.7} parent=5 // pred_region
        %s862 = ssub.s32 %s9, 2
        // Predicated region
        $region83: #{autoencoder_forward.7} parent=81 // pred_check
          %p863 = pneg %p130
        $region84: #{autoencoder_forward.7} parent=81 // pred_check_branch
          %865 = sbr.rel (%p863) target = $region86
        $region85: #{autoencoder_forward.7} parent=81 // pred_region
          %s866 = sand.u32 %s115, 1
          %s867 = sand.u32 %s115, 1
          %s868 = smul.addr %s867, 128
          %s869 = scalar_lea.vmem [#allocation3], %s868
        $region86: #{autoencoder_forward.7} parent=81 // pred_fallthru
          _
      $region82: #{autoencoder_forward.7} parent=5 // pred_fallthru
        _
    $region6: #{autoencoder_forward.7} parent=1 // loop_footer
      %s13 = sadd.s32 1, %s9
    $region7: #{autoencoder_forward.7} parent=1 // loop_footer_branch
      %8 = sbr.rel target = $region3
    $region8: #{autoencoder_forward.7} parent=1 // loop_exit
      _

// kernel: autoencoder_forward.8
$region0: #{autoencoder_forward.8}
  #allocation0 [shape = 'u32[]', space=smem, size = 0x4, offset = 0x4, fixed_abs, tag = 'smem constant byte address 0x4 - core index']
  #allocation1 [shape = 'u32[144,128]{1,0:T(1,128)}', space=vmem, size = 0x12000, scoped, tag = 'internal scratch']
  #allocation2 [shape = 'f32[8,128]{1,0:T(8,128)}', space=vmem, size = 0x1000, scoped, tag = 'scratch operand']
  %s0 = inlined_call_operand.vmem [shape: f32[8,57600], index: 0, kind: input, shape index: {}]
  %s1 = inlined_call_operand.vmem [shape: bf16[57600,128], index: 1, kind: input, shape index: {}]
  %s2 = inlined_call_operand.vmem [shape: f32[2,8,128], index: 2, kind: output, shape index: {}]
  %s3 = sld [smem:[#allocation0]]
  $region49: #{autoencoder_forward.8} parent=0
    _
  %s5 = ssub.s32 1, %s3
  %s6 = scalar_select 0, %s5, %s3
  loop: start=0, step=1, limit=20
  $region2: #{autoencoder_forward.8} parent=0 // loop_pre_header
    _
  $region3: #{autoencoder_forward.8} parent=0 // loop_header
    %s8 = sphi 0, %s12
    %p9 = scmp.ge.s32.totalorder %s8, 20
    %s15 = sphi 0, %s27
    %s16 = sphi 0, %s23
    %s17 = sphi 0, %s15
    %s18 = sphi 0, %s16
    %s19 = sphi 0, %s17
    %s20 = sphi 0, %s18
    %s34 = sphi 0, %s36
    %s37 = sphi 0, %s34
    %s38 = sphi 0, %s37
    %s54 = sphi 0, %s38
    %s64 = sphi 0, %s66
    %s67 = sphi 0, %s64
    %s68 = sphi 0, %s67
    %s84 = sphi 0, %s68
    %s90 = sphi 0, %s92
    %s93 = sphi 0, %s90
    %s94 = sphi 0, %s93
    %s110 = sphi 0, %s94
  $region4: #{autoencoder_forward.8} parent=0 // loop_header_branch
    %11 = sbr.rel (%p9) target = $region8
  $region5: #{autoencoder_forward.8} parent=0 // loop_body
    %s13 = ssub.s32 %s8, 1
    %s14 = ssub.s32 %s8, 2
    %s21 = sadd.s32 1, %s16
    %p22 = scmp.ge.s32.totalorder %s21, 9
    %s23 = scalar_select %p22, 0, %s21
    %s24 = sadd.s32 1, %s15
    %s25 = scalar_select %p22, %s24, %s15
    %p26 = scmp.ge.s32.totalorder %s25, 2
    %s27 = scalar_select %p26, 0, %s25
    %s28 = smul.u32 %s15, 9
    %s29 = sadd.s32 %s28, %s16
    %s30 = smul.u32 %s27, 9
    %s31 = sadd.s32 %s30, %s23
    %s32 = ssub.s32 %s29, %s31
    %p33 = scmp.eq.s32.totalorder %s32, 0
    %s35 = sadd.s32 %s34, 1
    %s36 = scalar_select %p33, %s34, %s35
    %p39 = pneg %p33
    %p40 = scmp.eq.s32.totalorder %s8, 17
    %p41 = por %p39, %p40
    %p42 = scmp.ne.s32.totalorder %s34, %s37
    %p43 = scmp.eq.s32.totalorder %s8, 0
    %p44 = por %p42, %p43
    %p45 = scmp.ne.s32.totalorder %s34, %s37
    %p46 = scmp.eq.s32.totalorder %s13, 17
    %p47 = por %p45, %p46
    %p48 = scmp.ne.s32.totalorder %s37, %s38
    %p49 = scmp.eq.s32.totalorder %s13, 0
    %p50 = por %p48, %p49
    %p51 = scmp.ne.s32.totalorder %s37, %s38
    %p52 = scmp.eq.s32.totalorder %s14, 17
    %p53 = por %p51, %p52
    %p55 = scmp.ne.s32.totalorder %s38, %s54
    %p56 = scmp.eq.s32.totalorder %s14, 0
    %p57 = por %p55, %p56
    %s58 = smul.u32 %s15, 9
    %s59 = sadd.s32 %s58, %s16
    %s60 = smul.u32 %s27, 9
    %s61 = sadd.s32 %s60, %s23
    %s62 = ssub.s32 %s59, %s61
    %p63 = scmp.eq.s32.totalorder %s62, 0
    %s65 = sadd.s32 %s64, 1
    %s66 = scalar_select %p63, %s64, %s65
    %p69 = pneg %p63
    %p70 = scmp.eq.s32.totalorder %s8, 17
    %p71 = por %p69, %p70
    %p72 = scmp.ne.s32.totalorder %s64, %s67
    %p73 = scmp.eq.s32.totalorder %s8, 0
    %p74 = por %p72, %p73
    %p75 = scmp.ne.s32.totalorder %s64, %s67
    %p76 = scmp.eq.s32.totalorder %s13, 17
    %p77 = por %p75, %p76
    %p78 = scmp.ne.s32.totalorder %s67, %s68
    %p79 = scmp.eq.s32.totalorder %s13, 0
    %p80 = por %p78, %p79
    %p81 = scmp.ne.s32.totalorder %s67, %s68
    %p82 = scmp.eq.s32.totalorder %s14, 17
    %p83 = por %p81, %p82
    %p85 = scmp.ne.s32.totalorder %s68, %s84
    %p86 = scmp.eq.s32.totalorder %s14, 0
    %p87 = por %p85, %p86
    %s88 = ssub.s32 %s15, %s27
    %p89 = scmp.eq.s32.totalorder %s88, 0
    %s91 = sadd.s32 %s90, 1
    %s92 = scalar_select %p89, %s90, %s91
    %p95 = pneg %p89
    %p96 = scmp.eq.s32.totalorder %s8, 17
    %p97 = por %p95, %p96
    %p98 = scmp.ne.s32.totalorder %s90, %s93
    %p99 = scmp.eq.s32.totalorder %s8, 0
    %p100 = por %p98, %p99
    %p101 = scmp.ne.s32.totalorder %s90, %s93
    %p102 = scmp.eq.s32.totalorder %s13, 17
    %p103 = por %p101, %p102
    %p104 = scmp.ne.s32.totalorder %s93, %s94
    %p105 = scmp.eq.s32.totalorder %s13, 0
    %p106 = por %p104, %p105
    %p107 = scmp.ne.s32.totalorder %s93, %s94
    %p108 = scmp.eq.s32.totalorder %s14, 17
    %p109 = por %p107, %p108
    %p111 = scmp.ne.s32.totalorder %s94, %s110
    %p112 = scmp.eq.s32.totalorder %s14, 0
    %p113 = por %p111, %p112
    %p114 = scmp.le.s32.totalorder 1, %s8
    %p115 = scmp.lt.s32.totalorder %s8, 19
    %p116 = pnand %p114, %p115
    %p117 = pneg %p116
    // Predicated region
    $region9: #{autoencoder_forward.8} parent=5 // pred_check
      _
    $region10: #{autoencoder_forward.8} parent=5 // pred_check_branch
      %119 = sbr.rel (%p116) target = $region12
    $region11: #{autoencoder_forward.8} parent=5 // pred_region
      %s120 = ssub.s32 %s8, 1
    $region12: #{autoencoder_forward.8} parent=5 // pred_fallthru
      _
    %p121 = scmp.lt.s32.totalorder %s8, 18
    // Predicated region
    $region13: #{autoencoder_forward.8} parent=5 // pred_check
      %p122 = pneg %p121
    $region14: #{autoencoder_forward.8} parent=5 // pred_check_branch
      %124 = sbr.rel (%p122) target = $region16
    $region15: #{autoencoder_forward.8} parent=5 // pred_region
      // Predicated region
      $region17: #{autoencoder_forward.8} parent=15 // pred_check
        %p125 = pneg %p44
      $region18: #{autoencoder_forward.8} parent=15 // pred_check_branch
        %127 = sbr.rel (%p125) target = $region20
      $region19: #{autoencoder_forward.8} parent=15 // pred_region
        %s128 = smul.u32 %s15, 9
        %s129 = sadd.s32 %s128, %s16
        %s130 = smul.u32 25, %s129
        %p131 = scmp.lt.s32.totalorder %s130, 449
        %s132 = scalar_select %p131, %s130, 449
        %s133 = smul.addr %s132, 8
        %s134 = scalar_lea.vmem %s0, %s133
        %s135 = smul.u32 %s15, 9
        %s136 = sadd.s32 %s135, %s16
        %s137 = smul.u32 25, %s136
      $region20: #{autoencoder_forward.8} parent=15 // pred_fallthru
        _
      // Predicated region
      $region21: #{autoencoder_forward.8} parent=15 // pred_check
        %p138 = pneg %p74
      $region22: #{autoencoder_forward.8} parent=15 // pred_check_branch
        %140 = sbr.rel (%p138) target = $region24
      $region23: #{autoencoder_forward.8} parent=15 // pred_region
        %s141 = smul.u32 %s15, 9
        %s142 = sadd.s32 %s141, %s16
        %s143 = smul.u32 400, %s142
        %p144 = scmp.lt.s32.totalorder %s143, 7199
        %s145 = scalar_select %p144, %s143, 7199
        %s146 = smul.addr %s145, 4
        %s147 = scalar_lea.vmem %s1, %s146
        %s148 = smul.u32 %s15, 9
        %s149 = sadd.s32 %s148, %s16
        %s150 = smul.u32 400, %s149
      $region24: #{autoencoder_forward.8} parent=15 // pred_fallthru
        _
    $region16: #{autoencoder_forward.8} parent=5 // pred_fallthru
      _
    %p151 = scmp.le.s32.totalorder 1, %s8
    %p152 = scmp.lt.s32.totalorder %s8, 19
    %p153 = pnand %p151, %p152
    %p154 = pneg %p153
    // Predicated region
    $region25: #{autoencoder_forward.8} parent=5 // pred_check
      _
    $region26: #{autoencoder_forward.8} parent=5 // pred_check_branch
      %156 = sbr.rel (%p153) target = $region28
    $region27: #{autoencoder_forward.8} parent=5 // pred_region
      %s157 = ssub.s32 %s8, 1
      %s158 = smul.u32 %s17, 9
      %s159 = sadd.s32 %s158, %s18
      %s160 = smul.u32 25, %s159
      %p161 = scmp.lt.s32.totalorder %s160, 449
      %s162 = scalar_select %p161, %s160, 449
      %s163 = smul.addr %s162, 8
      %s164 = scalar_lea.vmem %s0, %s163
      %p165 = pneg %p50
      %p166 = pneg %p47
      %s167 = smul.u32 %s17, 9
      %s168 = sadd.s32 %s167, %s18
      %s169 = smul.u32 400, %s168
      %p170 = scmp.lt.s32.totalorder %s169, 7199
      %s171 = scalar_select %p170, %s169, 7199
      %s172 = smul.addr %s171, 4
      %s173 = scalar_lea.vmem %s1, %s172
      %p174 = pneg %p80
      %p175 = pneg %p77
      %p176 = pneg %p106
      %p177 = pneg %p103
      %p178 = scmp.lt.s32.totalorder %s17, 1
      %s179 = scalar_select %p178, %s17, 1
      %s180 = smul.addr %s179, 8
      %s181 = scalar_lea.vmem %s2, %s180
      %s182 = smul.u32 %s17, 9
      %s183 = sadd.s32 %s182, %s18
      %s184 = smul.u32 25, %s183
      %p185 = scmp.lt.s32.totalorder %s184, 449
      %s186 = scalar_select %p185, %s184, 449
      %s187 = smul.addr %s186, 8
      %s188 = scalar_lea.vmem %s0, %s187
      %s189 = smul.u32 %s17, 9
      %s190 = sadd.s32 %s189, %s18
      %s191 = smul.u32 25, %s190
      %s192 = smul.u32 %s17, 9
      %s193 = sadd.s32 %s192, %s18
      %s194 = smul.u32 400, %s193
      %p195 = scmp.lt.s32.totalorder %s194, 7199
      %s196 = scalar_select %p195, %s194, 7199
      %s197 = smul.addr %s196, 4
      %s198 = scalar_lea.vmem %s1, %s197
      %s199 = smul.u32 %s17, 9
      %s200 = sadd.s32 %s199, %s18
      %s201 = smul.u32 400, %s200
      %p202 = scmp.lt.s32.totalorder %s17, 1
      %s203 = scalar_select %p202, %s17, 1
      %s204 = smul.addr %s203, 8
      %s205 = scalar_lea.vmem %s2, %s204
      %p207 = scmp.eq.s32.totalorder %s18, 0
      // Predicated region
      $region29: #{autoencoder_forward.8} parent=27 // pred_check
        %p208 = pneg %p207
      $region30: #{autoencoder_forward.8} parent=27 // pred_check_branch
        %210 = sbr.rel (%p208) target = $region32
      $region31: #{autoencoder_forward.8} parent=27 // pred_region
        %211 = vst [vmem:[#allocation2] sm:$0xff] 0.0
      $region32: #{autoencoder_forward.8} parent=27 // pred_fallthru
        _
      %v212 = vld [vmem:[%s188] sm:$0xff]
      %v213 = vld [vmem:[%s188 + $0x8] sm:$0xff]
      %v214 = vld [vmem:[%s188 + $0x10] sm:$0xff]
      %v215 = vld [vmem:[%s188 + $0x18] sm:$0xff]
      %v216 = vld [vmem:[%s188 + $0x20] sm:$0xff]
      %v217 = vld [vmem:[%s188 + $0x28] sm:$0xff]
      %v218 = vld [vmem:[%s188 + $0x30] sm:$0xff]
      %v219 = vld [vmem:[%s188 + $0x38] sm:$0xff]
      %v220 = vld [vmem:[%s188 + $0x40] sm:$0xff]
      %v221 = vld [vmem:[%s188 + $0x48] sm:$0xff]
      %v222 = vld [vmem:[%s188 + $0x50] sm:$0xff]
      %v223 = vld [vmem:[%s188 + $0x58] sm:$0xff]
      %v224 = vld [vmem:[%s188 + $0x60] sm:$0xff]
      %v225 = vld [vmem:[%s188 + $0x68] sm:$0xff]
      %v226 = vld [vmem:[%s188 + $0x70] sm:$0xff]
      %v227 = vld [vmem:[%s188 + $0x78] sm:$0xff]
      %v228 = vld [vmem:[%s188 + $0x80] sm:$0xff]
      %v229 = vld [vmem:[%s188 + $0x88] sm:$0xff]
      %v230 = vld [vmem:[%s188 + $0x90] sm:$0xff]
      %v231 = vld [vmem:[%s188 + $0x98] sm:$0xff]
      %v232 = vld [vmem:[%s188 + $0xa0] sm:$0xff]
      %v233 = vld [vmem:[%s188 + $0xa8] sm:$0xff]
      %v234 = vld [vmem:[%s188 + $0xb0] sm:$0xff]
      %v235 = vld [vmem:[%s188 + $0xb8] sm:$0xff]
      %v236 = vld [vmem:[%s188 + $0xc0] sm:$0xff]
      %v237 = vld [vmem:[%s198] sm:$0xf]
      %v238 = vld [vmem:[%s198 + $0x4] sm:$0xf]
      %v239 = vld [vmem:[%s198 + $0x8] sm:$0xf]
      %v240 = vld [vmem:[%s198 + $0xc] sm:$0xf]
      %v241 = vld [vmem:[%s198 + $0x10] sm:$0xf]
      %v242 = vld [vmem:[%s198 + $0x14] sm:$0xf]
      %v243 = vld [vmem:[%s198 + $0x18] sm:$0xf]
      %v244 = vld [vmem:[%s198 + $0x1c] sm:$0xf]
      %v245 = vld [vmem:[%s198 + $0x20] sm:$0xf]
      %v246 = vld [vmem:[%s198 + $0x24] sm:$0xf]
      %v247 = vld [vmem:[%s198 + $0x28] sm:$0xf]
      %v248 = vld [vmem:[%s198 + $0x2c] sm:$0xf]
      %v249 = vld [vmem:[%s198 + $0x30] sm:$0xf]
      %v250 = vld [vmem:[%s198 + $0x34] sm:$0xf]
      %v251 = vld [vmem:[%s198 + $0x38] sm:$0xf]
      %v252 = vld [vmem:[%s198 + $0x3c] sm:$0xf]
      %v253 = vld [vmem:[%s198 + $0x40] sm:$0xf]
      %v254 = vld [vmem:[%s198 + $0x44] sm:$0xf]
      %v255 = vld [vmem:[%s198 + $0x48] sm:$0xf]
      %v256 = vld [vmem:[%s198 + $0x4c] sm:$0xf]
      %v257 = vld [vmem:[%s198 + $0x50] sm:$0xf]
      %v258 = vld [vmem:[%s198 + $0x54] sm:$0xf]
      %v259 = vld [vmem:[%s198 + $0x58] sm:$0xf]
      %v260 = vld [vmem:[%s198 + $0x5c] sm:$0xf]
      %v261 = vld [vmem:[%s198 + $0x60] sm:$0xf]
      %v262 = vld [vmem:[%s198 + $0x64] sm:$0xf]
      %v263 = vld [vmem:[%s198 + $0x68] sm:$0xf]
      %v264 = vld [vmem:[%s198 + $0x6c] sm:$0xf]
      %v265 = vld [vmem:[%s198 + $0x70] sm:$0xf]
      %v266 = vld [vmem:[%s198 + $0x74] sm:$0xf]
      %v267 = vld [vmem:[%s198 + $0x78] sm:$0xf]
      %v268 = vld [vmem:[%s198 + $0x7c] sm:$0xf]
      %v269 = vld [vmem:[%s198 + $0x80] sm:$0xf]
      %v270 = vld [vmem:[%s198 + $0x84] sm:$0xf]
      %v271 = vld [vmem:[%s198 + $0x88] sm:$0xf]
      %v272 = vld [vmem:[%s198 + $0x8c] sm:$0xf]
      %v273 = vld [vmem:[%s198 + $0x90] sm:$0xf]
      %v274 = vld [vmem:[%s198 + $0x94] sm:$0xf]
      %v275 = vld [vmem:[%s198 + $0x98] sm:$0xf]
      %v276 = vld [vmem:[%s198 + $0x9c] sm:$0xf]
      %v277 = vld [vmem:[%s198 + $0xa0] sm:$0xf]
      %v278 = vld [vmem:[%s198 + $0xa4] sm:$0xf]
      %v279 = vld [vmem:[%s198 + $0xa8] sm:$0xf]
      %v280 = vld [vmem:[%s198 + $0xac] sm:$0xf]
      %v281 = vld [vmem:[%s198 + $0xb0] sm:$0xf]
      %v282 = vld [vmem:[%s198 + $0xb4] sm:$0xf]
      %v283 = vld [vmem:[%s198 + $0xb8] sm:$0xf]
      %v284 = vld [vmem:[%s198 + $0xbc] sm:$0xf]
      %v285 = vld [vmem:[%s198 + $0xc0] sm:$0xf]
      %v286 = vld [vmem:[%s198 + $0xc4] sm:$0xf]
      %v287 = vld [vmem:[%s198 + $0xc8] sm:$0xf]
      %v288 = vld [vmem:[%s198 + $0xcc] sm:$0xf]
      %v289 = vld [vmem:[%s198 + $0xd0] sm:$0xf]
      %v290 = vld [vmem:[%s198 + $0xd4] sm:$0xf]
      %v291 = vld [vmem:[%s198 + $0xd8] sm:$0xf]
      %v292 = vld [vmem:[%s198 + $0xdc] sm:$0xf]
      %v293 = vld [vmem:[%s198 + $0xe0] sm:$0xf]
      %v294 = vld [vmem:[%s198 + $0xe4] sm:$0xf]
      %v295 = vld [vmem:[%s198 + $0xe8] sm:$0xf]
      %v296 = vld [vmem:[%s198 + $0xec] sm:$0xf]
      %v297 = vld [vmem:[%s198 + $0xf0] sm:$0xf]
      %v298 = vld [vmem:[%s198 + $0xf4] sm:$0xf]
      %v299 = vld [vmem:[%s198 + $0xf8] sm:$0xf]
      %v300 = vld [vmem:[%s198 + $0xfc] sm:$0xf]
      %v301 = vld [vmem:[%s198 + $0x100] sm:$0xf]
      %v302 = vld [vmem:[%s198 + $0x104] sm:$0xf]
      %v303 = vld [vmem:[%s198 + $0x108] sm:$0xf]
      %v304 = vld [vmem:[%s198 + $0x10c] sm:$0xf]
      %v305 = vld [vmem:[%s198 + $0x110] sm:$0xf]
      %v306 = vld [vmem:[%s198 + $0x114] sm:$0xf]
      %v307 = vld [vmem:[%s198 + $0x118] sm:$0xf]
      %v308 = vld [vmem:[%s198 + $0x11c] sm:$0xf]
      %v309 = vld [vmem:[%s198 + $0x120] sm:$0xf]
      %v310 = vld [vmem:[%s198 + $0x124] sm:$0xf]
      %v311 = vld [vmem:[%s198 + $0x128] sm:$0xf]
      %v312 = vld [vmem:[%s198 + $0x12c] sm:$0xf]
      %v313 = vld [vmem:[%s198 + $0x130] sm:$0xf]
      %v314 = vld [vmem:[%s198 + $0x134] sm:$0xf]
      %v315 = vld [vmem:[%s198 + $0x138] sm:$0xf]
      %v316 = vld [vmem:[%s198 + $0x13c] sm:$0xf]
      %v317 = vld [vmem:[%s198 + $0x140] sm:$0xf]
      %v318 = vld [vmem:[%s198 + $0x144] sm:$0xf]
      %v319 = vld [vmem:[%s198 + $0x148] sm:$0xf]
      %v320 = vld [vmem:[%s198 + $0x14c] sm:$0xf]
      %v321 = vld [vmem:[%s198 + $0x150] sm:$0xf]
      %v322 = vld [vmem:[%s198 + $0x154] sm:$0xf]
      %v323 = vld [vmem:[%s198 + $0x158] sm:$0xf]
      %v324 = vld [vmem:[%s198 + $0x15c] sm:$0xf]
      %v325 = vld [vmem:[%s198 + $0x160] sm:$0xf]
      %v326 = vld [vmem:[%s198 + $0x164] sm:$0xf]
      %v327 = vld [vmem:[%s198 + $0x168] sm:$0xf]
      %v328 = vld [vmem:[%s198 + $0x16c] sm:$0xf]
      %v329 = vld [vmem:[%s198 + $0x170] sm:$0xf]
      %v330 = vld [vmem:[%s198 + $0x174] sm:$0xf]
      %v331 = vld [vmem:[%s198 + $0x178] sm:$0xf]
      %v332 = vld [vmem:[%s198 + $0x17c] sm:$0xf]
      %v333 = vld [vmem:[%s198 + $0x180] sm:$0xf]
      %v334 = vld [vmem:[%s198 + $0x184] sm:$0xf]
      %v335 = vld [vmem:[%s198 + $0x188] sm:$0xf]
      %v336 = vld [vmem:[%s198 + $0x18c] sm:$0xf]
      %v337 = vld [vmem:[%s198 + $0x190] sm:$0xf]
      %v338 = vld [vmem:[%s198 + $0x194] sm:$0xf]
      %v339 = vld [vmem:[%s198 + $0x198] sm:$0xf]
      %v340 = vld [vmem:[%s198 + $0x19c] sm:$0xf]
      %v341 = vld [vmem:[%s198 + $0x1a0] sm:$0xf]
      %v342 = vld [vmem:[%s198 + $0x1a4] sm:$0xf]
      %v343 = vld [vmem:[%s198 + $0x1a8] sm:$0xf]
      %v344 = vld [vmem:[%s198 + $0x1ac] sm:$0xf]
      %v345 = vld [vmem:[%s198 + $0x1b0] sm:$0xf]
      %v346 = vld [vmem:[%s198 + $0x1b4] sm:$0xf]
      %v347 = vld [vmem:[%s198 + $0x1b8] sm:$0xf]
      %v348 = vld [vmem:[%s198 + $0x1bc] sm:$0xf]
      %v349 = vld [vmem:[%s198 + $0x1c0] sm:$0xf]
      %v350 = vld [vmem:[%s198 + $0x1c4] sm:$0xf]
      %v351 = vld [vmem:[%s198 + $0x1c8] sm:$0xf]
      %v352 = vld [vmem:[%s198 + $0x1cc] sm:$0xf]
      %v353 = vld [vmem:[%s198 + $0x1d0] sm:$0xf]
      %v354 = vld [vmem:[%s198 + $0x1d4] sm:$0xf]
      %v355 = vld [vmem:[%s198 + $0x1d8] sm:$0xf]
      %v356 = vld [vmem:[%s198 + $0x1dc] sm:$0xf]
      %v357 = vld [vmem:[%s198 + $0x1e0] sm:$0xf]
      %v358 = vld [vmem:[%s198 + $0x1e4] sm:$0xf]
      %v359 = vld [vmem:[%s198 + $0x1e8] sm:$0xf]
      %v360 = vld [vmem:[%s198 + $0x1ec] sm:$0xf]
      %v361 = vld [vmem:[%s198 + $0x1f0] sm:$0xf]
      %v362 = vld [vmem:[%s198 + $0x1f4] sm:$0xf]
      %v363 = vld [vmem:[%s198 + $0x1f8] sm:$0xf]
      %v364 = vld [vmem:[%s198 + $0x1fc] sm:$0xf]
      %v365 = vld [vmem:[%s198 + $0x200] sm:$0xf]
      %v366 = vld [vmem:[%s198 + $0x204] sm:$0xf]
      %v367 = vld [vmem:[%s198 + $0x208] sm:$0xf]
      %v368 = vld [vmem:[%s198 + $0x20c] sm:$0xf]
      %v369 = vld [vmem:[%s198 + $0x210] sm:$0xf]
      %v370 = vld [vmem:[%s198 + $0x214] sm:$0xf]
      %v371 = vld [vmem:[%s198 + $0x218] sm:$0xf]
      %v372 = vld [vmem:[%s198 + $0x21c] sm:$0xf]
      %v373 = vld [vmem:[%s198 + $0x220] sm:$0xf]
      %v374 = vld [vmem:[%s198 + $0x224] sm:$0xf]
      %v375 = vld [vmem:[%s198 + $0x228] sm:$0xf]
      %v376 = vld [vmem:[%s198 + $0x22c] sm:$0xf]
      %v377 = vld [vmem:[%s198 + $0x230] sm:$0xf]
      %v378 = vld [vmem:[%s198 + $0x234] sm:$0xf]
      %v379 = vld [vmem:[%s198 + $0x238] sm:$0xf]
      %v380 = vld [vmem:[%s198 + $0x23c] sm:$0xf]
      %v381 = vld [vmem:[%s198 + $0x240] sm:$0xf]
      %v382 = vld [vmem:[%s198 + $0x244] sm:$0xf]
      %v383 = vld [vmem:[%s198 + $0x248] sm:$0xf]
      %v384 = vld [vmem:[%s198 + $0x24c] sm:$0xf]
      %v385 = vld [vmem:[%s198 + $0x250] sm:$0xf]
      %v386 = vld [vmem:[%s198 + $0x254] sm:$0xf]
      %v387 = vld [vmem:[%s198 + $0x258] sm:$0xf]
      %v388 = vld [vmem:[%s198 + $0x25c] sm:$0xf]
      %v389 = vld [vmem:[%s198 + $0x260] sm:$0xf]
      %v390 = vld [vmem:[%s198 + $0x264] sm:$0xf]
      %v391 = vld [vmem:[%s198 + $0x268] sm:$0xf]
      %v392 = vld [vmem:[%s198 + $0x26c] sm:$0xf]
      %v393 = vld [vmem:[%s198 + $0x270] sm:$0xf]
      %v394 = vld [vmem:[%s198 + $0x274] sm:$0xf]
      %v395 = vld [vmem:[%s198 + $0x278] sm:$0xf]
      %v396 = vld [vmem:[%s198 + $0x27c] sm:$0xf]
      %v397 = vld [vmem:[%s198 + $0x280] sm:$0xf]
      %v398 = vld [vmem:[%s198 + $0x284] sm:$0xf]
      %v399 = vld [vmem:[%s198 + $0x288] sm:$0xf]
      %v400 = vld [vmem:[%s198 + $0x28c] sm:$0xf]
      %v401 = vld [vmem:[%s198 + $0x290] sm:$0xf]
      %v402 = vld [vmem:[%s198 + $0x294] sm:$0xf]
      %v403 = vld [vmem:[%s198 + $0x298] sm:$0xf]
      %v404 = vld [vmem:[%s198 + $0x29c] sm:$0xf]
      %v405 = vld [vmem:[%s198 + $0x2a0] sm:$0xf]
      %v406 = vld [vmem:[%s198 + $0x2a4] sm:$0xf]
      %v407 = vld [vmem:[%s198 + $0x2a8] sm:$0xf]
      %v408 = vld [vmem:[%s198 + $0x2ac] sm:$0xf]
      %v409 = vld [vmem:[%s198 + $0x2b0] sm:$0xf]
      %v410 = vld [vmem:[%s198 + $0x2b4] sm:$0xf]
      %v411 = vld [vmem:[%s198 + $0x2b8] sm:$0xf]
      %v412 = vld [vmem:[%s198 + $0x2bc] sm:$0xf]
      %v413 = vld [vmem:[%s198 + $0x2c0] sm:$0xf]
      %v414 = vld [vmem:[%s198 + $0x2c4] sm:$0xf]
      %v415 = vld [vmem:[%s198 + $0x2c8] sm:$0xf]
      %v416 = vld [vmem:[%s198 + $0x2cc] sm:$0xf]
      %v417 = vld [vmem:[%s198 + $0x2d0] sm:$0xf]
      %v418 = vld [vmem:[%s198 + $0x2d4] sm:$0xf]
      %v419 = vld [vmem:[%s198 + $0x2d8] sm:$0xf]
      %v420 = vld [vmem:[%s198 + $0x2dc] sm:$0xf]
      %v421 = vld [vmem:[%s198 + $0x2e0] sm:$0xf]
      %v422 = vld [vmem:[%s198 + $0x2e4] sm:$0xf]
      %v423 = vld [vmem:[%s198 + $0x2e8] sm:$0xf]
      %v424 = vld [vmem:[%s198 + $0x2ec] sm:$0xf]
      %v425 = vld [vmem:[%s198 + $0x2f0] sm:$0xf]
      %v426 = vld [vmem:[%s198 + $0x2f4] sm:$0xf]
      %v427 = vld [vmem:[%s198 + $0x2f8] sm:$0xf]
      %v428 = vld [vmem:[%s198 + $0x2fc] sm:$0xf]
      %v429 = vld [vmem:[%s198 + $0x300] sm:$0xf]
      %v430 = vld [vmem:[%s198 + $0x304] sm:$0xf]
      %v431 = vld [vmem:[%s198 + $0x308] sm:$0xf]
      %v432 = vld [vmem:[%s198 + $0x30c] sm:$0xf]
      %v433 = vld [vmem:[%s198 + $0x310] sm:$0xf]
      %v434 = vld [vmem:[%s198 + $0x314] sm:$0xf]
      %v435 = vld [vmem:[%s198 + $0x318] sm:$0xf]
      %v436 = vld [vmem:[%s198 + $0x31c] sm:$0xf]
      %v437 = vld [vmem:[%s198 + $0x320] sm:$0xf]
      %v438 = vld [vmem:[%s198 + $0x324] sm:$0xf]
      %v439 = vld [vmem:[%s198 + $0x328] sm:$0xf]
      %v440 = vld [vmem:[%s198 + $0x32c] sm:$0xf]
      %v441 = vld [vmem:[%s198 + $0x330] sm:$0xf]
      %v442 = vld [vmem:[%s198 + $0x334] sm:$0xf]
      %v443 = vld [vmem:[%s198 + $0x338] sm:$0xf]
      %v444 = vld [vmem:[%s198 + $0x33c] sm:$0xf]
      %v445 = vld [vmem:[%s198 + $0x340] sm:$0xf]
      %v446 = vld [vmem:[%s198 + $0x344] sm:$0xf]
      %v447 = vld [vmem:[%s198 + $0x348] sm:$0xf]
      %v448 = vld [vmem:[%s198 + $0x34c] sm:$0xf]
      %v449 = vld [vmem:[%s198 + $0x350] sm:$0xf]
      %v450 = vld [vmem:[%s198 + $0x354] sm:$0xf]
      %v451 = vld [vmem:[%s198 + $0x358] sm:$0xf]
      %v452 = vld [vmem:[%s198 + $0x35c] sm:$0xf]
      %v453 = vld [vmem:[%s198 + $0x360] sm:$0xf]
      %v454 = vld [vmem:[%s198 + $0x364] sm:$0xf]
      %v455 = vld [vmem:[%s198 + $0x368] sm:$0xf]
      %v456 = vld [vmem:[%s198 + $0x36c] sm:$0xf]
      %v457 = vld [vmem:[%s198 + $0x370] sm:$0xf]
      %v458 = vld [vmem:[%s198 + $0x374] sm:$0xf]
      %v459 = vld [vmem:[%s198 + $0x378] sm:$0xf]
      %v460 = vld [vmem:[%s198 + $0x37c] sm:$0xf]
      %v461 = vld [vmem:[%s198 + $0x380] sm:$0xf]
      %v462 = vld [vmem:[%s198 + $0x384] sm:$0xf]
      %v463 = vld [vmem:[%s198 + $0x388] sm:$0xf]
      %v464 = vld [vmem:[%s198 + $0x38c] sm:$0xf]
      %v465 = vld [vmem:[%s198 + $0x390] sm:$0xf]
      %v466 = vld [vmem:[%s198 + $0x394] sm:$0xf]
      %v467 = vld [vmem:[%s198 + $0x398] sm:$0xf]
      %v468 = vld [vmem:[%s198 + $0x39c] sm:$0xf]
      %v469 = vld [vmem:[%s198 + $0x3a0] sm:$0xf]
      %v470 = vld [vmem:[%s198 + $0x3a4] sm:$0xf]
      %v471 = vld [vmem:[%s198 + $0x3a8] sm:$0xf]
      %v472 = vld [vmem:[%s198 + $0x3ac] sm:$0xf]
      %v473 = vld [vmem:[%s198 + $0x3b0] sm:$0xf]
      %v474 = vld [vmem:[%s198 + $0x3b4] sm:$0xf]
      %v475 = vld [vmem:[%s198 + $0x3b8] sm:$0xf]
      %v476 = vld [vmem:[%s198 + $0x3bc] sm:$0xf]
      %v477 = vld [vmem:[%s198 + $0x3c0] sm:$0xf]
      %v478 = vld [vmem:[%s198 + $0x3c4] sm:$0xf]
      %v479 = vld [vmem:[%s198 + $0x3c8] sm:$0xf]
      %v480 = vld [vmem:[%s198 + $0x3cc] sm:$0xf]
      %v481 = vld [vmem:[%s198 + $0x3d0] sm:$0xf]
      %v482 = vld [vmem:[%s198 + $0x3d4] sm:$0xf]
      %v483 = vld [vmem:[%s198 + $0x3d8] sm:$0xf]
      %v484 = vld [vmem:[%s198 + $0x3dc] sm:$0xf]
      %v485 = vld [vmem:[%s198 + $0x3e0] sm:$0xf]
      %v486 = vld [vmem:[%s198 + $0x3e4] sm:$0xf]
      %v487 = vld [vmem:[%s198 + $0x3e8] sm:$0xf]
      %v488 = vld [vmem:[%s198 + $0x3ec] sm:$0xf]
      %v489 = vld [vmem:[%s198 + $0x3f0] sm:$0xf]
      %v490 = vld [vmem:[%s198 + $0x3f4] sm:$0xf]
      %v491 = vld [vmem:[%s198 + $0x3f8] sm:$0xf]
      %v492 = vld [vmem:[%s198 + $0x3fc] sm:$0xf]
      %v493 = vld [vmem:[%s198 + $0x400] sm:$0xf]
      %v494 = vld [vmem:[%s198 + $0x404] sm:$0xf]
      %v495 = vld [vmem:[%s198 + $0x408] sm:$0xf]
      %v496 = vld [vmem:[%s198 + $0x40c] sm:$0xf]
      %v497 = vld [vmem:[%s198 + $0x410] sm:$0xf]
      %v498 = vld [vmem:[%s198 + $0x414] sm:$0xf]
      %v499 = vld [vmem:[%s198 + $0x418] sm:$0xf]
      %v500 = vld [vmem:[%s198 + $0x41c] sm:$0xf]
      %v501 = vld [vmem:[%s198 + $0x420] sm:$0xf]
      %v502 = vld [vmem:[%s198 + $0x424] sm:$0xf]
      %v503 = vld [vmem:[%s198 + $0x428] sm:$0xf]
      %v504 = vld [vmem:[%s198 + $0x42c] sm:$0xf]
      %v505 = vld [vmem:[%s198 + $0x430] sm:$0xf]
      %v506 = vld [vmem:[%s198 + $0x434] sm:$0xf]
      %v507 = vld [vmem:[%s198 + $0x438] sm:$0xf]
      %v508 = vld [vmem:[%s198 + $0x43c] sm:$0xf]
      %v509 = vld [vmem:[%s198 + $0x440] sm:$0xf]
      %v510 = vld [vmem:[%s198 + $0x444] sm:$0xf]
      %v511 = vld [vmem:[%s198 + $0x448] sm:$0xf]
      %v512 = vld [vmem:[%s198 + $0x44c] sm:$0xf]
      %v513 = vld [vmem:[%s198 + $0x450] sm:$0xf]
      %v514 = vld [vmem:[%s198 + $0x454] sm:$0xf]
      %v515 = vld [vmem:[%s198 + $0x458] sm:$0xf]
      %v516 = vld [vmem:[%s198 + $0x45c] sm:$0xf]
      %v517 = vld [vmem:[%s198 + $0x460] sm:$0xf]
      %v518 = vld [vmem:[%s198 + $0x464] sm:$0xf]
      %v519 = vld [vmem:[%s198 + $0x468] sm:$0xf]
      %v520 = vld [vmem:[%s198 + $0x46c] sm:$0xf]
      %v521 = vld [vmem:[%s198 + $0x470] sm:$0xf]
      %v522 = vld [vmem:[%s198 + $0x474] sm:$0xf]
      %v523 = vld [vmem:[%s198 + $0x478] sm:$0xf]
      %v524 = vld [vmem:[%s198 + $0x47c] sm:$0xf]
      %v525 = vld [vmem:[%s198 + $0x480] sm:$0xf]
      %v526 = vld [vmem:[%s198 + $0x484] sm:$0xf]
      %v527 = vld [vmem:[%s198 + $0x488] sm:$0xf]
      %v528 = vld [vmem:[%s198 + $0x48c] sm:$0xf]
      %v529 = vld [vmem:[%s198 + $0x490] sm:$0xf]
      %v530 = vld [vmem:[%s198 + $0x494] sm:$0xf]
      %v531 = vld [vmem:[%s198 + $0x498] sm:$0xf]
      %v532 = vld [vmem:[%s198 + $0x49c] sm:$0xf]
      %v533 = vld [vmem:[%s198 + $0x4a0] sm:$0xf]
      %v534 = vld [vmem:[%s198 + $0x4a4] sm:$0xf]
      %v535 = vld [vmem:[%s198 + $0x4a8] sm:$0xf]
      %v536 = vld [vmem:[%s198 + $0x4ac] sm:$0xf]
      %v537 = vld [vmem:[%s198 + $0x4b0] sm:$0xf]
      %v538 = vld [vmem:[%s198 + $0x4b4] sm:$0xf]
      %v539 = vld [vmem:[%s198 + $0x4b8] sm:$0xf]
      %v540 = vld [vmem:[%s198 + $0x4bc] sm:$0xf]
      %v541 = vld [vmem:[%s198 + $0x4c0] sm:$0xf]
      %v542 = vld [vmem:[%s198 + $0x4c4] sm:$0xf]
      %v543 = vld [vmem:[%s198 + $0x4c8] sm:$0xf]
      %v544 = vld [vmem:[%s198 + $0x4cc] sm:$0xf]
      %v545 = vld [vmem:[%s198 + $0x4d0] sm:$0xf]
      %v546 = vld [vmem:[%s198 + $0x4d4] sm:$0xf]
      %v547 = vld [vmem:[%s198 + $0x4d8] sm:$0xf]
      %v548 = vld [vmem:[%s198 + $0x4dc] sm:$0xf]
      %v549 = vld [vmem:[%s198 + $0x4e0] sm:$0xf]
      %v550 = vld [vmem:[%s198 + $0x4e4] sm:$0xf]
      %v551 = vld [vmem:[%s198 + $0x4e8] sm:$0xf]
      %v552 = vld [vmem:[%s198 + $0x4ec] sm:$0xf]
      %v553 = vld [vmem:[%s198 + $0x4f0] sm:$0xf]
      %v554 = vld [vmem:[%s198 + $0x4f4] sm:$0xf]
      %v555 = vld [vmem:[%s198 + $0x4f8] sm:$0xf]
      %v556 = vld [vmem:[%s198 + $0x4fc] sm:$0xf]
      %v557 = vld [vmem:[%s198 + $0x500] sm:$0xf]
      %v558 = vld [vmem:[%s198 + $0x504] sm:$0xf]
      %v559 = vld [vmem:[%s198 + $0x508] sm:$0xf]
      %v560 = vld [vmem:[%s198 + $0x50c] sm:$0xf]
      %v561 = vld [vmem:[%s198 + $0x510] sm:$0xf]
      %v562 = vld [vmem:[%s198 + $0x514] sm:$0xf]
      %v563 = vld [vmem:[%s198 + $0x518] sm:$0xf]
      %v564 = vld [vmem:[%s198 + $0x51c] sm:$0xf]
      %v565 = vld [vmem:[%s198 + $0x520] sm:$0xf]
      %v566 = vld [vmem:[%s198 + $0x524] sm:$0xf]
      %v567 = vld [vmem:[%s198 + $0x528] sm:$0xf]
      %v568 = vld [vmem:[%s198 + $0x52c] sm:$0xf]
      %v569 = vld [vmem:[%s198 + $0x530] sm:$0xf]
      %v570 = vld [vmem:[%s198 + $0x534] sm:$0xf]
      %v571 = vld [vmem:[%s198 + $0x538] sm:$0xf]
      %v572 = vld [vmem:[%s198 + $0x53c] sm:$0xf]
      %v573 = vld [vmem:[%s198 + $0x540] sm:$0xf]
      %v574 = vld [vmem:[%s198 + $0x544] sm:$0xf]
      %v575 = vld [vmem:[%s198 + $0x548] sm:$0xf]
      %v576 = vld [vmem:[%s198 + $0x54c] sm:$0xf]
      %v577 = vld [vmem:[%s198 + $0x550] sm:$0xf]
      %v578 = vld [vmem:[%s198 + $0x554] sm:$0xf]
      %v579 = vld [vmem:[%s198 + $0x558] sm:$0xf]
      %v580 = vld [vmem:[%s198 + $0x55c] sm:$0xf]
      %v581 = vld [vmem:[%s198 + $0x560] sm:$0xf]
      %v582 = vld [vmem:[%s198 + $0x564] sm:$0xf]
      %v583 = vld [vmem:[%s198 + $0x568] sm:$0xf]
      %v584 = vld [vmem:[%s198 + $0x56c] sm:$0xf]
      %v585 = vld [vmem:[%s198 + $0x570] sm:$0xf]
      %v586 = vld [vmem:[%s198 + $0x574] sm:$0xf]
      %v587 = vld [vmem:[%s198 + $0x578] sm:$0xf]
      %v588 = vld [vmem:[%s198 + $0x57c] sm:$0xf]
      %v589 = vld [vmem:[%s198 + $0x580] sm:$0xf]
      %v590 = vld [vmem:[%s198 + $0x584] sm:$0xf]
      %v591 = vld [vmem:[%s198 + $0x588] sm:$0xf]
      %v592 = vld [vmem:[%s198 + $0x58c] sm:$0xf]
      %v593 = vld [vmem:[%s198 + $0x590] sm:$0xf]
      %v594 = vld [vmem:[%s198 + $0x594] sm:$0xf]
      %v595 = vld [vmem:[%s198 + $0x598] sm:$0xf]
      %v596 = vld [vmem:[%s198 + $0x59c] sm:$0xf]
      %v597 = vld [vmem:[%s198 + $0x5a0] sm:$0xf]
      %v598 = vld [vmem:[%s198 + $0x5a4] sm:$0xf]
      %v599 = vld [vmem:[%s198 + $0x5a8] sm:$0xf]
      %v600 = vld [vmem:[%s198 + $0x5ac] sm:$0xf]
      %v601 = vld [vmem:[%s198 + $0x5b0] sm:$0xf]
      %v602 = vld [vmem:[%s198 + $0x5b4] sm:$0xf]
      %v603 = vld [vmem:[%s198 + $0x5b8] sm:$0xf]
      %v604 = vld [vmem:[%s198 + $0x5bc] sm:$0xf]
      %v605 = vld [vmem:[%s198 + $0x5c0] sm:$0xf]
      %v606 = vld [vmem:[%s198 + $0x5c4] sm:$0xf]
      %v607 = vld [vmem:[%s198 + $0x5c8] sm:$0xf]
      %v608 = vld [vmem:[%s198 + $0x5cc] sm:$0xf]
      %v609 = vld [vmem:[%s198 + $0x5d0] sm:$0xf]
      %v610 = vld [vmem:[%s198 + $0x5d4] sm:$0xf]
      %v611 = vld [vmem:[%s198 + $0x5d8] sm:$0xf]
      %v612 = vld [vmem:[%s198 + $0x5dc] sm:$0xf]
      %v613 = vld [vmem:[%s198 + $0x5e0] sm:$0xf]
      %v614 = vld [vmem:[%s198 + $0x5e4] sm:$0xf]
      %v615 = vld [vmem:[%s198 + $0x5e8] sm:$0xf]
      %v616 = vld [vmem:[%s198 + $0x5ec] sm:$0xf]
      %v617 = vld [vmem:[%s198 + $0x5f0] sm:$0xf]
      %v618 = vld [vmem:[%s198 + $0x5f4] sm:$0xf]
      %v619 = vld [vmem:[%s198 + $0x5f8] sm:$0xf]
      %v620 = vld [vmem:[%s198 + $0x5fc] sm:$0xf]
      %v621 = vld [vmem:[%s198 + $0x600] sm:$0xf]
      %v622 = vld [vmem:[%s198 + $0x604] sm:$0xf]
      %v623 = vld [vmem:[%s198 + $0x608] sm:$0xf]
      %v624 = vld [vmem:[%s198 + $0x60c] sm:$0xf]
      %v625 = vld [vmem:[%s198 + $0x610] sm:$0xf]
      %v626 = vld [vmem:[%s198 + $0x614] sm:$0xf]
      %v627 = vld [vmem:[%s198 + $0x618] sm:$0xf]
      %v628 = vld [vmem:[%s198 + $0x61c] sm:$0xf]
      %v629 = vld [vmem:[%s198 + $0x620] sm:$0xf]
      %v630 = vld [vmem:[%s198 + $0x624] sm:$0xf]
      %v631 = vld [vmem:[%s198 + $0x628] sm:$0xf]
      %v632 = vld [vmem:[%s198 + $0x62c] sm:$0xf]
      %v633 = vld [vmem:[%s198 + $0x630] sm:$0xf]
      %v634 = vld [vmem:[%s198 + $0x634] sm:$0xf]
      %v635 = vld [vmem:[%s198 + $0x638] sm:$0xf]
      %v636 = vld [vmem:[%s198 + $0x63c] sm:$0xf]
      %v637 = vpack.c.bf16 %v212, %v212
      %v638 = vpack.c.bf16 %v213, %v213
      %v639 = vpack.c.bf16 %v214, %v214
      %v640 = vpack.c.bf16 %v215, %v215
      %v641 = vpack.c.bf16 %v216, %v216
      %v642 = vpack.c.bf16 %v217, %v217
      %v643 = vpack.c.bf16 %v218, %v218
      %v644 = vpack.c.bf16 %v219, %v219
      %v645 = vpack.c.bf16 %v220, %v220
      %v646 = vpack.c.bf16 %v221, %v221
      %v647 = vpack.c.bf16 %v222, %v222
      %v648 = vpack.c.bf16 %v223, %v223
      %v649 = vpack.c.bf16 %v224, %v224
      %v650 = vpack.c.bf16 %v225, %v225
      %v651 = vpack.c.bf16 %v226, %v226
      %v652 = vpack.c.bf16 %v227, %v227
      %v653 = vpack.c.bf16 %v228, %v228
      %v654 = vpack.c.bf16 %v229, %v229
      %v655 = vpack.c.bf16 %v230, %v230
      %v656 = vpack.c.bf16 %v231, %v231
      %v657 = vpack.c.bf16 %v232, %v232
      %v658 = vpack.c.bf16 %v233, %v233
      %v659 = vpack.c.bf16 %v234, %v234
      %v660 = vpack.c.bf16 %v235, %v235
      %v661 = vpack.c.bf16 %v236, %v236
      %v662 = vld [vmem:[#allocation2] sm:$0xff]
      %v1063 = vunpack.c.l.b16 %v237
      %v1064 = vunpack.c.l.b16 %v238
      %v1065 = vunpack.c.l.b16 %v239
      %v1066 = vunpack.c.l.b16 %v240
      %v1067 = vunpack.c.l.b16 %v241
      %v1068 = vunpack.c.l.b16 %v242
      %v1069 = vunpack.c.l.b16 %v243
      %v1070 = vunpack.c.l.b16 %v244
      %v1071 = vunpack.c.l.b16 %v245
      %v1072 = vunpack.c.l.b16 %v246
      %v1073 = vunpack.c.l.b16 %v247
      %v1074 = vunpack.c.l.b16 %v248
      %v1075 = vunpack.c.l.b16 %v249
      %v1076 = vunpack.c.l.b16 %v250
      %v1077 = vunpack.c.l.b16 %v251
      %v1078 = vunpack.c.l.b16 %v252
      %v1079 = vunpack.c.l.b16 %v253
      %v1080 = vunpack.c.l.b16 %v254
      %v1081 = vunpack.c.l.b16 %v255
      %v1082 = vunpack.c.l.b16 %v256
      %v1083 = vunpack.c.l.b16 %v257
      %v1084 = vunpack.c.l.b16 %v258
      %v1085 = vunpack.c.l.b16 %v259
      %v1086 = vunpack.c.l.b16 %v260
      %v1087 = vunpack.c.l.b16 %v261
      %v1088 = vunpack.c.l.b16 %v262
      %v1089 = vunpack.c.l.b16 %v263
      %v1090 = vunpack.c.l.b16 %v264
      %v1091 = vunpack.c.l.b16 %v265
      %v1092 = vunpack.c.l.b16 %v266
      %v1093 = vunpack.c.l.b16 %v267
      %v1094 = vunpack.c.l.b16 %v268
      %v1095 = vunpack.c.l.b16 %v269
      %v1096 = vunpack.c.l.b16 %v270
      %v1097 = vunpack.c.l.b16 %v271
      %v1098 = vunpack.c.l.b16 %v272
      %v1099 = vunpack.c.l.b16 %v273
      %v1100 = vunpack.c.l.b16 %v274
      %v1101 = vunpack.c.l.b16 %v275
      %v1102 = vunpack.c.l.b16 %v276
      %v1103 = vunpack.c.l.b16 %v277
      %v1104 = vunpack.c.l.b16 %v278
      %v1105 = vunpack.c.l.b16 %v279
      %v1106 = vunpack.c.l.b16 %v280
      %v1107 = vunpack.c.l.b16 %v281
      %v1108 = vunpack.c.l.b16 %v282
      %v1109 = vunpack.c.l.b16 %v283
      %v1110 = vunpack.c.l.b16 %v284
      %v1111 = vunpack.c.l.b16 %v285
      %v1112 = vunpack.c.l.b16 %v286
      %v1113 = vunpack.c.l.b16 %v287
      %v1114 = vunpack.c.l.b16 %v288
      %v1115 = vunpack.c.l.b16 %v289
      %v1116 = vunpack.c.l.b16 %v290
      %v1117 = vunpack.c.l.b16 %v291
      %v1118 = vunpack.c.l.b16 %v292
      %v1119 = vunpack.c.l.b16 %v293
      %v1120 = vunpack.c.l.b16 %v294
      %v1121 = vunpack.c.l.b16 %v295
      %v1122 = vunpack.c.l.b16 %v296
      %v1123 = vunpack.c.l.b16 %v297
      %v1124 = vunpack.c.l.b16 %v298
      %v1125 = vunpack.c.l.b16 %v299
      %v1126 = vunpack.c.l.b16 %v300
      %v1127 = vunpack.c.l.b16 %v301
      %v1128 = vunpack.c.l.b16 %v302
      %v1129 = vunpack.c.l.b16 %v303
      %v1130 = vunpack.c.l.b16 %v304
      %v1131 = vunpack.c.l.b16 %v305
      %v1132 = vunpack.c.l.b16 %v306
      %v1133 = vunpack.c.l.b16 %v307
      %v1134 = vunpack.c.l.b16 %v308
      %v1135 = vunpack.c.l.b16 %v309
      %v1136 = vunpack.c.l.b16 %v310
      %v1137 = vunpack.c.l.b16 %v311
      %v1138 = vunpack.c.l.b16 %v312
      %v1139 = vunpack.c.l.b16 %v313
      %v1140 = vunpack.c.l.b16 %v314
      %v1141 = vunpack.c.l.b16 %v315
      %v1142 = vunpack.c.l.b16 %v316
      %v1143 = vunpack.c.l.b16 %v317
      %v1144 = vunpack.c.l.b16 %v318
      %v1145 = vunpack.c.l.b16 %v319
      %v1146 = vunpack.c.l.b16 %v320
      %v1147 = vunpack.c.l.b16 %v321
      %v1148 = vunpack.c.l.b16 %v322
      %v1149 = vunpack.c.l.b16 %v323
      %v1150 = vunpack.c.l.b16 %v324
      %v1151 = vunpack.c.l.b16 %v325
      %v1152 = vunpack.c.l.b16 %v326
      %v1153 = vunpack.c.l.b16 %v327
      %v1154 = vunpack.c.l.b16 %v328
      %v1155 = vunpack.c.l.b16 %v329
      %v1156 = vunpack.c.l.b16 %v330
      %v1157 = vunpack.c.l.b16 %v331
      %v1158 = vunpack.c.l.b16 %v332
      %v1159 = vunpack.c.l.b16 %v333
      %v1160 = vunpack.c.l.b16 %v334
      %v1161 = vunpack.c.l.b16 %v335
      %v1162 = vunpack.c.l.b16 %v336
      %v1163 = vunpack.c.l.b16 %v337
      %v1164 = vunpack.c.l.b16 %v338
      %v1165 = vunpack.c.l.b16 %v339
      %v1166 = vunpack.c.l.b16 %v340
      %v1167 = vunpack.c.l.b16 %v341
      %v1168 = vunpack.c.l.b16 %v342
      %v1169 = vunpack.c.l.b16 %v343
      %v1170 = vunpack.c.l.b16 %v344
      %v1171 = vunpack.c.l.b16 %v345
      %v1172 = vunpack.c.l.b16 %v346
      %v1173 = vunpack.c.l.b16 %v347
      %v1174 = vunpack.c.l.b16 %v348
      %v1175 = vunpack.c.l.b16 %v349
      %v1176 = vunpack.c.l.b16 %v350
      %v1177 = vunpack.c.l.b16 %v351
      %v1178 = vunpack.c.l.b16 %v352
      %v1179 = vunpack.c.l.b16 %v353
      %v1180 = vunpack.c.l.b16 %v354
      %v1181 = vunpack.c.l.b16 %v355
      %v1182 = vunpack.c.l.b16 %v356
      %v1183 = vunpack.c.l.b16 %v357
      %v1184 = vunpack.c.l.b16 %v358
      %v1185 = vunpack.c.l.b16 %v359
      %v1186 = vunpack.c.l.b16 %v360
      %v1187 = vunpack.c.l.b16 %v361
      %v1188 = vunpack.c.l.b16 %v362
      %v1189 = vunpack.c.l.b16 %v363
      %v1190 = vunpack.c.l.b16 %v364
      %v1191 = vunpack.c.l.b16 %v365
      %v1192 = vunpack.c.l.b16 %v366
      %v1193 = vunpack.c.l.b16 %v367
      %v1194 = vunpack.c.l.b16 %v368
      %v1195 = vunpack.c.l.b16 %v369
      %v1196 = vunpack.c.l.b16 %v370
      %v1197 = vunpack.c.l.b16 %v371
      %v1198 = vunpack.c.l.b16 %v372
      %v1199 = vunpack.c.l.b16 %v373
      %v1200 = vunpack.c.l.b16 %v374
      %v1201 = vunpack.c.l.b16 %v375
      %v1202 = vunpack.c.l.b16 %v376
      %v1203 = vunpack.c.l.b16 %v377
      %v1204 = vunpack.c.l.b16 %v378
      %v1205 = vunpack.c.l.b16 %v379
      %v1206 = vunpack.c.l.b16 %v380
      %v1207 = vunpack.c.l.b16 %v381
      %v1208 = vunpack.c.l.b16 %v382
      %v1209 = vunpack.c.l.b16 %v383
      %v1210 = vunpack.c.l.b16 %v384
      %v1211 = vunpack.c.l.b16 %v385
      %v1212 = vunpack.c.l.b16 %v386
      %v1213 = vunpack.c.l.b16 %v387
      %v1214 = vunpack.c.l.b16 %v388
      %v1215 = vunpack.c.l.b16 %v389
      %v1216 = vunpack.c.l.b16 %v390
      %v1217 = vunpack.c.l.b16 %v391
      %v1218 = vunpack.c.l.b16 %v392
      %v1219 = vunpack.c.l.b16 %v393
      %v1220 = vunpack.c.l.b16 %v394
      %v1221 = vunpack.c.l.b16 %v395
      %v1222 = vunpack.c.l.b16 %v396
      %v1223 = vunpack.c.l.b16 %v397
      %v1224 = vunpack.c.l.b16 %v398
      %v1225 = vunpack.c.l.b16 %v399
      %v1226 = vunpack.c.l.b16 %v400
      %v1227 = vunpack.c.l.b16 %v401
      %v1228 = vunpack.c.l.b16 %v402
      %v1229 = vunpack.c.l.b16 %v403
      %v1230 = vunpack.c.l.b16 %v404
      %v1231 = vunpack.c.l.b16 %v405
      %v1232 = vunpack.c.l.b16 %v406
      %v1233 = vunpack.c.l.b16 %v407
      %v1234 = vunpack.c.l.b16 %v408
      %v1235 = vunpack.c.l.b16 %v409
      %v1236 = vunpack.c.l.b16 %v410
      %v1237 = vunpack.c.l.b16 %v411
      %v1238 = vunpack.c.l.b16 %v412
      %v1239 = vunpack.c.l.b16 %v413
      %v1240 = vunpack.c.l.b16 %v414
      %v1241 = vunpack.c.l.b16 %v415
      %v1242 = vunpack.c.l.b16 %v416
      %v1243 = vunpack.c.l.b16 %v417
      %v1244 = vunpack.c.l.b16 %v418
      %v1245 = vunpack.c.l.b16 %v419
      %v1246 = vunpack.c.l.b16 %v420
      %v1247 = vunpack.c.l.b16 %v421
      %v1248 = vunpack.c.l.b16 %v422
      %v1249 = vunpack.c.l.b16 %v423
      %v1250 = vunpack.c.l.b16 %v424
      %v1251 = vunpack.c.l.b16 %v425
      %v1252 = vunpack.c.l.b16 %v426
      %v1253 = vunpack.c.l.b16 %v427
      %v1254 = vunpack.c.l.b16 %v428
      %v1255 = vunpack.c.l.b16 %v429
      %v1256 = vunpack.c.l.b16 %v430
      %v1257 = vunpack.c.l.b16 %v431
      %v1258 = vunpack.c.l.b16 %v432
      %v1259 = vunpack.c.l.b16 %v433
      %v1260 = vunpack.c.l.b16 %v434
      %v1261 = vunpack.c.l.b16 %v435
      %v1262 = vunpack.c.l.b16 %v436
      %v1263 = vunpack.c.l.b16 %v437
      %v1264 = vunpack.c.l.b16 %v438
      %v1265 = vunpack.c.l.b16 %v439
      %v1266 = vunpack.c.l.b16 %v440
      %v1267 = vunpack.c.l.b16 %v441
      %v1268 = vunpack.c.l.b16 %v442
      %v1269 = vunpack.c.l.b16 %v443
      %v1270 = vunpack.c.l.b16 %v444
      %v1271 = vunpack.c.l.b16 %v445
      %v1272 = vunpack.c.l.b16 %v446
      %v1273 = vunpack.c.l.b16 %v447
      %v1274 = vunpack.c.l.b16 %v448
      %v1275 = vunpack.c.l.b16 %v449
      %v1276 = vunpack.c.l.b16 %v450
      %v1277 = vunpack.c.l.b16 %v451
      %v1278 = vunpack.c.l.b16 %v452
      %v1279 = vunpack.c.l.b16 %v453
      %v1280 = vunpack.c.l.b16 %v454
      %v1281 = vunpack.c.l.b16 %v455
      %v1282 = vunpack.c.l.b16 %v456
      %v1283 = vunpack.c.l.b16 %v457
      %v1284 = vunpack.c.l.b16 %v458
      %v1285 = vunpack.c.l.b16 %v459
      %v1286 = vunpack.c.l.b16 %v460
      %v1287 = vunpack.c.l.b16 %v461
      %v1288 = vunpack.c.l.b16 %v462
      %v1289 = vunpack.c.l.b16 %v463
      %v1290 = vunpack.c.l.b16 %v464
      %v1291 = vunpack.c.l.b16 %v465
      %v1292 = vunpack.c.l.b16 %v466
      %v1293 = vunpack.c.l.b16 %v467
      %v1294 = vunpack.c.l.b16 %v468
      %v1295 = vunpack.c.l.b16 %v469
      %v1296 = vunpack.c.l.b16 %v470
      %v1297 = vunpack.c.l.b16 %v471
      %v1298 = vunpack.c.l.b16 %v472
      %v1299 = vunpack.c.l.b16 %v473
      %v1300 = vunpack.c.l.b16 %v474
      %v1301 = vunpack.c.l.b16 %v475
      %v1302 = vunpack.c.l.b16 %v476
      %v1303 = vunpack.c.l.b16 %v477
      %v1304 = vunpack.c.l.b16 %v478
      %v1305 = vunpack.c.l.b16 %v479
      %v1306 = vunpack.c.l.b16 %v480
      %v1307 = vunpack.c.l.b16 %v481
      %v1308 = vunpack.c.l.b16 %v482
      %v1309 = vunpack.c.l.b16 %v483
      %v1310 = vunpack.c.l.b16 %v484
      %v1311 = vunpack.c.l.b16 %v485
      %v1312 = vunpack.c.l.b16 %v486
      %v1313 = vunpack.c.l.b16 %v487
      %v1314 = vunpack.c.l.b16 %v488
      %v1315 = vunpack.c.l.b16 %v489
      %v1316 = vunpack.c.l.b16 %v490
      %v1317 = vunpack.c.l.b16 %v491
      %v1318 = vunpack.c.l.b16 %v492
      %v1319 = vunpack.c.l.b16 %v493
      %v1320 = vunpack.c.l.b16 %v494
      %v1321 = vunpack.c.l.b16 %v495
      %v1322 = vunpack.c.l.b16 %v496
      %v1323 = vunpack.c.l.b16 %v497
      %v1324 = vunpack.c.l.b16 %v498
      %v1325 = vunpack.c.l.b16 %v499
      %v1326 = vunpack.c.l.b16 %v500
      %v1327 = vunpack.c.l.b16 %v501
      %v1328 = vunpack.c.l.b16 %v502
      %v1329 = vunpack.c.l.b16 %v503
      %v1330 = vunpack.c.l.b16 %v504
      %v1331 = vunpack.c.l.b16 %v505
      %v1332 = vunpack.c.l.b16 %v506
      %v1333 = vunpack.c.l.b16 %v507
      %v1334 = vunpack.c.l.b16 %v508
      %v1335 = vunpack.c.l.b16 %v509
      %v1336 = vunpack.c.l.b16 %v510
      %v1337 = vunpack.c.l.b16 %v511
      %v1338 = vunpack.c.l.b16 %v512
      %v1339 = vunpack.c.l.b16 %v513
      %v1340 = vunpack.c.l.b16 %v514
      %v1341 = vunpack.c.l.b16 %v515
      %v1342 = vunpack.c.l.b16 %v516
      %v1343 = vunpack.c.l.b16 %v517
      %v1344 = vunpack.c.l.b16 %v518
      %v1345 = vunpack.c.l.b16 %v519
      %v1346 = vunpack.c.l.b16 %v520
      %v1347 = vunpack.c.l.b16 %v521
      %v1348 = vunpack.c.l.b16 %v522
      %v1349 = vunpack.c.l.b16 %v523
      %v1350 = vunpack.c.l.b16 %v524
      %v1351 = vunpack.c.l.b16 %v525
      %v1352 = vunpack.c.l.b16 %v526
      %v1353 = vunpack.c.l.b16 %v527
      %v1354 = vunpack.c.l.b16 %v528
      %v1355 = vunpack.c.l.b16 %v529
      %v1356 = vunpack.c.l.b16 %v530
      %v1357 = vunpack.c.l.b16 %v531
      %v1358 = vunpack.c.l.b16 %v532
      %v1359 = vunpack.c.l.b16 %v533
      %v1360 = vunpack.c.l.b16 %v534
      %v1361 = vunpack.c.l.b16 %v535
      %v1362 = vunpack.c.l.b16 %v536
      %v1363 = vunpack.c.l.b16 %v537
      %v1364 = vunpack.c.l.b16 %v538
      %v1365 = vunpack.c.l.b16 %v539
      %v1366 = vunpack.c.l.b16 %v540
      %v1367 = vunpack.c.l.b16 %v541
      %v1368 = vunpack.c.l.b16 %v542
      %v1369 = vunpack.c.l.b16 %v543
      %v1370 = vunpack.c.l.b16 %v544
      %v1371 = vunpack.c.l.b16 %v545
      %v1372 = vunpack.c.l.b16 %v546
      %v1373 = vunpack.c.l.b16 %v547
      %v1374 = vunpack.c.l.b16 %v548
      %v1375 = vunpack.c.l.b16 %v549
      %v1376 = vunpack.c.l.b16 %v550
      %v1377 = vunpack.c.l.b16 %v551
      %v1378 = vunpack.c.l.b16 %v552
      %v1379 = vunpack.c.l.b16 %v553
      %v1380 = vunpack.c.l.b16 %v554
      %v1381 = vunpack.c.l.b16 %v555
      %v1382 = vunpack.c.l.b16 %v556
      %v1383 = vunpack.c.l.b16 %v557
      %v1384 = vunpack.c.l.b16 %v558
      %v1385 = vunpack.c.l.b16 %v559
      %v1386 = vunpack.c.l.b16 %v560
      %v1387 = vunpack.c.l.b16 %v561
      %v1388 = vunpack.c.l.b16 %v562
      %v1389 = vunpack.c.l.b16 %v563
      %v1390 = vunpack.c.l.b16 %v564
      %v1391 = vunpack.c.l.b16 %v565
      %v1392 = vunpack.c.l.b16 %v566
      %v1393 = vunpack.c.l.b16 %v567
      %v1394 = vunpack.c.l.b16 %v568
      %v1395 = vunpack.c.l.b16 %v569
      %v1396 = vunpack.c.l.b16 %v570
      %v1397 = vunpack.c.l.b16 %v571
      %v1398 = vunpack.c.l.b16 %v572
      %v1399 = vunpack.c.l.b16 %v573
      %v1400 = vunpack.c.l.b16 %v574
      %v1401 = vunpack.c.l.b16 %v575
      %v1402 = vunpack.c.l.b16 %v576
      %v1403 = vunpack.c.l.b16 %v577
      %v1404 = vunpack.c.l.b16 %v578
      %v1405 = vunpack.c.l.b16 %v579
      %v1406 = vunpack.c.l.b16 %v580
      %v1407 = vunpack.c.l.b16 %v581
      %v1408 = vunpack.c.l.b16 %v582
      %v1409 = vunpack.c.l.b16 %v583
      %v1410 = vunpack.c.l.b16 %v584
      %v1411 = vunpack.c.l.b16 %v585
      %v1412 = vunpack.c.l.b16 %v586
      %v1413 = vunpack.c.l.b16 %v587
      %v1414 = vunpack.c.l.b16 %v588
      %v1415 = vunpack.c.l.b16 %v589
      %v1416 = vunpack.c.l.b16 %v590
      %v1417 = vunpack.c.l.b16 %v591
      %v1418 = vunpack.c.l.b16 %v592
      %v1419 = vunpack.c.l.b16 %v593
      %v1420 = vunpack.c.l.b16 %v594
      %v1421 = vunpack.c.l.b16 %v595
      %v1422 = vunpack.c.l.b16 %v596
      %v1423 = vunpack.c.l.b16 %v597
      %v1424 = vunpack.c.l.b16 %v598
      %v1425 = vunpack.c.l.b16 %v599
      %v1426 = vunpack.c.l.b16 %v600
      %v1427 = vunpack.c.l.b16 %v601
      %v1428 = vunpack.c.l.b16 %v602
      %v1429 = vunpack.c.l.b16 %v603
      %v1430 = vunpack.c.l.b16 %v604
      %v1431 = vunpack.c.l.b16 %v605
      %v1432 = vunpack.c.l.b16 %v606
      %v1433 = vunpack.c.l.b16 %v607
      %v1434 = vunpack.c.l.b16 %v608
      %v1435 = vunpack.c.l.b16 %v609
      %v1436 = vunpack.c.l.b16 %v610
      %v1437 = vunpack.c.l.b16 %v611
      %v1438 = vunpack.c.l.b16 %v612
      %v1439 = vunpack.c.l.b16 %v613
      %v1440 = vunpack.c.l.b16 %v614
      %v1441 = vunpack.c.l.b16 %v615
      %v1442 = vunpack.c.l.b16 %v616
      %v1443 = vunpack.c.l.b16 %v617
      %v1444 = vunpack.c.l.b16 %v618
      %v1445 = vunpack.c.l.b16 %v619
      %v1446 = vunpack.c.l.b16 %v620
      %v1447 = vunpack.c.l.b16 %v621
      %v1448 = vunpack.c.l.b16 %v622
      %v1449 = vunpack.c.l.b16 %v623
      %v1450 = vunpack.c.l.b16 %v624
      %v1451 = vunpack.c.l.b16 %v625
      %v1452 = vunpack.c.l.b16 %v626
      %v1453 = vunpack.c.l.b16 %v627
      %v1454 = vunpack.c.l.b16 %v628
      %v1455 = vunpack.c.l.b16 %v629
      %v1456 = vunpack.c.l.b16 %v630
      %v1457 = vunpack.c.l.b16 %v631
      %v1458 = vunpack.c.l.b16 %v632
      %v1459 = vunpack.c.l.b16 %v633
      %v1460 = vunpack.c.l.b16 %v634
      %v1461 = vunpack.c.l.b16 %v635
      %v1462 = vunpack.c.l.b16 %v636
      %v1463 = vpack.c.b16 %v1064, %v1063
      %v1464 = vpack.c.b16 %v1066, %v1065
      %v1465 = vpack.c.b16 %v1068, %v1067
      %v1466 = vpack.c.b16 %v1070, %v1069
      %v1467 = vpack.c.b16 %v1072, %v1071
      %v1468 = vpack.c.b16 %v1074, %v1073
      %v1469 = vpack.c.b16 %v1076, %v1075
      %v1470 = vpack.c.b16 %v1078, %v1077
      %v1471 = vpack.c.b16 %v1080, %v1079
      %v1472 = vpack.c.b16 %v1082, %v1081
      %v1473 = vpack.c.b16 %v1084, %v1083
      %v1474 = vpack.c.b16 %v1086, %v1085
      %v1475 = vpack.c.b16 %v1088, %v1087
      %v1476 = vpack.c.b16 %v1090, %v1089
      %v1477 = vpack.c.b16 %v1092, %v1091
      %v1478 = vpack.c.b16 %v1094, %v1093
      %v1479 = vpack.c.b16 %v1096, %v1095
      %v1480 = vpack.c.b16 %v1098, %v1097
      %v1481 = vpack.c.b16 %v1100, %v1099
      %v1482 = vpack.c.b16 %v1102, %v1101
      %v1483 = vpack.c.b16 %v1104, %v1103
      %v1484 = vpack.c.b16 %v1106, %v1105
      %v1485 = vpack.c.b16 %v1108, %v1107
      %v1486 = vpack.c.b16 %v1110, %v1109
      %v1487 = vpack.c.b16 %v1112, %v1111
      %v1488 = vpack.c.b16 %v1114, %v1113
      %v1489 = vpack.c.b16 %v1116, %v1115
      %v1490 = vpack.c.b16 %v1118, %v1117
      %v1491 = vpack.c.b16 %v1120, %v1119
      %v1492 = vpack.c.b16 %v1122, %v1121
      %v1493 = vpack.c.b16 %v1124, %v1123
      %v1494 = vpack.c.b16 %v1126, %v1125
      %v1495 = vpack.c.b16 %v1128, %v1127
      %v1496 = vpack.c.b16 %v1130, %v1129
      %v1497 = vpack.c.b16 %v1132, %v1131
      %v1498 = vpack.c.b16 %v1134, %v1133
      %v1499 = vpack.c.b16 %v1136, %v1135
      %v1500 = vpack.c.b16 %v1138, %v1137
      %v1501 = vpack.c.b16 %v1140, %v1139
      %v1502 = vpack.c.b16 %v1142, %v1141
      %v1503 = vpack.c.b16 %v1144, %v1143
      %v1504 = vpack.c.b16 %v1146, %v1145
      %v1505 = vpack.c.b16 %v1148, %v1147
      %v1506 = vpack.c.b16 %v1150, %v1149
      %v1507 = vpack.c.b16 %v1152, %v1151
      %v1508 = vpack.c.b16 %v1154, %v1153
      %v1509 = vpack.c.b16 %v1156, %v1155
      %v1510 = vpack.c.b16 %v1158, %v1157
      %v1511 = vpack.c.b16 %v1160, %v1159
      %v1512 = vpack.c.b16 %v1162, %v1161
      %v1513 = vpack.c.b16 %v1164, %v1163
      %v1514 = vpack.c.b16 %v1166, %v1165
      %v1515 = vpack.c.b16 %v1168, %v1167
      %v1516 = vpack.c.b16 %v1170, %v1169
      %v1517 = vpack.c.b16 %v1172, %v1171
      %v1518 = vpack.c.b16 %v1174, %v1173
      %v1519 = vpack.c.b16 %v1176, %v1175
      %v1520 = vpack.c.b16 %v1178, %v1177
      %v1521 = vpack.c.b16 %v1180, %v1179
      %v1522 = vpack.c.b16 %v1182, %v1181
      %v1523 = vpack.c.b16 %v1184, %v1183
      %v1524 = vpack.c.b16 %v1186, %v1185
      %v1525 = vpack.c.b16 %v1188, %v1187
      %v1526 = vpack.c.b16 %v1190, %v1189
      %v1527 = vpack.c.b16 %v1192, %v1191
      %v1528 = vpack.c.b16 %v1194, %v1193
      %v1529 = vpack.c.b16 %v1196, %v1195
      %v1530 = vpack.c.b16 %v1198, %v1197
      %v1531 = vpack.c.b16 %v1200, %v1199
      %v1532 = vpack.c.b16 %v1202, %v1201
      %v1533 = vpack.c.b16 %v1204, %v1203
      %v1534 = vpack.c.b16 %v1206, %v1205
      %v1535 = vpack.c.b16 %v1208, %v1207
      %v1536 = vpack.c.b16 %v1210, %v1209
      %v1537 = vpack.c.b16 %v1212, %v1211
      %v1538 = vpack.c.b16 %v1214, %v1213
      %v1539 = vpack.c.b16 %v1216, %v1215
      %v1540 = vpack.c.b16 %v1218, %v1217
      %v1541 = vpack.c.b16 %v1220, %v1219
      %v1542 = vpack.c.b16 %v1222, %v1221
      %v1543 = vpack.c.b16 %v1224, %v1223
      %v1544 = vpack.c.b16 %v1226, %v1225
      %v1545 = vpack.c.b16 %v1228, %v1227
      %v1546 = vpack.c.b16 %v1230, %v1229
      %v1547 = vpack.c.b16 %v1232, %v1231
      %v1548 = vpack.c.b16 %v1234, %v1233
      %v1549 = vpack.c.b16 %v1236, %v1235
      %v1550 = vpack.c.b16 %v1238, %v1237
      %v1551 = vpack.c.b16 %v1240, %v1239
      %v1552 = vpack.c.b16 %v1242, %v1241
      %v1553 = vpack.c.b16 %v1244, %v1243
      %v1554 = vpack.c.b16 %v1246, %v1245
      %v1555 = vpack.c.b16 %v1248, %v1247
      %v1556 = vpack.c.b16 %v1250, %v1249
      %v1557 = vpack.c.b16 %v1252, %v1251
      %v1558 = vpack.c.b16 %v1254, %v1253
      %v1559 = vpack.c.b16 %v1256, %v1255
      %v1560 = vpack.c.b16 %v1258, %v1257
      %v1561 = vpack.c.b16 %v1260, %v1259
      %v1562 = vpack.c.b16 %v1262, %v1261
      %v1563 = vpack.c.b16 %v1264, %v1263
      %v1564 = vpack.c.b16 %v1266, %v1265
      %v1565 = vpack.c.b16 %v1268, %v1267
      %v1566 = vpack.c.b16 %v1270, %v1269
      %v1567 = vpack.c.b16 %v1272, %v1271
      %v1568 = vpack.c.b16 %v1274, %v1273
      %v1569 = vpack.c.b16 %v1276, %v1275
      %v1570 = vpack.c.b16 %v1278, %v1277
      %v1571 = vpack.c.b16 %v1280, %v1279
      %v1572 = vpack.c.b16 %v1282, %v1281
      %v1573 = vpack.c.b16 %v1284, %v1283
      %v1574 = vpack.c.b16 %v1286, %v1285
      %v1575 = vpack.c.b16 %v1288, %v1287
      %v1576 = vpack.c.b16 %v1290, %v1289
      %v1577 = vpack.c.b16 %v1292, %v1291
      %v1578 = vpack.c.b16 %v1294, %v1293
      %v1579 = vpack.c.b16 %v1296, %v1295
      %v1580 = vpack.c.b16 %v1298, %v1297
      %v1581 = vpack.c.b16 %v1300, %v1299
      %v1582 = vpack.c.b16 %v1302, %v1301
      %v1583 = vpack.c.b16 %v1304, %v1303
      %v1584 = vpack.c.b16 %v1306, %v1305
      %v1585 = vpack.c.b16 %v1308, %v1307
      %v1586 = vpack.c.b16 %v1310, %v1309
      %v1587 = vpack.c.b16 %v1312, %v1311
      %v1588 = vpack.c.b16 %v1314, %v1313
      %v1589 = vpack.c.b16 %v1316, %v1315
      %v1590 = vpack.c.b16 %v1318, %v1317
      %v1591 = vpack.c.b16 %v1320, %v1319
      %v1592 = vpack.c.b16 %v1322, %v1321
      %v1593 = vpack.c.b16 %v1324, %v1323
      %v1594 = vpack.c.b16 %v1326, %v1325
      %v1595 = vpack.c.b16 %v1328, %v1327
      %v1596 = vpack.c.b16 %v1330, %v1329
      %v1597 = vpack.c.b16 %v1332, %v1331
      %v1598 = vpack.c.b16 %v1334, %v1333
      %v1599 = vpack.c.b16 %v1336, %v1335
      %v1600 = vpack.c.b16 %v1338, %v1337
      %v1601 = vpack.c.b16 %v1340, %v1339
      %v1602 = vpack.c.b16 %v1342, %v1341
      %v1603 = vpack.c.b16 %v1344, %v1343
      %v1604 = vpack.c.b16 %v1346, %v1345
      %v1605 = vpack.c.b16 %v1348, %v1347
      %v1606 = vpack.c.b16 %v1350, %v1349
      %v1607 = vpack.c.b16 %v1352, %v1351
      %v1608 = vpack.c.b16 %v1354, %v1353
      %v1609 = vpack.c.b16 %v1356, %v1355
      %v1610 = vpack.c.b16 %v1358, %v1357
      %v1611 = vpack.c.b16 %v1360, %v1359
      %v1612 = vpack.c.b16 %v1362, %v1361
      %v1613 = vpack.c.b16 %v1364, %v1363
      %v1614 = vpack.c.b16 %v1366, %v1365
      %v1615 = vpack.c.b16 %v1368, %v1367
      %v1616 = vpack.c.b16 %v1370, %v1369
      %v1617 = vpack.c.b16 %v1372, %v1371
      %v1618 = vpack.c.b16 %v1374, %v1373
      %v1619 = vpack.c.b16 %v1376, %v1375
      %v1620 = vpack.c.b16 %v1378, %v1377
      %v1621 = vpack.c.b16 %v1380, %v1379
      %v1622 = vpack.c.b16 %v1382, %v1381
      %v1623 = vpack.c.b16 %v1384, %v1383
      %v1624 = vpack.c.b16 %v1386, %v1385
      %v1625 = vpack.c.b16 %v1388, %v1387
      %v1626 = vpack.c.b16 %v1390, %v1389
      %v1627 = vpack.c.b16 %v1392, %v1391
      %v1628 = vpack.c.b16 %v1394, %v1393
      %v1629 = vpack.c.b16 %v1396, %v1395
      %v1630 = vpack.c.b16 %v1398, %v1397
      %v1631 = vpack.c.b16 %v1400, %v1399
      %v1632 = vpack.c.b16 %v1402, %v1401
      %v1633 = vpack.c.b16 %v1404, %v1403
      %v1634 = vpack.c.b16 %v1406, %v1405
      %v1635 = vpack.c.b16 %v1408, %v1407
      %v1636 = vpack.c.b16 %v1410, %v1409
      %v1637 = vpack.c.b16 %v1412, %v1411
      %v1638 = vpack.c.b16 %v1414, %v1413
      %v1639 = vpack.c.b16 %v1416, %v1415
      %v1640 = vpack.c.b16 %v1418, %v1417
      %v1641 = vpack.c.b16 %v1420, %v1419
      %v1642 = vpack.c.b16 %v1422, %v1421
      %v1643 = vpack.c.b16 %v1424, %v1423
      %v1644 = vpack.c.b16 %v1426, %v1425
      %v1645 = vpack.c.b16 %v1428, %v1427
      %v1646 = vpack.c.b16 %v1430, %v1429
      %v1647 = vpack.c.b16 %v1432, %v1431
      %v1648 = vpack.c.b16 %v1434, %v1433
      %v1649 = vpack.c.b16 %v1436, %v1435
      %v1650 = vpack.c.b16 %v1438, %v1437
      %v1651 = vpack.c.b16 %v1440, %v1439
      %v1652 = vpack.c.b16 %v1442, %v1441
      %v1653 = vpack.c.b16 %v1444, %v1443
      %v1654 = vpack.c.b16 %v1446, %v1445
      %v1655 = vpack.c.b16 %v1448, %v1447
      %v1656 = vpack.c.b16 %v1450, %v1449
      %v1657 = vpack.c.b16 %v1452, %v1451
      %v1658 = vpack.c.b16 %v1454, %v1453
      %v1659 = vpack.c.b16 %v1456, %v1455
      %v1660 = vpack.c.b16 %v1458, %v1457
      %v1661 = vpack.c.b16 %v1460, %v1459
      %v1662 = vpack.c.b16 %v1462, %v1461
      %1863 = vmatprep.subr.bf16.mxu0 0
      %1864 = vmatpush1.bf16.msra.mxu0 %v1463
      %1865 = vmatprep.subr.bf16.mxu0 0
      %1866 = vmatpush1.bf16.msra.mxu0 %v1464
      %1867 = vmatprep.subr.bf16.mxu0 0
      %1868 = vmatpush1.bf16.msra.mxu0 %v1465
      %1869 = vmatprep.subr.bf16.mxu0 0
      %1870 = vmatpush1.bf16.msra.mxu0 %v1466
      %1871 = vmatprep.subr.bf16.mxu0 0
      %1872 = vmatpush1.bf16.msra.mxu0 %v1467
      %1873 = vmatprep.subr.bf16.mxu0 0
      %1874 = vmatpush1.bf16.msra.mxu0 %v1468
      %1875 = vmatprep.subr.bf16.mxu0 0
      %1876 = vmatpush1.bf16.msra.mxu0 %v1469
      %1877 = vmatprep.subr.bf16.mxu0 0
      %1878 = vmatpush1.bf16.msra.mxu0 %v1470
      %1879 = vmatprep.subr.bf16.mxu0 0
      %1880 = vmatpush1.bf16.msra.mxu0 %v1471
      %1881 = vmatprep.subr.bf16.mxu0 0
      %1882 = vmatpush1.bf16.msra.mxu0 %v1472
      %1883 = vmatprep.subr.bf16.mxu0 0
      %1884 = vmatpush1.bf16.msra.mxu0 %v1473
      %1885 = vmatprep.subr.bf16.mxu0 0
      %1886 = vmatpush1.bf16.msra.mxu0 %v1474
      %1887 = vmatprep.subr.bf16.mxu0 0
      %1888 = vmatpush1.bf16.msra.mxu0 %v1475
      %1889 = vmatprep.subr.bf16.mxu0 0
      %1890 = vmatpush1.bf16.msra.mxu0 %v1476
      %1891 = vmatprep.subr.bf16.mxu0 0
      %1892 = vmatpush1.bf16.msra.mxu0 %v1477
      %1893 = vmatprep.subr.bf16.mxu0 0
      %1894 = vmatpush1.bf16.msra.mxu0 %v1478
      %1895 = vmatprep.mubr.bf16.mxu0 %v638
      %1896 = vmatmul.mubr.bf16.gmra.mrb[0].mxu0 %v637
      %v1897 = vpop.f32.mrb[0].mxu0
      %v1898 = vadd.f32 0.0, %v1897
      %v1899 = vpop.f32.mrb[0].mxu0
      %v1900 = vpop.f32.mrb[0].mxu0
      %v1901 = vpop.f32.mrb[0].mxu0
      %1902 = vdwg.mxu0
      %1903 = vmatprep.subr.bf16.mxu0 0
      %1904 = vmatpush1.bf16.msra.mxu0 %v1479
      %1905 = vmatprep.subr.bf16.mxu0 0
      %1906 = vmatpush1.bf16.msra.mxu0 %v1480
      %1907 = vmatprep.subr.bf16.mxu0 0
      %1908 = vmatpush1.bf16.msra.mxu0 %v1481
      %1909 = vmatprep.subr.bf16.mxu0 0
      %1910 = vmatpush1.bf16.msra.mxu0 %v1482
      %1911 = vmatprep.subr.bf16.mxu0 0
      %1912 = vmatpush1.bf16.msra.mxu0 %v1483
      %1913 = vmatprep.subr.bf16.mxu0 0
      %1914 = vmatpush1.bf16.msra.mxu0 %v1484
      %1915 = vmatprep.subr.bf16.mxu0 0
      %1916 = vmatpush1.bf16.msra.mxu0 %v1485
      %1917 = vmatprep.subr.bf16.mxu0 0
      %1918 = vmatpush1.bf16.msra.mxu0 %v1486
      %1919 = vmatprep.subr.bf16.mxu0 0
      %1920 = vmatpush1.bf16.msra.mxu0 %v1487
      %1921 = vmatprep.subr.bf16.mxu0 0
      %1922 = vmatpush1.bf16.msra.mxu0 %v1488
      %1923 = vmatprep.subr.bf16.mxu0 0
      %1924 = vmatpush1.bf16.msra.mxu0 %v1489
      %1925 = vmatprep.subr.bf16.mxu0 0
      %1926 = vmatpush1.bf16.msra.mxu0 %v1490
      %1927 = vmatprep.subr.bf16.mxu0 0
      %1928 = vmatpush1.bf16.msra.mxu0 %v1491
      %1929 = vmatprep.subr.bf16.mxu0 0
      %1930 = vmatpush1.bf16.msra.mxu0 %v1492
      %1931 = vmatprep.subr.bf16.mxu0 0
      %1932 = vmatpush1.bf16.msra.mxu0 %v1493
      %1933 = vmatprep.subr.bf16.mxu0 0
      %1934 = vmatpush1.bf16.msra.mxu0 %v1494
      %1935 = vmatprep.mubr.bf16.mxu0 %v640
      %1936 = vmatmul.mubr.bf16.gmra.mrb[0].mxu0 %v639
      %v1937 = vpop.f32.mrb[0].mxu0
      %v1938 = vadd.f32 %v1898, %v1937
      %v1939 = vpop.f32.mrb[0].mxu0
      %v1940 = vpop.f32.mrb[0].mxu0
      %v1941 = vpop.f32.mrb[0].mxu0
      %1942 = vdwg.mxu0
      %1943 = vmatprep.subr.bf16.mxu0 0
      %1944 = vmatpush1.bf16.msra.mxu0 %v1495
      %1945 = vmatprep.subr.bf16.mxu0 0
      %1946 = vmatpush1.bf16.msra.mxu0 %v1496
      %1947 = vmatprep.subr.bf16.mxu0 0
      %1948 = vmatpush1.bf16.msra.mxu0 %v1497
      %1949 = vmatprep.subr.bf16.mxu0 0
      %1950 = vmatpush1.bf16.msra.mxu0 %v1498
      %1951 = vmatprep.subr.bf16.mxu0 0
      %1952 = vmatpush1.bf16.msra.mxu0 %v1499
      %1953 = vmatprep.subr.bf16.mxu0 0
      %1954 = vmatpush1.bf16.msra.mxu0 %v1500
      %1955 = vmatprep.subr.bf16.mxu0 0
      %1956 = vmatpush1.bf16.msra.mxu0 %v1501
      %1957 = vmatprep.subr.bf16.mxu0 0
      %1958 = vmatpush1.bf16.msra.mxu0 %v1502
      %1959 = vmatprep.subr.bf16.mxu0 0
      %1960 = vmatpush1.bf16.msra.mxu0 %v1503
      %1961 = vmatprep.subr.bf16.mxu0 0
      %1962 = vmatpush1.bf16.msra.mxu0 %v1504
      %1963 = vmatprep.subr.bf16.mxu0 0
      %1964 = vmatpush1.bf16.msra.mxu0 %v1505
      %1965 = vmatprep.subr.bf16.mxu0 0
      %1966 = vmatpush1.bf16.msra.mxu0 %v1506
      %1967 = vmatprep.subr.bf16.mxu0 0
      %1968 = vmatpush1.bf16.msra.mxu0 %v1507
      %1969 = vmatprep.subr.bf16.mxu0 0
      %1970 = vmatpush1.bf16.msra.mxu0 %v1508
      %1971 = vmatprep.subr.bf16.mxu0 0
      %1972 = vmatpush1.bf16.msra.mxu0 %v1509
      %1973 = vmatprep.subr.bf16.mxu0 0
      %1974 = vmatpush1.bf16.msra.mxu0 %v1510
      %1975 = vmatprep.mubr.bf16.mxu0 %v642
      %1976 = vmatmul.mubr.bf16.gmra.mrb[0].mxu0 %v641
      %v1977 = vpop.f32.mrb[0].mxu0
      %v1978 = vadd.f32 %v1938, %v1977
      %v1979 = vpop.f32.mrb[0].mxu0
      %v1980 = vpop.f32.mrb[0].mxu0
      %v1981 = vpop.f32.mrb[0].mxu0
      %1982 = vdwg.mxu0
      %1983 = vmatprep.subr.bf16.mxu0 0
      %1984 = vmatpush1.bf16.msra.mxu0 %v1511
      %1985 = vmatprep.subr.bf16.mxu0 0
      %1986 = vmatpush1.bf16.msra.mxu0 %v1512
      %1987 = vmatprep.subr.bf16.mxu0 0
      %1988 = vmatpush1.bf16.msra.mxu0 %v1513
      %1989 = vmatprep.subr.bf16.mxu0 0
      %1990 = vmatpush1.bf16.msra.mxu0 %v1514
      %1991 = vmatprep.subr.bf16.mxu0 0
      %1992 = vmatpush1.bf16.msra.mxu0 %v1515
      %1993 = vmatprep.subr.bf16.mxu0 0
      %1994 = vmatpush1.bf16.msra.mxu0 %v1516
      %1995 = vmatprep.subr.bf16.mxu0 0
      %1996 = vmatpush1.bf16.msra.mxu0 %v1517
      %1997 = vmatprep.subr.bf16.mxu0 0
      %1998 = vmatpush1.bf16.msra.mxu0 %v1518
      %1999 = vmatprep.subr.bf16.mxu0 0
      %2000 = vmatpush1.bf16.msra.mxu0 %v1519
      %2001 = vmatprep.subr.bf16.mxu0 0
      %2002 = vmatpush1.bf16.msra.mxu0 %v1520
      %2003 = vmatprep.subr.bf16.mxu0 0
      %2004 = vmatpush1.bf16.msra.mxu0 %v1521
      %2005 = vmatprep.subr.bf16.mxu0 0
      %2006 = vmatpush1.bf16.msra.mxu0 %v1522
      %2007 = vmatprep.subr.bf16.mxu0 0
      %2008 = vmatpush1.bf16.msra.mxu0 %v1523
      %2009 = vmatprep.subr.bf16.mxu0 0
      %2010 = vmatpush1.bf16.msra.mxu0 %v1524
      %2011 = vmatprep.subr.bf16.mxu0 0
      %2012 = vmatpush1.bf16.msra.mxu0 %v1525
      %2013 = vmatprep.subr.bf16.mxu0 0
      %2014 = vmatpush1.bf16.msra.mxu0 %v1526
      %2015 = vmatprep.mubr.bf16.mxu0 %v644
      %2016 = vmatmul.mubr.bf16.gmra.mrb[0].mxu0 %v643
      %v2017 = vpop.f32.mrb[0].mxu0
      %v2018 = vadd.f32 %v1978, %v2017
      %v2019 = vpop.f32.mrb[0].mxu0
      %v2020 = vpop.f32.mrb[0].mxu0
      %v2021 = vpop.f32.mrb[0].mxu0
      %2022 = vdwg.mxu0
      %2023 = vmatprep.subr.bf16.mxu0 0
      %2024 = vmatpush1.bf16.msra.mxu0 %v1527
      %2025 = vmatprep.subr.bf16.mxu0 0
      %2026 = vmatpush1.bf16.msra.mxu0 %v1528
      %2027 = vmatprep.subr.bf16.mxu0 0
      %2028 = vmatpush1.bf16.msra.mxu0 %v1529
      %2029 = vmatprep.subr.bf16.mxu0 0
      %2030 = vmatpush1.bf16.msra.mxu0 %v1530
      %2031 = vmatprep.subr.bf16.mxu0 0
      %2032 = vmatpush1.bf16.msra.mxu0 %v1531
      %2033 = vmatprep.subr.bf16.mxu0 0
      %2034 = vmatpush1.bf16.msra.mxu0 %v1532
      %2035 = vmatprep.subr.bf16.mxu0 0
      %2036 = vmatpush1.bf16.msra.mxu0 %v1533
      %2037 = vmatprep.subr.bf16.mxu0 0
      %2038 = vmatpush1.bf16.msra.mxu0 %v1534
      %2039 = vmatprep.subr.bf16.mxu0 0
      %2040 = vmatpush1.bf16.msra.mxu0 %v1535
      %2041 = vmatprep.subr.bf16.mxu0 0
      %2042 = vmatpush1.bf16.msra.mxu0 %v1536
      %2043 = vmatprep.subr.bf16.mxu0 0
      %2044 = vmatpush1.bf16.msra.mxu0 %v1537
      %2045 = vmatprep.subr.bf16.mxu0 0
      %2046 = vmatpush1.bf16.msra.mxu0 %v1538
      %2047 = vmatprep.subr.bf16.mxu0 0
      %2048 = vmatpush1.bf16.msra.mxu0 %v1539
      %2049 = vmatprep.subr.bf16.mxu0 0
      %2050 = vmatpush1.bf16.msra.mxu0 %v1540
      %2051 = vmatprep.subr.bf16.mxu0 0
      %2052 = vmatpush1.bf16.msra.mxu0 %v1541
      %2053 = vmatprep.subr.bf16.mxu0 0
      %2054 = vmatpush1.bf16.msra.mxu0 %v1542
      %2055 = vmatprep.mubr.bf16.mxu0 %v646
      %2056 = vmatmul.mubr.bf16.gmra.mrb[0].mxu0 %v645
      %v2057 = vpop.f32.mrb[0].mxu0
      %v2058 = vadd.f32 %v2018, %v2057
      %v2059 = vpop.f32.mrb[0].mxu0
      %v2060 = vpop.f32.mrb[0].mxu0
      %v2061 = vpop.f32.mrb[0].mxu0
      %2062 = vdwg.mxu0
      %2063 = vmatprep.subr.bf16.mxu0 0
      %2064 = vmatpush1.bf16.msra.mxu0 %v1543
      %2065 = vmatprep.subr.bf16.mxu0 0
      %2066 = vmatpush1.bf16.msra.mxu0 %v1544
      %2067 = vmatprep.subr.bf16.mxu0 0
      %2068 = vmatpush1.bf16.msra.mxu0 %v1545
      %2069 = vmatprep.subr.bf16.mxu0 0
      %2070 = vmatpush1.bf16.msra.mxu0 %v1546
      %2071 = vmatprep.subr.bf16.mxu0 0
      %2072 = vmatpush1.bf16.msra.mxu0 %v1547
      %2073 = vmatprep.subr.bf16.mxu0 0
      %2074 = vmatpush1.bf16.msra.mxu0 %v1548
      %2075 = vmatprep.subr.bf16.mxu0 0
      %2076 = vmatpush1.bf16.msra.mxu0 %v1549
      %2077 = vmatprep.subr.bf16.mxu0 0
      %2078 = vmatpush1.bf16.msra.mxu0 %v1550
      %2079 = vmatprep.subr.bf16.mxu0 0
      %2080 = vmatpush1.bf16.msra.mxu0 %v1551
      %2081 = vmatprep.subr.bf16.mxu0 0
      %2082 = vmatpush1.bf16.msra.mxu0 %v1552
      %2083 = vmatprep.subr.bf16.mxu0 0
      %2084 = vmatpush1.bf16.msra.mxu0 %v1553
      %2085 = vmatprep.subr.bf16.mxu0 0
      %2086 = vmatpush1.bf16.msra.mxu0 %v1554
      %2087 = vmatprep.subr.bf16.mxu0 0
      %2088 = vmatpush1.bf16.msra.mxu0 %v1555
      %2089 = vmatprep.subr.bf16.mxu0 0
      %2090 = vmatpush1.bf16.msra.mxu0 %v1556
      %2091 = vmatprep.subr.bf16.mxu0 0
      %2092 = vmatpush1.bf16.msra.mxu0 %v1557
      %2093 = vmatprep.subr.bf16.mxu0 0
      %2094 = vmatpush1.bf16.msra.mxu0 %v1558
      %2095 = vmatprep.mubr.bf16.mxu0 %v648
      %2096 = vmatmul.mubr.bf16.gmra.mrb[0].mxu0 %v647
      %v2097 = vpop.f32.mrb[0].mxu0
      %v2098 = vadd.f32 %v2058, %v2097
      %v2099 = vpop.f32.mrb[0].mxu0
      %v2100 = vpop.f32.mrb[0].mxu0
      %v2101 = vpop.f32.mrb[0].mxu0
      %2102 = vdwg.mxu0
      %2103 = vmatprep.subr.bf16.mxu0 0
      %2104 = vmatpush1.bf16.msra.mxu0 %v1559
      %2105 = vmatprep.subr.bf16.mxu0 0
      %2106 = vmatpush1.bf16.msra.mxu0 %v1560
      %2107 = vmatprep.subr.bf16.mxu0 0
      %2108 = vmatpush1.bf16.msra.mxu0 %v1561
      %2109 = vmatprep.subr.bf16.mxu0 0
      %2110 = vmatpush1.bf16.msra.mxu0 %v1562
      %2111 = vmatprep.subr.bf16.mxu0 0
      %2112 = vmatpush1.bf16.msra.mxu0 %v1563
      %2113 = vmatprep.subr.bf16.mxu0 0
      %2114 = vmatpush1.bf16.msra.mxu0 %v1564
      %2115 = vmatprep.subr.bf16.mxu0 0
      %2116 = vmatpush1.bf16.msra.mxu0 %v1565
      %2117 = vmatprep.subr.bf16.mxu0 0
      %2118 = vmatpush1.bf16.msra.mxu0 %v1566
      %2119 = vmatprep.subr.bf16.mxu0 0
      %2120 = vmatpush1.bf16.msra.mxu0 %v1567
      %2121 = vmatprep.subr.bf16.mxu0 0
      %2122 = vmatpush1.bf16.msra.mxu0 %v1568
      %2123 = vmatprep.subr.bf16.mxu0 0
      %2124 = vmatpush1.bf16.msra.mxu0 %v1569
      %2125 = vmatprep.subr.bf16.mxu0 0
      %2126 = vmatpush1.bf16.msra.mxu0 %v1570
      %2127 = vmatprep.subr.bf16.mxu0 0
      %2128 = vmatpush1.bf16.msra.mxu0 %v1571
      %2129 = vmatprep.subr.bf16.mxu0 0
      %2130 = vmatpush1.bf16.msra.mxu0 %v1572
      %2131 = vmatprep.subr.bf16.mxu0 0
      %2132 = vmatpush1.bf16.msra.mxu0 %v1573
      %2133 = vmatprep.subr.bf16.mxu0 0
      %2134 = vmatpush1.bf16.msra.mxu0 %v1574
      %2135 = vmatprep.mubr.bf16.mxu0 %v650
      %2136 = vmatmul.mubr.bf16.gmra.mrb[0].mxu0 %v649
      %v2137 = vpop.f32.mrb[0].mxu0
      %v2138 = vadd.f32 %v2098, %v2137
      %v2139 = vpop.f32.mrb[0].mxu0
      %v2140 = vpop.f32.mrb[0].mxu0
      %v2141 = vpop.f32.mrb[0].mxu0
      %2142 = vdwg.mxu0
      %2143 = vmatprep.subr.bf16.mxu0 0
      %2144 = vmatpush1.bf16.msra.mxu0 %v1575
      %2145 = vmatprep.subr.bf16.mxu0 0
      %2146 = vmatpush1.bf16.msra.mxu0 %v1576
      %2147 = vmatprep.subr.bf16.mxu0 0
      %2148 = vmatpush1.bf16.msra.mxu0 %v1577
      %2149 = vmatprep.subr.bf16.mxu0 0
      %2150 = vmatpush1.bf16.msra.mxu0 %v1578
      %2151 = vmatprep.subr.bf16.mxu0 0
      %2152 = vmatpush1.bf16.msra.mxu0 %v1579
      %2153 = vmatprep.subr.bf16.mxu0 0
      %2154 = vmatpush1.bf16.msra.mxu0 %v1580
      %2155 = vmatprep.subr.bf16.mxu0 0
      %2156 = vmatpush1.bf16.msra.mxu0 %v1581
      %2157 = vmatprep.subr.bf16.mxu0 0
      %2158 = vmatpush1.bf16.msra.mxu0 %v1582
      %2159 = vmatprep.subr.bf16.mxu0 0
      %2160 = vmatpush1.bf16.msra.mxu0 %v1583
      %2161 = vmatprep.subr.bf16.mxu0 0
      %2162 = vmatpush1.bf16.msra.mxu0 %v1584
      %2163 = vmatprep.subr.bf16.mxu0 0
      %2164 = vmatpush1.bf16.msra.mxu0 %v1585
      %2165 = vmatprep.subr.bf16.mxu0 0
      %2166 = vmatpush1.bf16.msra.mxu0 %v1586
      %2167 = vmatprep.subr.bf16.mxu0 0
      %2168 = vmatpush1.bf16.msra.mxu0 %v1587
      %2169 = vmatprep.subr.bf16.mxu0 0
      %2170 = vmatpush1.bf16.msra.mxu0 %v1588
      %2171 = vmatprep.subr.bf16.mxu0 0
      %2172 = vmatpush1.bf16.msra.mxu0 %v1589
      %2173 = vmatprep.subr.bf16.mxu0 0
      %2174 = vmatpush1.bf16.msra.mxu0 %v1590
      %2175 = vmatprep.mubr.bf16.mxu0 %v652
      %2176 = vmatmul.mubr.bf16.gmra.mrb[0].mxu0 %v651
      %v2177 = vpop.f32.mrb[0].mxu0
      %v2178 = vadd.f32 %v2138, %v2177
      %v2179 = vpop.f32.mrb[0].mxu0
      %v2180 = vpop.f32.mrb[0].mxu0
      %v2181 = vpop.f32.mrb[0].mxu0
      %2182 = vdwg.mxu0
      %2183 = vmatprep.subr.bf16.mxu0 0
      %2184 = vmatpush1.bf16.msra.mxu0 %v1591
      %2185 = vmatprep.subr.bf16.mxu0 0
      %2186 = vmatpush1.bf16.msra.mxu0 %v1592
      %2187 = vmatprep.subr.bf16.mxu0 0
      %2188 = vmatpush1.bf16.msra.mxu0 %v1593
      %2189 = vmatprep.subr.bf16.mxu0 0
      %2190 = vmatpush1.bf16.msra.mxu0 %v1594
      %2191 = vmatprep.subr.bf16.mxu0 0
      %2192 = vmatpush1.bf16.msra.mxu0 %v1595
      %2193 = vmatprep.subr.bf16.mxu0 0
      %2194 = vmatpush1.bf16.msra.mxu0 %v1596
      %2195 = vmatprep.subr.bf16.mxu0 0
      %2196 = vmatpush1.bf16.msra.mxu0 %v1597
      %2197 = vmatprep.subr.bf16.mxu0 0
      %2198 = vmatpush1.bf16.msra.mxu0 %v1598
      %2199 = vmatprep.subr.bf16.mxu0 0
      %2200 = vmatpush1.bf16.msra.mxu0 %v1599
      %2201 = vmatprep.subr.bf16.mxu0 0
      %2202 = vmatpush1.bf16.msra.mxu0 %v1600
      %2203 = vmatprep.subr.bf16.mxu0 0
      %2204 = vmatpush1.bf16.msra.mxu0 %v1601
      %2205 = vmatprep.subr.bf16.mxu0 0
      %2206 = vmatpush1.bf16.msra.mxu0 %v1602
      %2207 = vmatprep.subr.bf16.mxu0 0
      %2208 = vmatpush1.bf16.msra.mxu0 %v1603
      %2209 = vmatprep.subr.bf16.mxu0 0
      %2210 = vmatpush1.bf16.msra.mxu0 %v1604
      %2211 = vmatprep.subr.bf16.mxu0 0
      %2212 = vmatpush1.bf16.msra.mxu0 %v1605
      %2213 = vmatprep.subr.bf16.mxu0 0
      %2214 = vmatpush1.bf16.msra.mxu0 %v1606
      %2215 = vmatprep.mubr.bf16.mxu0 %v654
      %2216 = vmatmul.mubr.bf16.gmra.mrb[0].mxu0 %v653
      %v2217 = vpop.f32.mrb[0].mxu0
      %v2218 = vadd.f32 %v2178, %v2217
      %v2219 = vpop.f32.mrb[0].mxu0
      %v2220 = vpop.f32.mrb[0].mxu0
      %v2221 = vpop.f32.mrb[0].mxu0
      %2222 = vdwg.mxu0
      %2223 = vmatprep.subr.bf16.mxu0 0
      %2224 = vmatpush1.bf16.msra.mxu0 %v1607
      %2225 = vmatprep.subr.bf16.mxu0 0
      %2226 = vmatpush1.bf16.msra.mxu0 %v1608
      %2227 = vmatprep.subr.bf16.mxu0 0
      %2228 = vmatpush1.bf16.msra.mxu0 %v1609
      %2229 = vmatprep.subr.bf16.mxu0 0
      %2230 = vmatpush1.bf16.msra.mxu0 %v1610
      %2231 = vmatprep.subr.bf16.mxu0 0
      %2232 = vmatpush1.bf16.msra.mxu0 %v1611
      %2233 = vmatprep.subr.bf16.mxu0 0
      %2234 = vmatpush1.bf16.msra.mxu0 %v1612
      %2235 = vmatprep.subr.bf16.mxu0 0
      %2236 = vmatpush1.bf16.msra.mxu0 %v1613
      %2237 = vmatprep.subr.bf16.mxu0 0
      %2238 = vmatpush1.bf16.msra.mxu0 %v1614
      %2239 = vmatprep.subr.bf16.mxu0 0
      %2240 = vmatpush1.bf16.msra.mxu0 %v1615
      %2241 = vmatprep.subr.bf16.mxu0 0
      %2242 = vmatpush1.bf16.msra.mxu0 %v1616
      %2243 = vmatprep.subr.bf16.mxu0 0
      %2244 = vmatpush1.bf16.msra.mxu0 %v1617
      %2245 = vmatprep.subr.bf16.mxu0 0
      %2246 = vmatpush1.bf16.msra.mxu0 %v1618
      %2247 = vmatprep.subr.bf16.mxu0 0
      %2248 = vmatpush1.bf16.msra.mxu0 %v1619
      %2249 = vmatprep.subr.bf16.mxu0 0
      %2250 = vmatpush1.bf16.msra.mxu0 %v1620
      %2251 = vmatprep.subr.bf16.mxu0 0
      %2252 = vmatpush1.bf16.msra.mxu0 %v1621
      %2253 = vmatprep.subr.bf16.mxu0 0
      %2254 = vmatpush1.bf16.msra.mxu0 %v1622
      %2255 = vmatprep.mubr.bf16.mxu0 %v656
      %2256 = vmatmul.mubr.bf16.gmra.mrb[0].mxu0 %v655
      %v2257 = vpop.f32.mrb[0].mxu0
      %v2258 = vadd.f32 %v2218, %v2257
      %v2259 = vpop.f32.mrb[0].mxu0
      %v2260 = vpop.f32.mrb[0].mxu0
      %v2261 = vpop.f32.mrb[0].mxu0
      %2262 = vdwg.mxu0
      %2263 = vmatprep.subr.bf16.mxu0 0
      %2264 = vmatpush1.bf16.msra.mxu0 %v1623
      %2265 = vmatprep.subr.bf16.mxu0 0
      %2266 = vmatpush1.bf16.msra.mxu0 %v1624
      %2267 = vmatprep.subr.bf16.mxu0 0
      %2268 = vmatpush1.bf16.msra.mxu0 %v1625
      %2269 = vmatprep.subr.bf16.mxu0 0
      %2270 = vmatpush1.bf16.msra.mxu0 %v1626
      %2271 = vmatprep.subr.bf16.mxu0 0
      %2272 = vmatpush1.bf16.msra.mxu0 %v1627
      %2273 = vmatprep.subr.bf16.mxu0 0
      %2274 = vmatpush1.bf16.msra.mxu0 %v1628
      %2275 = vmatprep.subr.bf16.mxu0 0
      %2276 = vmatpush1.bf16.msra.mxu0 %v1629
      %2277 = vmatprep.subr.bf16.mxu0 0
      %2278 = vmatpush1.bf16.msra.mxu0 %v1630
      %2279 = vmatprep.subr.bf16.mxu0 0
      %2280 = vmatpush1.bf16.msra.mxu0 %v1631
      %2281 = vmatprep.subr.bf16.mxu0 0
      %2282 = vmatpush1.bf16.msra.mxu0 %v1632
      %2283 = vmatprep.subr.bf16.mxu0 0
      %2284 = vmatpush1.bf16.msra.mxu0 %v1633
      %2285 = vmatprep.subr.bf16.mxu0 0
      %2286 = vmatpush1.bf16.msra.mxu0 %v1634
      %2287 = vmatprep.subr.bf16.mxu0 0
      %2288 = vmatpush1.bf16.msra.mxu0 %v1635
      %2289 = vmatprep.subr.bf16.mxu0 0
      %2290 = vmatpush1.bf16.msra.mxu0 %v1636
      %2291 = vmatprep.subr.bf16.mxu0 0
      %2292 = vmatpush1.bf16.msra.mxu0 %v1637
      %2293 = vmatprep.subr.bf16.mxu0 0
      %2294 = vmatpush1.bf16.msra.mxu0 %v1638
      %2295 = vmatprep.mubr.bf16.mxu0 %v658
      %2296 = vmatmul.mubr.bf16.gmra.mrb[0].mxu0 %v657
      %v2297 = vpop.f32.mrb[0].mxu0
      %v2298 = vadd.f32 %v2258, %v2297
      %v2299 = vpop.f32.mrb[0].mxu0
      %v2300 = vpop.f32.mrb[0].mxu0
      %v2301 = vpop.f32.mrb[0].mxu0
      %2302 = vdwg.mxu0
      %2303 = vmatprep.subr.bf16.mxu0 0
      %2304 = vmatpush1.bf16.msra.mxu0 %v1639
      %2305 = vmatprep.subr.bf16.mxu0 0
      %2306 = vmatpush1.bf16.msra.mxu0 %v1640
      %2307 = vmatprep.subr.bf16.mxu0 0
      %2308 = vmatpush1.bf16.msra.mxu0 %v1641
      %2309 = vmatprep.subr.bf16.mxu0 0
      %2310 = vmatpush1.bf16.msra.mxu0 %v1642
      %2311 = vmatprep.subr.bf16.mxu0 0
      %2312 = vmatpush1.bf16.msra.mxu0 %v1643
      %2313 = vmatprep.subr.bf16.mxu0 0
      %2314 = vmatpush1.bf16.msra.mxu0 %v1644
      %2315 = vmatprep.subr.bf16.mxu0 0
      %2316 = vmatpush1.bf16.msra.mxu0 %v1645
      %2317 = vmatprep.subr.bf16.mxu0 0
      %2318 = vmatpush1.bf16.msra.mxu0 %v1646
      %2319 = vmatprep.subr.bf16.mxu0 0
      %2320 = vmatpush1.bf16.msra.mxu0 %v1647
      %2321 = vmatprep.subr.bf16.mxu0 0
      %2322 = vmatpush1.bf16.msra.mxu0 %v1648
      %2323 = vmatprep.subr.bf16.mxu0 0
      %2324 = vmatpush1.bf16.msra.mxu0 %v1649
      %2325 = vmatprep.subr.bf16.mxu0 0
      %2326 = vmatpush1.bf16.msra.mxu0 %v1650
      %2327 = vmatprep.subr.bf16.mxu0 0
      %2328 = vmatpush1.bf16.msra.mxu0 %v1651
      %2329 = vmatprep.subr.bf16.mxu0 0
      %2330 = vmatpush1.bf16.msra.mxu0 %v1652
      %2331 = vmatprep.subr.bf16.mxu0 0
      %2332 = vmatpush1.bf16.msra.mxu0 %v1653
      %2333 = vmatprep.subr.bf16.mxu0 0
      %2334 = vmatpush1.bf16.msra.mxu0 %v1654
      %2335 = vmatprep.mubr.bf16.mxu0 %v660
      %2336 = vmatmul.mubr.bf16.gmra.mrb[0].mxu0 %v659
      %v2337 = vpop.f32.mrb[0].mxu0
      %v2338 = vadd.f32 %v2298, %v2337
      %v2339 = vpop.f32.mrb[0].mxu0
      %v2340 = vpop.f32.mrb[0].mxu0
      %v2341 = vpop.f32.mrb[0].mxu0
      %2342 = vdwg.mxu0
      %2343 = vmatprep.subr.bf16.mxu0 0
      %2344 = vmatpush1.bf16.msra.mxu0 %v1655
      %2345 = vmatprep.subr.bf16.mxu0 0
      %2346 = vmatpush1.bf16.msra.mxu0 %v1656
      %2347 = vmatprep.subr.bf16.mxu0 0
      %2348 = vmatpush1.bf16.msra.mxu0 %v1657
      %2349 = vmatprep.subr.bf16.mxu0 0
      %2350 = vmatpush1.bf16.msra.mxu0 %v1658
      %2351 = vmatprep.subr.bf16.mxu0 0
      %2352 = vmatpush1.bf16.msra.mxu0 %v1659
      %2353 = vmatprep.subr.bf16.mxu0 0
      %2354 = vmatpush1.bf16.msra.mxu0 %v1660
      %2355 = vmatprep.subr.bf16.mxu0 0
      %2356 = vmatpush1.bf16.msra.mxu0 %v1661
      %2357 = vmatprep.subr.bf16.mxu0 0
      %2358 = vmatpush1.bf16.msra.mxu0 %v1662
      %2359 = vmatprep.subr.bf16.mxu0 0
      %2360 = vmatpush1.bf16.msra.mxu0 0
      %2361 = vmatprep.subr.bf16.mxu0 0
      %2362 = vmatpush1.bf16.msra.mxu0 0
      %2363 = vmatprep.subr.bf16.mxu0 0
      %2364 = vmatpush1.bf16.msra.mxu0 0
      %2365 = vmatprep.subr.bf16.mxu0 0
      %2366 = vmatpush1.bf16.msra.mxu0 0
      %2367 = vmatprep.subr.bf16.mxu0 0
      %2368 = vmatpush1.bf16.msra.mxu0 0
      %2369 = vmatprep.subr.bf16.mxu0 0
      %2370 = vmatpush1.bf16.msra.mxu0 0
      %2371 = vmatprep.subr.bf16.mxu0 0
      %2372 = vmatpush1.bf16.msra.mxu0 0
      %2373 = vmatprep.subr.bf16.mxu0 0
      %2374 = vmatpush1.bf16.msra.mxu0 0
      %2375 = vmatprep.mubr.bf16.mxu0 0
      %2376 = vmatmul.mubr.bf16.gmra.mrb[0].mxu0 %v661
      %v2377 = vpop.f32.mrb[0].mxu0
      %v2378 = vadd.f32 %v2338, %v2377
      %v2379 = vpop.f32.mrb[0].mxu0
      %v2380 = vpop.f32.mrb[0].mxu0
      %v2381 = vpop.f32.mrb[0].mxu0
      %2382 = vdwg.mxu0
      %v2383 = vadd.f32 %v662, %v2378
      %2384 = vst [vmem:[#allocation2] sm:$0xff] %v2383
      %p2385 = scmp.eq.s32.totalorder %s18, 8
      // Predicated region
      $region33: #{autoencoder_forward.8} parent=27 // pred_check
        %p2386 = pneg %p2385
      $region34: #{autoencoder_forward.8} parent=27 // pred_check_branch
        %2388 = sbr.rel (%p2386) target = $region36
      $region35: #{autoencoder_forward.8} parent=27 // pred_region
        %v2389 = vld [vmem:[#allocation2] sm:$0xff]
        %2390 = vst [vmem:[%s205] sm:$0xff] %v2389
      $region36: #{autoencoder_forward.8} parent=27 // pred_fallthru
        _
      %p2391 = scmp.lt.s32.totalorder %s17, 1
      %s2392 = scalar_select %p2391, %s17, 1
      %s2393 = smul.addr %s2392, 8
      %s2394 = scalar_lea.vmem %s2, %s2393
      // Predicated region
      $region37: #{autoencoder_forward.8} parent=27 // pred_check
        %p2395 = pneg %p103
      $region38: #{autoencoder_forward.8} parent=27 // pred_check_branch
        %2397 = sbr.rel (%p2395) target = $region40
      $region39: #{autoencoder_forward.8} parent=27 // pred_region
        _
      $region40: #{autoencoder_forward.8} parent=27 // pred_fallthru
        _
    $region28: #{autoencoder_forward.8} parent=5 // pred_fallthru
      _
    %p2398 = scmp.le.s32.totalorder 2, %s8
    // Predicated region
    $region41: #{autoencoder_forward.8} parent=5 // pred_check
      %p2399 = pneg %p2398
    $region42: #{autoencoder_forward.8} parent=5 // pred_check_branch
      %2401 = sbr.rel (%p2399) target = $region44
    $region43: #{autoencoder_forward.8} parent=5 // pred_region
      %s2402 = ssub.s32 %s8, 2
      // Predicated region
      $region45: #{autoencoder_forward.8} parent=43 // pred_check
        %p2403 = pneg %p109
      $region46: #{autoencoder_forward.8} parent=43 // pred_check_branch
        %2405 = sbr.rel (%p2403) target = $region48
      $region47: #{autoencoder_forward.8} parent=43 // pred_region
        %p2406 = scmp.lt.s32.totalorder %s19, 1
        %s2407 = scalar_select %p2406, %s19, 1
        %s2408 = smul.addr %s2407, 8
        %s2409 = scalar_lea.vmem %s2, %s2408
      $region48: #{autoencoder_forward.8} parent=43 // pred_fallthru
        _
    $region44: #{autoencoder_forward.8} parent=5 // pred_fallthru
      _
  $region6: #{autoencoder_forward.8} parent=0 // loop_footer
    %s12 = sadd.s32 1, %s8
  $region7: #{autoencoder_forward.8} parent=0 // loop_footer_branch
    %7 = sbr.rel target = $region3
  $region8: #{autoencoder_forward.8} parent=0 // loop_exit
    _

// kernel: autoencoder_forward.9
$region0: #{autoencoder_forward.9}
  #allocation0 [shape = 'u32[]', space=smem, size = 0x4, offset = 0x4, fixed_abs, tag = 'smem constant byte address 0x4 - core index']
  #allocation1 [shape = 'u32[144,128]{1,0:T(1,128)}', space=vmem, size = 0x12000, scoped, tag = 'internal scratch']
  %s0 = inlined_call_operand.vmem [shape: f32[8,128], index: 0, kind: input, shape index: {}]
  %s1 = inlined_call_operand.vmem [shape: bf16[128,57600], index: 1, kind: input, shape index: {}]
  %s2 = inlined_call_operand.vmem [shape: f32[1,57600], index: 2, kind: input, shape index: {}]
  %s3 = inlined_call_operand.vmem [shape: f32[8,57600], index: 3, kind: output, shape index: {}]
  %s4 = sld [smem:[#allocation0]]
  $region71: #{autoencoder_forward.9} parent=0
    _
  %s6 = ssub.s32 1, %s4
  %s7 = scalar_select 0, %s6, %s4
  $region1: #{autoencoder_forward.9} parent=0
    #allocation2 [shape = 'u8[2949120]{0}', space=vmem, size = 0x2d0000, scoped, tag = 'input window, operand 1']
    loop: start=0, step=1, limit=12
    $region2: #{autoencoder_forward.9} parent=1 // loop_pre_header
      _
    $region3: #{autoencoder_forward.9} parent=1 // loop_header
      %s9 = sphi 0, %s13
      %p10 = scmp.ge.s32.totalorder %s9, 12
      %s16 = sphi 0, %s28
      %s17 = sphi 0, %s24
      %s18 = sphi 0, %s16
      %s19 = sphi 0, %s17
      %s20 = sphi 0, %s18
      %s21 = sphi 0, %s19
      %s31 = sphi 0, %s33
      %s34 = sphi 0, %s31
      %s35 = sphi 0, %s34
      %s51 = sphi 0, %s35
      %s57 = sphi 0, %s59
      %s60 = sphi 0, %s57
      %s61 = sphi 0, %s60
      %s77 = sphi 0, %s61
      %s83 = sphi 0, %s85
      %s86 = sphi 0, %s83
      %s87 = sphi 0, %s86
      %s103 = sphi 0, %s87
      %s111 = sphi 0, %s113
      %s114 = sphi 0, %s111
      %s115 = sphi 0, %s114
      %s131 = sphi 0, %s115
    $region4: #{autoencoder_forward.9} parent=1 // loop_header_branch
      %12 = sbr.rel (%p10) target = $region8
    $region5: #{autoencoder_forward.9} parent=1 // loop_body
      %s14 = ssub.s32 %s9, 1
      %s15 = ssub.s32 %s9, 2
      %s22 = sadd.s32 1, %s17
      %p23 = scmp.ge.s32.totalorder %s22, 10
      %s24 = scalar_select %p23, 0, %s22
      %s25 = sadd.s32 1, %s16
      %s26 = scalar_select %p23, %s25, %s16
      %p27 = scmp.ge.s32.totalorder %s26, 1
      %s28 = scalar_select %p27, 0, %s26
      %s29 = ssub.s32 %s16, %s28
      %p30 = scmp.eq.s32.totalorder %s29, 0
      %s32 = sadd.s32 %s31, 1
      %s33 = scalar_select %p30, %s31, %s32
      %p36 = pneg %p30
      %p37 = scmp.eq.s32.totalorder %s9, 9
      %p38 = por %p36, %p37
      %p39 = scmp.ne.s32.totalorder %s31, %s34
      %p40 = scmp.eq.s32.totalorder %s9, 0
      %p41 = por %p39, %p40
      %p42 = scmp.ne.s32.totalorder %s31, %s34
      %p43 = scmp.eq.s32.totalorder %s14, 9
      %p44 = por %p42, %p43
      %p45 = scmp.ne.s32.totalorder %s34, %s35
      %p46 = scmp.eq.s32.totalorder %s14, 0
      %p47 = por %p45, %p46
      %p48 = scmp.ne.s32.totalorder %s34, %s35
      %p49 = scmp.eq.s32.totalorder %s15, 9
      %p50 = por %p48, %p49
      %p52 = scmp.ne.s32.totalorder %s35, %s51
      %p53 = scmp.eq.s32.totalorder %s15, 0
      %p54 = por %p52, %p53
      %s55 = ssub.s32 %s17, %s24
      %p56 = scmp.eq.s32.totalorder %s55, 0
      %s58 = sadd.s32 %s57, 1
      %s59 = scalar_select %p56, %s57, %s58
      %p62 = pneg %p56
      %p63 = scmp.eq.s32.totalorder %s9, 9
      %p64 = por %p62, %p63
      %p65 = scmp.ne.s32.totalorder %s57, %s60
      %p66 = scmp.eq.s32.totalorder %s9, 0
      %p67 = por %p65, %p66
      %p68 = scmp.ne.s32.totalorder %s57, %s60
      %p69 = scmp.eq.s32.totalorder %s14, 9
      %p70 = por %p68, %p69
      %p71 = scmp.ne.s32.totalorder %s60, %s61
      %p72 = scmp.eq.s32.totalorder %s14, 0
      %p73 = por %p71, %p72
      %p74 = scmp.ne.s32.totalorder %s60, %s61
      %p75 = scmp.eq.s32.totalorder %s15, 9
      %p76 = por %p74, %p75
      %p78 = scmp.ne.s32.totalorder %s61, %s77
      %p79 = scmp.eq.s32.totalorder %s15, 0
      %p80 = por %p78, %p79
      %s81 = ssub.s32 %s17, %s24
      %p82 = scmp.eq.s32.totalorder %s81, 0
      %s84 = sadd.s32 %s83, 1
      %s85 = scalar_select %p82, %s83, %s84
      %p88 = pneg %p82
      %p89 = scmp.eq.s32.totalorder %s9, 9
      %p90 = por %p88, %p89
      %p91 = scmp.ne.s32.totalorder %s83, %s86
      %p92 = scmp.eq.s32.totalorder %s9, 0
      %p93 = por %p91, %p92
      %p94 = scmp.ne.s32.totalorder %s83, %s86
      %p95 = scmp.eq.s32.totalorder %s14, 9
      %p96 = por %p94, %p95
      %p97 = scmp.ne.s32.totalorder %s86, %s87
      %p98 = scmp.eq.s32.totalorder %s14, 0
      %p99 = por %p97, %p98
      %p100 = scmp.ne.s32.totalorder %s86, %s87
      %p101 = scmp.eq.s32.totalorder %s15, 9
      %p102 = por %p100, %p101
      %p104 = scmp.ne.s32.totalorder %s87, %s103
      %p105 = scmp.eq.s32.totalorder %s15, 0
      %p106 = por %p104, %p105
      %s107 = ssub.s32 %s16, %s28
      %s108 = ssub.s32 %s17, %s24
      %s109 = sor.u32 %s107, %s108
      %p110 = scmp.eq.s32.totalorder %s109, 0
      %s112 = sadd.s32 %s111, 1
      %s113 = scalar_select %p110, %s111, %s112
      %p116 = pneg %p110
      %p117 = scmp.eq.s32.totalorder %s9, 9
      %p118 = por %p116, %p117
      %p119 = scmp.ne.s32.totalorder %s111, %s114
      %p120 = scmp.eq.s32.totalorder %s9, 0
      %p121 = por %p119, %p120
      %p122 = scmp.ne.s32.totalorder %s111, %s114
      %p123 = scmp.eq.s32.totalorder %s14, 9
      %p124 = por %p122, %p123
      %p125 = scmp.ne.s32.totalorder %s114, %s115
      %p126 = scmp.eq.s32.totalorder %s14, 0
      %p127 = por %p125, %p126
      %p128 = scmp.ne.s32.totalorder %s114, %s115
      %p129 = scmp.eq.s32.totalorder %s15, 9
      %p130 = por %p128, %p129
      %p132 = scmp.ne.s32.totalorder %s115, %s131
      %p133 = scmp.eq.s32.totalorder %s15, 0
      %p134 = por %p132, %p133
      %p135 = scmp.le.s32.totalorder 1, %s9
      %p136 = scmp.lt.s32.totalorder %s9, 11
      %p137 = pnand %p135, %p136
      %p138 = pneg %p137
      // Predicated region
      $region9: #{autoencoder_forward.9} parent=5 // pred_check
        _
      $region10: #{autoencoder_forward.9} parent=5 // pred_check_branch
        %140 = sbr.rel (%p137) target = $region12
      $region11: #{autoencoder_forward.9} parent=5 // pred_region
        %s141 = ssub.s32 %s9, 1
        // Predicated region
        $region13: #{autoencoder_forward.9} parent=11 // pred_check
          %p142 = pneg %p47
        $region14: #{autoencoder_forward.9} parent=11 // pred_check_branch
          %144 = sbr.rel (%p142) target = $region16
        $region15: #{autoencoder_forward.9} parent=11 // pred_region
          %p145 = scmp.lt.s32.totalorder %s18, 0
          %s146 = scalar_select %p145, %s18, 0
          %s147 = smul.addr %s146, 8
          %s148 = scalar_lea.vmem %s0, %s147
        $region16: #{autoencoder_forward.9} parent=11 // pred_fallthru
          _
      $region12: #{autoencoder_forward.9} parent=5 // pred_fallthru
        _
      %p149 = scmp.lt.s32.totalorder %s9, 10
      // Predicated region
      $region17: #{autoencoder_forward.9} parent=5 // pred_check
        %p150 = pneg %p149
      $region18: #{autoencoder_forward.9} parent=5 // pred_check_branch
        %152 = sbr.rel (%p150) target = $region20
      $region19: #{autoencoder_forward.9} parent=5 // pred_region
        // Predicated region
        $region21: #{autoencoder_forward.9} parent=19 // pred_check
          %p153 = pneg %p67
        $region22: #{autoencoder_forward.9} parent=19 // pred_check_branch
          %155 = sbr.rel (%p153) target = $region24
        $region23: #{autoencoder_forward.9} parent=19 // pred_region
          %s156 = sand.u32 %s57, 1
          %s157 = sand.u32 %s57, 1
          %s158 = smul.addr %s157, 2880
          %s159 = scalar_lea.vmem [#allocation2], %s158
          %s160 = smul.u32 45, %s17
          %s161 = smul.addr %s160, 4
          %s162 = scalar_lea.vmem %s1, %s161
          // Predicated region
          $region25: #{autoencoder_forward.9} parent=23 // pred_check
            _
          $region26: #{autoencoder_forward.9} parent=23 // pred_check_branch
            %164 = sbr.rel (0) target = $region28
          $region27: #{autoencoder_forward.9} parent=23 // pred_region
            // Predicated region
            $region29: #{autoencoder_forward.9} parent=27 // pred_check
              _
            $region30: #{autoencoder_forward.9} parent=27 // pred_check_branch
              %166 = sbr.rel (0) target = $region32
            $region31: #{autoencoder_forward.9} parent=27 // pred_region
              %s167 = scalar_lea.vmem %s162, 176
              %s168 = scalar_lea.vmem %s159, 176 [#allocation2]
              loop: start=0, step=1, limit=1
              $region33: #{autoencoder_forward.9} parent=31 // loop_pre_header
                _
              $region34: #{autoencoder_forward.9} parent=31 // loop_header
                %s170 = sphi 0, %s174
                %p171 = scmp.ge.s32.totalorder %s170, 1
                %s175 = sphi %s162, %s162
                %s176 = sphi %s159, %s159
              $region35: #{autoencoder_forward.9} parent=31 // loop_header_branch
                %173 = sbr.rel (%p171) target = $region39
              $region36: #{autoencoder_forward.9} parent=31 // loop_body
                %v177 = vld [vmem:[%s175] sm:$0xff]
                %178 = vst [vmem:[%s176] sm:$0xff] %v177
                %v179 = vld [vmem:[%s175 + $0x8] sm:$0xff]
                %180 = vst [vmem:[%s176 + $0x8] sm:$0xff] %v179
                %v181 = vld [vmem:[%s175 + $0x10] sm:$0xff]
                %182 = vst [vmem:[%s176 + $0x10] sm:$0xff] %v181
                %v183 = vld [vmem:[%s175 + $0x18] sm:$0xff]
                %184 = vst [vmem:[%s176 + $0x18] sm:$0xff] %v183
                %v185 = vld [vmem:[%s175 + $0x20] sm:$0xff]
                %186 = vst [vmem:[%s176 + $0x20] sm:$0xff] %v185
                %v187 = vld [vmem:[%s175 + $0x28] sm:$0xff]
                %188 = vst [vmem:[%s176 + $0x28] sm:$0xff] %v187
                %v189 = vld [vmem:[%s175 + $0x30] sm:$0xff]
                %190 = vst [vmem:[%s176 + $0x30] sm:$0xff] %v189
                %v191 = vld [vmem:[%s175 + $0x38] sm:$0xff]
                %192 = vst [vmem:[%s176 + $0x38] sm:$0xff] %v191
                %v193 = vld [vmem:[%s175 + $0x40] sm:$0xff]
                %194 = vst [vmem:[%s176 + $0x40] sm:$0xff] %v193
                %v195 = vld [vmem:[%s175 + $0x48] sm:$0xff]
                %196 = vst [vmem:[%s176 + $0x48] sm:$0xff] %v195
                %v197 = vld [vmem:[%s175 + $0x50] sm:$0xff]
                %198 = vst [vmem:[%s176 + $0x50] sm:$0xff] %v197
                %v199 = vld [vmem:[%s175 + $0x58] sm:$0xff]
                %200 = vst [vmem:[%s176 + $0x58] sm:$0xff] %v199
                %v201 = vld [vmem:[%s175 + $0x60] sm:$0xff]
                %202 = vst [vmem:[%s176 + $0x60] sm:$0xff] %v201
                %v203 = vld [vmem:[%s175 + $0x68] sm:$0xff]
                %204 = vst [vmem:[%s176 + $0x68] sm:$0xff] %v203
                %v205 = vld [vmem:[%s175 + $0x70] sm:$0xff]
                %206 = vst [vmem:[%s176 + $0x70] sm:$0xff] %v205
                %v207 = vld [vmem:[%s175 + $0x78] sm:$0xff]
                %208 = vst [vmem:[%s176 + $0x78] sm:$0xff] %v207
                %v209 = vld [vmem:[%s175 + $0x80] sm:$0xff]
                %210 = vst [vmem:[%s176 + $0x80] sm:$0xff] %v209
                %v211 = vld [vmem:[%s175 + $0x88] sm:$0xff]
                %212 = vst [vmem:[%s176 + $0x88] sm:$0xff] %v211
                %v213 = vld [vmem:[%s175 + $0x90] sm:$0xff]
                %214 = vst [vmem:[%s176 + $0x90] sm:$0xff] %v213
                %v215 = vld [vmem:[%s175 + $0x98] sm:$0xff]
                %216 = vst [vmem:[%s176 + $0x98] sm:$0xff] %v215
                %v217 = vld [vmem:[%s175 + $0xa0] sm:$0xff]
                %218 = vst [vmem:[%s176 + $0xa0] sm:$0xff] %v217
                %v219 = vld [vmem:[%s175 + $0xa8] sm:$0xff]
                %220 = vst [vmem:[%s176 + $0xa8] sm:$0xff] %v219
                %v221 = vld [vmem:[%s175 + $0x708] sm:$0xff]
                %222 = vst [vmem:[%s176 + $0xb4] sm:$0xff] %v221
                %v223 = vld [vmem:[%s175 + $0x710] sm:$0xff]
                %224 = vst [vmem:[%s176 + $0xbc] sm:$0xff] %v223
                %v225 = vld [vmem:[%s175 + $0x718] sm:$0xff]
                %226 = vst [vmem:[%s176 + $0xc4] sm:$0xff] %v225
                %v227 = vld [vmem:[%s175 + $0x720] sm:$0xff]
                %228 = vst [vmem:[%s176 + $0xcc] sm:$0xff] %v227
                %v229 = vld [vmem:[%s175 + $0x728] sm:$0xff]
                %230 = vst [vmem:[%s176 + $0xd4] sm:$0xff] %v229
                %v231 = vld [vmem:[%s175 + $0x730] sm:$0xff]
                %232 = vst [vmem:[%s176 + $0xdc] sm:$0xff] %v231
                %v233 = vld [vmem:[%s175 + $0x738] sm:$0xff]
                %234 = vst [vmem:[%s176 + $0xe4] sm:$0xff] %v233
                %v235 = vld [vmem:[%s175 + $0x740] sm:$0xff]
                %236 = vst [vmem:[%s176 + $0xec] sm:$0xff] %v235
                %v237 = vld [vmem:[%s175 + $0x748] sm:$0xff]
                %238 = vst [vmem:[%s176 + $0xf4] sm:$0xff] %v237
                %v239 = vld [vmem:[%s175 + $0x750] sm:$0xff]
                %240 = vst [vmem:[%s176 + $0xfc] sm:$0xff] %v239
                %v241 = vld [vmem:[%s175 + $0x758] sm:$0xff]
                %242 = vst [vmem:[%s176 + $0x104] sm:$0xff] %v241
                %v243 = vld [vmem:[%s175 + $0x760] sm:$0xff]
                %244 = vst [vmem:[%s176 + $0x10c] sm:$0xff] %v243
                %v245 = vld [vmem:[%s175 + $0x768] sm:$0xff]
                %246 = vst [vmem:[%s176 + $0x114] sm:$0xff] %v245
                %v247 = vld [vmem:[%s175 + $0x770] sm:$0xff]
                %248 = vst [vmem:[%s176 + $0x11c] sm:$0xff] %v247
                %v249 = vld [vmem:[%s175 + $0x778] sm:$0xff]
                %250 = vst [vmem:[%s176 + $0x124] sm:$0xff] %v249
                %v251 = vld [vmem:[%s175 + $0x780] sm:$0xff]
                %252 = vst [vmem:[%s176 + $0x12c] sm:$0xff] %v251
                %v253 = vld [vmem:[%s175 + $0x788] sm:$0xff]
                %254 = vst [vmem:[%s176 + $0x134] sm:$0xff] %v253
                %v255 = vld [vmem:[%s175 + $0x790] sm:$0xff]
                %256 = vst [vmem:[%s176 + $0x13c] sm:$0xff] %v255
                %v257 = vld [vmem:[%s175 + $0x798] sm:$0xff]
                %258 = vst [vmem:[%s176 + $0x144] sm:$0xff] %v257
                %v259 = vld [vmem:[%s175 + $0x7a0] sm:$0xff]
                %260 = vst [vmem:[%s176 + $0x14c] sm:$0xff] %v259
                %v261 = vld [vmem:[%s175 + $0x7a8] sm:$0xff]
                %262 = vst [vmem:[%s176 + $0x154] sm:$0xff] %v261
                %v263 = vld [vmem:[%s175 + $0x7b0] sm:$0xff]
                %264 = vst [vmem:[%s176 + $0x15c] sm:$0xff] %v263
                %v265 = vld [vmem:[%s175 + $0xe10] sm:$0xff]
                %266 = vst [vmem:[%s176 + $0x168] sm:$0xff] %v265
                %v267 = vld [vmem:[%s175 + $0xe18] sm:$0xff]
                %268 = vst [vmem:[%s176 + $0x170] sm:$0xff] %v267
                %v269 = vld [vmem:[%s175 + $0xe20] sm:$0xff]
                %270 = vst [vmem:[%s176 + $0x178] sm:$0xff] %v269
                %v271 = vld [vmem:[%s175 + $0xe28] sm:$0xff]
                %272 = vst [vmem:[%s176 + $0x180] sm:$0xff] %v271
                %v273 = vld [vmem:[%s175 + $0xe30] sm:$0xff]
                %274 = vst [vmem:[%s176 + $0x188] sm:$0xff] %v273
                %v275 = vld [vmem:[%s175 + $0xe38] sm:$0xff]
                %276 = vst [vmem:[%s176 + $0x190] sm:$0xff] %v275
                %v277 = vld [vmem:[%s175 + $0xe40] sm:$0xff]
                %278 = vst [vmem:[%s176 + $0x198] sm:$0xff] %v277
                %v279 = vld [vmem:[%s175 + $0xe48] sm:$0xff]
                %280 = vst [vmem:[%s176 + $0x1a0] sm:$0xff] %v279
                %v281 = vld [vmem:[%s175 + $0xe50] sm:$0xff]
                %282 = vst [vmem:[%s176 + $0x1a8] sm:$0xff] %v281
                %v283 = vld [vmem:[%s175 + $0xe58] sm:$0xff]
                %284 = vst [vmem:[%s176 + $0x1b0] sm:$0xff] %v283
                %v285 = vld [vmem:[%s175 + $0xe60] sm:$0xff]
                %286 = vst [vmem:[%s176 + $0x1b8] sm:$0xff] %v285
                %v287 = vld [vmem:[%s175 + $0xe68] sm:$0xff]
                %288 = vst [vmem:[%s176 + $0x1c0] sm:$0xff] %v287
                %v289 = vld [vmem:[%s175 + $0xe70] sm:$0xff]
                %290 = vst [vmem:[%s176 + $0x1c8] sm:$0xff] %v289
                %v291 = vld [vmem:[%s175 + $0xe78] sm:$0xff]
                %292 = vst [vmem:[%s176 + $0x1d0] sm:$0xff] %v291
                %v293 = vld [vmem:[%s175 + $0xe80] sm:$0xff]
                %294 = vst [vmem:[%s176 + $0x1d8] sm:$0xff] %v293
                %v295 = vld [vmem:[%s175 + $0xe88] sm:$0xff]
                %296 = vst [vmem:[%s176 + $0x1e0] sm:$0xff] %v295
                %v297 = vld [vmem:[%s175 + $0xe90] sm:$0xff]
                %298 = vst [vmem:[%s176 + $0x1e8] sm:$0xff] %v297
                %v299 = vld [vmem:[%s175 + $0xe98] sm:$0xff]
                %300 = vst [vmem:[%s176 + $0x1f0] sm:$0xff] %v299
                %v301 = vld [vmem:[%s175 + $0xea0] sm:$0xff]
                %302 = vst [vmem:[%s176 + $0x1f8] sm:$0xff] %v301
                %v303 = vld [vmem:[%s175 + $0xea8] sm:$0xff]
                %304 = vst [vmem:[%s176 + $0x200] sm:$0xff] %v303
                %v305 = vld [vmem:[%s175 + $0xeb0] sm:$0xff]
                %306 = vst [vmem:[%s176 + $0x208] sm:$0xff] %v305
                %v307 = vld [vmem:[%s175 + $0xeb8] sm:$0xff]
                %308 = vst [vmem:[%s176 + $0x210] sm:$0xff] %v307
                %v309 = vld [vmem:[%s175 + $0x1518] sm:$0xff]
                %310 = vst [vmem:[%s176 + $0x21c] sm:$0xff] %v309
                %v311 = vld [vmem:[%s175 + $0x1520] sm:$0xff]
                %312 = vst [vmem:[%s176 + $0x224] sm:$0xff] %v311
                %v313 = vld [vmem:[%s175 + $0x1528] sm:$0xff]
                %314 = vst [vmem:[%s176 + $0x22c] sm:$0xff] %v313
                %v315 = vld [vmem:[%s175 + $0x1530] sm:$0xff]
                %316 = vst [vmem:[%s176 + $0x234] sm:$0xff] %v315
                %v317 = vld [vmem:[%s175 + $0x1538] sm:$0xff]
                %318 = vst [vmem:[%s176 + $0x23c] sm:$0xff] %v317
                %v319 = vld [vmem:[%s175 + $0x1540] sm:$0xff]
                %320 = vst [vmem:[%s176 + $0x244] sm:$0xff] %v319
                %v321 = vld [vmem:[%s175 + $0x1548] sm:$0xff]
                %322 = vst [vmem:[%s176 + $0x24c] sm:$0xff] %v321
                %v323 = vld [vmem:[%s175 + $0x1550] sm:$0xff]
                %324 = vst [vmem:[%s176 + $0x254] sm:$0xff] %v323
                %v325 = vld [vmem:[%s175 + $0x1558] sm:$0xff]
                %326 = vst [vmem:[%s176 + $0x25c] sm:$0xff] %v325
                %v327 = vld [vmem:[%s175 + $0x1560] sm:$0xff]
                %328 = vst [vmem:[%s176 + $0x264] sm:$0xff] %v327
                %v329 = vld [vmem:[%s175 + $0x1568] sm:$0xff]
                %330 = vst [vmem:[%s176 + $0x26c] sm:$0xff] %v329
                %v331 = vld [vmem:[%s175 + $0x1570] sm:$0xff]
                %332 = vst [vmem:[%s176 + $0x274] sm:$0xff] %v331
                %v333 = vld [vmem:[%s175 + $0x1578] sm:$0xff]
                %334 = vst [vmem:[%s176 + $0x27c] sm:$0xff] %v333
                %v335 = vld [vmem:[%s175 + $0x1580] sm:$0xff]
                %336 = vst [vmem:[%s176 + $0x284] sm:$0xff] %v335
                %v337 = vld [vmem:[%s175 + $0x1588] sm:$0xff]
                %338 = vst [vmem:[%s176 + $0x28c] sm:$0xff] %v337
                %v339 = vld [vmem:[%s175 + $0x1590] sm:$0xff]
                %340 = vst [vmem:[%s176 + $0x294] sm:$0xff] %v339
                %v341 = vld [vmem:[%s175 + $0x1598] sm:$0xff]
                %342 = vst [vmem:[%s176 + $0x29c] sm:$0xff] %v341
                %v343 = vld [vmem:[%s175 + $0x15a0] sm:$0xff]
                %344 = vst [vmem:[%s176 + $0x2a4] sm:$0xff] %v343
                %v345 = vld [vmem:[%s175 + $0x15a8] sm:$0xff]
                %346 = vst [vmem:[%s176 + $0x2ac] sm:$0xff] %v345
                %v347 = vld [vmem:[%s175 + $0x15b0] sm:$0xff]
                %348 = vst [vmem:[%s176 + $0x2b4] sm:$0xff] %v347
                %v349 = vld [vmem:[%s175 + $0x15b8] sm:$0xff]
                %350 = vst [vmem:[%s176 + $0x2bc] sm:$0xff] %v349
                %v351 = vld [vmem:[%s175 + $0x15c0] sm:$0xff]
                %352 = vst [vmem:[%s176 + $0x2c4] sm:$0xff] %v351
                %v353 = vld [vmem:[%s175 + $0x1c20] sm:$0xff]
                %354 = vst [vmem:[%s176 + $0x2d0] sm:$0xff] %v353
                %v355 = vld [vmem:[%s175 + $0x1c28] sm:$0xff]
                %356 = vst [vmem:[%s176 + $0x2d8] sm:$0xff] %v355
                %v357 = vld [vmem:[%s175 + $0x1c30] sm:$0xff]
                %358 = vst [vmem:[%s176 + $0x2e0] sm:$0xff] %v357
                %v359 = vld [vmem:[%s175 + $0x1c38] sm:$0xff]
                %360 = vst [vmem:[%s176 + $0x2e8] sm:$0xff] %v359
                %v361 = vld [vmem:[%s175 + $0x1c40] sm:$0xff]
                %362 = vst [vmem:[%s176 + $0x2f0] sm:$0xff] %v361
                %v363 = vld [vmem:[%s175 + $0x1c48] sm:$0xff]
                %364 = vst [vmem:[%s176 + $0x2f8] sm:$0xff] %v363
                %v365 = vld [vmem:[%s175 + $0x1c50] sm:$0xff]
                %366 = vst [vmem:[%s176 + $0x300] sm:$0xff] %v365
                %v367 = vld [vmem:[%s175 + $0x1c58] sm:$0xff]
                %368 = vst [vmem:[%s176 + $0x308] sm:$0xff] %v367
                %v369 = vld [vmem:[%s175 + $0x1c60] sm:$0xff]
                %370 = vst [vmem:[%s176 + $0x310] sm:$0xff] %v369
                %v371 = vld [vmem:[%s175 + $0x1c68] sm:$0xff]
                %372 = vst [vmem:[%s176 + $0x318] sm:$0xff] %v371
                %v373 = vld [vmem:[%s175 + $0x1c70] sm:$0xff]
                %374 = vst [vmem:[%s176 + $0x320] sm:$0xff] %v373
                %v375 = vld [vmem:[%s175 + $0x1c78] sm:$0xff]
                %376 = vst [vmem:[%s176 + $0x328] sm:$0xff] %v375
                %v377 = vld [vmem:[%s175 + $0x1c80] sm:$0xff]
                %378 = vst [vmem:[%s176 + $0x330] sm:$0xff] %v377
                %v379 = vld [vmem:[%s175 + $0x1c88] sm:$0xff]
                %380 = vst [vmem:[%s176 + $0x338] sm:$0xff] %v379
                %v381 = vld [vmem:[%s175 + $0x1c90] sm:$0xff]
                %382 = vst [vmem:[%s176 + $0x340] sm:$0xff] %v381
                %v383 = vld [vmem:[%s175 + $0x1c98] sm:$0xff]
                %384 = vst [vmem:[%s176 + $0x348] sm:$0xff] %v383
                %v385 = vld [vmem:[%s175 + $0x1ca0] sm:$0xff]
                %386 = vst [vmem:[%s176 + $0x350] sm:$0xff] %v385
                %v387 = vld [vmem:[%s175 + $0x1ca8] sm:$0xff]
                %388 = vst [vmem:[%s176 + $0x358] sm:$0xff] %v387
                %v389 = vld [vmem:[%s175 + $0x1cb0] sm:$0xff]
                %390 = vst [vmem:[%s176 + $0x360] sm:$0xff] %v389
                %v391 = vld [vmem:[%s175 + $0x1cb8] sm:$0xff]
                %392 = vst [vmem:[%s176 + $0x368] sm:$0xff] %v391
                %v393 = vld [vmem:[%s175 + $0x1cc0] sm:$0xff]
                %394 = vst [vmem:[%s176 + $0x370] sm:$0xff] %v393
                %v395 = vld [vmem:[%s175 + $0x1cc8] sm:$0xff]
                %396 = vst [vmem:[%s176 + $0x378] sm:$0xff] %v395
                %v397 = vld [vmem:[%s175 + $0x2328] sm:$0xff]
                %398 = vst [vmem:[%s176 + $0x384] sm:$0xff] %v397
                %v399 = vld [vmem:[%s175 + $0x2330] sm:$0xff]
                %400 = vst [vmem:[%s176 + $0x38c] sm:$0xff] %v399
                %v401 = vld [vmem:[%s175 + $0x2338] sm:$0xff]
                %402 = vst [vmem:[%s176 + $0x394] sm:$0xff] %v401
                %v403 = vld [vmem:[%s175 + $0x2340] sm:$0xff]
                %404 = vst [vmem:[%s176 + $0x39c] sm:$0xff] %v403
                %v405 = vld [vmem:[%s175 + $0x2348] sm:$0xff]
                %406 = vst [vmem:[%s176 + $0x3a4] sm:$0xff] %v405
                %v407 = vld [vmem:[%s175 + $0x2350] sm:$0xff]
                %408 = vst [vmem:[%s176 + $0x3ac] sm:$0xff] %v407
                %v409 = vld [vmem:[%s175 + $0x2358] sm:$0xff]
                %410 = vst [vmem:[%s176 + $0x3b4] sm:$0xff] %v409
                %v411 = vld [vmem:[%s175 + $0x2360] sm:$0xff]
                %412 = vst [vmem:[%s176 + $0x3bc] sm:$0xff] %v411
                %v413 = vld [vmem:[%s175 + $0x2368] sm:$0xff]
                %414 = vst [vmem:[%s176 + $0x3c4] sm:$0xff] %v413
                %v415 = vld [vmem:[%s175 + $0x2370] sm:$0xff]
                %416 = vst [vmem:[%s176 + $0x3cc] sm:$0xff] %v415
                %v417 = vld [vmem:[%s175 + $0x2378] sm:$0xff]
                %418 = vst [vmem:[%s176 + $0x3d4] sm:$0xff] %v417
                %v419 = vld [vmem:[%s175 + $0x2380] sm:$0xff]
                %420 = vst [vmem:[%s176 + $0x3dc] sm:$0xff] %v419
                %v421 = vld [vmem:[%s175 + $0x2388] sm:$0xff]
                %422 = vst [vmem:[%s176 + $0x3e4] sm:$0xff] %v421
                %v423 = vld [vmem:[%s175 + $0x2390] sm:$0xff]
                %424 = vst [vmem:[%s176 + $0x3ec] sm:$0xff] %v423
                %v425 = vld [vmem:[%s175 + $0x2398] sm:$0xff]
                %426 = vst [vmem:[%s176 + $0x3f4] sm:$0xff] %v425
                %v427 = vld [vmem:[%s175 + $0x23a0] sm:$0xff]
                %428 = vst [vmem:[%s176 + $0x3fc] sm:$0xff] %v427
                %v429 = vld [vmem:[%s175 + $0x23a8] sm:$0xff]
                %430 = vst [vmem:[%s176 + $0x404] sm:$0xff] %v429
                %v431 = vld [vmem:[%s175 + $0x23b0] sm:$0xff]
                %432 = vst [vmem:[%s176 + $0x40c] sm:$0xff] %v431
                %v433 = vld [vmem:[%s175 + $0x23b8] sm:$0xff]
                %434 = vst [vmem:[%s176 + $0x414] sm:$0xff] %v433
                %v435 = vld [vmem:[%s175 + $0x23c0] sm:$0xff]
                %436 = vst [vmem:[%s176 + $0x41c] sm:$0xff] %v435
                %v437 = vld [vmem:[%s175 + $0x23c8] sm:$0xff]
                %438 = vst [vmem:[%s176 + $0x424] sm:$0xff] %v437
                %v439 = vld [vmem:[%s175 + $0x23d0] sm:$0xff]
                %440 = vst [vmem:[%s176 + $0x42c] sm:$0xff] %v439
                %v441 = vld [vmem:[%s175 + $0x2a30] sm:$0xff]
                %442 = vst [vmem:[%s176 + $0x438] sm:$0xff] %v441
                %v443 = vld [vmem:[%s175 + $0x2a38] sm:$0xff]
                %444 = vst [vmem:[%s176 + $0x440] sm:$0xff] %v443
                %v445 = vld [vmem:[%s175 + $0x2a40] sm:$0xff]
                %446 = vst [vmem:[%s176 + $0x448] sm:$0xff] %v445
                %v447 = vld [vmem:[%s175 + $0x2a48] sm:$0xff]
                %448 = vst [vmem:[%s176 + $0x450] sm:$0xff] %v447
                %v449 = vld [vmem:[%s175 + $0x2a50] sm:$0xff]
                %450 = vst [vmem:[%s176 + $0x458] sm:$0xff] %v449
                %v451 = vld [vmem:[%s175 + $0x2a58] sm:$0xff]
                %452 = vst [vmem:[%s176 + $0x460] sm:$0xff] %v451
                %v453 = vld [vmem:[%s175 + $0x2a60] sm:$0xff]
                %454 = vst [vmem:[%s176 + $0x468] sm:$0xff] %v453
                %v455 = vld [vmem:[%s175 + $0x2a68] sm:$0xff]
                %456 = vst [vmem:[%s176 + $0x470] sm:$0xff] %v455
                %v457 = vld [vmem:[%s175 + $0x2a70] sm:$0xff]
                %458 = vst [vmem:[%s176 + $0x478] sm:$0xff] %v457
                %v459 = vld [vmem:[%s175 + $0x2a78] sm:$0xff]
                %460 = vst [vmem:[%s176 + $0x480] sm:$0xff] %v459
                %v461 = vld [vmem:[%s175 + $0x2a80] sm:$0xff]
                %462 = vst [vmem:[%s176 + $0x488] sm:$0xff] %v461
                %v463 = vld [vmem:[%s175 + $0x2a88] sm:$0xff]
                %464 = vst [vmem:[%s176 + $0x490] sm:$0xff] %v463
                %v465 = vld [vmem:[%s175 + $0x2a90] sm:$0xff]
                %466 = vst [vmem:[%s176 + $0x498] sm:$0xff] %v465
                %v467 = vld [vmem:[%s175 + $0x2a98] sm:$0xff]
                %468 = vst [vmem:[%s176 + $0x4a0] sm:$0xff] %v467
                %v469 = vld [vmem:[%s175 + $0x2aa0] sm:$0xff]
                %470 = vst [vmem:[%s176 + $0x4a8] sm:$0xff] %v469
                %v471 = vld [vmem:[%s175 + $0x2aa8] sm:$0xff]
                %472 = vst [vmem:[%s176 + $0x4b0] sm:$0xff] %v471
                %v473 = vld [vmem:[%s175 + $0x2ab0] sm:$0xff]
                %474 = vst [vmem:[%s176 + $0x4b8] sm:$0xff] %v473
                %v475 = vld [vmem:[%s175 + $0x2ab8] sm:$0xff]
                %476 = vst [vmem:[%s176 + $0x4c0] sm:$0xff] %v475
                %v477 = vld [vmem:[%s175 + $0x2ac0] sm:$0xff]
                %478 = vst [vmem:[%s176 + $0x4c8] sm:$0xff] %v477
                %v479 = vld [vmem:[%s175 + $0x2ac8] sm:$0xff]
                %480 = vst [vmem:[%s176 + $0x4d0] sm:$0xff] %v479
                %v481 = vld [vmem:[%s175 + $0x2ad0] sm:$0xff]
                %482 = vst [vmem:[%s176 + $0x4d8] sm:$0xff] %v481
                %v483 = vld [vmem:[%s175 + $0x2ad8] sm:$0xff]
                %484 = vst [vmem:[%s176 + $0x4e0] sm:$0xff] %v483
                %v485 = vld [vmem:[%s175 + $0x3138] sm:$0xff]
                %486 = vst [vmem:[%s176 + $0x4ec] sm:$0xff] %v485
                %v487 = vld [vmem:[%s175 + $0x3140] sm:$0xff]
                %488 = vst [vmem:[%s176 + $0x4f4] sm:$0xff] %v487
                %v489 = vld [vmem:[%s175 + $0x3148] sm:$0xff]
                %490 = vst [vmem:[%s176 + $0x4fc] sm:$0xff] %v489
                %v491 = vld [vmem:[%s175 + $0x3150] sm:$0xff]
                %492 = vst [vmem:[%s176 + $0x504] sm:$0xff] %v491
                %v493 = vld [vmem:[%s175 + $0x3158] sm:$0xff]
                %494 = vst [vmem:[%s176 + $0x50c] sm:$0xff] %v493
                %v495 = vld [vmem:[%s175 + $0x3160] sm:$0xff]
                %496 = vst [vmem:[%s176 + $0x514] sm:$0xff] %v495
                %v497 = vld [vmem:[%s175 + $0x3168] sm:$0xff]
                %498 = vst [vmem:[%s176 + $0x51c] sm:$0xff] %v497
                %v499 = vld [vmem:[%s175 + $0x3170] sm:$0xff]
                %500 = vst [vmem:[%s176 + $0x524] sm:$0xff] %v499
                %v501 = vld [vmem:[%s175 + $0x3178] sm:$0xff]
                %502 = vst [vmem:[%s176 + $0x52c] sm:$0xff] %v501
                %v503 = vld [vmem:[%s175 + $0x3180] sm:$0xff]
                %504 = vst [vmem:[%s176 + $0x534] sm:$0xff] %v503
                %v505 = vld [vmem:[%s175 + $0x3188] sm:$0xff]
                %506 = vst [vmem:[%s176 + $0x53c] sm:$0xff] %v505
                %v507 = vld [vmem:[%s175 + $0x3190] sm:$0xff]
                %508 = vst [vmem:[%s176 + $0x544] sm:$0xff] %v507
                %v509 = vld [vmem:[%s175 + $0x3198] sm:$0xff]
                %510 = vst [vmem:[%s176 + $0x54c] sm:$0xff] %v509
                %v511 = vld [vmem:[%s175 + $0x31a0] sm:$0xff]
                %512 = vst [vmem:[%s176 + $0x554] sm:$0xff] %v511
                %v513 = vld [vmem:[%s175 + $0x31a8] sm:$0xff]
                %514 = vst [vmem:[%s176 + $0x55c] sm:$0xff] %v513
                %v515 = vld [vmem:[%s175 + $0x31b0] sm:$0xff]
                %516 = vst [vmem:[%s176 + $0x564] sm:$0xff] %v515
                %v517 = vld [vmem:[%s175 + $0x31b8] sm:$0xff]
                %518 = vst [vmem:[%s176 + $0x56c] sm:$0xff] %v517
                %v519 = vld [vmem:[%s175 + $0x31c0] sm:$0xff]
                %520 = vst [vmem:[%s176 + $0x574] sm:$0xff] %v519
                %v521 = vld [vmem:[%s175 + $0x31c8] sm:$0xff]
                %522 = vst [vmem:[%s176 + $0x57c] sm:$0xff] %v521
                %v523 = vld [vmem:[%s175 + $0x31d0] sm:$0xff]
                %524 = vst [vmem:[%s176 + $0x584] sm:$0xff] %v523
                %v525 = vld [vmem:[%s175 + $0x31d8] sm:$0xff]
                %526 = vst [vmem:[%s176 + $0x58c] sm:$0xff] %v525
                %v527 = vld [vmem:[%s175 + $0x31e0] sm:$0xff]
                %528 = vst [vmem:[%s176 + $0x594] sm:$0xff] %v527
                %v529 = vld [vmem:[%s175 + $0x3840] sm:$0xff]
                %530 = vst [vmem:[%s176 + $0x5a0] sm:$0xff] %v529
                %v531 = vld [vmem:[%s175 + $0x3848] sm:$0xff]
                %532 = vst [vmem:[%s176 + $0x5a8] sm:$0xff] %v531
                %v533 = vld [vmem:[%s175 + $0x3850] sm:$0xff]
                %534 = vst [vmem:[%s176 + $0x5b0] sm:$0xff] %v533
                %v535 = vld [vmem:[%s175 + $0x3858] sm:$0xff]
                %536 = vst [vmem:[%s176 + $0x5b8] sm:$0xff] %v535
                %v537 = vld [vmem:[%s175 + $0x3860] sm:$0xff]
                %538 = vst [vmem:[%s176 + $0x5c0] sm:$0xff] %v537
                %v539 = vld [vmem:[%s175 + $0x3868] sm:$0xff]
                %540 = vst [vmem:[%s176 + $0x5c8] sm:$0xff] %v539
                %v541 = vld [vmem:[%s175 + $0x3870] sm:$0xff]
                %542 = vst [vmem:[%s176 + $0x5d0] sm:$0xff] %v541
                %v543 = vld [vmem:[%s175 + $0x3878] sm:$0xff]
                %544 = vst [vmem:[%s176 + $0x5d8] sm:$0xff] %v543
                %v545 = vld [vmem:[%s175 + $0x3880] sm:$0xff]
                %546 = vst [vmem:[%s176 + $0x5e0] sm:$0xff] %v545
                %v547 = vld [vmem:[%s175 + $0x3888] sm:$0xff]
                %548 = vst [vmem:[%s176 + $0x5e8] sm:$0xff] %v547
                %v549 = vld [vmem:[%s175 + $0x3890] sm:$0xff]
                %550 = vst [vmem:[%s176 + $0x5f0] sm:$0xff] %v549
                %v551 = vld [vmem:[%s175 + $0x3898] sm:$0xff]
                %552 = vst [vmem:[%s176 + $0x5f8] sm:$0xff] %v551
                %v553 = vld [vmem:[%s175 + $0x38a0] sm:$0xff]
                %554 = vst [vmem:[%s176 + $0x600] sm:$0xff] %v553
                %v555 = vld [vmem:[%s175 + $0x38a8] sm:$0xff]
                %556 = vst [vmem:[%s176 + $0x608] sm:$0xff] %v555
                %v557 = vld [vmem:[%s175 + $0x38b0] sm:$0xff]
                %558 = vst [vmem:[%s176 + $0x610] sm:$0xff] %v557
                %v559 = vld [vmem:[%s175 + $0x38b8] sm:$0xff]
                %560 = vst [vmem:[%s176 + $0x618] sm:$0xff] %v559
                %v561 = vld [vmem:[%s175 + $0x38c0] sm:$0xff]
                %562 = vst [vmem:[%s176 + $0x620] sm:$0xff] %v561
                %v563 = vld [vmem:[%s175 + $0x38c8] sm:$0xff]
                %564 = vst [vmem:[%s176 + $0x628] sm:$0xff] %v563
                %v565 = vld [vmem:[%s175 + $0x38d0] sm:$0xff]
                %566 = vst [vmem:[%s176 + $0x630] sm:$0xff] %v565
                %v567 = vld [vmem:[%s175 + $0x38d8] sm:$0xff]
                %568 = vst [vmem:[%s176 + $0x638] sm:$0xff] %v567
                %v569 = vld [vmem:[%s175 + $0x38e0] sm:$0xff]
                %570 = vst [vmem:[%s176 + $0x640] sm:$0xff] %v569
                %v571 = vld [vmem:[%s175 + $0x38e8] sm:$0xff]
                %572 = vst [vmem:[%s176 + $0x648] sm:$0xff] %v571
                %v573 = vld [vmem:[%s175 + $0x3f48] sm:$0xff]
                %574 = vst [vmem:[%s176 + $0x654] sm:$0xff] %v573
                %v575 = vld [vmem:[%s175 + $0x3f50] sm:$0xff]
                %576 = vst [vmem:[%s176 + $0x65c] sm:$0xff] %v575
                %v577 = vld [vmem:[%s175 + $0x3f58] sm:$0xff]
                %578 = vst [vmem:[%s176 + $0x664] sm:$0xff] %v577
                %v579 = vld [vmem:[%s175 + $0x3f60] sm:$0xff]
                %580 = vst [vmem:[%s176 + $0x66c] sm:$0xff] %v579
                %v581 = vld [vmem:[%s175 + $0x3f68] sm:$0xff]
                %582 = vst [vmem:[%s176 + $0x674] sm:$0xff] %v581
                %v583 = vld [vmem:[%s175 + $0x3f70] sm:$0xff]
                %584 = vst [vmem:[%s176 + $0x67c] sm:$0xff] %v583
                %v585 = vld [vmem:[%s175 + $0x3f78] sm:$0xff]
                %586 = vst [vmem:[%s176 + $0x684] sm:$0xff] %v585
                %v587 = vld [vmem:[%s175 + $0x3f80] sm:$0xff]
                %588 = vst [vmem:[%s176 + $0x68c] sm:$0xff] %v587
                %v589 = vld [vmem:[%s175 + $0x3f88] sm:$0xff]
                %590 = vst [vmem:[%s176 + $0x694] sm:$0xff] %v589
                %v591 = vld [vmem:[%s175 + $0x3f90] sm:$0xff]
                %592 = vst [vmem:[%s176 + $0x69c] sm:$0xff] %v591
                %v593 = vld [vmem:[%s175 + $0x3f98] sm:$0xff]
                %594 = vst [vmem:[%s176 + $0x6a4] sm:$0xff] %v593
                %v595 = vld [vmem:[%s175 + $0x3fa0] sm:$0xff]
                %596 = vst [vmem:[%s176 + $0x6ac] sm:$0xff] %v595
                %v597 = vld [vmem:[%s175 + $0x3fa8] sm:$0xff]
                %598 = vst [vmem:[%s176 + $0x6b4] sm:$0xff] %v597
                %v599 = vld [vmem:[%s175 + $0x3fb0] sm:$0xff]
                %600 = vst [vmem:[%s176 + $0x6bc] sm:$0xff] %v599
                %v601 = vld [vmem:[%s175 + $0x3fb8] sm:$0xff]
                %602 = vst [vmem:[%s176 + $0x6c4] sm:$0xff] %v601
                %v603 = vld [vmem:[%s175 + $0x3fc0] sm:$0xff]
                %604 = vst [vmem:[%s176 + $0x6cc] sm:$0xff] %v603
                %v605 = vld [vmem:[%s175 + $0x3fc8] sm:$0xff]
                %606 = vst [vmem:[%s176 + $0x6d4] sm:$0xff] %v605
                %v607 = vld [vmem:[%s175 + $0x3fd0] sm:$0xff]
                %608 = vst [vmem:[%s176 + $0x6dc] sm:$0xff] %v607
                %v609 = vld [vmem:[%s175 + $0x3fd8] sm:$0xff]
                %610 = vst [vmem:[%s176 + $0x6e4] sm:$0xff] %v609
                %v611 = vld [vmem:[%s175 + $0x3fe0] sm:$0xff]
                %612 = vst [vmem:[%s176 + $0x6ec] sm:$0xff] %v611
                %v613 = vld [vmem:[%s175 + $0x3fe8] sm:$0xff]
                %614 = vst [vmem:[%s176 + $0x6f4] sm:$0xff] %v613
                %v615 = vld [vmem:[%s175 + $0x3ff0] sm:$0xff]
                %616 = vst [vmem:[%s176 + $0x6fc] sm:$0xff] %v615
                %v617 = vld [vmem:[%s175 + $0x4650] sm:$0xff]
                %618 = vst [vmem:[%s176 + $0x708] sm:$0xff] %v617
                %v619 = vld [vmem:[%s175 + $0x4658] sm:$0xff]
                %620 = vst [vmem:[%s176 + $0x710] sm:$0xff] %v619
                %v621 = vld [vmem:[%s175 + $0x4660] sm:$0xff]
                %622 = vst [vmem:[%s176 + $0x718] sm:$0xff] %v621
                %v623 = vld [vmem:[%s175 + $0x4668] sm:$0xff]
                %624 = vst [vmem:[%s176 + $0x720] sm:$0xff] %v623
                %v625 = vld [vmem:[%s175 + $0x4670] sm:$0xff]
                %626 = vst [vmem:[%s176 + $0x728] sm:$0xff] %v625
                %v627 = vld [vmem:[%s175 + $0x4678] sm:$0xff]
                %628 = vst [vmem:[%s176 + $0x730] sm:$0xff] %v627
                %v629 = vld [vmem:[%s175 + $0x4680] sm:$0xff]
                %630 = vst [vmem:[%s176 + $0x738] sm:$0xff] %v629
                %v631 = vld [vmem:[%s175 + $0x4688] sm:$0xff]
                %632 = vst [vmem:[%s176 + $0x740] sm:$0xff] %v631
                %v633 = vld [vmem:[%s175 + $0x4690] sm:$0xff]
                %634 = vst [vmem:[%s176 + $0x748] sm:$0xff] %v633
                %v635 = vld [vmem:[%s175 + $0x4698] sm:$0xff]
                %636 = vst [vmem:[%s176 + $0x750] sm:$0xff] %v635
                %v637 = vld [vmem:[%s175 + $0x46a0] sm:$0xff]
                %638 = vst [vmem:[%s176 + $0x758] sm:$0xff] %v637
                %v639 = vld [vmem:[%s175 + $0x46a8] sm:$0xff]
                %640 = vst [vmem:[%s176 + $0x760] sm:$0xff] %v639
                %v641 = vld [vmem:[%s175 + $0x46b0] sm:$0xff]
                %642 = vst [vmem:[%s176 + $0x768] sm:$0xff] %v641
                %v643 = vld [vmem:[%s175 + $0x46b8] sm:$0xff]
                %644 = vst [vmem:[%s176 + $0x770] sm:$0xff] %v643
                %v645 = vld [vmem:[%s175 + $0x46c0] sm:$0xff]
                %646 = vst [vmem:[%s176 + $0x778] sm:$0xff] %v645
                %v647 = vld [vmem:[%s175 + $0x46c8] sm:$0xff]
                %648 = vst [vmem:[%s176 + $0x780] sm:$0xff] %v647
                %v649 = vld [vmem:[%s175 + $0x46d0] sm:$0xff]
                %650 = vst [vmem:[%s176 + $0x788] sm:$0xff] %v649
                %v651 = vld [vmem:[%s175 + $0x46d8] sm:$0xff]
                %652 = vst [vmem:[%s176 + $0x790] sm:$0xff] %v651
                %v653 = vld [vmem:[%s175 + $0x46e0] sm:$0xff]
                %654 = vst [vmem:[%s176 + $0x798] sm:$0xff] %v653
                %v655 = vld [vmem:[%s175 + $0x46e8] sm:$0xff]
                %656 = vst [vmem:[%s176 + $0x7a0] sm:$0xff] %v655
                %v657 = vld [vmem:[%s175 + $0x46f0] sm:$0xff]
                %658 = vst [vmem:[%s176 + $0x7a8] sm:$0xff] %v657
                %v659 = vld [vmem:[%s175 + $0x46f8] sm:$0xff]
                %660 = vst [vmem:[%s176 + $0x7b0] sm:$0xff] %v659
                %v661 = vld [vmem:[%s175 + $0x4d58] sm:$0xff]
                %662 = vst [vmem:[%s176 + $0x7bc] sm:$0xff] %v661
                %v663 = vld [vmem:[%s175 + $0x4d60] sm:$0xff]
                %664 = vst [vmem:[%s176 + $0x7c4] sm:$0xff] %v663
                %v665 = vld [vmem:[%s175 + $0x4d68] sm:$0xff]
                %666 = vst [vmem:[%s176 + $0x7cc] sm:$0xff] %v665
                %v667 = vld [vmem:[%s175 + $0x4d70] sm:$0xff]
                %668 = vst [vmem:[%s176 + $0x7d4] sm:$0xff] %v667
                %v669 = vld [vmem:[%s175 + $0x4d78] sm:$0xff]
                %670 = vst [vmem:[%s176 + $0x7dc] sm:$0xff] %v669
                %v671 = vld [vmem:[%s175 + $0x4d80] sm:$0xff]
                %672 = vst [vmem:[%s176 + $0x7e4] sm:$0xff] %v671
                %v673 = vld [vmem:[%s175 + $0x4d88] sm:$0xff]
                %674 = vst [vmem:[%s176 + $0x7ec] sm:$0xff] %v673
                %v675 = vld [vmem:[%s175 + $0x4d90] sm:$0xff]
                %676 = vst [vmem:[%s176 + $0x7f4] sm:$0xff] %v675
                %v677 = vld [vmem:[%s175 + $0x4d98] sm:$0xff]
                %678 = vst [vmem:[%s176 + $0x7fc] sm:$0xff] %v677
                %v679 = vld [vmem:[%s175 + $0x4da0] sm:$0xff]
                %680 = vst [vmem:[%s176 + $0x804] sm:$0xff] %v679
                %v681 = vld [vmem:[%s175 + $0x4da8] sm:$0xff]
                %682 = vst [vmem:[%s176 + $0x80c] sm:$0xff] %v681
                %v683 = vld [vmem:[%s175 + $0x4db0] sm:$0xff]
                %684 = vst [vmem:[%s176 + $0x814] sm:$0xff] %v683
                %v685 = vld [vmem:[%s175 + $0x4db8] sm:$0xff]
                %686 = vst [vmem:[%s176 + $0x81c] sm:$0xff] %v685
                %v687 = vld [vmem:[%s175 + $0x4dc0] sm:$0xff]
                %688 = vst [vmem:[%s176 + $0x824] sm:$0xff] %v687
                %v689 = vld [vmem:[%s175 + $0x4dc8] sm:$0xff]
                %690 = vst [vmem:[%s176 + $0x82c] sm:$0xff] %v689
                %v691 = vld [vmem:[%s175 + $0x4dd0] sm:$0xff]
                %692 = vst [vmem:[%s176 + $0x834] sm:$0xff] %v691
                %v693 = vld [vmem:[%s175 + $0x4dd8] sm:$0xff]
                %694 = vst [vmem:[%s176 + $0x83c] sm:$0xff] %v693
                %v695 = vld [vmem:[%s175 + $0x4de0] sm:$0xff]
                %696 = vst [vmem:[%s176 + $0x844] sm:$0xff] %v695
                %v697 = vld [vmem:[%s175 + $0x4de8] sm:$0xff]
                %698 = vst [vmem:[%s176 + $0x84c] sm:$0xff] %v697
                %v699 = vld [vmem:[%s175 + $0x4df0] sm:$0xff]
                %700 = vst [vmem:[%s176 + $0x854] sm:$0xff] %v699
                %v701 = vld [vmem:[%s175 + $0x4df8] sm:$0xff]
                %702 = vst [vmem:[%s176 + $0x85c] sm:$0xff] %v701
                %v703 = vld [vmem:[%s175 + $0x4e00] sm:$0xff]
                %704 = vst [vmem:[%s176 + $0x864] sm:$0xff] %v703
                %v705 = vld [vmem:[%s175 + $0x5460] sm:$0xff]
                %706 = vst [vmem:[%s176 + $0x870] sm:$0xff] %v705
                %v707 = vld [vmem:[%s175 + $0x5468] sm:$0xff]
                %708 = vst [vmem:[%s176 + $0x878] sm:$0xff] %v707
                %v709 = vld [vmem:[%s175 + $0x5470] sm:$0xff]
                %710 = vst [vmem:[%s176 + $0x880] sm:$0xff] %v709
                %v711 = vld [vmem:[%s175 + $0x5478] sm:$0xff]
                %712 = vst [vmem:[%s176 + $0x888] sm:$0xff] %v711
                %v713 = vld [vmem:[%s175 + $0x5480] sm:$0xff]
                %714 = vst [vmem:[%s176 + $0x890] sm:$0xff] %v713
                %v715 = vld [vmem:[%s175 + $0x5488] sm:$0xff]
                %716 = vst [vmem:[%s176 + $0x898] sm:$0xff] %v715
                %v717 = vld [vmem:[%s175 + $0x5490] sm:$0xff]
                %718 = vst [vmem:[%s176 + $0x8a0] sm:$0xff] %v717
                %v719 = vld [vmem:[%s175 + $0x5498] sm:$0xff]
                %720 = vst [vmem:[%s176 + $0x8a8] sm:$0xff] %v719
                %v721 = vld [vmem:[%s175 + $0x54a0] sm:$0xff]
                %722 = vst [vmem:[%s176 + $0x8b0] sm:$0xff] %v721
                %v723 = vld [vmem:[%s175 + $0x54a8] sm:$0xff]
                %724 = vst [vmem:[%s176 + $0x8b8] sm:$0xff] %v723
                %v725 = vld [vmem:[%s175 + $0x54b0] sm:$0xff]
                %726 = vst [vmem:[%s176 + $0x8c0] sm:$0xff] %v725
                %v727 = vld [vmem:[%s175 + $0x54b8] sm:$0xff]
                %728 = vst [vmem:[%s176 + $0x8c8] sm:$0xff] %v727
                %v729 = vld [vmem:[%s175 + $0x54c0] sm:$0xff]
                %730 = vst [vmem:[%s176 + $0x8d0] sm:$0xff] %v729
                %v731 = vld [vmem:[%s175 + $0x54c8] sm:$0xff]
                %732 = vst [vmem:[%s176 + $0x8d8] sm:$0xff] %v731
                %v733 = vld [vmem:[%s175 + $0x54d0] sm:$0xff]
                %734 = vst [vmem:[%s176 + $0x8e0] sm:$0xff] %v733
                %v735 = vld [vmem:[%s175 + $0x54d8] sm:$0xff]
                %736 = vst [vmem:[%s176 + $0x8e8] sm:$0xff] %v735
                %v737 = vld [vmem:[%s175 + $0x54e0] sm:$0xff]
                %738 = vst [vmem:[%s176 + $0x8f0] sm:$0xff] %v737
                %v739 = vld [vmem:[%s175 + $0x54e8] sm:$0xff]
                %740 = vst [vmem:[%s176 + $0x8f8] sm:$0xff] %v739
                %v741 = vld [vmem:[%s175 + $0x54f0] sm:$0xff]
                %742 = vst [vmem:[%s176 + $0x900] sm:$0xff] %v741
                %v743 = vld [vmem:[%s175 + $0x54f8] sm:$0xff]
                %744 = vst [vmem:[%s176 + $0x908] sm:$0xff] %v743
                %v745 = vld [vmem:[%s175 + $0x5500] sm:$0xff]
                %746 = vst [vmem:[%s176 + $0x910] sm:$0xff] %v745
                %v747 = vld [vmem:[%s175 + $0x5508] sm:$0xff]
                %748 = vst [vmem:[%s176 + $0x918] sm:$0xff] %v747
                %v749 = vld [vmem:[%s175 + $0x5b68] sm:$0xff]
                %750 = vst [vmem:[%s176 + $0x924] sm:$0xff] %v749
                %v751 = vld [vmem:[%s175 + $0x5b70] sm:$0xff]
                %752 = vst [vmem:[%s176 + $0x92c] sm:$0xff] %v751
                %v753 = vld [vmem:[%s175 + $0x5b78] sm:$0xff]
                %754 = vst [vmem:[%s176 + $0x934] sm:$0xff] %v753
                %v755 = vld [vmem:[%s175 + $0x5b80] sm:$0xff]
                %756 = vst [vmem:[%s176 + $0x93c] sm:$0xff] %v755
                %v757 = vld [vmem:[%s175 + $0x5b88] sm:$0xff]
                %758 = vst [vmem:[%s176 + $0x944] sm:$0xff] %v757
                %v759 = vld [vmem:[%s175 + $0x5b90] sm:$0xff]
                %760 = vst [vmem:[%s176 + $0x94c] sm:$0xff] %v759
                %v761 = vld [vmem:[%s175 + $0x5b98] sm:$0xff]
                %762 = vst [vmem:[%s176 + $0x954] sm:$0xff] %v761
                %v763 = vld [vmem:[%s175 + $0x5ba0] sm:$0xff]
                %764 = vst [vmem:[%s176 + $0x95c] sm:$0xff] %v763
                %v765 = vld [vmem:[%s175 + $0x5ba8] sm:$0xff]
                %766 = vst [vmem:[%s176 + $0x964] sm:$0xff] %v765
                %v767 = vld [vmem:[%s175 + $0x5bb0] sm:$0xff]
                %768 = vst [vmem:[%s176 + $0x96c] sm:$0xff] %v767
                %v769 = vld [vmem:[%s175 + $0x5bb8] sm:$0xff]
                %770 = vst [vmem:[%s176 + $0x974] sm:$0xff] %v769
                %v771 = vld [vmem:[%s175 + $0x5bc0] sm:$0xff]
                %772 = vst [vmem:[%s176 + $0x97c] sm:$0xff] %v771
                %v773 = vld [vmem:[%s175 + $0x5bc8] sm:$0xff]
                %774 = vst [vmem:[%s176 + $0x984] sm:$0xff] %v773
                %v775 = vld [vmem:[%s175 + $0x5bd0] sm:$0xff]
                %776 = vst [vmem:[%s176 + $0x98c] sm:$0xff] %v775
                %v777 = vld [vmem:[%s175 + $0x5bd8] sm:$0xff]
                %778 = vst [vmem:[%s176 + $0x994] sm:$0xff] %v777
                %v779 = vld [vmem:[%s175 + $0x5be0] sm:$0xff]
                %780 = vst [vmem:[%s176 + $0x99c] sm:$0xff] %v779
                %v781 = vld [vmem:[%s175 + $0x5be8] sm:$0xff]
                %782 = vst [vmem:[%s176 + $0x9a4] sm:$0xff] %v781
                %v783 = vld [vmem:[%s175 + $0x5bf0] sm:$0xff]
                %784 = vst [vmem:[%s176 + $0x9ac] sm:$0xff] %v783
                %v785 = vld [vmem:[%s175 + $0x5bf8] sm:$0xff]
                %786 = vst [vmem:[%s176 + $0x9b4] sm:$0xff] %v785
                %v787 = vld [vmem:[%s175 + $0x5c00] sm:$0xff]
                %788 = vst [vmem:[%s176 + $0x9bc] sm:$0xff] %v787
                %v789 = vld [vmem:[%s175 + $0x5c08] sm:$0xff]
                %790 = vst [vmem:[%s176 + $0x9c4] sm:$0xff] %v789
                %v791 = vld [vmem:[%s175 + $0x5c10] sm:$0xff]
                %792 = vst [vmem:[%s176 + $0x9cc] sm:$0xff] %v791
                %v793 = vld [vmem:[%s175 + $0x6270] sm:$0xff]
                %794 = vst [vmem:[%s176 + $0x9d8] sm:$0xff] %v793
                %v795 = vld [vmem:[%s175 + $0x6278] sm:$0xff]
                %796 = vst [vmem:[%s176 + $0x9e0] sm:$0xff] %v795
                %v797 = vld [vmem:[%s175 + $0x6280] sm:$0xff]
                %798 = vst [vmem:[%s176 + $0x9e8] sm:$0xff] %v797
                %v799 = vld [vmem:[%s175 + $0x6288] sm:$0xff]
                %800 = vst [vmem:[%s176 + $0x9f0] sm:$0xff] %v799
                %v801 = vld [vmem:[%s175 + $0x6290] sm:$0xff]
                %802 = vst [vmem:[%s176 + $0x9f8] sm:$0xff] %v801
                %v803 = vld [vmem:[%s175 + $0x6298] sm:$0xff]
                %804 = vst [vmem:[%s176 + $0xa00] sm:$0xff] %v803
                %v805 = vld [vmem:[%s175 + $0x62a0] sm:$0xff]
                %806 = vst [vmem:[%s176 + $0xa08] sm:$0xff] %v805
                %v807 = vld [vmem:[%s175 + $0x62a8] sm:$0xff]
                %808 = vst [vmem:[%s176 + $0xa10] sm:$0xff] %v807
                %v809 = vld [vmem:[%s175 + $0x62b0] sm:$0xff]
                %810 = vst [vmem:[%s176 + $0xa18] sm:$0xff] %v809
                %v811 = vld [vmem:[%s175 + $0x62b8] sm:$0xff]
                %812 = vst [vmem:[%s176 + $0xa20] sm:$0xff] %v811
                %v813 = vld [vmem:[%s175 + $0x62c0] sm:$0xff]
                %814 = vst [vmem:[%s176 + $0xa28] sm:$0xff] %v813
                %v815 = vld [vmem:[%s175 + $0x62c8] sm:$0xff]
                %816 = vst [vmem:[%s176 + $0xa30] sm:$0xff] %v815
                %v817 = vld [vmem:[%s175 + $0x62d0] sm:$0xff]
                %818 = vst [vmem:[%s176 + $0xa38] sm:$0xff] %v817
                %v819 = vld [vmem:[%s175 + $0x62d8] sm:$0xff]
                %820 = vst [vmem:[%s176 + $0xa40] sm:$0xff] %v819
                %v821 = vld [vmem:[%s175 + $0x62e0] sm:$0xff]
                %822 = vst [vmem:[%s176 + $0xa48] sm:$0xff] %v821
                %v823 = vld [vmem:[%s175 + $0x62e8] sm:$0xff]
                %824 = vst [vmem:[%s176 + $0xa50] sm:$0xff] %v823
                %v825 = vld [vmem:[%s175 + $0x62f0] sm:$0xff]
                %826 = vst [vmem:[%s176 + $0xa58] sm:$0xff] %v825
                %v827 = vld [vmem:[%s175 + $0x62f8] sm:$0xff]
                %828 = vst [vmem:[%s176 + $0xa60] sm:$0xff] %v827
                %v829 = vld [vmem:[%s175 + $0x6300] sm:$0xff]
                %830 = vst [vmem:[%s176 + $0xa68] sm:$0xff] %v829
                %v831 = vld [vmem:[%s175 + $0x6308] sm:$0xff]
                %832 = vst [vmem:[%s176 + $0xa70] sm:$0xff] %v831
                %v833 = vld [vmem:[%s175 + $0x6310] sm:$0xff]
                %834 = vst [vmem:[%s176 + $0xa78] sm:$0xff] %v833
                %v835 = vld [vmem:[%s175 + $0x6318] sm:$0xff]
                %836 = vst [vmem:[%s176 + $0xa80] sm:$0xff] %v835
                %v837 = vld [vmem:[%s175 + $0x6978] sm:$0xff]
                %838 = vst [vmem:[%s176 + $0xa8c] sm:$0xff] %v837
                %v839 = vld [vmem:[%s175 + $0x6980] sm:$0xff]
                %840 = vst [vmem:[%s176 + $0xa94] sm:$0xff] %v839
                %v841 = vld [vmem:[%s175 + $0x6988] sm:$0xff]
                %842 = vst [vmem:[%s176 + $0xa9c] sm:$0xff] %v841
                %v843 = vld [vmem:[%s175 + $0x6990] sm:$0xff]
                %844 = vst [vmem:[%s176 + $0xaa4] sm:$0xff] %v843
                %v845 = vld [vmem:[%s175 + $0x6998] sm:$0xff]
                %846 = vst [vmem:[%s176 + $0xaac] sm:$0xff] %v845
                %v847 = vld [vmem:[%s175 + $0x69a0] sm:$0xff]
                %848 = vst [vmem:[%s176 + $0xab4] sm:$0xff] %v847
                %v849 = vld [vmem:[%s175 + $0x69a8] sm:$0xff]
                %850 = vst [vmem:[%s176 + $0xabc] sm:$0xff] %v849
                %v851 = vld [vmem:[%s175 + $0x69b0] sm:$0xff]
                %852 = vst [vmem:[%s176 + $0xac4] sm:$0xff] %v851
                %v853 = vld [vmem:[%s175 + $0x69b8] sm:$0xff]
                %854 = vst [vmem:[%s176 + $0xacc] sm:$0xff] %v853
                %v855 = vld [vmem:[%s175 + $0x69c0] sm:$0xff]
                %856 = vst [vmem:[%s176 + $0xad4] sm:$0xff] %v855
                %v857 = vld [vmem:[%s175 + $0x69c8] sm:$0xff]
                %858 = vst [vmem:[%s176 + $0xadc] sm:$0xff] %v857
                %v859 = vld [vmem:[%s175 + $0x69d0] sm:$0xff]
                %860 = vst [vmem:[%s176 + $0xae4] sm:$0xff] %v859
                %v861 = vld [vmem:[%s175 + $0x69d8] sm:$0xff]
                %862 = vst [vmem:[%s176 + $0xaec] sm:$0xff] %v861
                %v863 = vld [vmem:[%s175 + $0x69e0] sm:$0xff]
                %864 = vst [vmem:[%s176 + $0xaf4] sm:$0xff] %v863
                %v865 = vld [vmem:[%s175 + $0x69e8] sm:$0xff]
                %866 = vst [vmem:[%s176 + $0xafc] sm:$0xff] %v865
                %v867 = vld [vmem:[%s175 + $0x69f0] sm:$0xff]
                %868 = vst [vmem:[%s176 + $0xb04] sm:$0xff] %v867
                %v869 = vld [vmem:[%s175 + $0x69f8] sm:$0xff]
                %870 = vst [vmem:[%s176 + $0xb0c] sm:$0xff] %v869
                %v871 = vld [vmem:[%s175 + $0x6a00] sm:$0xff]
                %872 = vst [vmem:[%s176 + $0xb14] sm:$0xff] %v871
                %v873 = vld [vmem:[%s175 + $0x6a08] sm:$0xff]
                %874 = vst [vmem:[%s176 + $0xb1c] sm:$0xff] %v873
                %v875 = vld [vmem:[%s175 + $0x6a10] sm:$0xff]
                %876 = vst [vmem:[%s176 + $0xb24] sm:$0xff] %v875
                %v877 = vld [vmem:[%s175 + $0x6a18] sm:$0xff]
                %878 = vst [vmem:[%s176 + $0xb2c] sm:$0xff] %v877
                %v879 = vld [vmem:[%s175 + $0x6a20] sm:$0xff]
                %880 = vst [vmem:[%s176 + $0xb34] sm:$0xff] %v879
              $region37: #{autoencoder_forward.9} parent=31 // loop_footer
                %s174 = sadd.s32 1, %s170
              $region38: #{autoencoder_forward.9} parent=31 // loop_footer_branch
                %169 = sbr.rel target = $region34
              $region39: #{autoencoder_forward.9} parent=31 // loop_exit
                _
              loop: start=0, step=1, limit=1
              $region40: #{autoencoder_forward.9} parent=31 // loop_pre_header
                _
              $region41: #{autoencoder_forward.9} parent=31 // loop_header
                %s883 = sphi 0, %s887
                %p884 = scmp.ge.s32.totalorder %s883, 1
                %s888 = sphi %s167, %s167
                %s889 = sphi %s168, %s168
              $region42: #{autoencoder_forward.9} parent=31 // loop_header_branch
                %886 = sbr.rel (%p884) target = $region46
              $region43: #{autoencoder_forward.9} parent=31 // loop_body
                %v890 = vld [vmem:[%s888] sm:$0xf]
                %891 = vst [vmem:[%s889] sm:$0xf] %v890
                %v892 = vld [vmem:[%s888 + $0x708] sm:$0xf]
                %893 = vst [vmem:[%s889 + $0xb4] sm:$0xf] %v892
                %v894 = vld [vmem:[%s888 + $0xe10] sm:$0xf]
                %895 = vst [vmem:[%s889 + $0x168] sm:$0xf] %v894
                %v896 = vld [vmem:[%s888 + $0x1518] sm:$0xf]
                %897 = vst [vmem:[%s889 + $0x21c] sm:$0xf] %v896
                %v898 = vld [vmem:[%s888 + $0x1c20] sm:$0xf]
                %899 = vst [vmem:[%s889 + $0x2d0] sm:$0xf] %v898
                %v900 = vld [vmem:[%s888 + $0x2328] sm:$0xf]
                %901 = vst [vmem:[%s889 + $0x384] sm:$0xf] %v900
                %v902 = vld [vmem:[%s888 + $0x2a30] sm:$0xf]
                %903 = vst [vmem:[%s889 + $0x438] sm:$0xf] %v902
                %v904 = vld [vmem:[%s888 + $0x3138] sm:$0xf]
                %905 = vst [vmem:[%s889 + $0x4ec] sm:$0xf] %v904
                %v906 = vld [vmem:[%s888 + $0x3840] sm:$0xf]
                %907 = vst [vmem:[%s889 + $0x5a0] sm:$0xf] %v906
                %v908 = vld [vmem:[%s888 + $0x3f48] sm:$0xf]
                %909 = vst [vmem:[%s889 + $0x654] sm:$0xf] %v908
                %v910 = vld [vmem:[%s888 + $0x4650] sm:$0xf]
                %911 = vst [vmem:[%s889 + $0x708] sm:$0xf] %v910
                %v912 = vld [vmem:[%s888 + $0x4d58] sm:$0xf]
                %913 = vst [vmem:[%s889 + $0x7bc] sm:$0xf] %v912
                %v914 = vld [vmem:[%s888 + $0x5460] sm:$0xf]
                %915 = vst [vmem:[%s889 + $0x870] sm:$0xf] %v914
                %v916 = vld [vmem:[%s888 + $0x5b68] sm:$0xf]
                %917 = vst [vmem:[%s889 + $0x924] sm:$0xf] %v916
                %v918 = vld [vmem:[%s888 + $0x6270] sm:$0xf]
                %919 = vst [vmem:[%s889 + $0x9d8] sm:$0xf] %v918
                %v920 = vld [vmem:[%s888 + $0x6978] sm:$0xf]
                %921 = vst [vmem:[%s889 + $0xa8c] sm:$0xf] %v920
              $region44: #{autoencoder_forward.9} parent=31 // loop_footer
                %s887 = sadd.s32 1, %s883
              $region45: #{autoencoder_forward.9} parent=31 // loop_footer_branch
                %882 = sbr.rel target = $region41
              $region46: #{autoencoder_forward.9} parent=31 // loop_exit
                _
            $region32: #{autoencoder_forward.9} parent=27 // pred_fallthru
              _
          $region28: #{autoencoder_forward.9} parent=23 // pred_fallthru
            _
          %922 = vnop
        $region24: #{autoencoder_forward.9} parent=19 // pred_fallthru
          _
        // Predicated region
        $region47: #{autoencoder_forward.9} parent=19 // pred_check
          %p923 = pneg %p93
        $region48: #{autoencoder_forward.9} parent=19 // pred_check_branch
          %925 = sbr.rel (%p923) target = $region50
        $region49: #{autoencoder_forward.9} parent=19 // pred_region
          %s926 = smul.u32 45, %s17
          %p927 = scmp.lt.s32.totalorder %s926, 449
          %s928 = scalar_select %p927, %s926, 449
          %s929 = scalar_lea.vmem %s2, %s928
          %s930 = smul.u32 45, %s17
        $region50: #{autoencoder_forward.9} parent=19 // pred_fallthru
          _
      $region20: #{autoencoder_forward.9} parent=5 // pred_fallthru
        _
      %p931 = scmp.le.s32.totalorder 1, %s9
      %p932 = scmp.lt.s32.totalorder %s9, 11
      %p933 = pnand %p931, %p932
      %p934 = pneg %p933
      // Predicated region
      $region51: #{autoencoder_forward.9} parent=5 // pred_check
        _
      $region52: #{autoencoder_forward.9} parent=5 // pred_check_branch
        %936 = sbr.rel (%p933) target = $region54
      $region53: #{autoencoder_forward.9} parent=5 // pred_region
        %s937 = ssub.s32 %s9, 1
        %s938 = sand.u32 %s60, 1
        %s939 = sand.u32 %s60, 1
        %s940 = smul.addr %s939, 2880
        %s941 = scalar_lea.vmem [#allocation2], %s940
        // Predicated region
        $region55: #{autoencoder_forward.9} parent=53 // pred_check
          %p942 = pneg %p73
        $region56: #{autoencoder_forward.9} parent=53 // pred_check_branch
          %944 = sbr.rel (%p942) target = $region58
        $region57: #{autoencoder_forward.9} parent=53 // pred_region
          _
        $region58: #{autoencoder_forward.9} parent=53 // pred_fallthru
          _
        %p945 = scmp.lt.s32.totalorder %s18, 0
        %s946 = scalar_select %p945, %s18, 0
        %s947 = smul.addr %s946, 8
        %s948 = scalar_lea.vmem %s0, %s947
        %p949 = pneg %p47
        %p950 = pneg %p44
        %s951 = sand.u32 %s60, 1
        %s952 = sand.u32 %s60, 1
        %s953 = smul.addr %s952, 2880
        %s954 = scalar_lea.vmem [#allocation2], %s953
        %p955 = pneg %p73
        %p956 = pneg %p70
        %s957 = smul.u32 45, %s19
        %p958 = scmp.lt.s32.totalorder %s957, 449
        %s959 = scalar_select %p958, %s957, 449
        %s960 = scalar_lea.vmem %s2, %s959
        %p961 = pneg %p99
        %p962 = pneg %p96
        %p963 = pneg %p127
        %p964 = pneg %p124
        %s965 = smul.u32 45, %s19
        %p966 = scmp.lt.s32.totalorder %s18, 0
        %s967 = scalar_select %p966, %s18, 0
        %p968 = scmp.lt.s32.totalorder %s965, 449
        %s969 = scalar_select %p968, %s965, 449
        %s970 = smul.addr %s967, 450
        %s971 = sadd.s32 %s969, %s970
        %s972 = smul.addr %s971, 8
        %s973 = scalar_lea.vmem %s3, %s972
        %p974 = scmp.lt.s32.totalorder %s18, 0
        %s975 = scalar_select %p974, %s18, 0
        %s976 = smul.addr %s975, 8
        %s977 = scalar_lea.vmem %s0, %s976
        %s978 = smul.u32 45, %s19
        %s979 = smul.u32 45, %s19
        %p980 = scmp.lt.s32.totalorder %s979, 449
        %s981 = scalar_select %p980, %s979, 449
        %s982 = scalar_lea.vmem %s2, %s981
        %s983 = smul.u32 45, %s19
        %s984 = smul.u32 45, %s19
        %p985 = scmp.lt.s32.totalorder %s18, 0
        %s986 = scalar_select %p985, %s18, 0
        %p987 = scmp.lt.s32.totalorder %s984, 449
        %s988 = scalar_select %p987, %s984, 449
        %s989 = smul.addr %s986, 450
        %s990 = sadd.s32 %s988, %s989
        %s991 = smul.addr %s990, 8
        %s992 = scalar_lea.vmem %s3, %s991
        %s993 = smul.u32 45, %s19
        %v995 = vld [vmem:[%s977] sm:$0xff]
        %v996 = vld [vmem:[%s941] sm:$0xff]
        %v997 = vld [vmem:[%s941 + $0x8] sm:$0xff]
        %v998 = vld [vmem:[%s941 + $0x10] sm:$0xff]
        %v999 = vld [vmem:[%s941 + $0x18] sm:$0xff]
        %v1000 = vld [vmem:[%s941 + $0x20] sm:$0xff]
        %v1001 = vld [vmem:[%s941 + $0x28] sm:$0xff]
        %v1002 = vld [vmem:[%s941 + $0x30] sm:$0xff]
        %v1003 = vld [vmem:[%s941 + $0x38] sm:$0xff]
        %v1004 = vld [vmem:[%s941 + $0x40] sm:$0xff]
        %v1005 = vld [vmem:[%s941 + $0x48] sm:$0xff]
        %v1006 = vld [vmem:[%s941 + $0x50] sm:$0xff]
        %v1007 = vld [vmem:[%s941 + $0x58] sm:$0xff]
        %v1008 = vld [vmem:[%s941 + $0x60] sm:$0xff]
        %v1009 = vld [vmem:[%s941 + $0x68] sm:$0xff]
        %v1010 = vld [vmem:[%s941 + $0x70] sm:$0xff]
        %v1011 = vld [vmem:[%s941 + $0x78] sm:$0xff]
        %v1012 = vld [vmem:[%s941 + $0x80] sm:$0xff]
        %v1013 = vld [vmem:[%s941 + $0x88] sm:$0xff]
        %v1014 = vld [vmem:[%s941 + $0x90] sm:$0xff]
        %v1015 = vld [vmem:[%s941 + $0x98] sm:$0xff]
        %v1016 = vld [vmem:[%s941 + $0xa0] sm:$0xff]
        %v1017 = vld [vmem:[%s941 + $0xa8] sm:$0xff]
        %v1018 = vld [vmem:[%s941 + $0xb0] sm:$0xf]
        %v1019 = vld [vmem:[%s941 + $0xb4] sm:$0xff]
        %v1020 = vld [vmem:[%s941 + $0xbc] sm:$0xff]
        %v1021 = vld [vmem:[%s941 + $0xc4] sm:$0xff]
        %v1022 = vld [vmem:[%s941 + $0xcc] sm:$0xff]
        %v1023 = vld [vmem:[%s941 + $0xd4] sm:$0xff]
        %v1024 = vld [vmem:[%s941 + $0xdc] sm:$0xff]
        %v1025 = vld [vmem:[%s941 + $0xe4] sm:$0xff]
        %v1026 = vld [vmem:[%s941 + $0xec] sm:$0xff]
        %v1027 = vld [vmem:[%s941 + $0xf4] sm:$0xff]
        %v1028 = vld [vmem:[%s941 + $0xfc] sm:$0xff]
        %v1029 = vld [vmem:[%s941 + $0x104] sm:$0xff]
        %v1030 = vld [vmem:[%s941 + $0x10c] sm:$0xff]
        %v1031 = vld [vmem:[%s941 + $0x114] sm:$0xff]
        %v1032 = vld [vmem:[%s941 + $0x11c] sm:$0xff]
        %v1033 = vld [vmem:[%s941 + $0x124] sm:$0xff]
        %v1034 = vld [vmem:[%s941 + $0x12c] sm:$0xff]
        %v1035 = vld [vmem:[%s941 + $0x134] sm:$0xff]
        %v1036 = vld [vmem:[%s941 + $0x13c] sm:$0xff]
        %v1037 = vld [vmem:[%s941 + $0x144] sm:$0xff]
        %v1038 = vld [vmem:[%s941 + $0x14c] sm:$0xff]
        %v1039 = vld [vmem:[%s941 + $0x154] sm:$0xff]
        %v1040 = vld [vmem:[%s941 + $0x15c] sm:$0xff]
        %v1041 = vld [vmem:[%s941 + $0x164] sm:$0xf]
        %v1042 = vld [vmem:[%s941 + $0x168] sm:$0xff]
        %v1043 = vld [vmem:[%s941 + $0x170] sm:$0xff]
        %v1044 = vld [vmem:[%s941 + $0x178] sm:$0xff]
        %v1045 = vld [vmem:[%s941 + $0x180] sm:$0xff]
        %v1046 = vld [vmem:[%s941 + $0x188] sm:$0xff]
        %v1047 = vld [vmem:[%s941 + $0x190] sm:$0xff]
        %v1048 = vld [vmem:[%s941 + $0x198] sm:$0xff]
        %v1049 = vld [vmem:[%s941 + $0x1a0] sm:$0xff]
        %v1050 = vld [vmem:[%s941 + $0x1a8] sm:$0xff]
        %v1051 = vld [vmem:[%s941 + $0x1b0] sm:$0xff]
        %v1052 = vld [vmem:[%s941 + $0x1b8] sm:$0xff]
        %v1053 = vld [vmem:[%s941 + $0x1c0] sm:$0xff]
        %v1054 = vld [vmem:[%s941 + $0x1c8] sm:$0xff]
        %v1055 = vld [vmem:[%s941 + $0x1d0] sm:$0xff]
        %v1056 = vld [vmem:[%s941 + $0x1d8] sm:$0xff]
        %v1057 = vld [vmem:[%s941 + $0x1e0] sm:$0xff]
        %v1058 = vld [vmem:[%s941 + $0x1e8] sm:$0xff]
        %v1059 = vld [vmem:[%s941 + $0x1f0] sm:$0xff]
        %v1060 = vld [vmem:[%s941 + $0x1f8] sm:$0xff]
        %v1061 = vld [vmem:[%s941 + $0x200] sm:$0xff]
        %v1062 = vld [vmem:[%s941 + $0x208] sm:$0xff]
        %v1063 = vld [vmem:[%s941 + $0x210] sm:$0xff]
        %v1064 = vld [vmem:[%s941 + $0x218] sm:$0xf]
        %v1065 = vld [vmem:[%s941 + $0x21c] sm:$0xff]
        %v1066 = vld [vmem:[%s941 + $0x224] sm:$0xff]
        %v1067 = vld [vmem:[%s941 + $0x22c] sm:$0xff]
        %v1068 = vld [vmem:[%s941 + $0x234] sm:$0xff]
        %v1069 = vld [vmem:[%s941 + $0x23c] sm:$0xff]
        %v1070 = vld [vmem:[%s941 + $0x244] sm:$0xff]
        %v1071 = vld [vmem:[%s941 + $0x24c] sm:$0xff]
        %v1072 = vld [vmem:[%s941 + $0x254] sm:$0xff]
        %v1073 = vld [vmem:[%s941 + $0x25c] sm:$0xff]
        %v1074 = vld [vmem:[%s941 + $0x264] sm:$0xff]
        %v1075 = vld [vmem:[%s941 + $0x26c] sm:$0xff]
        %v1076 = vld [vmem:[%s941 + $0x274] sm:$0xff]
        %v1077 = vld [vmem:[%s941 + $0x27c] sm:$0xff]
        %v1078 = vld [vmem:[%s941 + $0x284] sm:$0xff]
        %v1079 = vld [vmem:[%s941 + $0x28c] sm:$0xff]
        %v1080 = vld [vmem:[%s941 + $0x294] sm:$0xff]
        %v1081 = vld [vmem:[%s941 + $0x29c] sm:$0xff]
        %v1082 = vld [vmem:[%s941 + $0x2a4] sm:$0xff]
        %v1083 = vld [vmem:[%s941 + $0x2ac] sm:$0xff]
        %v1084 = vld [vmem:[%s941 + $0x2b4] sm:$0xff]
        %v1085 = vld [vmem:[%s941 + $0x2bc] sm:$0xff]
        %v1086 = vld [vmem:[%s941 + $0x2c4] sm:$0xff]
        %v1087 = vld [vmem:[%s941 + $0x2cc] sm:$0xf]
        %v1088 = vld [vmem:[%s941 + $0x2d0] sm:$0xff]
        %v1089 = vld [vmem:[%s941 + $0x2d8] sm:$0xff]
        %v1090 = vld [vmem:[%s941 + $0x2e0] sm:$0xff]
        %v1091 = vld [vmem:[%s941 + $0x2e8] sm:$0xff]
        %v1092 = vld [vmem:[%s941 + $0x2f0] sm:$0xff]
        %v1093 = vld [vmem:[%s941 + $0x2f8] sm:$0xff]
        %v1094 = vld [vmem:[%s941 + $0x300] sm:$0xff]
        %v1095 = vld [vmem:[%s941 + $0x308] sm:$0xff]
        %v1096 = vld [vmem:[%s941 + $0x310] sm:$0xff]
        %v1097 = vld [vmem:[%s941 + $0x318] sm:$0xff]
        %v1098 = vld [vmem:[%s941 + $0x320] sm:$0xff]
        %v1099 = vld [vmem:[%s941 + $0x328] sm:$0xff]
        %v1100 = vld [vmem:[%s941 + $0x330] sm:$0xff]
        %v1101 = vld [vmem:[%s941 + $0x338] sm:$0xff]
        %v1102 = vld [vmem:[%s941 + $0x340] sm:$0xff]
        %v1103 = vld [vmem:[%s941 + $0x348] sm:$0xff]
        %v1104 = vld [vmem:[%s941 + $0x350] sm:$0xff]
        %v1105 = vld [vmem:[%s941 + $0x358] sm:$0xff]
        %v1106 = vld [vmem:[%s941 + $0x360] sm:$0xff]
        %v1107 = vld [vmem:[%s941 + $0x368] sm:$0xff]
        %v1108 = vld [vmem:[%s941 + $0x370] sm:$0xff]
        %v1109 = vld [vmem:[%s941 + $0x378] sm:$0xff]
        %v1110 = vld [vmem:[%s941 + $0x380] sm:$0xf]
        %v1111 = vld [vmem:[%s941 + $0x384] sm:$0xff]
        %v1112 = vld [vmem:[%s941 + $0x38c] sm:$0xff]
        %v1113 = vld [vmem:[%s941 + $0x394] sm:$0xff]
        %v1114 = vld [vmem:[%s941 + $0x39c] sm:$0xff]
        %v1115 = vld [vmem:[%s941 + $0x3a4] sm:$0xff]
        %v1116 = vld [vmem:[%s941 + $0x3ac] sm:$0xff]
        %v1117 = vld [vmem:[%s941 + $0x3b4] sm:$0xff]
        %v1118 = vld [vmem:[%s941 + $0x3bc] sm:$0xff]
        %v1119 = vld [vmem:[%s941 + $0x3c4] sm:$0xff]
        %v1120 = vld [vmem:[%s941 + $0x3cc] sm:$0xff]
        %v1121 = vld [vmem:[%s941 + $0x3d4] sm:$0xff]
        %v1122 = vld [vmem:[%s941 + $0x3dc] sm:$0xff]
        %v1123 = vld [vmem:[%s941 + $0x3e4] sm:$0xff]
        %v1124 = vld [vmem:[%s941 + $0x3ec] sm:$0xff]
        %v1125 = vld [vmem:[%s941 + $0x3f4] sm:$0xff]
        %v1126 = vld [vmem:[%s941 + $0x3fc] sm:$0xff]
        %v1127 = vld [vmem:[%s941 + $0x404] sm:$0xff]
        %v1128 = vld [vmem:[%s941 + $0x40c] sm:$0xff]
        %v1129 = vld [vmem:[%s941 + $0x414] sm:$0xff]
        %v1130 = vld [vmem:[%s941 + $0x41c] sm:$0xff]
        %v1131 = vld [vmem:[%s941 + $0x424] sm:$0xff]
        %v1132 = vld [vmem:[%s941 + $0x42c] sm:$0xff]
        %v1133 = vld [vmem:[%s941 + $0x434] sm:$0xf]
        %v1134 = vld [vmem:[%s941 + $0x438] sm:$0xff]
        %v1135 = vld [vmem:[%s941 + $0x440] sm:$0xff]
        %v1136 = vld [vmem:[%s941 + $0x448] sm:$0xff]
        %v1137 = vld [vmem:[%s941 + $0x450] sm:$0xff]
        %v1138 = vld [vmem:[%s941 + $0x458] sm:$0xff]
        %v1139 = vld [vmem:[%s941 + $0x460] sm:$0xff]
        %v1140 = vld [vmem:[%s941 + $0x468] sm:$0xff]
        %v1141 = vld [vmem:[%s941 + $0x470] sm:$0xff]
        %v1142 = vld [vmem:[%s941 + $0x478] sm:$0xff]
        %v1143 = vld [vmem:[%s941 + $0x480] sm:$0xff]
        %v1144 = vld [vmem:[%s941 + $0x488] sm:$0xff]
        %v1145 = vld [vmem:[%s941 + $0x490] sm:$0xff]
        %v1146 = vld [vmem:[%s941 + $0x498] sm:$0xff]
        %v1147 = vld [vmem:[%s941 + $0x4a0] sm:$0xff]
        %v1148 = vld [vmem:[%s941 + $0x4a8] sm:$0xff]
        %v1149 = vld [vmem:[%s941 + $0x4b0] sm:$0xff]
        %v1150 = vld [vmem:[%s941 + $0x4b8] sm:$0xff]
        %v1151 = vld [vmem:[%s941 + $0x4c0] sm:$0xff]
        %v1152 = vld [vmem:[%s941 + $0x4c8] sm:$0xff]
        %v1153 = vld [vmem:[%s941 + $0x4d0] sm:$0xff]
        %v1154 = vld [vmem:[%s941 + $0x4d8] sm:$0xff]
        %v1155 = vld [vmem:[%s941 + $0x4e0] sm:$0xff]
        %v1156 = vld [vmem:[%s941 + $0x4e8] sm:$0xf]
        %v1157 = vld [vmem:[%s941 + $0x4ec] sm:$0xff]
        %v1158 = vld [vmem:[%s941 + $0x4f4] sm:$0xff]
        %v1159 = vld [vmem:[%s941 + $0x4fc] sm:$0xff]
        %v1160 = vld [vmem:[%s941 + $0x504] sm:$0xff]
        %v1161 = vld [vmem:[%s941 + $0x50c] sm:$0xff]
        %v1162 = vld [vmem:[%s941 + $0x514] sm:$0xff]
        %v1163 = vld [vmem:[%s941 + $0x51c] sm:$0xff]
        %v1164 = vld [vmem:[%s941 + $0x524] sm:$0xff]
        %v1165 = vld [vmem:[%s941 + $0x52c] sm:$0xff]
        %v1166 = vld [vmem:[%s941 + $0x534] sm:$0xff]
        %v1167 = vld [vmem:[%s941 + $0x53c] sm:$0xff]
        %v1168 = vld [vmem:[%s941 + $0x544] sm:$0xff]
        %v1169 = vld [vmem:[%s941 + $0x54c] sm:$0xff]
        %v1170 = vld [vmem:[%s941 + $0x554] sm:$0xff]
        %v1171 = vld [vmem:[%s941 + $0x55c] sm:$0xff]
        %v1172 = vld [vmem:[%s941 + $0x564] sm:$0xff]
        %v1173 = vld [vmem:[%s941 + $0x56c] sm:$0xff]
        %v1174 = vld [vmem:[%s941 + $0x574] sm:$0xff]
        %v1175 = vld [vmem:[%s941 + $0x57c] sm:$0xff]
        %v1176 = vld [vmem:[%s941 + $0x584] sm:$0xff]
        %v1177 = vld [vmem:[%s941 + $0x58c] sm:$0xff]
        %v1178 = vld [vmem:[%s941 + $0x594] sm:$0xff]
        %v1179 = vld [vmem:[%s941 + $0x59c] sm:$0xf]
        %v1180 = vld [vmem:[%s941 + $0x5a0] sm:$0xff]
        %v1181 = vld [vmem:[%s941 + $0x5a8] sm:$0xff]
        %v1182 = vld [vmem:[%s941 + $0x5b0] sm:$0xff]
        %v1183 = vld [vmem:[%s941 + $0x5b8] sm:$0xff]
        %v1184 = vld [vmem:[%s941 + $0x5c0] sm:$0xff]
        %v1185 = vld [vmem:[%s941 + $0x5c8] sm:$0xff]
        %v1186 = vld [vmem:[%s941 + $0x5d0] sm:$0xff]
        %v1187 = vld [vmem:[%s941 + $0x5d8] sm:$0xff]
        %v1188 = vld [vmem:[%s941 + $0x5e0] sm:$0xff]
        %v1189 = vld [vmem:[%s941 + $0x5e8] sm:$0xff]
        %v1190 = vld [vmem:[%s941 + $0x5f0] sm:$0xff]
        %v1191 = vld [vmem:[%s941 + $0x5f8] sm:$0xff]
        %v1192 = vld [vmem:[%s941 + $0x600] sm:$0xff]
        %v1193 = vld [vmem:[%s941 + $0x608] sm:$0xff]
        %v1194 = vld [vmem:[%s941 + $0x610] sm:$0xff]
        %v1195 = vld [vmem:[%s941 + $0x618] sm:$0xff]
        %v1196 = vld [vmem:[%s941 + $0x620] sm:$0xff]
        %v1197 = vld [vmem:[%s941 + $0x628] sm:$0xff]
        %v1198 = vld [vmem:[%s941 + $0x630] sm:$0xff]
        %v1199 = vld [vmem:[%s941 + $0x638] sm:$0xff]
        %v1200 = vld [vmem:[%s941 + $0x640] sm:$0xff]
        %v1201 = vld [vmem:[%s941 + $0x648] sm:$0xff]
        %v1202 = vld [vmem:[%s941 + $0x650] sm:$0xf]
        %v1203 = vld [vmem:[%s941 + $0x654] sm:$0xff]
        %v1204 = vld [vmem:[%s941 + $0x65c] sm:$0xff]
        %v1205 = vld [vmem:[%s941 + $0x664] sm:$0xff]
        %v1206 = vld [vmem:[%s941 + $0x66c] sm:$0xff]
        %v1207 = vld [vmem:[%s941 + $0x674] sm:$0xff]
        %v1208 = vld [vmem:[%s941 + $0x67c] sm:$0xff]
        %v1209 = vld [vmem:[%s941 + $0x684] sm:$0xff]
        %v1210 = vld [vmem:[%s941 + $0x68c] sm:$0xff]
        %v1211 = vld [vmem:[%s941 + $0x694] sm:$0xff]
        %v1212 = vld [vmem:[%s941 + $0x69c] sm:$0xff]
        %v1213 = vld [vmem:[%s941 + $0x6a4] sm:$0xff]
        %v1214 = vld [vmem:[%s941 + $0x6ac] sm:$0xff]
        %v1215 = vld [vmem:[%s941 + $0x6b4] sm:$0xff]
        %v1216 = vld [vmem:[%s941 + $0x6bc] sm:$0xff]
        %v1217 = vld [vmem:[%s941 + $0x6c4] sm:$0xff]
        %v1218 = vld [vmem:[%s941 + $0x6cc] sm:$0xff]
        %v1219 = vld [vmem:[%s941 + $0x6d4] sm:$0xff]
        %v1220 = vld [vmem:[%s941 + $0x6dc] sm:$0xff]
        %v1221 = vld [vmem:[%s941 + $0x6e4] sm:$0xff]
        %v1222 = vld [vmem:[%s941 + $0x6ec] sm:$0xff]
        %v1223 = vld [vmem:[%s941 + $0x6f4] sm:$0xff]
        %v1224 = vld [vmem:[%s941 + $0x6fc] sm:$0xff]
        %v1225 = vld [vmem:[%s941 + $0x704] sm:$0xf]
        %v1226 = vld [vmem:[%s941 + $0x708] sm:$0xff]
        %v1227 = vld [vmem:[%s941 + $0x710] sm:$0xff]
        %v1228 = vld [vmem:[%s941 + $0x718] sm:$0xff]
        %v1229 = vld [vmem:[%s941 + $0x720] sm:$0xff]
        %v1230 = vld [vmem:[%s941 + $0x728] sm:$0xff]
        %v1231 = vld [vmem:[%s941 + $0x730] sm:$0xff]
        %v1232 = vld [vmem:[%s941 + $0x738] sm:$0xff]
        %v1233 = vld [vmem:[%s941 + $0x740] sm:$0xff]
        %v1234 = vld [vmem:[%s941 + $0x748] sm:$0xff]
        %v1235 = vld [vmem:[%s941 + $0x750] sm:$0xff]
        %v1236 = vld [vmem:[%s941 + $0x758] sm:$0xff]
        %v1237 = vld [vmem:[%s941 + $0x760] sm:$0xff]
        %v1238 = vld [vmem:[%s941 + $0x768] sm:$0xff]
        %v1239 = vld [vmem:[%s941 + $0x770] sm:$0xff]
        %v1240 = vld [vmem:[%s941 + $0x778] sm:$0xff]
        %v1241 = vld [vmem:[%s941 + $0x780] sm:$0xff]
        %v1242 = vld [vmem:[%s941 + $0x788] sm:$0xff]
        %v1243 = vld [vmem:[%s941 + $0x790] sm:$0xff]
        %v1244 = vld [vmem:[%s941 + $0x798] sm:$0xff]
        %v1245 = vld [vmem:[%s941 + $0x7a0] sm:$0xff]
        %v1246 = vld [vmem:[%s941 + $0x7a8] sm:$0xff]
        %v1247 = vld [vmem:[%s941 + $0x7b0] sm:$0xff]
        %v1248 = vld [vmem:[%s941 + $0x7b8] sm:$0xf]
        %v1249 = vld [vmem:[%s941 + $0x7bc] sm:$0xff]
        %v1250 = vld [vmem:[%s941 + $0x7c4] sm:$0xff]
        %v1251 = vld [vmem:[%s941 + $0x7cc] sm:$0xff]
        %v1252 = vld [vmem:[%s941 + $0x7d4] sm:$0xff]
        %v1253 = vld [vmem:[%s941 + $0x7dc] sm:$0xff]
        %v1254 = vld [vmem:[%s941 + $0x7e4] sm:$0xff]
        %v1255 = vld [vmem:[%s941 + $0x7ec] sm:$0xff]
        %v1256 = vld [vmem:[%s941 + $0x7f4] sm:$0xff]
        %v1257 = vld [vmem:[%s941 + $0x7fc] sm:$0xff]
        %v1258 = vld [vmem:[%s941 + $0x804] sm:$0xff]
        %v1259 = vld [vmem:[%s941 + $0x80c] sm:$0xff]
        %v1260 = vld [vmem:[%s941 + $0x814] sm:$0xff]
        %v1261 = vld [vmem:[%s941 + $0x81c] sm:$0xff]
        %v1262 = vld [vmem:[%s941 + $0x824] sm:$0xff]
        %v1263 = vld [vmem:[%s941 + $0x82c] sm:$0xff]
        %v1264 = vld [vmem:[%s941 + $0x834] sm:$0xff]
        %v1265 = vld [vmem:[%s941 + $0x83c] sm:$0xff]
        %v1266 = vld [vmem:[%s941 + $0x844] sm:$0xff]
        %v1267 = vld [vmem:[%s941 + $0x84c] sm:$0xff]
        %v1268 = vld [vmem:[%s941 + $0x854] sm:$0xff]
        %v1269 = vld [vmem:[%s941 + $0x85c] sm:$0xff]
        %v1270 = vld [vmem:[%s941 + $0x864] sm:$0xff]
        %v1271 = vld [vmem:[%s941 + $0x86c] sm:$0xf]
        %v1272 = vld [vmem:[%s941 + $0x870] sm:$0xff]
        %v1273 = vld [vmem:[%s941 + $0x878] sm:$0xff]
        %v1274 = vld [vmem:[%s941 + $0x880] sm:$0xff]
        %v1275 = vld [vmem:[%s941 + $0x888] sm:$0xff]
        %v1276 = vld [vmem:[%s941 + $0x890] sm:$0xff]
        %v1277 = vld [vmem:[%s941 + $0x898] sm:$0xff]
        %v1278 = vld [vmem:[%s941 + $0x8a0] sm:$0xff]
        %v1279 = vld [vmem:[%s941 + $0x8a8] sm:$0xff]
        %v1280 = vld [vmem:[%s941 + $0x8b0] sm:$0xff]
        %v1281 = vld [vmem:[%s941 + $0x8b8] sm:$0xff]
        %v1282 = vld [vmem:[%s941 + $0x8c0] sm:$0xff]
        %v1283 = vld [vmem:[%s941 + $0x8c8] sm:$0xff]
        %v1284 = vld [vmem:[%s941 + $0x8d0] sm:$0xff]
        %v1285 = vld [vmem:[%s941 + $0x8d8] sm:$0xff]
        %v1286 = vld [vmem:[%s941 + $0x8e0] sm:$0xff]
        %v1287 = vld [vmem:[%s941 + $0x8e8] sm:$0xff]
        %v1288 = vld [vmem:[%s941 + $0x8f0] sm:$0xff]
        %v1289 = vld [vmem:[%s941 + $0x8f8] sm:$0xff]
        %v1290 = vld [vmem:[%s941 + $0x900] sm:$0xff]
        %v1291 = vld [vmem:[%s941 + $0x908] sm:$0xff]
        %v1292 = vld [vmem:[%s941 + $0x910] sm:$0xff]
        %v1293 = vld [vmem:[%s941 + $0x918] sm:$0xff]
        %v1294 = vld [vmem:[%s941 + $0x920] sm:$0xf]
        %v1295 = vld [vmem:[%s941 + $0x924] sm:$0xff]
        %v1296 = vld [vmem:[%s941 + $0x92c] sm:$0xff]
        %v1297 = vld [vmem:[%s941 + $0x934] sm:$0xff]
        %v1298 = vld [vmem:[%s941 + $0x93c] sm:$0xff]
        %v1299 = vld [vmem:[%s941 + $0x944] sm:$0xff]
        %v1300 = vld [vmem:[%s941 + $0x94c] sm:$0xff]
        %v1301 = vld [vmem:[%s941 + $0x954] sm:$0xff]
        %v1302 = vld [vmem:[%s941 + $0x95c] sm:$0xff]
        %v1303 = vld [vmem:[%s941 + $0x964] sm:$0xff]
        %v1304 = vld [vmem:[%s941 + $0x96c] sm:$0xff]
        %v1305 = vld [vmem:[%s941 + $0x974] sm:$0xff]
        %v1306 = vld [vmem:[%s941 + $0x97c] sm:$0xff]
        %v1307 = vld [vmem:[%s941 + $0x984] sm:$0xff]
        %v1308 = vld [vmem:[%s941 + $0x98c] sm:$0xff]
        %v1309 = vld [vmem:[%s941 + $0x994] sm:$0xff]
        %v1310 = vld [vmem:[%s941 + $0x99c] sm:$0xff]
        %v1311 = vld [vmem:[%s941 + $0x9a4] sm:$0xff]
        %v1312 = vld [vmem:[%s941 + $0x9ac] sm:$0xff]
        %v1313 = vld [vmem:[%s941 + $0x9b4] sm:$0xff]
        %v1314 = vld [vmem:[%s941 + $0x9bc] sm:$0xff]
        %v1315 = vld [vmem:[%s941 + $0x9c4] sm:$0xff]
        %v1316 = vld [vmem:[%s941 + $0x9cc] sm:$0xff]
        %v1317 = vld [vmem:[%s941 + $0x9d4] sm:$0xf]
        %v1318 = vld [vmem:[%s941 + $0x9d8] sm:$0xff]
        %v1319 = vld [vmem:[%s941 + $0x9e0] sm:$0xff]
        %v1320 = vld [vmem:[%s941 + $0x9e8] sm:$0xff]
        %v1321 = vld [vmem:[%s941 + $0x9f0] sm:$0xff]
        %v1322 = vld [vmem:[%s941 + $0x9f8] sm:$0xff]
        %v1323 = vld [vmem:[%s941 + $0xa00] sm:$0xff]
        %v1324 = vld [vmem:[%s941 + $0xa08] sm:$0xff]
        %v1325 = vld [vmem:[%s941 + $0xa10] sm:$0xff]
        %v1326 = vld [vmem:[%s941 + $0xa18] sm:$0xff]
        %v1327 = vld [vmem:[%s941 + $0xa20] sm:$0xff]
        %v1328 = vld [vmem:[%s941 + $0xa28] sm:$0xff]
        %v1329 = vld [vmem:[%s941 + $0xa30] sm:$0xff]
        %v1330 = vld [vmem:[%s941 + $0xa38] sm:$0xff]
        %v1331 = vld [vmem:[%s941 + $0xa40] sm:$0xff]
        %v1332 = vld [vmem:[%s941 + $0xa48] sm:$0xff]
        %v1333 = vld [vmem:[%s941 + $0xa50] sm:$0xff]
        %v1334 = vld [vmem:[%s941 + $0xa58] sm:$0xff]
        %v1335 = vld [vmem:[%s941 + $0xa60] sm:$0xff]
        %v1336 = vld [vmem:[%s941 + $0xa68] sm:$0xff]
        %v1337 = vld [vmem:[%s941 + $0xa70] sm:$0xff]
        %v1338 = vld [vmem:[%s941 + $0xa78] sm:$0xff]
        %v1339 = vld [vmem:[%s941 + $0xa80] sm:$0xff]
        %v1340 = vld [vmem:[%s941 + $0xa88] sm:$0xf]
        %v1341 = vld [vmem:[%s941 + $0xa8c] sm:$0xff]
        %v1342 = vld [vmem:[%s941 + $0xa94] sm:$0xff]
        %v1343 = vld [vmem:[%s941 + $0xa9c] sm:$0xff]
        %v1344 = vld [vmem:[%s941 + $0xaa4] sm:$0xff]
        %v1345 = vld [vmem:[%s941 + $0xaac] sm:$0xff]
        %v1346 = vld [vmem:[%s941 + $0xab4] sm:$0xff]
        %v1347 = vld [vmem:[%s941 + $0xabc] sm:$0xff]
        %v1348 = vld [vmem:[%s941 + $0xac4] sm:$0xff]
        %v1349 = vld [vmem:[%s941 + $0xacc] sm:$0xff]
        %v1350 = vld [vmem:[%s941 + $0xad4] sm:$0xff]
        %v1351 = vld [vmem:[%s941 + $0xadc] sm:$0xff]
        %v1352 = vld [vmem:[%s941 + $0xae4] sm:$0xff]
        %v1353 = vld [vmem:[%s941 + $0xaec] sm:$0xff]
        %v1354 = vld [vmem:[%s941 + $0xaf4] sm:$0xff]
        %v1355 = vld [vmem:[%s941 + $0xafc] sm:$0xff]
        %v1356 = vld [vmem:[%s941 + $0xb04] sm:$0xff]
        %v1357 = vld [vmem:[%s941 + $0xb0c] sm:$0xff]
        %v1358 = vld [vmem:[%s941 + $0xb14] sm:$0xff]
        %v1359 = vld [vmem:[%s941 + $0xb1c] sm:$0xff]
        %v1360 = vld [vmem:[%s941 + $0xb24] sm:$0xff]
        %v1361 = vld [vmem:[%s941 + $0xb2c] sm:$0xff]
        %v1362 = vld [vmem:[%s941 + $0xb34] sm:$0xff]
        %v1363 = vld [vmem:[%s941 + $0xb3c] sm:$0xf]
        %v1364 = vpack.c.bf16 %v995, %v995
        %v1365 = vld [vmem:[%s982] sm:$0xff]
        %v1366 = vld [vmem:[%s982 + $0x8] sm:$0xff]
        %v1367 = vld [vmem:[%s982 + $0x10] sm:$0xff]
        %v1368 = vld [vmem:[%s982 + $0x18] sm:$0xff]
        %v1369 = vld [vmem:[%s982 + $0x20] sm:$0xff]
        %v1370 = vld [vmem:[%s982 + $0x28] sm:$0x1f]
        %v1377 = vlaneseq
        %v1378 = vshrl.u32 %v1377, 7
        %v1379 = vsub.s32 0, %v1378
        %v1380 = vrot.slane %v1365, %v1379
        %v1381 = vlaneseq
        %v1382 = vshrl.u32 %v1381, 7
        %v1383 = vsub.s32 1, %v1382
        %v1384 = vrot.slane %v1365, %v1383
        %v1385 = vlaneseq
        %v1386 = vshrl.u32 %v1385, 7
        %v1387 = vsub.s32 2, %v1386
        %v1388 = vrot.slane %v1365, %v1387
        %v1389 = vlaneseq
        %v1390 = vshrl.u32 %v1389, 7
        %v1391 = vsub.s32 3, %v1390
        %v1392 = vrot.slane %v1365, %v1391
        %v1393 = vlaneseq
        %v1394 = vshrl.u32 %v1393, 7
        %v1395 = vsub.s32 4, %v1394
        %v1396 = vrot.slane %v1365, %v1395
        %v1397 = vlaneseq
        %v1398 = vshrl.u32 %v1397, 7
        %v1399 = vsub.s32 5, %v1398
        %v1400 = vrot.slane %v1365, %v1399
        %v1401 = vlaneseq
        %v1402 = vshrl.u32 %v1401, 7
        %v1403 = vsub.s32 6, %v1402
        %v1404 = vrot.slane %v1365, %v1403
        %v1405 = vlaneseq
        %v1406 = vshrl.u32 %v1405, 7
        %v1407 = vsub.s32 7, %v1406
        %v1408 = vrot.slane %v1365, %v1407
        %v1409 = vlaneseq
        %v1410 = vshrl.u32 %v1409, 7
        %v1411 = vsub.s32 0, %v1410
        %v1412 = vrot.slane %v1366, %v1411
        %v1413 = vlaneseq
        %v1414 = vshrl.u32 %v1413, 7
        %v1415 = vsub.s32 1, %v1414
        %v1416 = vrot.slane %v1366, %v1415
        %v1417 = vlaneseq
        %v1418 = vshrl.u32 %v1417, 7
        %v1419 = vsub.s32 2, %v1418
        %v1420 = vrot.slane %v1366, %v1419
        %v1421 = vlaneseq
        %v1422 = vshrl.u32 %v1421, 7
        %v1423 = vsub.s32 3, %v1422
        %v1424 = vrot.slane %v1366, %v1423
        %v1425 = vlaneseq
        %v1426 = vshrl.u32 %v1425, 7
        %v1427 = vsub.s32 4, %v1426
        %v1428 = vrot.slane %v1366, %v1427
        %v1429 = vlaneseq
        %v1430 = vshrl.u32 %v1429, 7
        %v1431 = vsub.s32 5, %v1430
        %v1432 = vrot.slane %v1366, %v1431
        %v1433 = vlaneseq
        %v1434 = vshrl.u32 %v1433, 7
        %v1435 = vsub.s32 6, %v1434
        %v1436 = vrot.slane %v1366, %v1435
        %v1437 = vlaneseq
        %v1438 = vshrl.u32 %v1437, 7
        %v1439 = vsub.s32 7, %v1438
        %v1440 = vrot.slane %v1366, %v1439
        %v1441 = vlaneseq
        %v1442 = vshrl.u32 %v1441, 7
        %v1443 = vsub.s32 0, %v1442
        %v1444 = vrot.slane %v1367, %v1443
        %v1445 = vlaneseq
        %v1446 = vshrl.u32 %v1445, 7
        %v1447 = vsub.s32 1, %v1446
        %v1448 = vrot.slane %v1367, %v1447
        %v1449 = vlaneseq
        %v1450 = vshrl.u32 %v1449, 7
        %v1451 = vsub.s32 2, %v1450
        %v1452 = vrot.slane %v1367, %v1451
        %v1453 = vlaneseq
        %v1454 = vshrl.u32 %v1453, 7
        %v1455 = vsub.s32 3, %v1454
        %v1456 = vrot.slane %v1367, %v1455
        %v1457 = vlaneseq
        %v1458 = vshrl.u32 %v1457, 7
        %v1459 = vsub.s32 4, %v1458
        %v1460 = vrot.slane %v1367, %v1459
        %v1461 = vlaneseq
        %v1462 = vshrl.u32 %v1461, 7
        %v1463 = vsub.s32 5, %v1462
        %v1464 = vrot.slane %v1367, %v1463
        %v1465 = vlaneseq
        %v1466 = vshrl.u32 %v1465, 7
        %v1467 = vsub.s32 6, %v1466
        %v1468 = vrot.slane %v1367, %v1467
        %v1469 = vlaneseq
        %v1470 = vshrl.u32 %v1469, 7
        %v1471 = vsub.s32 7, %v1470
        %v1472 = vrot.slane %v1367, %v1471
        %v1473 = vlaneseq
        %v1474 = vshrl.u32 %v1473, 7
        %v1475 = vsub.s32 0, %v1474
        %v1476 = vrot.slane %v1368, %v1475
        %v1477 = vlaneseq
        %v1478 = vshrl.u32 %v1477, 7
        %v1479 = vsub.s32 1, %v1478
        %v1480 = vrot.slane %v1368, %v1479
        %v1481 = vlaneseq
        %v1482 = vshrl.u32 %v1481, 7
        %v1483 = vsub.s32 2, %v1482
        %v1484 = vrot.slane %v1368, %v1483
        %v1485 = vlaneseq
        %v1486 = vshrl.u32 %v1485, 7
        %v1487 = vsub.s32 3, %v1486
        %v1488 = vrot.slane %v1368, %v1487
        %v1489 = vlaneseq
        %v1490 = vshrl.u32 %v1489, 7
        %v1491 = vsub.s32 4, %v1490
        %v1492 = vrot.slane %v1368, %v1491
        %v1493 = vlaneseq
        %v1494 = vshrl.u32 %v1493, 7
        %v1495 = vsub.s32 5, %v1494
        %v1496 = vrot.slane %v1368, %v1495
        %v1497 = vlaneseq
        %v1498 = vshrl.u32 %v1497, 7
        %v1499 = vsub.s32 6, %v1498
        %v1500 = vrot.slane %v1368, %v1499
        %v1501 = vlaneseq
        %v1502 = vshrl.u32 %v1501, 7
        %v1503 = vsub.s32 7, %v1502
        %v1504 = vrot.slane %v1368, %v1503
        %v1505 = vlaneseq
        %v1506 = vshrl.u32 %v1505, 7
        %v1507 = vsub.s32 0, %v1506
        %v1508 = vrot.slane %v1369, %v1507
        %v1509 = vlaneseq
        %v1510 = vshrl.u32 %v1509, 7
        %v1511 = vsub.s32 1, %v1510
        %v1512 = vrot.slane %v1369, %v1511
        %v1513 = vlaneseq
        %v1514 = vshrl.u32 %v1513, 7
        %v1515 = vsub.s32 2, %v1514
        %v1516 = vrot.slane %v1369, %v1515
        %v1517 = vlaneseq
        %v1518 = vshrl.u32 %v1517, 7
        %v1519 = vsub.s32 3, %v1518
        %v1520 = vrot.slane %v1369, %v1519
        %v1521 = vlaneseq
        %v1522 = vshrl.u32 %v1521, 7
        %v1523 = vsub.s32 4, %v1522
        %v1524 = vrot.slane %v1369, %v1523
        %v1525 = vlaneseq
        %v1526 = vshrl.u32 %v1525, 7
        %v1527 = vsub.s32 5, %v1526
        %v1528 = vrot.slane %v1369, %v1527
        %v1529 = vlaneseq
        %v1530 = vshrl.u32 %v1529, 7
        %v1531 = vsub.s32 6, %v1530
        %v1532 = vrot.slane %v1369, %v1531
        %v1533 = vlaneseq
        %v1534 = vshrl.u32 %v1533, 7
        %v1535 = vsub.s32 7, %v1534
        %v1536 = vrot.slane %v1369, %v1535
        %v1537 = vlaneseq
        %v1538 = vshrl.u32 %v1537, 7
        %v1539 = vsub.s32 0, %v1538
        %v1540 = vrot.slane %v1370, %v1539
        %v1541 = vlaneseq
        %v1542 = vshrl.u32 %v1541, 7
        %v1543 = vsub.s32 1, %v1542
        %v1544 = vrot.slane %v1370, %v1543
        %v1545 = vlaneseq
        %v1546 = vshrl.u32 %v1545, 7
        %v1547 = vsub.s32 2, %v1546
        %v1548 = vrot.slane %v1370, %v1547
        %v1549 = vlaneseq
        %v1550 = vshrl.u32 %v1549, 7
        %v1551 = vsub.s32 3, %v1550
        %v1552 = vrot.slane %v1370, %v1551
        %v1553 = vlaneseq
        %v1554 = vshrl.u32 %v1553, 7
        %v1555 = vsub.s32 4, %v1554
        %v1556 = vrot.slane %v1370, %v1555
        %v1970 = vunpack.c.l.b16 %v996
        %v1971 = vunpack.c.h.b16 %v996
        %v1972 = vunpack.c.l.b16 %v997
        %v1973 = vunpack.c.h.b16 %v997
        %v1974 = vunpack.c.l.b16 %v998
        %v1975 = vunpack.c.h.b16 %v998
        %v1976 = vunpack.c.l.b16 %v999
        %v1977 = vunpack.c.h.b16 %v999
        %v1978 = vunpack.c.l.b16 %v1000
        %v1979 = vunpack.c.h.b16 %v1000
        %v1980 = vunpack.c.l.b16 %v1001
        %v1981 = vunpack.c.h.b16 %v1001
        %v1982 = vunpack.c.l.b16 %v1002
        %v1983 = vunpack.c.h.b16 %v1002
        %v1984 = vunpack.c.l.b16 %v1003
        %v1985 = vunpack.c.h.b16 %v1003
        %v1986 = vunpack.c.l.b16 %v1004
        %v1987 = vunpack.c.h.b16 %v1004
        %v1988 = vunpack.c.l.b16 %v1005
        %v1989 = vunpack.c.h.b16 %v1005
        %v1990 = vunpack.c.l.b16 %v1006
        %v1991 = vunpack.c.h.b16 %v1006
        %v1992 = vunpack.c.l.b16 %v1007
        %v1993 = vunpack.c.h.b16 %v1007
        %v1994 = vunpack.c.l.b16 %v1008
        %v1995 = vunpack.c.h.b16 %v1008
        %v1996 = vunpack.c.l.b16 %v1009
        %v1997 = vunpack.c.h.b16 %v1009
        %v1998 = vunpack.c.l.b16 %v1010
        %v1999 = vunpack.c.h.b16 %v1010
        %v2000 = vunpack.c.l.b16 %v1011
        %v2001 = vunpack.c.h.b16 %v1011
        %v2002 = vunpack.c.l.b16 %v1012
        %v2003 = vunpack.c.h.b16 %v1012
        %v2004 = vunpack.c.l.b16 %v1013
        %v2005 = vunpack.c.h.b16 %v1013
        %v2006 = vunpack.c.l.b16 %v1014
        %v2007 = vunpack.c.h.b16 %v1014
        %v2008 = vunpack.c.l.b16 %v1015
        %v2009 = vunpack.c.h.b16 %v1015
        %v2010 = vunpack.c.l.b16 %v1016
        %v2011 = vunpack.c.h.b16 %v1016
        %v2012 = vunpack.c.l.b16 %v1017
        %v2013 = vunpack.c.h.b16 %v1017
        %v2014 = vunpack.c.l.b16 %v1018
        %v2015 = vunpack.c.l.b16 %v1019
        %v2016 = vunpack.c.h.b16 %v1019
        %v2017 = vunpack.c.l.b16 %v1020
        %v2018 = vunpack.c.h.b16 %v1020
        %v2019 = vunpack.c.l.b16 %v1021
        %v2020 = vunpack.c.h.b16 %v1021
        %v2021 = vunpack.c.l.b16 %v1022
        %v2022 = vunpack.c.h.b16 %v1022
        %v2023 = vunpack.c.l.b16 %v1023
        %v2024 = vunpack.c.h.b16 %v1023
        %v2025 = vunpack.c.l.b16 %v1024
        %v2026 = vunpack.c.h.b16 %v1024
        %v2027 = vunpack.c.l.b16 %v1025
        %v2028 = vunpack.c.h.b16 %v1025
        %v2029 = vunpack.c.l.b16 %v1026
        %v2030 = vunpack.c.h.b16 %v1026
        %v2031 = vunpack.c.l.b16 %v1027
        %v2032 = vunpack.c.h.b16 %v1027
        %v2033 = vunpack.c.l.b16 %v1028
        %v2034 = vunpack.c.h.b16 %v1028
        %v2035 = vunpack.c.l.b16 %v1029
        %v2036 = vunpack.c.h.b16 %v1029
        %v2037 = vunpack.c.l.b16 %v1030
        %v2038 = vunpack.c.h.b16 %v1030
        %v2039 = vunpack.c.l.b16 %v1031
        %v2040 = vunpack.c.h.b16 %v1031
        %v2041 = vunpack.c.l.b16 %v1032
        %v2042 = vunpack.c.h.b16 %v1032
        %v2043 = vunpack.c.l.b16 %v1033
        %v2044 = vunpack.c.h.b16 %v1033
        %v2045 = vunpack.c.l.b16 %v1034
        %v2046 = vunpack.c.h.b16 %v1034
        %v2047 = vunpack.c.l.b16 %v1035
        %v2048 = vunpack.c.h.b16 %v1035
        %v2049 = vunpack.c.l.b16 %v1036
        %v2050 = vunpack.c.h.b16 %v1036
        %v2051 = vunpack.c.l.b16 %v1037
        %v2052 = vunpack.c.h.b16 %v1037
        %v2053 = vunpack.c.l.b16 %v1038
        %v2054 = vunpack.c.h.b16 %v1038
        %v2055 = vunpack.c.l.b16 %v1039
        %v2056 = vunpack.c.h.b16 %v1039
        %v2057 = vunpack.c.l.b16 %v1040
        %v2058 = vunpack.c.h.b16 %v1040
        %v2059 = vunpack.c.l.b16 %v1041
        %v2060 = vunpack.c.l.b16 %v1042
        %v2061 = vunpack.c.h.b16 %v1042
        %v2062 = vunpack.c.l.b16 %v1043
        %v2063 = vunpack.c.h.b16 %v1043
        %v2064 = vunpack.c.l.b16 %v1044
        %v2065 = vunpack.c.h.b16 %v1044
        %v2066 = vunpack.c.l.b16 %v1045
        %v2067 = vunpack.c.h.b16 %v1045
        %v2068 = vunpack.c.l.b16 %v1046
        %v2069 = vunpack.c.h.b16 %v1046
        %v2070 = vunpack.c.l.b16 %v1047
        %v2071 = vunpack.c.h.b16 %v1047
        %v2072 = vunpack.c.l.b16 %v1048
        %v2073 = vunpack.c.h.b16 %v1048
        %v2074 = vunpack.c.l.b16 %v1049
        %v2075 = vunpack.c.h.b16 %v1049
        %v2076 = vunpack.c.l.b16 %v1050
        %v2077 = vunpack.c.h.b16 %v1050
        %v2078 = vunpack.c.l.b16 %v1051
        %v2079 = vunpack.c.h.b16 %v1051
        %v2080 = vunpack.c.l.b16 %v1052
        %v2081 = vunpack.c.h.b16 %v1052
        %v2082 = vunpack.c.l.b16 %v1053
        %v2083 = vunpack.c.h.b16 %v1053
        %v2084 = vunpack.c.l.b16 %v1054
        %v2085 = vunpack.c.h.b16 %v1054
        %v2086 = vunpack.c.l.b16 %v1055
        %v2087 = vunpack.c.h.b16 %v1055
        %v2088 = vunpack.c.l.b16 %v1056
        %v2089 = vunpack.c.h.b16 %v1056
        %v2090 = vunpack.c.l.b16 %v1057
        %v2091 = vunpack.c.h.b16 %v1057
        %v2092 = vunpack.c.l.b16 %v1058
        %v2093 = vunpack.c.h.b16 %v1058
        %v2094 = vunpack.c.l.b16 %v1059
        %v2095 = vunpack.c.h.b16 %v1059
        %v2096 = vunpack.c.l.b16 %v1060
        %v2097 = vunpack.c.h.b16 %v1060
        %v2098 = vunpack.c.l.b16 %v1061
        %v2099 = vunpack.c.h.b16 %v1061
        %v2100 = vunpack.c.l.b16 %v1062
        %v2101 = vunpack.c.h.b16 %v1062
        %v2102 = vunpack.c.l.b16 %v1063
        %v2103 = vunpack.c.h.b16 %v1063
        %v2104 = vunpack.c.l.b16 %v1064
        %v2105 = vunpack.c.l.b16 %v1065
        %v2106 = vunpack.c.h.b16 %v1065
        %v2107 = vunpack.c.l.b16 %v1066
        %v2108 = vunpack.c.h.b16 %v1066
        %v2109 = vunpack.c.l.b16 %v1067
        %v2110 = vunpack.c.h.b16 %v1067
        %v2111 = vunpack.c.l.b16 %v1068
        %v2112 = vunpack.c.h.b16 %v1068
        %v2113 = vunpack.c.l.b16 %v1069
        %v2114 = vunpack.c.h.b16 %v1069
        %v2115 = vunpack.c.l.b16 %v1070
        %v2116 = vunpack.c.h.b16 %v1070
        %v2117 = vunpack.c.l.b16 %v1071
        %v2118 = vunpack.c.h.b16 %v1071
        %v2119 = vunpack.c.l.b16 %v1072
        %v2120 = vunpack.c.h.b16 %v1072
        %v2121 = vunpack.c.l.b16 %v1073
        %v2122 = vunpack.c.h.b16 %v1073
        %v2123 = vunpack.c.l.b16 %v1074
        %v2124 = vunpack.c.h.b16 %v1074
        %v2125 = vunpack.c.l.b16 %v1075
        %v2126 = vunpack.c.h.b16 %v1075
        %v2127 = vunpack.c.l.b16 %v1076
        %v2128 = vunpack.c.h.b16 %v1076
        %v2129 = vunpack.c.l.b16 %v1077
        %v2130 = vunpack.c.h.b16 %v1077
        %v2131 = vunpack.c.l.b16 %v1078
        %v2132 = vunpack.c.h.b16 %v1078
        %v2133 = vunpack.c.l.b16 %v1079
        %v2134 = vunpack.c.h.b16 %v1079
        %v2135 = vunpack.c.l.b16 %v1080
        %v2136 = vunpack.c.h.b16 %v1080
        %v2137 = vunpack.c.l.b16 %v1081
        %v2138 = vunpack.c.h.b16 %v1081
        %v2139 = vunpack.c.l.b16 %v1082
        %v2140 = vunpack.c.h.b16 %v1082
        %v2141 = vunpack.c.l.b16 %v1083
        %v2142 = vunpack.c.h.b16 %v1083
        %v2143 = vunpack.c.l.b16 %v1084
        %v2144 = vunpack.c.h.b16 %v1084
        %v2145 = vunpack.c.l.b16 %v1085
        %v2146 = vunpack.c.h.b16 %v1085
        %v2147 = vunpack.c.l.b16 %v1086
        %v2148 = vunpack.c.h.b16 %v1086
        %v2149 = vunpack.c.l.b16 %v1087
        %v2150 = vunpack.c.l.b16 %v1088
        %v2151 = vunpack.c.h.b16 %v1088
        %v2152 = vunpack.c.l.b16 %v1089
        %v2153 = vunpack.c.h.b16 %v1089
        %v2154 = vunpack.c.l.b16 %v1090
        %v2155 = vunpack.c.h.b16 %v1090
        %v2156 = vunpack.c.l.b16 %v1091
        %v2157 = vunpack.c.h.b16 %v1091
        %v2158 = vunpack.c.l.b16 %v1092
        %v2159 = vunpack.c.h.b16 %v1092
        %v2160 = vunpack.c.l.b16 %v1093
        %v2161 = vunpack.c.h.b16 %v1093
        %v2162 = vunpack.c.l.b16 %v1094
        %v2163 = vunpack.c.h.b16 %v1094
        %v2164 = vunpack.c.l.b16 %v1095
        %v2165 = vunpack.c.h.b16 %v1095
        %v2166 = vunpack.c.l.b16 %v1096
        %v2167 = vunpack.c.h.b16 %v1096
        %v2168 = vunpack.c.l.b16 %v1097
        %v2169 = vunpack.c.h.b16 %v1097
        %v2170 = vunpack.c.l.b16 %v1098
        %v2171 = vunpack.c.h.b16 %v1098
        %v2172 = vunpack.c.l.b16 %v1099
        %v2173 = vunpack.c.h.b16 %v1099
        %v2174 = vunpack.c.l.b16 %v1100
        %v2175 = vunpack.c.h.b16 %v1100
        %v2176 = vunpack.c.l.b16 %v1101
        %v2177 = vunpack.c.h.b16 %v1101
        %v2178 = vunpack.c.l.b16 %v1102
        %v2179 = vunpack.c.h.b16 %v1102
        %v2180 = vunpack.c.l.b16 %v1103
        %v2181 = vunpack.c.h.b16 %v1103
        %v2182 = vunpack.c.l.b16 %v1104
        %v2183 = vunpack.c.h.b16 %v1104
        %v2184 = vunpack.c.l.b16 %v1105
        %v2185 = vunpack.c.h.b16 %v1105
        %v2186 = vunpack.c.l.b16 %v1106
        %v2187 = vunpack.c.h.b16 %v1106
        %v2188 = vunpack.c.l.b16 %v1107
        %v2189 = vunpack.c.h.b16 %v1107
        %v2190 = vunpack.c.l.b16 %v1108
        %v2191 = vunpack.c.h.b16 %v1108
        %v2192 = vunpack.c.l.b16 %v1109
        %v2193 = vunpack.c.h.b16 %v1109
        %v2194 = vunpack.c.l.b16 %v1110
        %v2195 = vunpack.c.l.b16 %v1111
        %v2196 = vunpack.c.h.b16 %v1111
        %v2197 = vunpack.c.l.b16 %v1112
        %v2198 = vunpack.c.h.b16 %v1112
        %v2199 = vunpack.c.l.b16 %v1113
        %v2200 = vunpack.c.h.b16 %v1113
        %v2201 = vunpack.c.l.b16 %v1114
        %v2202 = vunpack.c.h.b16 %v1114
        %v2203 = vunpack.c.l.b16 %v1115
        %v2204 = vunpack.c.h.b16 %v1115
        %v2205 = vunpack.c.l.b16 %v1116
        %v2206 = vunpack.c.h.b16 %v1116
        %v2207 = vunpack.c.l.b16 %v1117
        %v2208 = vunpack.c.h.b16 %v1117
        %v2209 = vunpack.c.l.b16 %v1118
        %v2210 = vunpack.c.h.b16 %v1118
        %v2211 = vunpack.c.l.b16 %v1119
        %v2212 = vunpack.c.h.b16 %v1119
        %v2213 = vunpack.c.l.b16 %v1120
        %v2214 = vunpack.c.h.b16 %v1120
        %v2215 = vunpack.c.l.b16 %v1121
        %v2216 = vunpack.c.h.b16 %v1121
        %v2217 = vunpack.c.l.b16 %v1122
        %v2218 = vunpack.c.h.b16 %v1122
        %v2219 = vunpack.c.l.b16 %v1123
        %v2220 = vunpack.c.h.b16 %v1123
        %v2221 = vunpack.c.l.b16 %v1124
        %v2222 = vunpack.c.h.b16 %v1124
        %v2223 = vunpack.c.l.b16 %v1125
        %v2224 = vunpack.c.h.b16 %v1125
        %v2225 = vunpack.c.l.b16 %v1126
        %v2226 = vunpack.c.h.b16 %v1126
        %v2227 = vunpack.c.l.b16 %v1127
        %v2228 = vunpack.c.h.b16 %v1127
        %v2229 = vunpack.c.l.b16 %v1128
        %v2230 = vunpack.c.h.b16 %v1128
        %v2231 = vunpack.c.l.b16 %v1129
        %v2232 = vunpack.c.h.b16 %v1129
        %v2233 = vunpack.c.l.b16 %v1130
        %v2234 = vunpack.c.h.b16 %v1130
        %v2235 = vunpack.c.l.b16 %v1131
        %v2236 = vunpack.c.h.b16 %v1131
        %v2237 = vunpack.c.l.b16 %v1132
        %v2238 = vunpack.c.h.b16 %v1132
        %v2239 = vunpack.c.l.b16 %v1133
        %v2240 = vunpack.c.l.b16 %v1134
        %v2241 = vunpack.c.h.b16 %v1134
        %v2242 = vunpack.c.l.b16 %v1135
        %v2243 = vunpack.c.h.b16 %v1135
        %v2244 = vunpack.c.l.b16 %v1136
        %v2245 = vunpack.c.h.b16 %v1136
        %v2246 = vunpack.c.l.b16 %v1137
        %v2247 = vunpack.c.h.b16 %v1137
        %v2248 = vunpack.c.l.b16 %v1138
        %v2249 = vunpack.c.h.b16 %v1138
        %v2250 = vunpack.c.l.b16 %v1139
        %v2251 = vunpack.c.h.b16 %v1139
        %v2252 = vunpack.c.l.b16 %v1140
        %v2253 = vunpack.c.h.b16 %v1140
        %v2254 = vunpack.c.l.b16 %v1141
        %v2255 = vunpack.c.h.b16 %v1141
        %v2256 = vunpack.c.l.b16 %v1142
        %v2257 = vunpack.c.h.b16 %v1142
        %v2258 = vunpack.c.l.b16 %v1143
        %v2259 = vunpack.c.h.b16 %v1143
        %v2260 = vunpack.c.l.b16 %v1144
        %v2261 = vunpack.c.h.b16 %v1144
        %v2262 = vunpack.c.l.b16 %v1145
        %v2263 = vunpack.c.h.b16 %v1145
        %v2264 = vunpack.c.l.b16 %v1146
        %v2265 = vunpack.c.h.b16 %v1146
        %v2266 = vunpack.c.l.b16 %v1147
        %v2267 = vunpack.c.h.b16 %v1147
        %v2268 = vunpack.c.l.b16 %v1148
        %v2269 = vunpack.c.h.b16 %v1148
        %v2270 = vunpack.c.l.b16 %v1149
        %v2271 = vunpack.c.h.b16 %v1149
        %v2272 = vunpack.c.l.b16 %v1150
        %v2273 = vunpack.c.h.b16 %v1150
        %v2274 = vunpack.c.l.b16 %v1151
        %v2275 = vunpack.c.h.b16 %v1151
        %v2276 = vunpack.c.l.b16 %v1152
        %v2277 = vunpack.c.h.b16 %v1152
        %v2278 = vunpack.c.l.b16 %v1153
        %v2279 = vunpack.c.h.b16 %v1153
        %v2280 = vunpack.c.l.b16 %v1154
        %v2281 = vunpack.c.h.b16 %v1154
        %v2282 = vunpack.c.l.b16 %v1155
        %v2283 = vunpack.c.h.b16 %v1155
        %v2284 = vunpack.c.l.b16 %v1156
        %v2285 = vunpack.c.l.b16 %v1157
        %v2286 = vunpack.c.h.b16 %v1157
        %v2287 = vunpack.c.l.b16 %v1158
        %v2288 = vunpack.c.h.b16 %v1158
        %v2289 = vunpack.c.l.b16 %v1159
        %v2290 = vunpack.c.h.b16 %v1159
        %v2291 = vunpack.c.l.b16 %v1160
        %v2292 = vunpack.c.h.b16 %v1160
        %v2293 = vunpack.c.l.b16 %v1161
        %v2294 = vunpack.c.h.b16 %v1161
        %v2295 = vunpack.c.l.b16 %v1162
        %v2296 = vunpack.c.h.b16 %v1162
        %v2297 = vunpack.c.l.b16 %v1163
        %v2298 = vunpack.c.h.b16 %v1163
        %v2299 = vunpack.c.l.b16 %v1164
        %v2300 = vunpack.c.h.b16 %v1164
        %v2301 = vunpack.c.l.b16 %v1165
        %v2302 = vunpack.c.h.b16 %v1165
        %v2303 = vunpack.c.l.b16 %v1166
        %v2304 = vunpack.c.h.b16 %v1166
        %v2305 = vunpack.c.l.b16 %v1167
        %v2306 = vunpack.c.h.b16 %v1167
        %v2307 = vunpack.c.l.b16 %v1168
        %v2308 = vunpack.c.h.b16 %v1168
        %v2309 = vunpack.c.l.b16 %v1169
        %v2310 = vunpack.c.h.b16 %v1169
        %v2311 = vunpack.c.l.b16 %v1170
        %v2312 = vunpack.c.h.b16 %v1170
        %v2313 = vunpack.c.l.b16 %v1171
        %v2314 = vunpack.c.h.b16 %v1171
        %v2315 = vunpack.c.l.b16 %v1172
        %v2316 = vunpack.c.h.b16 %v1172
        %v2317 = vunpack.c.l.b16 %v1173
        %v2318 = vunpack.c.h.b16 %v1173
        %v2319 = vunpack.c.l.b16 %v1174
        %v2320 = vunpack.c.h.b16 %v1174
        %v2321 = vunpack.c.l.b16 %v1175
        %v2322 = vunpack.c.h.b16 %v1175
        %v2323 = vunpack.c.l.b16 %v1176
        %v2324 = vunpack.c.h.b16 %v1176
        %v2325 = vunpack.c.l.b16 %v1177
        %v2326 = vunpack.c.h.b16 %v1177
        %v2327 = vunpack.c.l.b16 %v1178
        %v2328 = vunpack.c.h.b16 %v1178
        %v2329 = vunpack.c.l.b16 %v1179
        %v2330 = vunpack.c.l.b16 %v1180
        %v2331 = vunpack.c.h.b16 %v1180
        %v2332 = vunpack.c.l.b16 %v1181
        %v2333 = vunpack.c.h.b16 %v1181
        %v2334 = vunpack.c.l.b16 %v1182
        %v2335 = vunpack.c.h.b16 %v1182
        %v2336 = vunpack.c.l.b16 %v1183
        %v2337 = vunpack.c.h.b16 %v1183
        %v2338 = vunpack.c.l.b16 %v1184
        %v2339 = vunpack.c.h.b16 %v1184
        %v2340 = vunpack.c.l.b16 %v1185
        %v2341 = vunpack.c.h.b16 %v1185
        %v2342 = vunpack.c.l.b16 %v1186
        %v2343 = vunpack.c.h.b16 %v1186
        %v2344 = vunpack.c.l.b16 %v1187
        %v2345 = vunpack.c.h.b16 %v1187
        %v2346 = vunpack.c.l.b16 %v1188
        %v2347 = vunpack.c.h.b16 %v1188
        %v2348 = vunpack.c.l.b16 %v1189
        %v2349 = vunpack.c.h.b16 %v1189
        %v2350 = vunpack.c.l.b16 %v1190
        %v2351 = vunpack.c.h.b16 %v1190
        %v2352 = vunpack.c.l.b16 %v1191
        %v2353 = vunpack.c.h.b16 %v1191
        %v2354 = vunpack.c.l.b16 %v1192
        %v2355 = vunpack.c.h.b16 %v1192
        %v2356 = vunpack.c.l.b16 %v1193
        %v2357 = vunpack.c.h.b16 %v1193
        %v2358 = vunpack.c.l.b16 %v1194
        %v2359 = vunpack.c.h.b16 %v1194
        %v2360 = vunpack.c.l.b16 %v1195
        %v2361 = vunpack.c.h.b16 %v1195
        %v2362 = vunpack.c.l.b16 %v1196
        %v2363 = vunpack.c.h.b16 %v1196
        %v2364 = vunpack.c.l.b16 %v1197
        %v2365 = vunpack.c.h.b16 %v1197
        %v2366 = vunpack.c.l.b16 %v1198
        %v2367 = vunpack.c.h.b16 %v1198
        %v2368 = vunpack.c.l.b16 %v1199
        %v2369 = vunpack.c.h.b16 %v1199
        %v2370 = vunpack.c.l.b16 %v1200
        %v2371 = vunpack.c.h.b16 %v1200
        %v2372 = vunpack.c.l.b16 %v1201
        %v2373 = vunpack.c.h.b16 %v1201
        %v2374 = vunpack.c.l.b16 %v1202
        %v2375 = vunpack.c.l.b16 %v1203
        %v2376 = vunpack.c.h.b16 %v1203
        %v2377 = vunpack.c.l.b16 %v1204
        %v2378 = vunpack.c.h.b16 %v1204
        %v2379 = vunpack.c.l.b16 %v1205
        %v2380 = vunpack.c.h.b16 %v1205
        %v2381 = vunpack.c.l.b16 %v1206
        %v2382 = vunpack.c.h.b16 %v1206
        %v2383 = vunpack.c.l.b16 %v1207
        %v2384 = vunpack.c.h.b16 %v1207
        %v2385 = vunpack.c.l.b16 %v1208
        %v2386 = vunpack.c.h.b16 %v1208
        %v2387 = vunpack.c.l.b16 %v1209
        %v2388 = vunpack.c.h.b16 %v1209
        %v2389 = vunpack.c.l.b16 %v1210
        %v2390 = vunpack.c.h.b16 %v1210
        %v2391 = vunpack.c.l.b16 %v1211
        %v2392 = vunpack.c.h.b16 %v1211
        %v2393 = vunpack.c.l.b16 %v1212
        %v2394 = vunpack.c.h.b16 %v1212
        %v2395 = vunpack.c.l.b16 %v1213
        %v2396 = vunpack.c.h.b16 %v1213
        %v2397 = vunpack.c.l.b16 %v1214
        %v2398 = vunpack.c.h.b16 %v1214
        %v2399 = vunpack.c.l.b16 %v1215
        %v2400 = vunpack.c.h.b16 %v1215
        %v2401 = vunpack.c.l.b16 %v1216
        %v2402 = vunpack.c.h.b16 %v1216
        %v2403 = vunpack.c.l.b16 %v1217
        %v2404 = vunpack.c.h.b16 %v1217
        %v2405 = vunpack.c.l.b16 %v1218
        %v2406 = vunpack.c.h.b16 %v1218
        %v2407 = vunpack.c.l.b16 %v1219
        %v2408 = vunpack.c.h.b16 %v1219
        %v2409 = vunpack.c.l.b16 %v1220
        %v2410 = vunpack.c.h.b16 %v1220
        %v2411 = vunpack.c.l.b16 %v1221
        %v2412 = vunpack.c.h.b16 %v1221
        %v2413 = vunpack.c.l.b16 %v1222
        %v2414 = vunpack.c.h.b16 %v1222
        %v2415 = vunpack.c.l.b16 %v1223
        %v2416 = vunpack.c.h.b16 %v1223
        %v2417 = vunpack.c.l.b16 %v1224
        %v2418 = vunpack.c.h.b16 %v1224
        %v2419 = vunpack.c.l.b16 %v1225
        %v2420 = vunpack.c.l.b16 %v1226
        %v2421 = vunpack.c.h.b16 %v1226
        %v2422 = vunpack.c.l.b16 %v1227
        %v2423 = vunpack.c.h.b16 %v1227
        %v2424 = vunpack.c.l.b16 %v1228
        %v2425 = vunpack.c.h.b16 %v1228
        %v2426 = vunpack.c.l.b16 %v1229
        %v2427 = vunpack.c.h.b16 %v1229
        %v2428 = vunpack.c.l.b16 %v1230
        %v2429 = vunpack.c.h.b16 %v1230
        %v2430 = vunpack.c.l.b16 %v1231
        %v2431 = vunpack.c.h.b16 %v1231
        %v2432 = vunpack.c.l.b16 %v1232
        %v2433 = vunpack.c.h.b16 %v1232
        %v2434 = vunpack.c.l.b16 %v1233
        %v2435 = vunpack.c.h.b16 %v1233
        %v2436 = vunpack.c.l.b16 %v1234
        %v2437 = vunpack.c.h.b16 %v1234
        %v2438 = vunpack.c.l.b16 %v1235
        %v2439 = vunpack.c.h.b16 %v1235
        %v2440 = vunpack.c.l.b16 %v1236
        %v2441 = vunpack.c.h.b16 %v1236
        %v2442 = vunpack.c.l.b16 %v1237
        %v2443 = vunpack.c.h.b16 %v1237
        %v2444 = vunpack.c.l.b16 %v1238
        %v2445 = vunpack.c.h.b16 %v1238
        %v2446 = vunpack.c.l.b16 %v1239
        %v2447 = vunpack.c.h.b16 %v1239
        %v2448 = vunpack.c.l.b16 %v1240
        %v2449 = vunpack.c.h.b16 %v1240
        %v2450 = vunpack.c.l.b16 %v1241
        %v2451 = vunpack.c.h.b16 %v1241
        %v2452 = vunpack.c.l.b16 %v1242
        %v2453 = vunpack.c.h.b16 %v1242
        %v2454 = vunpack.c.l.b16 %v1243
        %v2455 = vunpack.c.h.b16 %v1243
        %v2456 = vunpack.c.l.b16 %v1244
        %v2457 = vunpack.c.h.b16 %v1244
        %v2458 = vunpack.c.l.b16 %v1245
        %v2459 = vunpack.c.h.b16 %v1245
        %v2460 = vunpack.c.l.b16 %v1246
        %v2461 = vunpack.c.h.b16 %v1246
        %v2462 = vunpack.c.l.b16 %v1247
        %v2463 = vunpack.c.h.b16 %v1247
        %v2464 = vunpack.c.l.b16 %v1248
        %v2465 = vunpack.c.l.b16 %v1249
        %v2466 = vunpack.c.h.b16 %v1249
        %v2467 = vunpack.c.l.b16 %v1250
        %v2468 = vunpack.c.h.b16 %v1250
        %v2469 = vunpack.c.l.b16 %v1251
        %v2470 = vunpack.c.h.b16 %v1251
        %v2471 = vunpack.c.l.b16 %v1252
        %v2472 = vunpack.c.h.b16 %v1252
        %v2473 = vunpack.c.l.b16 %v1253
        %v2474 = vunpack.c.h.b16 %v1253
        %v2475 = vunpack.c.l.b16 %v1254
        %v2476 = vunpack.c.h.b16 %v1254
        %v2477 = vunpack.c.l.b16 %v1255
        %v2478 = vunpack.c.h.b16 %v1255
        %v2479 = vunpack.c.l.b16 %v1256
        %v2480 = vunpack.c.h.b16 %v1256
        %v2481 = vunpack.c.l.b16 %v1257
        %v2482 = vunpack.c.h.b16 %v1257
        %v2483 = vunpack.c.l.b16 %v1258
        %v2484 = vunpack.c.h.b16 %v1258
        %v2485 = vunpack.c.l.b16 %v1259
        %v2486 = vunpack.c.h.b16 %v1259
        %v2487 = vunpack.c.l.b16 %v1260
        %v2488 = vunpack.c.h.b16 %v1260
        %v2489 = vunpack.c.l.b16 %v1261
        %v2490 = vunpack.c.h.b16 %v1261
        %v2491 = vunpack.c.l.b16 %v1262
        %v2492 = vunpack.c.h.b16 %v1262
        %v2493 = vunpack.c.l.b16 %v1263
        %v2494 = vunpack.c.h.b16 %v1263
        %v2495 = vunpack.c.l.b16 %v1264
        %v2496 = vunpack.c.h.b16 %v1264
        %v2497 = vunpack.c.l.b16 %v1265
        %v2498 = vunpack.c.h.b16 %v1265
        %v2499 = vunpack.c.l.b16 %v1266
        %v2500 = vunpack.c.h.b16 %v1266
        %v2501 = vunpack.c.l.b16 %v1267
        %v2502 = vunpack.c.h.b16 %v1267
        %v2503 = vunpack.c.l.b16 %v1268
        %v2504 = vunpack.c.h.b16 %v1268
        %v2505 = vunpack.c.l.b16 %v1269
        %v2506 = vunpack.c.h.b16 %v1269
        %v2507 = vunpack.c.l.b16 %v1270
        %v2508 = vunpack.c.h.b16 %v1270
        %v2509 = vunpack.c.l.b16 %v1271
        %v2510 = vunpack.c.l.b16 %v1272
        %v2511 = vunpack.c.h.b16 %v1272
        %v2512 = vunpack.c.l.b16 %v1273
        %v2513 = vunpack.c.h.b16 %v1273
        %v2514 = vunpack.c.l.b16 %v1274
        %v2515 = vunpack.c.h.b16 %v1274
        %v2516 = vunpack.c.l.b16 %v1275
        %v2517 = vunpack.c.h.b16 %v1275
        %v2518 = vunpack.c.l.b16 %v1276
        %v2519 = vunpack.c.h.b16 %v1276
        %v2520 = vunpack.c.l.b16 %v1277
        %v2521 = vunpack.c.h.b16 %v1277
        %v2522 = vunpack.c.l.b16 %v1278
        %v2523 = vunpack.c.h.b16 %v1278
        %v2524 = vunpack.c.l.b16 %v1279
        %v2525 = vunpack.c.h.b16 %v1279
        %v2526 = vunpack.c.l.b16 %v1280
        %v2527 = vunpack.c.h.b16 %v1280
        %v2528 = vunpack.c.l.b16 %v1281
        %v2529 = vunpack.c.h.b16 %v1281
        %v2530 = vunpack.c.l.b16 %v1282
        %v2531 = vunpack.c.h.b16 %v1282
        %v2532 = vunpack.c.l.b16 %v1283
        %v2533 = vunpack.c.h.b16 %v1283
        %v2534 = vunpack.c.l.b16 %v1284
        %v2535 = vunpack.c.h.b16 %v1284
        %v2536 = vunpack.c.l.b16 %v1285
        %v2537 = vunpack.c.h.b16 %v1285
        %v2538 = vunpack.c.l.b16 %v1286
        %v2539 = vunpack.c.h.b16 %v1286
        %v2540 = vunpack.c.l.b16 %v1287
        %v2541 = vunpack.c.h.b16 %v1287
        %v2542 = vunpack.c.l.b16 %v1288
        %v2543 = vunpack.c.h.b16 %v1288
        %v2544 = vunpack.c.l.b16 %v1289
        %v2545 = vunpack.c.h.b16 %v1289
        %v2546 = vunpack.c.l.b16 %v1290
        %v2547 = vunpack.c.h.b16 %v1290
        %v2548 = vunpack.c.l.b16 %v1291
        %v2549 = vunpack.c.h.b16 %v1291
        %v2550 = vunpack.c.l.b16 %v1292
        %v2551 = vunpack.c.h.b16 %v1292
        %v2552 = vunpack.c.l.b16 %v1293
        %v2553 = vunpack.c.h.b16 %v1293
        %v2554 = vunpack.c.l.b16 %v1294
        %v2555 = vunpack.c.l.b16 %v1295
        %v2556 = vunpack.c.h.b16 %v1295
        %v2557 = vunpack.c.l.b16 %v1296
        %v2558 = vunpack.c.h.b16 %v1296
        %v2559 = vunpack.c.l.b16 %v1297
        %v2560 = vunpack.c.h.b16 %v1297
        %v2561 = vunpack.c.l.b16 %v1298
        %v2562 = vunpack.c.h.b16 %v1298
        %v2563 = vunpack.c.l.b16 %v1299
        %v2564 = vunpack.c.h.b16 %v1299
        %v2565 = vunpack.c.l.b16 %v1300
        %v2566 = vunpack.c.h.b16 %v1300
        %v2567 = vunpack.c.l.b16 %v1301
        %v2568 = vunpack.c.h.b16 %v1301
        %v2569 = vunpack.c.l.b16 %v1302
        %v2570 = vunpack.c.h.b16 %v1302
        %v2571 = vunpack.c.l.b16 %v1303
        %v2572 = vunpack.c.h.b16 %v1303
        %v2573 = vunpack.c.l.b16 %v1304
        %v2574 = vunpack.c.h.b16 %v1304
        %v2575 = vunpack.c.l.b16 %v1305
        %v2576 = vunpack.c.h.b16 %v1305
        %v2577 = vunpack.c.l.b16 %v1306
        %v2578 = vunpack.c.h.b16 %v1306
        %v2579 = vunpack.c.l.b16 %v1307
        %v2580 = vunpack.c.h.b16 %v1307
        %v2581 = vunpack.c.l.b16 %v1308
        %v2582 = vunpack.c.h.b16 %v1308
        %v2583 = vunpack.c.l.b16 %v1309
        %v2584 = vunpack.c.h.b16 %v1309
        %v2585 = vunpack.c.l.b16 %v1310
        %v2586 = vunpack.c.h.b16 %v1310
        %v2587 = vunpack.c.l.b16 %v1311
        %v2588 = vunpack.c.h.b16 %v1311
        %v2589 = vunpack.c.l.b16 %v1312
        %v2590 = vunpack.c.h.b16 %v1312
        %v2591 = vunpack.c.l.b16 %v1313
        %v2592 = vunpack.c.h.b16 %v1313
        %v2593 = vunpack.c.l.b16 %v1314
        %v2594 = vunpack.c.h.b16 %v1314
        %v2595 = vunpack.c.l.b16 %v1315
        %v2596 = vunpack.c.h.b16 %v1315
        %v2597 = vunpack.c.l.b16 %v1316
        %v2598 = vunpack.c.h.b16 %v1316
        %v2599 = vunpack.c.l.b16 %v1317
        %v2600 = vunpack.c.l.b16 %v1318
        %v2601 = vunpack.c.h.b16 %v1318
        %v2602 = vunpack.c.l.b16 %v1319
        %v2603 = vunpack.c.h.b16 %v1319
        %v2604 = vunpack.c.l.b16 %v1320
        %v2605 = vunpack.c.h.b16 %v1320
        %v2606 = vunpack.c.l.b16 %v1321
        %v2607 = vunpack.c.h.b16 %v1321
        %v2608 = vunpack.c.l.b16 %v1322
        %v2609 = vunpack.c.h.b16 %v1322
        %v2610 = vunpack.c.l.b16 %v1323
        %v2611 = vunpack.c.h.b16 %v1323
        %v2612 = vunpack.c.l.b16 %v1324
        %v2613 = vunpack.c.h.b16 %v1324
        %v2614 = vunpack.c.l.b16 %v1325
        %v2615 = vunpack.c.h.b16 %v1325
        %v2616 = vunpack.c.l.b16 %v1326
        %v2617 = vunpack.c.h.b16 %v1326
        %v2618 = vunpack.c.l.b16 %v1327
        %v2619 = vunpack.c.h.b16 %v1327
        %v2620 = vunpack.c.l.b16 %v1328
        %v2621 = vunpack.c.h.b16 %v1328
        %v2622 = vunpack.c.l.b16 %v1329
        %v2623 = vunpack.c.h.b16 %v1329
        %v2624 = vunpack.c.l.b16 %v1330
        %v2625 = vunpack.c.h.b16 %v1330
        %v2626 = vunpack.c.l.b16 %v1331
        %v2627 = vunpack.c.h.b16 %v1331
        %v2628 = vunpack.c.l.b16 %v1332
        %v2629 = vunpack.c.h.b16 %v1332
        %v2630 = vunpack.c.l.b16 %v1333
        %v2631 = vunpack.c.h.b16 %v1333
        %v2632 = vunpack.c.l.b16 %v1334
        %v2633 = vunpack.c.h.b16 %v1334
        %v2634 = vunpack.c.l.b16 %v1335
        %v2635 = vunpack.c.h.b16 %v1335
        %v2636 = vunpack.c.l.b16 %v1336
        %v2637 = vunpack.c.h.b16 %v1336
        %v2638 = vunpack.c.l.b16 %v1337
        %v2639 = vunpack.c.h.b16 %v1337
        %v2640 = vunpack.c.l.b16 %v1338
        %v2641 = vunpack.c.h.b16 %v1338
        %v2642 = vunpack.c.l.b16 %v1339
        %v2643 = vunpack.c.h.b16 %v1339
        %v2644 = vunpack.c.l.b16 %v1340
        %v2645 = vunpack.c.l.b16 %v1341
        %v2646 = vunpack.c.h.b16 %v1341
        %v2647 = vunpack.c.l.b16 %v1342
        %v2648 = vunpack.c.h.b16 %v1342
        %v2649 = vunpack.c.l.b16 %v1343
        %v2650 = vunpack.c.h.b16 %v1343
        %v2651 = vunpack.c.l.b16 %v1344
        %v2652 = vunpack.c.h.b16 %v1344
        %v2653 = vunpack.c.l.b16 %v1345
        %v2654 = vunpack.c.h.b16 %v1345
        %v2655 = vunpack.c.l.b16 %v1346
        %v2656 = vunpack.c.h.b16 %v1346
        %v2657 = vunpack.c.l.b16 %v1347
        %v2658 = vunpack.c.h.b16 %v1347
        %v2659 = vunpack.c.l.b16 %v1348
        %v2660 = vunpack.c.h.b16 %v1348
        %v2661 = vunpack.c.l.b16 %v1349
        %v2662 = vunpack.c.h.b16 %v1349
        %v2663 = vunpack.c.l.b16 %v1350
        %v2664 = vunpack.c.h.b16 %v1350
        %v2665 = vunpack.c.l.b16 %v1351
        %v2666 = vunpack.c.h.b16 %v1351
        %v2667 = vunpack.c.l.b16 %v1352
        %v2668 = vunpack.c.h.b16 %v1352
        %v2669 = vunpack.c.l.b16 %v1353
        %v2670 = vunpack.c.h.b16 %v1353
        %v2671 = vunpack.c.l.b16 %v1354
        %v2672 = vunpack.c.h.b16 %v1354
        %v2673 = vunpack.c.l.b16 %v1355
        %v2674 = vunpack.c.h.b16 %v1355
        %v2675 = vunpack.c.l.b16 %v1356
        %v2676 = vunpack.c.h.b16 %v1356
        %v2677 = vunpack.c.l.b16 %v1357
        %v2678 = vunpack.c.h.b16 %v1357
        %v2679 = vunpack.c.l.b16 %v1358
        %v2680 = vunpack.c.h.b16 %v1358
        %v2681 = vunpack.c.l.b16 %v1359
        %v2682 = vunpack.c.h.b16 %v1359
        %v2683 = vunpack.c.l.b16 %v1360
        %v2684 = vunpack.c.h.b16 %v1360
        %v2685 = vunpack.c.l.b16 %v1361
        %v2686 = vunpack.c.h.b16 %v1361
        %v2687 = vunpack.c.l.b16 %v1362
        %v2688 = vunpack.c.h.b16 %v1362
        %v2689 = vunpack.c.l.b16 %v1363
        %v2690 = vpack.c.b16 %v2015, %v1970
        %v2691 = vpack.c.b16 %v2016, %v1971
        %v2692 = vpack.c.b16 %v2017, %v1972
        %v2693 = vpack.c.b16 %v2018, %v1973
        %v2694 = vpack.c.b16 %v2019, %v1974
        %v2695 = vpack.c.b16 %v2020, %v1975
        %v2696 = vpack.c.b16 %v2021, %v1976
        %v2697 = vpack.c.b16 %v2022, %v1977
        %v2698 = vpack.c.b16 %v2023, %v1978
        %v2699 = vpack.c.b16 %v2024, %v1979
        %v2700 = vpack.c.b16 %v2025, %v1980
        %v2701 = vpack.c.b16 %v2026, %v1981
        %v2702 = vpack.c.b16 %v2027, %v1982
        %v2703 = vpack.c.b16 %v2028, %v1983
        %v2704 = vpack.c.b16 %v2029, %v1984
        %v2705 = vpack.c.b16 %v2030, %v1985
        %v2706 = vpack.c.b16 %v2031, %v1986
        %v2707 = vpack.c.b16 %v2032, %v1987
        %v2708 = vpack.c.b16 %v2033, %v1988
        %v2709 = vpack.c.b16 %v2034, %v1989
        %v2710 = vpack.c.b16 %v2035, %v1990
        %v2711 = vpack.c.b16 %v2036, %v1991
        %v2712 = vpack.c.b16 %v2037, %v1992
        %v2713 = vpack.c.b16 %v2038, %v1993
        %v2714 = vpack.c.b16 %v2039, %v1994
        %v2715 = vpack.c.b16 %v2040, %v1995
        %v2716 = vpack.c.b16 %v2041, %v1996
        %v2717 = vpack.c.b16 %v2042, %v1997
        %v2718 = vpack.c.b16 %v2043, %v1998
        %v2719 = vpack.c.b16 %v2044, %v1999
        %v2720 = vpack.c.b16 %v2045, %v2000
        %v2721 = vpack.c.b16 %v2046, %v2001
        %v2722 = vpack.c.b16 %v2047, %v2002
        %v2723 = vpack.c.b16 %v2048, %v2003
        %v2724 = vpack.c.b16 %v2049, %v2004
        %v2725 = vpack.c.b16 %v2050, %v2005
        %v2726 = vpack.c.b16 %v2051, %v2006
        %v2727 = vpack.c.b16 %v2052, %v2007
        %v2728 = vpack.c.b16 %v2053, %v2008
        %v2729 = vpack.c.b16 %v2054, %v2009
        %v2730 = vpack.c.b16 %v2055, %v2010
        %v2731 = vpack.c.b16 %v2056, %v2011
        %v2732 = vpack.c.b16 %v2057, %v2012
        %v2733 = vpack.c.b16 %v2058, %v2013
        %v2734 = vpack.c.b16 %v2059, %v2014
        %v2735 = vpack.c.b16 %v2105, %v2060
        %v2736 = vpack.c.b16 %v2106, %v2061
        %v2737 = vpack.c.b16 %v2107, %v2062
        %v2738 = vpack.c.b16 %v2108, %v2063
        %v2739 = vpack.c.b16 %v2109, %v2064
        %v2740 = vpack.c.b16 %v2110, %v2065
        %v2741 = vpack.c.b16 %v2111, %v2066
        %v2742 = vpack.c.b16 %v2112, %v2067
        %v2743 = vpack.c.b16 %v2113, %v2068
        %v2744 = vpack.c.b16 %v2114, %v2069
        %v2745 = vpack.c.b16 %v2115, %v2070
        %v2746 = vpack.c.b16 %v2116, %v2071
        %v2747 = vpack.c.b16 %v2117, %v2072
        %v2748 = vpack.c.b16 %v2118, %v2073
        %v2749 = vpack.c.b16 %v2119, %v2074
        %v2750 = vpack.c.b16 %v2120, %v2075
        %v2751 = vpack.c.b16 %v2121, %v2076
        %v2752 = vpack.c.b16 %v2122, %v2077
        %v2753 = vpack.c.b16 %v2123, %v2078
        %v2754 = vpack.c.b16 %v2124, %v2079
        %v2755 = vpack.c.b16 %v2125, %v2080
        %v2756 = vpack.c.b16 %v2126, %v2081
        %v2757 = vpack.c.b16 %v2127, %v2082
        %v2758 = vpack.c.b16 %v2128, %v2083
        %v2759 = vpack.c.b16 %v2129, %v2084
        %v2760 = vpack.c.b16 %v2130, %v2085
        %v2761 = vpack.c.b16 %v2131, %v2086
        %v2762 = vpack.c.b16 %v2132, %v2087
        %v2763 = vpack.c.b16 %v2133, %v2088
        %v2764 = vpack.c.b16 %v2134, %v2089
        %v2765 = vpack.c.b16 %v2135, %v2090
        %v2766 = vpack.c.b16 %v2136, %v2091
        %v2767 = vpack.c.b16 %v2137, %v2092
        %v2768 = vpack.c.b16 %v2138, %v2093
        %v2769 = vpack.c.b16 %v2139, %v2094
        %v2770 = vpack.c.b16 %v2140, %v2095
        %v2771 = vpack.c.b16 %v2141, %v2096
        %v2772 = vpack.c.b16 %v2142, %v2097
        %v2773 = vpack.c.b16 %v2143, %v2098
        %v2774 = vpack.c.b16 %v2144, %v2099
        %v2775 = vpack.c.b16 %v2145, %v2100
        %v2776 = vpack.c.b16 %v2146, %v2101
        %v2777 = vpack.c.b16 %v2147, %v2102
        %v2778 = vpack.c.b16 %v2148, %v2103
        %v2779 = vpack.c.b16 %v2149, %v2104
        %v2780 = vpack.c.b16 %v2195, %v2150
        %v2781 = vpack.c.b16 %v2196, %v2151
        %v2782 = vpack.c.b16 %v2197, %v2152
        %v2783 = vpack.c.b16 %v2198, %v2153
        %v2784 = vpack.c.b16 %v2199, %v2154
        %v2785 = vpack.c.b16 %v2200, %v2155
        %v2786 = vpack.c.b16 %v2201, %v2156
        %v2787 = vpack.c.b16 %v2202, %v2157
        %v2788 = vpack.c.b16 %v2203, %v2158
        %v2789 = vpack.c.b16 %v2204, %v2159
        %v2790 = vpack.c.b16 %v2205, %v2160
        %v2791 = vpack.c.b16 %v2206, %v2161
        %v2792 = vpack.c.b16 %v2207, %v2162
        %v2793 = vpack.c.b16 %v2208, %v2163
        %v2794 = vpack.c.b16 %v2209, %v2164
        %v2795 = vpack.c.b16 %v2210, %v2165
        %v2796 = vpack.c.b16 %v2211, %v2166
        %v2797 = vpack.c.b16 %v2212, %v2167
        %v2798 = vpack.c.b16 %v2213, %v2168
        %v2799 = vpack.c.b16 %v2214, %v2169
        %v2800 = vpack.c.b16 %v2215, %v2170
        %v2801 = vpack.c.b16 %v2216, %v2171
        %v2802 = vpack.c.b16 %v2217, %v2172
        %v2803 = vpack.c.b16 %v2218, %v2173
        %v2804 = vpack.c.b16 %v2219, %v2174
        %v2805 = vpack.c.b16 %v2220, %v2175
        %v2806 = vpack.c.b16 %v2221, %v2176
        %v2807 = vpack.c.b16 %v2222, %v2177
        %v2808 = vpack.c.b16 %v2223, %v2178
        %v2809 = vpack.c.b16 %v2224, %v2179
        %v2810 = vpack.c.b16 %v2225, %v2180
        %v2811 = vpack.c.b16 %v2226, %v2181
        %v2812 = vpack.c.b16 %v2227, %v2182
        %v2813 = vpack.c.b16 %v2228, %v2183
        %v2814 = vpack.c.b16 %v2229, %v2184
        %v2815 = vpack.c.b16 %v2230, %v2185
        %v2816 = vpack.c.b16 %v2231, %v2186
        %v2817 = vpack.c.b16 %v2232, %v2187
        %v2818 = vpack.c.b16 %v2233, %v2188
        %v2819 = vpack.c.b16 %v2234, %v2189
        %v2820 = vpack.c.b16 %v2235, %v2190
        %v2821 = vpack.c.b16 %v2236, %v2191
        %v2822 = vpack.c.b16 %v2237, %v2192
        %v2823 = vpack.c.b16 %v2238, %v2193
        %v2824 = vpack.c.b16 %v2239, %v2194
        %v2825 = vpack.c.b16 %v2285, %v2240
        %v2826 = vpack.c.b16 %v2286, %v2241
        %v2827 = vpack.c.b16 %v2287, %v2242
        %v2828 = vpack.c.b16 %v2288, %v2243
        %v2829 = vpack.c.b16 %v2289, %v2244
        %v2830 = vpack.c.b16 %v2290, %v2245
        %v2831 = vpack.c.b16 %v2291, %v2246
        %v2832 = vpack.c.b16 %v2292, %v2247
        %v2833 = vpack.c.b16 %v2293, %v2248
        %v2834 = vpack.c.b16 %v2294, %v2249
        %v2835 = vpack.c.b16 %v2295, %v2250
        %v2836 = vpack.c.b16 %v2296, %v2251
        %v2837 = vpack.c.b16 %v2297, %v2252
        %v2838 = vpack.c.b16 %v2298, %v2253
        %v2839 = vpack.c.b16 %v2299, %v2254
        %v2840 = vpack.c.b16 %v2300, %v2255
        %v2841 = vpack.c.b16 %v2301, %v2256
        %v2842 = vpack.c.b16 %v2302, %v2257
        %v2843 = vpack.c.b16 %v2303, %v2258
        %v2844 = vpack.c.b16 %v2304, %v2259
        %v2845 = vpack.c.b16 %v2305, %v2260
        %v2846 = vpack.c.b16 %v2306, %v2261
        %v2847 = vpack.c.b16 %v2307, %v2262
        %v2848 = vpack.c.b16 %v2308, %v2263
        %v2849 = vpack.c.b16 %v2309, %v2264
        %v2850 = vpack.c.b16 %v2310, %v2265
        %v2851 = vpack.c.b16 %v2311, %v2266
        %v2852 = vpack.c.b16 %v2312, %v2267
        %v2853 = vpack.c.b16 %v2313, %v2268
        %v2854 = vpack.c.b16 %v2314, %v2269
        %v2855 = vpack.c.b16 %v2315, %v2270
        %v2856 = vpack.c.b16 %v2316, %v2271
        %v2857 = vpack.c.b16 %v2317, %v2272
        %v2858 = vpack.c.b16 %v2318, %v2273
        %v2859 = vpack.c.b16 %v2319, %v2274
        %v2860 = vpack.c.b16 %v2320, %v2275
        %v2861 = vpack.c.b16 %v2321, %v2276
        %v2862 = vpack.c.b16 %v2322, %v2277
        %v2863 = vpack.c.b16 %v2323, %v2278
        %v2864 = vpack.c.b16 %v2324, %v2279
        %v2865 = vpack.c.b16 %v2325, %v2280
        %v2866 = vpack.c.b16 %v2326, %v2281
        %v2867 = vpack.c.b16 %v2327, %v2282
        %v2868 = vpack.c.b16 %v2328, %v2283
        %v2869 = vpack.c.b16 %v2329, %v2284
        %v2870 = vpack.c.b16 %v2375, %v2330
        %v2871 = vpack.c.b16 %v2376, %v2331
        %v2872 = vpack.c.b16 %v2377, %v2332
        %v2873 = vpack.c.b16 %v2378, %v2333
        %v2874 = vpack.c.b16 %v2379, %v2334
        %v2875 = vpack.c.b16 %v2380, %v2335
        %v2876 = vpack.c.b16 %v2381, %v2336
        %v2877 = vpack.c.b16 %v2382, %v2337
        %v2878 = vpack.c.b16 %v2383, %v2338
        %v2879 = vpack.c.b16 %v2384, %v2339
        %v2880 = vpack.c.b16 %v2385, %v2340
        %v2881 = vpack.c.b16 %v2386, %v2341
        %v2882 = vpack.c.b16 %v2387, %v2342
        %v2883 = vpack.c.b16 %v2388, %v2343
        %v2884 = vpack.c.b16 %v2389, %v2344
        %v2885 = vpack.c.b16 %v2390, %v2345
        %v2886 = vpack.c.b16 %v2391, %v2346
        %v2887 = vpack.c.b16 %v2392, %v2347
        %v2888 = vpack.c.b16 %v2393, %v2348
        %v2889 = vpack.c.b16 %v2394, %v2349
        %v2890 = vpack.c.b16 %v2395, %v2350
        %v2891 = vpack.c.b16 %v2396, %v2351
        %v2892 = vpack.c.b16 %v2397, %v2352
        %v2893 = vpack.c.b16 %v2398, %v2353
        %v2894 = vpack.c.b16 %v2399, %v2354
        %v2895 = vpack.c.b16 %v2400, %v2355
        %v2896 = vpack.c.b16 %v2401, %v2356
        %v2897 = vpack.c.b16 %v2402, %v2357
        %v2898 = vpack.c.b16 %v2403, %v2358
        %v2899 = vpack.c.b16 %v2404, %v2359
        %v2900 = vpack.c.b16 %v2405, %v2360
        %v2901 = vpack.c.b16 %v2406, %v2361
        %v2902 = vpack.c.b16 %v2407, %v2362
        %v2903 = vpack.c.b16 %v2408, %v2363
        %v2904 = vpack.c.b16 %v2409, %v2364
        %v2905 = vpack.c.b16 %v2410, %v2365
        %v2906 = vpack.c.b16 %v2411, %v2366
        %v2907 = vpack.c.b16 %v2412, %v2367
        %v2908 = vpack.c.b16 %v2413, %v2368
        %v2909 = vpack.c.b16 %v2414, %v2369
        %v2910 = vpack.c.b16 %v2415, %v2370
        %v2911 = vpack.c.b16 %v2416, %v2371
        %v2912 = vpack.c.b16 %v2417, %v2372
        %v2913 = vpack.c.b16 %v2418, %v2373
        %v2914 = vpack.c.b16 %v2419, %v2374
        %v2915 = vpack.c.b16 %v2465, %v2420
        %v2916 = vpack.c.b16 %v2466, %v2421
        %v2917 = vpack.c.b16 %v2467, %v2422
        %v2918 = vpack.c.b16 %v2468, %v2423
        %v2919 = vpack.c.b16 %v2469, %v2424
        %v2920 = vpack.c.b16 %v2470, %v2425
        %v2921 = vpack.c.b16 %v2471, %v2426
        %v2922 = vpack.c.b16 %v2472, %v2427
        %v2923 = vpack.c.b16 %v2473, %v2428
        %v2924 = vpack.c.b16 %v2474, %v2429
        %v2925 = vpack.c.b16 %v2475, %v2430
        %v2926 = vpack.c.b16 %v2476, %v2431
        %v2927 = vpack.c.b16 %v2477, %v2432
        %v2928 = vpack.c.b16 %v2478, %v2433
        %v2929 = vpack.c.b16 %v2479, %v2434
        %v2930 = vpack.c.b16 %v2480, %v2435
        %v2931 = vpack.c.b16 %v2481, %v2436
        %v2932 = vpack.c.b16 %v2482, %v2437
        %v2933 = vpack.c.b16 %v2483, %v2438
        %v2934 = vpack.c.b16 %v2484, %v2439
        %v2935 = vpack.c.b16 %v2485, %v2440
        %v2936 = vpack.c.b16 %v2486, %v2441
        %v2937 = vpack.c.b16 %v2487, %v2442
        %v2938 = vpack.c.b16 %v2488, %v2443
        %v2939 = vpack.c.b16 %v2489, %v2444
        %v2940 = vpack.c.b16 %v2490, %v2445
        %v2941 = vpack.c.b16 %v2491, %v2446
        %v2942 = vpack.c.b16 %v2492, %v2447
        %v2943 = vpack.c.b16 %v2493, %v2448
        %v2944 = vpack.c.b16 %v2494, %v2449
        %v2945 = vpack.c.b16 %v2495, %v2450
        %v2946 = vpack.c.b16 %v2496, %v2451
        %v2947 = vpack.c.b16 %v2497, %v2452
        %v2948 = vpack.c.b16 %v2498, %v2453
        %v2949 = vpack.c.b16 %v2499, %v2454
        %v2950 = vpack.c.b16 %v2500, %v2455
        %v2951 = vpack.c.b16 %v2501, %v2456
        %v2952 = vpack.c.b16 %v2502, %v2457
        %v2953 = vpack.c.b16 %v2503, %v2458
        %v2954 = vpack.c.b16 %v2504, %v2459
        %v2955 = vpack.c.b16 %v2505, %v2460
        %v2956 = vpack.c.b16 %v2506, %v2461
        %v2957 = vpack.c.b16 %v2507, %v2462
        %v2958 = vpack.c.b16 %v2508, %v2463
        %v2959 = vpack.c.b16 %v2509, %v2464
        %v2960 = vpack.c.b16 %v2555, %v2510
        %v2961 = vpack.c.b16 %v2556, %v2511
        %v2962 = vpack.c.b16 %v2557, %v2512
        %v2963 = vpack.c.b16 %v2558, %v2513
        %v2964 = vpack.c.b16 %v2559, %v2514
        %v2965 = vpack.c.b16 %v2560, %v2515
        %v2966 = vpack.c.b16 %v2561, %v2516
        %v2967 = vpack.c.b16 %v2562, %v2517
        %v2968 = vpack.c.b16 %v2563, %v2518
        %v2969 = vpack.c.b16 %v2564, %v2519
        %v2970 = vpack.c.b16 %v2565, %v2520
        %v2971 = vpack.c.b16 %v2566, %v2521
        %v2972 = vpack.c.b16 %v2567, %v2522
        %v2973 = vpack.c.b16 %v2568, %v2523
        %v2974 = vpack.c.b16 %v2569, %v2524
        %v2975 = vpack.c.b16 %v2570, %v2525
        %v2976 = vpack.c.b16 %v2571, %v2526
        %v2977 = vpack.c.b16 %v2572, %v2527
        %v2978 = vpack.c.b16 %v2573, %v2528
        %v2979 = vpack.c.b16 %v2574, %v2529
        %v2980 = vpack.c.b16 %v2575, %v2530
        %v2981 = vpack.c.b16 %v2576, %v2531
        %v2982 = vpack.c.b16 %v2577, %v2532
        %v2983 = vpack.c.b16 %v2578, %v2533
        %v2984 = vpack.c.b16 %v2579, %v2534
        %v2985 = vpack.c.b16 %v2580, %v2535
        %v2986 = vpack.c.b16 %v2581, %v2536
        %v2987 = vpack.c.b16 %v2582, %v2537
        %v2988 = vpack.c.b16 %v2583, %v2538
        %v2989 = vpack.c.b16 %v2584, %v2539
        %v2990 = vpack.c.b16 %v2585, %v2540
        %v2991 = vpack.c.b16 %v2586, %v2541
        %v2992 = vpack.c.b16 %v2587, %v2542
        %v2993 = vpack.c.b16 %v2588, %v2543
        %v2994 = vpack.c.b16 %v2589, %v2544
        %v2995 = vpack.c.b16 %v2590, %v2545
        %v2996 = vpack.c.b16 %v2591, %v2546
        %v2997 = vpack.c.b16 %v2592, %v2547
        %v2998 = vpack.c.b16 %v2593, %v2548
        %v2999 = vpack.c.b16 %v2594, %v2549
        %v3000 = vpack.c.b16 %v2595, %v2550
        %v3001 = vpack.c.b16 %v2596, %v2551
        %v3002 = vpack.c.b16 %v2597, %v2552
        %v3003 = vpack.c.b16 %v2598, %v2553
        %v3004 = vpack.c.b16 %v2599, %v2554
        %v3005 = vpack.c.b16 %v2645, %v2600
        %v3006 = vpack.c.b16 %v2646, %v2601
        %v3007 = vpack.c.b16 %v2647, %v2602
        %v3008 = vpack.c.b16 %v2648, %v2603
        %v3009 = vpack.c.b16 %v2649, %v2604
        %v3010 = vpack.c.b16 %v2650, %v2605
        %v3011 = vpack.c.b16 %v2651, %v2606
        %v3012 = vpack.c.b16 %v2652, %v2607
        %v3013 = vpack.c.b16 %v2653, %v2608
        %v3014 = vpack.c.b16 %v2654, %v2609
        %v3015 = vpack.c.b16 %v2655, %v2610
        %v3016 = vpack.c.b16 %v2656, %v2611
        %v3017 = vpack.c.b16 %v2657, %v2612
        %v3018 = vpack.c.b16 %v2658, %v2613
        %v3019 = vpack.c.b16 %v2659, %v2614
        %v3020 = vpack.c.b16 %v2660, %v2615
        %v3021 = vpack.c.b16 %v2661, %v2616
        %v3022 = vpack.c.b16 %v2662, %v2617
        %v3023 = vpack.c.b16 %v2663, %v2618
        %v3024 = vpack.c.b16 %v2664, %v2619
        %v3025 = vpack.c.b16 %v2665, %v2620
        %v3026 = vpack.c.b16 %v2666, %v2621
        %v3027 = vpack.c.b16 %v2667, %v2622
        %v3028 = vpack.c.b16 %v2668, %v2623
        %v3029 = vpack.c.b16 %v2669, %v2624
        %v3030 = vpack.c.b16 %v2670, %v2625
        %v3031 = vpack.c.b16 %v2671, %v2626
        %v3032 = vpack.c.b16 %v2672, %v2627
        %v3033 = vpack.c.b16 %v2673, %v2628
        %v3034 = vpack.c.b16 %v2674, %v2629
        %v3035 = vpack.c.b16 %v2675, %v2630
        %v3036 = vpack.c.b16 %v2676, %v2631
        %v3037 = vpack.c.b16 %v2677, %v2632
        %v3038 = vpack.c.b16 %v2678, %v2633
        %v3039 = vpack.c.b16 %v2679, %v2634
        %v3040 = vpack.c.b16 %v2680, %v2635
        %v3041 = vpack.c.b16 %v2681, %v2636
        %v3042 = vpack.c.b16 %v2682, %v2637
        %v3043 = vpack.c.b16 %v2683, %v2638
        %v3044 = vpack.c.b16 %v2684, %v2639
        %v3045 = vpack.c.b16 %v2685, %v2640
        %v3046 = vpack.c.b16 %v2686, %v2641
        %v3047 = vpack.c.b16 %v2687, %v2642
        %v3048 = vpack.c.b16 %v2688, %v2643
        %v3049 = vpack.c.b16 %v2689, %v2644
        %3410 = vmatprep.subr.bf16.mxu0 %v2691
        %3411 = vmatpush1.bf16.msra.mxu0 %v2690
        %3412 = vmatprep.subr.bf16.mxu0 %v2736
        %3413 = vmatpush1.bf16.msra.mxu0 %v2735
        %3414 = vmatprep.subr.bf16.mxu0 %v2781
        %3415 = vmatpush1.bf16.msra.mxu0 %v2780
        %3416 = vmatprep.subr.bf16.mxu0 %v2826
        %3417 = vmatpush1.bf16.msra.mxu0 %v2825
        %3418 = vmatprep.subr.bf16.mxu0 %v2871
        %3419 = vmatpush1.bf16.msra.mxu0 %v2870
        %3420 = vmatprep.subr.bf16.mxu0 %v2916
        %3421 = vmatpush1.bf16.msra.mxu0 %v2915
        %3422 = vmatprep.subr.bf16.mxu0 %v2961
        %3423 = vmatpush1.bf16.msra.mxu0 %v2960
        %3424 = vmatprep.subr.bf16.mxu0 %v3006
        %3425 = vmatpush1.bf16.msra.mxu0 %v3005
        %3426 = vmatprep.subr.bf16.mxu0 0
        %3427 = vmatpush1.bf16.msra.mxu0 0
        %3428 = vmatprep.subr.bf16.mxu0 0
        %3429 = vmatpush1.bf16.msra.mxu0 0
        %3430 = vmatprep.subr.bf16.mxu0 0
        %3431 = vmatpush1.bf16.msra.mxu0 0
        %3432 = vmatprep.subr.bf16.mxu0 0
        %3433 = vmatpush1.bf16.msra.mxu0 0
        %3434 = vmatprep.subr.bf16.mxu0 0
        %3435 = vmatpush1.bf16.msra.mxu0 0
        %3436 = vmatprep.subr.bf16.mxu0 0
        %3437 = vmatpush1.bf16.msra.mxu0 0
        %3438 = vmatprep.subr.bf16.mxu0 0
        %3439 = vmatpush1.bf16.msra.mxu0 0
        %3440 = vmatprep.subr.bf16.mxu0 0
        %3441 = vmatpush1.bf16.msra.mxu0 0
        %3442 = vmatprep.mubr.bf16.mxu0 0
        %3443 = vmatmul.mubr.bf16.gmra.mrb[0].mxu0 %v1364
        %v3444 = vpop.f32.mrb[0].mxu0
        %v3445 = vadd.f32 %v1380, %v3444
        %v3446 = vpop.f32.mrb[0].mxu0
        %v3447 = vadd.f32 %v1384, %v3446
        %v3448 = vpop.f32.mrb[0].mxu0
        %v3449 = vpop.f32.mrb[0].mxu0
        %3450 = vdwg.mxu0
        %3451 = vmatprep.subr.bf16.mxu0 %v2693
        %3452 = vmatpush1.bf16.msra.mxu0 %v2692
        %3453 = vmatprep.subr.bf16.mxu0 %v2738
        %3454 = vmatpush1.bf16.msra.mxu0 %v2737
        %3455 = vmatprep.subr.bf16.mxu0 %v2783
        %3456 = vmatpush1.bf16.msra.mxu0 %v2782
        %3457 = vmatprep.subr.bf16.mxu0 %v2828
        %3458 = vmatpush1.bf16.msra.mxu0 %v2827
        %3459 = vmatprep.subr.bf16.mxu0 %v2873
        %3460 = vmatpush1.bf16.msra.mxu0 %v2872
        %3461 = vmatprep.subr.bf16.mxu0 %v2918
        %3462 = vmatpush1.bf16.msra.mxu0 %v2917
        %3463 = vmatprep.subr.bf16.mxu0 %v2963
        %3464 = vmatpush1.bf16.msra.mxu0 %v2962
        %3465 = vmatprep.subr.bf16.mxu0 %v3008
        %3466 = vmatpush1.bf16.msra.mxu0 %v3007
        %3467 = vmatprep.subr.bf16.mxu0 0
        %3468 = vmatpush1.bf16.msra.mxu0 0
        %3469 = vmatprep.subr.bf16.mxu0 0
        %3470 = vmatpush1.bf16.msra.mxu0 0
        %3471 = vmatprep.subr.bf16.mxu0 0
        %3472 = vmatpush1.bf16.msra.mxu0 0
        %3473 = vmatprep.subr.bf16.mxu0 0
        %3474 = vmatpush1.bf16.msra.mxu0 0
        %3475 = vmatprep.subr.bf16.mxu0 0
        %3476 = vmatpush1.bf16.msra.mxu0 0
        %3477 = vmatprep.subr.bf16.mxu0 0
        %3478 = vmatpush1.bf16.msra.mxu0 0
        %3479 = vmatprep.subr.bf16.mxu0 0
        %3480 = vmatpush1.bf16.msra.mxu0 0
        %3481 = vmatprep.subr.bf16.mxu0 0
        %3482 = vmatpush1.bf16.msra.mxu0 0
        %3483 = vmatprep.mubr.bf16.mxu0 0
        %3484 = vmatmul.mubr.bf16.gmra.mrb[0].mxu0 %v1364
        %v3485 = vpop.f32.mrb[0].mxu0
        %v3486 = vadd.f32 %v1388, %v3485
        %v3487 = vpop.f32.mrb[0].mxu0
        %v3488 = vadd.f32 %v1392, %v3487
        %v3489 = vpop.f32.mrb[0].mxu0
        %v3490 = vpop.f32.mrb[0].mxu0
        %3491 = vdwg.mxu0
        %3492 = vmatprep.subr.bf16.mxu0 %v2695
        %3493 = vmatpush1.bf16.msra.mxu0 %v2694
        %3494 = vmatprep.subr.bf16.mxu0 %v2740
        %3495 = vmatpush1.bf16.msra.mxu0 %v2739
        %3496 = vmatprep.subr.bf16.mxu0 %v2785
        %3497 = vmatpush1.bf16.msra.mxu0 %v2784
        %3498 = vmatprep.subr.bf16.mxu0 %v2830
        %3499 = vmatpush1.bf16.msra.mxu0 %v2829
        %3500 = vmatprep.subr.bf16.mxu0 %v2875
        %3501 = vmatpush1.bf16.msra.mxu0 %v2874
        %3502 = vmatprep.subr.bf16.mxu0 %v2920
        %3503 = vmatpush1.bf16.msra.mxu0 %v2919
        %3504 = vmatprep.subr.bf16.mxu0 %v2965
        %3505 = vmatpush1.bf16.msra.mxu0 %v2964
        %3506 = vmatprep.subr.bf16.mxu0 %v3010
        %3507 = vmatpush1.bf16.msra.mxu0 %v3009
        %3508 = vmatprep.subr.bf16.mxu0 0
        %3509 = vmatpush1.bf16.msra.mxu0 0
        %3510 = vmatprep.subr.bf16.mxu0 0
        %3511 = vmatpush1.bf16.msra.mxu0 0
        %3512 = vmatprep.subr.bf16.mxu0 0
        %3513 = vmatpush1.bf16.msra.mxu0 0
        %3514 = vmatprep.subr.bf16.mxu0 0
        %3515 = vmatpush1.bf16.msra.mxu0 0
        %3516 = vmatprep.subr.bf16.mxu0 0
        %3517 = vmatpush1.bf16.msra.mxu0 0
        %3518 = vmatprep.subr.bf16.mxu0 0
        %3519 = vmatpush1.bf16.msra.mxu0 0
        %3520 = vmatprep.subr.bf16.mxu0 0
        %3521 = vmatpush1.bf16.msra.mxu0 0
        %3522 = vmatprep.subr.bf16.mxu0 0
        %3523 = vmatpush1.bf16.msra.mxu0 0
        %3524 = vmatprep.mubr.bf16.mxu0 0
        %3525 = vmatmul.mubr.bf16.gmra.mrb[0].mxu0 %v1364
        %v3526 = vpop.f32.mrb[0].mxu0
        %v3527 = vadd.f32 %v1396, %v3526
        %v3528 = vpop.f32.mrb[0].mxu0
        %v3529 = vadd.f32 %v1400, %v3528
        %v3530 = vpop.f32.mrb[0].mxu0
        %v3531 = vpop.f32.mrb[0].mxu0
        %3532 = vdwg.mxu0
        %3533 = vmatprep.subr.bf16.mxu0 %v2697
        %3534 = vmatpush1.bf16.msra.mxu0 %v2696
        %3535 = vmatprep.subr.bf16.mxu0 %v2742
        %3536 = vmatpush1.bf16.msra.mxu0 %v2741
        %3537 = vmatprep.subr.bf16.mxu0 %v2787
        %3538 = vmatpush1.bf16.msra.mxu0 %v2786
        %3539 = vmatprep.subr.bf16.mxu0 %v2832
        %3540 = vmatpush1.bf16.msra.mxu0 %v2831
        %3541 = vmatprep.subr.bf16.mxu0 %v2877
        %3542 = vmatpush1.bf16.msra.mxu0 %v2876
        %3543 = vmatprep.subr.bf16.mxu0 %v2922
        %3544 = vmatpush1.bf16.msra.mxu0 %v2921
        %3545 = vmatprep.subr.bf16.mxu0 %v2967
        %3546 = vmatpush1.bf16.msra.mxu0 %v2966
        %3547 = vmatprep.subr.bf16.mxu0 %v3012
        %3548 = vmatpush1.bf16.msra.mxu0 %v3011
        %3549 = vmatprep.subr.bf16.mxu0 0
        %3550 = vmatpush1.bf16.msra.mxu0 0
        %3551 = vmatprep.subr.bf16.mxu0 0
        %3552 = vmatpush1.bf16.msra.mxu0 0
        %3553 = vmatprep.subr.bf16.mxu0 0
        %3554 = vmatpush1.bf16.msra.mxu0 0
        %3555 = vmatprep.subr.bf16.mxu0 0
        %3556 = vmatpush1.bf16.msra.mxu0 0
        %3557 = vmatprep.subr.bf16.mxu0 0
        %3558 = vmatpush1.bf16.msra.mxu0 0
        %3559 = vmatprep.subr.bf16.mxu0 0
        %3560 = vmatpush1.bf16.msra.mxu0 0
        %3561 = vmatprep.subr.bf16.mxu0 0
        %3562 = vmatpush1.bf16.msra.mxu0 0
        %3563 = vmatprep.subr.bf16.mxu0 0
        %3564 = vmatpush1.bf16.msra.mxu0 0
        %3565 = vmatprep.mubr.bf16.mxu0 0
        %3566 = vmatmul.mubr.bf16.gmra.mrb[0].mxu0 %v1364
        %v3567 = vpop.f32.mrb[0].mxu0
        %v3568 = vadd.f32 %v1404, %v3567
        %v3569 = vpop.f32.mrb[0].mxu0
        %v3570 = vadd.f32 %v1408, %v3569
        %v3571 = vpop.f32.mrb[0].mxu0
        %v3572 = vpop.f32.mrb[0].mxu0
        %3573 = vdwg.mxu0
        %3574 = vmatprep.subr.bf16.mxu0 %v2699
        %3575 = vmatpush1.bf16.msra.mxu0 %v2698
        %3576 = vmatprep.subr.bf16.mxu0 %v2744
        %3577 = vmatpush1.bf16.msra.mxu0 %v2743
        %3578 = vmatprep.subr.bf16.mxu0 %v2789
        %3579 = vmatpush1.bf16.msra.mxu0 %v2788
        %3580 = vmatprep.subr.bf16.mxu0 %v2834
        %3581 = vmatpush1.bf16.msra.mxu0 %v2833
        %3582 = vmatprep.subr.bf16.mxu0 %v2879
        %3583 = vmatpush1.bf16.msra.mxu0 %v2878
        %3584 = vmatprep.subr.bf16.mxu0 %v2924
        %3585 = vmatpush1.bf16.msra.mxu0 %v2923
        %3586 = vmatprep.subr.bf16.mxu0 %v2969
        %3587 = vmatpush1.bf16.msra.mxu0 %v2968
        %3588 = vmatprep.subr.bf16.mxu0 %v3014
        %3589 = vmatpush1.bf16.msra.mxu0 %v3013
        %3590 = vmatprep.subr.bf16.mxu0 0
        %3591 = vmatpush1.bf16.msra.mxu0 0
        %3592 = vmatprep.subr.bf16.mxu0 0
        %3593 = vmatpush1.bf16.msra.mxu0 0
        %3594 = vmatprep.subr.bf16.mxu0 0
        %3595 = vmatpush1.bf16.msra.mxu0 0
        %3596 = vmatprep.subr.bf16.mxu0 0
        %3597 = vmatpush1.bf16.msra.mxu0 0
        %3598 = vmatprep.subr.bf16.mxu0 0
        %3599 = vmatpush1.bf16.msra.mxu0 0
        %3600 = vmatprep.subr.bf16.mxu0 0
        %3601 = vmatpush1.bf16.msra.mxu0 0
        %3602 = vmatprep.subr.bf16.mxu0 0
        %3603 = vmatpush1.bf16.msra.mxu0 0
        %3604 = vmatprep.subr.bf16.mxu0 0
        %3605 = vmatpush1.bf16.msra.mxu0 0
        %3606 = vmatprep.mubr.bf16.mxu0 0
        %3607 = vmatmul.mubr.bf16.gmra.mrb[0].mxu0 %v1364
        %v3608 = vpop.f32.mrb[0].mxu0
        %v3609 = vadd.f32 %v1412, %v3608
        %v3610 = vpop.f32.mrb[0].mxu0
        %v3611 = vadd.f32 %v1416, %v3610
        %v3612 = vpop.f32.mrb[0].mxu0
        %v3613 = vpop.f32.mrb[0].mxu0
        %3614 = vdwg.mxu0
        %3615 = vmatprep.subr.bf16.mxu0 %v2701
        %3616 = vmatpush1.bf16.msra.mxu0 %v2700
        %3617 = vmatprep.subr.bf16.mxu0 %v2746
        %3618 = vmatpush1.bf16.msra.mxu0 %v2745
        %3619 = vmatprep.subr.bf16.mxu0 %v2791
        %3620 = vmatpush1.bf16.msra.mxu0 %v2790
        %3621 = vmatprep.subr.bf16.mxu0 %v2836
        %3622 = vmatpush1.bf16.msra.mxu0 %v2835
        %3623 = vmatprep.subr.bf16.mxu0 %v2881
        %3624 = vmatpush1.bf16.msra.mxu0 %v2880
        %3625 = vmatprep.subr.bf16.mxu0 %v2926
        %3626 = vmatpush1.bf16.msra.mxu0 %v2925
        %3627 = vmatprep.subr.bf16.mxu0 %v2971
        %3628 = vmatpush1.bf16.msra.mxu0 %v2970
        %3629 = vmatprep.subr.bf16.mxu0 %v3016
        %3630 = vmatpush1.bf16.msra.mxu0 %v3015
        %3631 = vmatprep.subr.bf16.mxu0 0
        %3632 = vmatpush1.bf16.msra.mxu0 0
        %3633 = vmatprep.subr.bf16.mxu0 0
        %3634 = vmatpush1.bf16.msra.mxu0 0
        %3635 = vmatprep.subr.bf16.mxu0 0
        %3636 = vmatpush1.bf16.msra.mxu0 0
        %3637 = vmatprep.subr.bf16.mxu0 0
        %3638 = vmatpush1.bf16.msra.mxu0 0
        %3639 = vmatprep.subr.bf16.mxu0 0
        %3640 = vmatpush1.bf16.msra.mxu0 0
        %3641 = vmatprep.subr.bf16.mxu0 0
        %3642 = vmatpush1.bf16.msra.mxu0 0
        %3643 = vmatprep.subr.bf16.mxu0 0
        %3644 = vmatpush1.bf16.msra.mxu0 0
        %3645 = vmatprep.subr.bf16.mxu0 0
        %3646 = vmatpush1.bf16.msra.mxu0 0
        %3647 = vmatprep.mubr.bf16.mxu0 0
        %3648 = vmatmul.mubr.bf16.gmra.mrb[0].mxu0 %v1364
        %v3649 = vpop.f32.mrb[0].mxu0
        %v3650 = vadd.f32 %v1420, %v3649
        %v3651 = vpop.f32.mrb[0].mxu0
        %v3652 = vadd.f32 %v1424, %v3651
        %v3653 = vpop.f32.mrb[0].mxu0
        %v3654 = vpop.f32.mrb[0].mxu0
        %3655 = vdwg.mxu0
        %3656 = vmatprep.subr.bf16.mxu0 %v2703
        %3657 = vmatpush1.bf16.msra.mxu0 %v2702
        %3658 = vmatprep.subr.bf16.mxu0 %v2748
        %3659 = vmatpush1.bf16.msra.mxu0 %v2747
        %3660 = vmatprep.subr.bf16.mxu0 %v2793
        %3661 = vmatpush1.bf16.msra.mxu0 %v2792
        %3662 = vmatprep.subr.bf16.mxu0 %v2838
        %3663 = vmatpush1.bf16.msra.mxu0 %v2837
        %3664 = vmatprep.subr.bf16.mxu0 %v2883
        %3665 = vmatpush1.bf16.msra.mxu0 %v2882
        %3666 = vmatprep.subr.bf16.mxu0 %v2928
        %3667 = vmatpush1.bf16.msra.mxu0 %v2927
        %3668 = vmatprep.subr.bf16.mxu0 %v2973
        %3669 = vmatpush1.bf16.msra.mxu0 %v2972
        %3670 = vmatprep.subr.bf16.mxu0 %v3018
        %3671 = vmatpush1.bf16.msra.mxu0 %v3017
        %3672 = vmatprep.subr.bf16.mxu0 0
        %3673 = vmatpush1.bf16.msra.mxu0 0
        %3674 = vmatprep.subr.bf16.mxu0 0
        %3675 = vmatpush1.bf16.msra.mxu0 0
        %3676 = vmatprep.subr.bf16.mxu0 0
        %3677 = vmatpush1.bf16.msra.mxu0 0
        %3678 = vmatprep.subr.bf16.mxu0 0
        %3679 = vmatpush1.bf16.msra.mxu0 0
        %3680 = vmatprep.subr.bf16.mxu0 0
        %3681 = vmatpush1.bf16.msra.mxu0 0
        %3682 = vmatprep.subr.bf16.mxu0 0
        %3683 = vmatpush1.bf16.msra.mxu0 0
        %3684 = vmatprep.subr.bf16.mxu0 0
        %3685 = vmatpush1.bf16.msra.mxu0 0
        %3686 = vmatprep.subr.bf16.mxu0 0
        %3687 = vmatpush1.bf16.msra.mxu0 0
        %3688 = vmatprep.mubr.bf16.mxu0 0
        %3689 = vmatmul.mubr.bf16.gmra.mrb[0].mxu0 %v1364
        %v3690 = vpop.f32.mrb[0].mxu0
        %v3691 = vadd.f32 %v1428, %v3690
        %v3692 = vpop.f32.mrb[0].mxu0
        %v3693 = vadd.f32 %v1432, %v3692
        %v3694 = vpop.f32.mrb[0].mxu0
        %v3695 = vpop.f32.mrb[0].mxu0
        %3696 = vdwg.mxu0
        %3697 = vmatprep.subr.bf16.mxu0 %v2705
        %3698 = vmatpush1.bf16.msra.mxu0 %v2704
        %3699 = vmatprep.subr.bf16.mxu0 %v2750
        %3700 = vmatpush1.bf16.msra.mxu0 %v2749
        %3701 = vmatprep.subr.bf16.mxu0 %v2795
        %3702 = vmatpush1.bf16.msra.mxu0 %v2794
        %3703 = vmatprep.subr.bf16.mxu0 %v2840
        %3704 = vmatpush1.bf16.msra.mxu0 %v2839
        %3705 = vmatprep.subr.bf16.mxu0 %v2885
        %3706 = vmatpush1.bf16.msra.mxu0 %v2884
        %3707 = vmatprep.subr.bf16.mxu0 %v2930
        %3708 = vmatpush1.bf16.msra.mxu0 %v2929
        %3709 = vmatprep.subr.bf16.mxu0 %v2975
        %3710 = vmatpush1.bf16.msra.mxu0 %v2974
        %3711 = vmatprep.subr.bf16.mxu0 %v3020
        %3712 = vmatpush1.bf16.msra.mxu0 %v3019
        %3713 = vmatprep.subr.bf16.mxu0 0
        %3714 = vmatpush1.bf16.msra.mxu0 0
        %3715 = vmatprep.subr.bf16.mxu0 0
        %3716 = vmatpush1.bf16.msra.mxu0 0
        %3717 = vmatprep.subr.bf16.mxu0 0
        %3718 = vmatpush1.bf16.msra.mxu0 0
        %3719 = vmatprep.subr.bf16.mxu0 0
        %3720 = vmatpush1.bf16.msra.mxu0 0
        %3721 = vmatprep.subr.bf16.mxu0 0
        %3722 = vmatpush1.bf16.msra.mxu0 0
        %3723 = vmatprep.subr.bf16.mxu0 0
        %3724 = vmatpush1.bf16.msra.mxu0 0
        %3725 = vmatprep.subr.bf16.mxu0 0
        %3726 = vmatpush1.bf16.msra.mxu0 0
        %3727 = vmatprep.subr.bf16.mxu0 0
        %3728 = vmatpush1.bf16.msra.mxu0 0
        %3729 = vmatprep.mubr.bf16.mxu0 0
        %3730 = vmatmul.mubr.bf16.gmra.mrb[0].mxu0 %v1364
        %v3731 = vpop.f32.mrb[0].mxu0
        %v3732 = vadd.f32 %v1436, %v3731
        %v3733 = vpop.f32.mrb[0].mxu0
        %v3734 = vadd.f32 %v1440, %v3733
        %v3735 = vpop.f32.mrb[0].mxu0
        %v3736 = vpop.f32.mrb[0].mxu0
        %3737 = vdwg.mxu0
        %3738 = vmatprep.subr.bf16.mxu0 %v2707
        %3739 = vmatpush1.bf16.msra.mxu0 %v2706
        %3740 = vmatprep.subr.bf16.mxu0 %v2752
        %3741 = vmatpush1.bf16.msra.mxu0 %v2751
        %3742 = vmatprep.subr.bf16.mxu0 %v2797
        %3743 = vmatpush1.bf16.msra.mxu0 %v2796
        %3744 = vmatprep.subr.bf16.mxu0 %v2842
        %3745 = vmatpush1.bf16.msra.mxu0 %v2841
        %3746 = vmatprep.subr.bf16.mxu0 %v2887
        %3747 = vmatpush1.bf16.msra.mxu0 %v2886
        %3748 = vmatprep.subr.bf16.mxu0 %v2932
        %3749 = vmatpush1.bf16.msra.mxu0 %v2931
        %3750 = vmatprep.subr.bf16.mxu0 %v2977
        %3751 = vmatpush1.bf16.msra.mxu0 %v2976
        %3752 = vmatprep.subr.bf16.mxu0 %v3022
        %3753 = vmatpush1.bf16.msra.mxu0 %v3021
        %3754 = vmatprep.subr.bf16.mxu0 0
        %3755 = vmatpush1.bf16.msra.mxu0 0
        %3756 = vmatprep.subr.bf16.mxu0 0
        %3757 = vmatpush1.bf16.msra.mxu0 0
        %3758 = vmatprep.subr.bf16.mxu0 0
        %3759 = vmatpush1.bf16.msra.mxu0 0
        %3760 = vmatprep.subr.bf16.mxu0 0
        %3761 = vmatpush1.bf16.msra.mxu0 0
        %3762 = vmatprep.subr.bf16.mxu0 0
        %3763 = vmatpush1.bf16.msra.mxu0 0
        %3764 = vmatprep.subr.bf16.mxu0 0
        %3765 = vmatpush1.bf16.msra.mxu0 0
        %3766 = vmatprep.subr.bf16.mxu0 0
        %3767 = vmatpush1.bf16.msra.mxu0 0
        %3768 = vmatprep.subr.bf16.mxu0 0
        %3769 = vmatpush1.bf16.msra.mxu0 0
        %3770 = vmatprep.mubr.bf16.mxu0 0
        %3771 = vmatmul.mubr.bf16.gmra.mrb[0].mxu0 %v1364
        %v3772 = vpop.f32.mrb[0].mxu0
        %v3773 = vadd.f32 %v1444, %v3772
        %v3774 = vpop.f32.mrb[0].mxu0
        %v3775 = vadd.f32 %v1448, %v3774
        %v3776 = vpop.f32.mrb[0].mxu0
        %v3777 = vpop.f32.mrb[0].mxu0
        %3778 = vdwg.mxu0
        %3779 = vmatprep.subr.bf16.mxu0 %v2709
        %3780 = vmatpush1.bf16.msra.mxu0 %v2708
        %3781 = vmatprep.subr.bf16.mxu0 %v2754
        %3782 = vmatpush1.bf16.msra.mxu0 %v2753
        %3783 = vmatprep.subr.bf16.mxu0 %v2799
        %3784 = vmatpush1.bf16.msra.mxu0 %v2798
        %3785 = vmatprep.subr.bf16.mxu0 %v2844
        %3786 = vmatpush1.bf16.msra.mxu0 %v2843
        %3787 = vmatprep.subr.bf16.mxu0 %v2889
        %3788 = vmatpush1.bf16.msra.mxu0 %v2888
        %3789 = vmatprep.subr.bf16.mxu0 %v2934
        %3790 = vmatpush1.bf16.msra.mxu0 %v2933
        %3791 = vmatprep.subr.bf16.mxu0 %v2979
        %3792 = vmatpush1.bf16.msra.mxu0 %v2978
        %3793 = vmatprep.subr.bf16.mxu0 %v3024
        %3794 = vmatpush1.bf16.msra.mxu0 %v3023
        %3795 = vmatprep.subr.bf16.mxu0 0
        %3796 = vmatpush1.bf16.msra.mxu0 0
        %3797 = vmatprep.subr.bf16.mxu0 0
        %3798 = vmatpush1.bf16.msra.mxu0 0
        %3799 = vmatprep.subr.bf16.mxu0 0
        %3800 = vmatpush1.bf16.msra.mxu0 0
        %3801 = vmatprep.subr.bf16.mxu0 0
        %3802 = vmatpush1.bf16.msra.mxu0 0
        %3803 = vmatprep.subr.bf16.mxu0 0
        %3804 = vmatpush1.bf16.msra.mxu0 0
        %3805 = vmatprep.subr.bf16.mxu0 0
        %3806 = vmatpush1.bf16.msra.mxu0 0
        %3807 = vmatprep.subr.bf16.mxu0 0
        %3808 = vmatpush1.bf16.msra.mxu0 0
        %3809 = vmatprep.subr.bf16.mxu0 0
        %3810 = vmatpush1.bf16.msra.mxu0 0
        %3811 = vmatprep.mubr.bf16.mxu0 0
        %3812 = vmatmul.mubr.bf16.gmra.mrb[0].mxu0 %v1364
        %v3813 = vpop.f32.mrb[0].mxu0
        %v3814 = vadd.f32 %v1452, %v3813
        %v3815 = vpop.f32.mrb[0].mxu0
        %v3816 = vadd.f32 %v1456, %v3815
        %v3817 = vpop.f32.mrb[0].mxu0
        %v3818 = vpop.f32.mrb[0].mxu0
        %3819 = vdwg.mxu0
        %3820 = vmatprep.subr.bf16.mxu0 %v2711
        %3821 = vmatpush1.bf16.msra.mxu0 %v2710
        %3822 = vmatprep.subr.bf16.mxu0 %v2756
        %3823 = vmatpush1.bf16.msra.mxu0 %v2755
        %3824 = vmatprep.subr.bf16.mxu0 %v2801
        %3825 = vmatpush1.bf16.msra.mxu0 %v2800
        %3826 = vmatprep.subr.bf16.mxu0 %v2846
        %3827 = vmatpush1.bf16.msra.mxu0 %v2845
        %3828 = vmatprep.subr.bf16.mxu0 %v2891
        %3829 = vmatpush1.bf16.msra.mxu0 %v2890
        %3830 = vmatprep.subr.bf16.mxu0 %v2936
        %3831 = vmatpush1.bf16.msra.mxu0 %v2935
        %3832 = vmatprep.subr.bf16.mxu0 %v2981
        %3833 = vmatpush1.bf16.msra.mxu0 %v2980
        %3834 = vmatprep.subr.bf16.mxu0 %v3026
        %3835 = vmatpush1.bf16.msra.mxu0 %v3025
        %3836 = vmatprep.subr.bf16.mxu0 0
        %3837 = vmatpush1.bf16.msra.mxu0 0
        %3838 = vmatprep.subr.bf16.mxu0 0
        %3839 = vmatpush1.bf16.msra.mxu0 0
        %3840 = vmatprep.subr.bf16.mxu0 0
        %3841 = vmatpush1.bf16.msra.mxu0 0
        %3842 = vmatprep.subr.bf16.mxu0 0
        %3843 = vmatpush1.bf16.msra.mxu0 0
        %3844 = vmatprep.subr.bf16.mxu0 0
        %3845 = vmatpush1.bf16.msra.mxu0 0
        %3846 = vmatprep.subr.bf16.mxu0 0
        %3847 = vmatpush1.bf16.msra.mxu0 0
        %3848 = vmatprep.subr.bf16.mxu0 0
        %3849 = vmatpush1.bf16.msra.mxu0 0
        %3850 = vmatprep.subr.bf16.mxu0 0
        %3851 = vmatpush1.bf16.msra.mxu0 0
        %3852 = vmatprep.mubr.bf16.mxu0 0
        %3853 = vmatmul.mubr.bf16.gmra.mrb[0].mxu0 %v1364
        %v3854 = vpop.f32.mrb[0].mxu0
        %v3855 = vadd.f32 %v1460, %v3854
        %v3856 = vpop.f32.mrb[0].mxu0
        %v3857 = vadd.f32 %v1464, %v3856
        %v3858 = vpop.f32.mrb[0].mxu0
        %v3859 = vpop.f32.mrb[0].mxu0
        %3860 = vdwg.mxu0
        %3861 = vmatprep.subr.bf16.mxu0 %v2713
        %3862 = vmatpush1.bf16.msra.mxu0 %v2712
        %3863 = vmatprep.subr.bf16.mxu0 %v2758
        %3864 = vmatpush1.bf16.msra.mxu0 %v2757
        %3865 = vmatprep.subr.bf16.mxu0 %v2803
        %3866 = vmatpush1.bf16.msra.mxu0 %v2802
        %3867 = vmatprep.subr.bf16.mxu0 %v2848
        %3868 = vmatpush1.bf16.msra.mxu0 %v2847
        %3869 = vmatprep.subr.bf16.mxu0 %v2893
        %3870 = vmatpush1.bf16.msra.mxu0 %v2892
        %3871 = vmatprep.subr.bf16.mxu0 %v2938
        %3872 = vmatpush1.bf16.msra.mxu0 %v2937
        %3873 = vmatprep.subr.bf16.mxu0 %v2983
        %3874 = vmatpush1.bf16.msra.mxu0 %v2982
        %3875 = vmatprep.subr.bf16.mxu0 %v3028
        %3876 = vmatpush1.bf16.msra.mxu0 %v3027
        %3877 = vmatprep.subr.bf16.mxu0 0
        %3878 = vmatpush1.bf16.msra.mxu0 0
        %3879 = vmatprep.subr.bf16.mxu0 0
        %3880 = vmatpush1.bf16.msra.mxu0 0
        %3881 = vmatprep.subr.bf16.mxu0 0
        %3882 = vmatpush1.bf16.msra.mxu0 0
        %3883 = vmatprep.subr.bf16.mxu0 0
        %3884 = vmatpush1.bf16.msra.mxu0 0
        %3885 = vmatprep.subr.bf16.mxu0 0
        %3886 = vmatpush1.bf16.msra.mxu0 0
        %3887 = vmatprep.subr.bf16.mxu0 0
        %3888 = vmatpush1.bf16.msra.mxu0 0
        %3889 = vmatprep.subr.bf16.mxu0 0
        %3890 = vmatpush1.bf16.msra.mxu0 0
        %3891 = vmatprep.subr.bf16.mxu0 0
        %3892 = vmatpush1.bf16.msra.mxu0 0
        %3893 = vmatprep.mubr.bf16.mxu0 0
        %3894 = vmatmul.mubr.bf16.gmra.mrb[0].mxu0 %v1364
        %v3895 = vpop.f32.mrb[0].mxu0
        %v3896 = vadd.f32 %v1468, %v3895
        %v3897 = vpop.f32.mrb[0].mxu0
        %v3898 = vadd.f32 %v1472, %v3897
        %v3899 = vpop.f32.mrb[0].mxu0
        %v3900 = vpop.f32.mrb[0].mxu0
        %3901 = vdwg.mxu0
        %3902 = vmatprep.subr.bf16.mxu0 %v2715
        %3903 = vmatpush1.bf16.msra.mxu0 %v2714
        %3904 = vmatprep.subr.bf16.mxu0 %v2760
        %3905 = vmatpush1.bf16.msra.mxu0 %v2759
        %3906 = vmatprep.subr.bf16.mxu0 %v2805
        %3907 = vmatpush1.bf16.msra.mxu0 %v2804
        %3908 = vmatprep.subr.bf16.mxu0 %v2850
        %3909 = vmatpush1.bf16.msra.mxu0 %v2849
        %3910 = vmatprep.subr.bf16.mxu0 %v2895
        %3911 = vmatpush1.bf16.msra.mxu0 %v2894
        %3912 = vmatprep.subr.bf16.mxu0 %v2940
        %3913 = vmatpush1.bf16.msra.mxu0 %v2939
        %3914 = vmatprep.subr.bf16.mxu0 %v2985
        %3915 = vmatpush1.bf16.msra.mxu0 %v2984
        %3916 = vmatprep.subr.bf16.mxu0 %v3030
        %3917 = vmatpush1.bf16.msra.mxu0 %v3029
        %3918 = vmatprep.subr.bf16.mxu0 0
        %3919 = vmatpush1.bf16.msra.mxu0 0
        %3920 = vmatprep.subr.bf16.mxu0 0
        %3921 = vmatpush1.bf16.msra.mxu0 0
        %3922 = vmatprep.subr.bf16.mxu0 0
        %3923 = vmatpush1.bf16.msra.mxu0 0
        %3924 = vmatprep.subr.bf16.mxu0 0
        %3925 = vmatpush1.bf16.msra.mxu0 0
        %3926 = vmatprep.subr.bf16.mxu0 0
        %3927 = vmatpush1.bf16.msra.mxu0 0
        %3928 = vmatprep.subr.bf16.mxu0 0
        %3929 = vmatpush1.bf16.msra.mxu0 0
        %3930 = vmatprep.subr.bf16.mxu0 0
        %3931 = vmatpush1.bf16.msra.mxu0 0
        %3932 = vmatprep.subr.bf16.mxu0 0
        %3933 = vmatpush1.bf16.msra.mxu0 0
        %3934 = vmatprep.mubr.bf16.mxu0 0
        %3935 = vmatmul.mubr.bf16.gmra.mrb[0].mxu0 %v1364
        %v3936 = vpop.f32.mrb[0].mxu0
        %v3937 = vadd.f32 %v1476, %v3936
        %v3938 = vpop.f32.mrb[0].mxu0
        %v3939 = vadd.f32 %v1480, %v3938
        %v3940 = vpop.f32.mrb[0].mxu0
        %v3941 = vpop.f32.mrb[0].mxu0
        %3942 = vdwg.mxu0
        %3943 = vmatprep.subr.bf16.mxu0 %v2717
        %3944 = vmatpush1.bf16.msra.mxu0 %v2716
        %3945 = vmatprep.subr.bf16.mxu0 %v2762
        %3946 = vmatpush1.bf16.msra.mxu0 %v2761
        %3947 = vmatprep.subr.bf16.mxu0 %v2807
        %3948 = vmatpush1.bf16.msra.mxu0 %v2806
        %3949 = vmatprep.subr.bf16.mxu0 %v2852
        %3950 = vmatpush1.bf16.msra.mxu0 %v2851
        %3951 = vmatprep.subr.bf16.mxu0 %v2897
        %3952 = vmatpush1.bf16.msra.mxu0 %v2896
        %3953 = vmatprep.subr.bf16.mxu0 %v2942
        %3954 = vmatpush1.bf16.msra.mxu0 %v2941
        %3955 = vmatprep.subr.bf16.mxu0 %v2987
        %3956 = vmatpush1.bf16.msra.mxu0 %v2986
        %3957 = vmatprep.subr.bf16.mxu0 %v3032
        %3958 = vmatpush1.bf16.msra.mxu0 %v3031
        %3959 = vmatprep.subr.bf16.mxu0 0
        %3960 = vmatpush1.bf16.msra.mxu0 0
        %3961 = vmatprep.subr.bf16.mxu0 0
        %3962 = vmatpush1.bf16.msra.mxu0 0
        %3963 = vmatprep.subr.bf16.mxu0 0
        %3964 = vmatpush1.bf16.msra.mxu0 0
        %3965 = vmatprep.subr.bf16.mxu0 0
        %3966 = vmatpush1.bf16.msra.mxu0 0
        %3967 = vmatprep.subr.bf16.mxu0 0
        %3968 = vmatpush1.bf16.msra.mxu0 0
        %3969 = vmatprep.subr.bf16.mxu0 0
        %3970 = vmatpush1.bf16.msra.mxu0 0
        %3971 = vmatprep.subr.bf16.mxu0 0
        %3972 = vmatpush1.bf16.msra.mxu0 0
        %3973 = vmatprep.subr.bf16.mxu0 0
        %3974 = vmatpush1.bf16.msra.mxu0 0
        %3975 = vmatprep.mubr.bf16.mxu0 0
        %3976 = vmatmul.mubr.bf16.gmra.mrb[0].mxu0 %v1364
        %v3977 = vpop.f32.mrb[0].mxu0
        %v3978 = vadd.f32 %v1484, %v3977
        %v3979 = vpop.f32.mrb[0].mxu0
        %v3980 = vadd.f32 %v1488, %v3979
        %v3981 = vpop.f32.mrb[0].mxu0
        %v3982 = vpop.f32.mrb[0].mxu0
        %3983 = vdwg.mxu0
        %3984 = vmatprep.subr.bf16.mxu0 %v2719
        %3985 = vmatpush1.bf16.msra.mxu0 %v2718
        %3986 = vmatprep.subr.bf16.mxu0 %v2764
        %3987 = vmatpush1.bf16.msra.mxu0 %v2763
        %3988 = vmatprep.subr.bf16.mxu0 %v2809
        %3989 = vmatpush1.bf16.msra.mxu0 %v2808
        %3990 = vmatprep.subr.bf16.mxu0 %v2854
        %3991 = vmatpush1.bf16.msra.mxu0 %v2853
        %3992 = vmatprep.subr.bf16.mxu0 %v2899
        %3993 = vmatpush1.bf16.msra.mxu0 %v2898
        %3994 = vmatprep.subr.bf16.mxu0 %v2944
        %3995 = vmatpush1.bf16.msra.mxu0 %v2943
        %3996 = vmatprep.subr.bf16.mxu0 %v2989
        %3997 = vmatpush1.bf16.msra.mxu0 %v2988
        %3998 = vmatprep.subr.bf16.mxu0 %v3034
        %3999 = vmatpush1.bf16.msra.mxu0 %v3033
        %4000 = vmatprep.subr.bf16.mxu0 0
        %4001 = vmatpush1.bf16.msra.mxu0 0
        %4002 = vmatprep.subr.bf16.mxu0 0
        %4003 = vmatpush1.bf16.msra.mxu0 0
        %4004 = vmatprep.subr.bf16.mxu0 0
        %4005 = vmatpush1.bf16.msra.mxu0 0
        %4006 = vmatprep.subr.bf16.mxu0 0
        %4007 = vmatpush1.bf16.msra.mxu0 0
        %4008 = vmatprep.subr.bf16.mxu0 0
        %4009 = vmatpush1.bf16.msra.mxu0 0
        %4010 = vmatprep.subr.bf16.mxu0 0
        %4011 = vmatpush1.bf16.msra.mxu0 0
        %4012 = vmatprep.subr.bf16.mxu0 0
        %4013 = vmatpush1.bf16.msra.mxu0 0
        %4014 = vmatprep.subr.bf16.mxu0 0
        %4015 = vmatpush1.bf16.msra.mxu0 0
        %4016 = vmatprep.mubr.bf16.mxu0 0
        %4017 = vmatmul.mubr.bf16.gmra.mrb[0].mxu0 %v1364
        %v4018 = vpop.f32.mrb[0].mxu0
        %v4019 = vadd.f32 %v1492, %v4018
        %v4020 = vpop.f32.mrb[0].mxu0
        %v4021 = vadd.f32 %v1496, %v4020
        %v4022 = vpop.f32.mrb[0].mxu0
        %v4023 = vpop.f32.mrb[0].mxu0
        %4024 = vdwg.mxu0
        %4025 = vmatprep.subr.bf16.mxu0 %v2721
        %4026 = vmatpush1.bf16.msra.mxu0 %v2720
        %4027 = vmatprep.subr.bf16.mxu0 %v2766
        %4028 = vmatpush1.bf16.msra.mxu0 %v2765
        %4029 = vmatprep.subr.bf16.mxu0 %v2811
        %4030 = vmatpush1.bf16.msra.mxu0 %v2810
        %4031 = vmatprep.subr.bf16.mxu0 %v2856
        %4032 = vmatpush1.bf16.msra.mxu0 %v2855
        %4033 = vmatprep.subr.bf16.mxu0 %v2901
        %4034 = vmatpush1.bf16.msra.mxu0 %v2900
        %4035 = vmatprep.subr.bf16.mxu0 %v2946
        %4036 = vmatpush1.bf16.msra.mxu0 %v2945
        %4037 = vmatprep.subr.bf16.mxu0 %v2991
        %4038 = vmatpush1.bf16.msra.mxu0 %v2990
        %4039 = vmatprep.subr.bf16.mxu0 %v3036
        %4040 = vmatpush1.bf16.msra.mxu0 %v3035
        %4041 = vmatprep.subr.bf16.mxu0 0
        %4042 = vmatpush1.bf16.msra.mxu0 0
        %4043 = vmatprep.subr.bf16.mxu0 0
        %4044 = vmatpush1.bf16.msra.mxu0 0
        %4045 = vmatprep.subr.bf16.mxu0 0
        %4046 = vmatpush1.bf16.msra.mxu0 0
        %4047 = vmatprep.subr.bf16.mxu0 0
        %4048 = vmatpush1.bf16.msra.mxu0 0
        %4049 = vmatprep.subr.bf16.mxu0 0
        %4050 = vmatpush1.bf16.msra.mxu0 0
        %4051 = vmatprep.subr.bf16.mxu0 0
        %4052 = vmatpush1.bf16.msra.mxu0 0
        %4053 = vmatprep.subr.bf16.mxu0 0
        %4054 = vmatpush1.bf16.msra.mxu0 0
        %4055 = vmatprep.subr.bf16.mxu0 0
        %4056 = vmatpush1.bf16.msra.mxu0 0
        %4057 = vmatprep.mubr.bf16.mxu0 0
        %4058 = vmatmul.mubr.bf16.gmra.mrb[0].mxu0 %v1364
        %v4059 = vpop.f32.mrb[0].mxu0
        %v4060 = vadd.f32 %v1500, %v4059
        %v4061 = vpop.f32.mrb[0].mxu0
        %v4062 = vadd.f32 %v1504, %v4061
        %v4063 = vpop.f32.mrb[0].mxu0
        %v4064 = vpop.f32.mrb[0].mxu0
        %4065 = vdwg.mxu0
        %4066 = vmatprep.subr.bf16.mxu0 %v2723
        %4067 = vmatpush1.bf16.msra.mxu0 %v2722
        %4068 = vmatprep.subr.bf16.mxu0 %v2768
        %4069 = vmatpush1.bf16.msra.mxu0 %v2767
        %4070 = vmatprep.subr.bf16.mxu0 %v2813
        %4071 = vmatpush1.bf16.msra.mxu0 %v2812
        %4072 = vmatprep.subr.bf16.mxu0 %v2858
        %4073 = vmatpush1.bf16.msra.mxu0 %v2857
        %4074 = vmatprep.subr.bf16.mxu0 %v2903
        %4075 = vmatpush1.bf16.msra.mxu0 %v2902
        %4076 = vmatprep.subr.bf16.mxu0 %v2948
        %4077 = vmatpush1.bf16.msra.mxu0 %v2947
        %4078 = vmatprep.subr.bf16.mxu0 %v2993
        %4079 = vmatpush1.bf16.msra.mxu0 %v2992
        %4080 = vmatprep.subr.bf16.mxu0 %v3038
        %4081 = vmatpush1.bf16.msra.mxu0 %v3037
        %4082 = vmatprep.subr.bf16.mxu0 0
        %4083 = vmatpush1.bf16.msra.mxu0 0
        %4084 = vmatprep.subr.bf16.mxu0 0
        %4085 = vmatpush1.bf16.msra.mxu0 0
        %4086 = vmatprep.subr.bf16.mxu0 0
        %4087 = vmatpush1.bf16.msra.mxu0 0
        %4088 = vmatprep.subr.bf16.mxu0 0
        %4089 = vmatpush1.bf16.msra.mxu0 0
        %4090 = vmatprep.subr.bf16.mxu0 0
        %4091 = vmatpush1.bf16.msra.mxu0 0
        %4092 = vmatprep.subr.bf16.mxu0 0
        %4093 = vmatpush1.bf16.msra.mxu0 0
        %4094 = vmatprep.subr.bf16.mxu0 0
        %4095 = vmatpush1.bf16.msra.mxu0 0
        %4096 = vmatprep.subr.bf16.mxu0 0
        %4097 = vmatpush1.bf16.msra.mxu0 0
        %4098 = vmatprep.mubr.bf16.mxu0 0
        %4099 = vmatmul.mubr.bf16.gmra.mrb[0].mxu0 %v1364
        %v4100 = vpop.f32.mrb[0].mxu0
        %v4101 = vadd.f32 %v1508, %v4100
        %v4102 = vpop.f32.mrb[0].mxu0
        %v4103 = vadd.f32 %v1512, %v4102
        %v4104 = vpop.f32.mrb[0].mxu0
        %v4105 = vpop.f32.mrb[0].mxu0
        %4106 = vdwg.mxu0
        %4107 = vmatprep.subr.bf16.mxu0 %v2725
        %4108 = vmatpush1.bf16.msra.mxu0 %v2724
        %4109 = vmatprep.subr.bf16.mxu0 %v2770
        %4110 = vmatpush1.bf16.msra.mxu0 %v2769
        %4111 = vmatprep.subr.bf16.mxu0 %v2815
        %4112 = vmatpush1.bf16.msra.mxu0 %v2814
        %4113 = vmatprep.subr.bf16.mxu0 %v2860
        %4114 = vmatpush1.bf16.msra.mxu0 %v2859
        %4115 = vmatprep.subr.bf16.mxu0 %v2905
        %4116 = vmatpush1.bf16.msra.mxu0 %v2904
        %4117 = vmatprep.subr.bf16.mxu0 %v2950
        %4118 = vmatpush1.bf16.msra.mxu0 %v2949
        %4119 = vmatprep.subr.bf16.mxu0 %v2995
        %4120 = vmatpush1.bf16.msra.mxu0 %v2994
        %4121 = vmatprep.subr.bf16.mxu0 %v3040
        %4122 = vmatpush1.bf16.msra.mxu0 %v3039
        %4123 = vmatprep.subr.bf16.mxu0 0
        %4124 = vmatpush1.bf16.msra.mxu0 0
        %4125 = vmatprep.subr.bf16.mxu0 0
        %4126 = vmatpush1.bf16.msra.mxu0 0
        %4127 = vmatprep.subr.bf16.mxu0 0
        %4128 = vmatpush1.bf16.msra.mxu0 0
        %4129 = vmatprep.subr.bf16.mxu0 0
        %4130 = vmatpush1.bf16.msra.mxu0 0
        %4131 = vmatprep.subr.bf16.mxu0 0
        %4132 = vmatpush1.bf16.msra.mxu0 0
        %4133 = vmatprep.subr.bf16.mxu0 0
        %4134 = vmatpush1.bf16.msra.mxu0 0
        %4135 = vmatprep.subr.bf16.mxu0 0
        %4136 = vmatpush1.bf16.msra.mxu0 0
        %4137 = vmatprep.subr.bf16.mxu0 0
        %4138 = vmatpush1.bf16.msra.mxu0 0
        %4139 = vmatprep.mubr.bf16.mxu0 0
        %4140 = vmatmul.mubr.bf16.gmra.mrb[0].mxu0 %v1364
        %v4141 = vpop.f32.mrb[0].mxu0
        %v4142 = vadd.f32 %v1516, %v4141
        %v4143 = vpop.f32.mrb[0].mxu0
        %v4144 = vadd.f32 %v1520, %v4143
        %v4145 = vpop.f32.mrb[0].mxu0
        %v4146 = vpop.f32.mrb[0].mxu0
        %4147 = vdwg.mxu0
        %4148 = vmatprep.subr.bf16.mxu0 %v2727
        %4149 = vmatpush1.bf16.msra.mxu0 %v2726
        %4150 = vmatprep.subr.bf16.mxu0 %v2772
        %4151 = vmatpush1.bf16.msra.mxu0 %v2771
        %4152 = vmatprep.subr.bf16.mxu0 %v2817
        %4153 = vmatpush1.bf16.msra.mxu0 %v2816
        %4154 = vmatprep.subr.bf16.mxu0 %v2862
        %4155 = vmatpush1.bf16.msra.mxu0 %v2861
        %4156 = vmatprep.subr.bf16.mxu0 %v2907
        %4157 = vmatpush1.bf16.msra.mxu0 %v2906
        %4158 = vmatprep.subr.bf16.mxu0 %v2952
        %4159 = vmatpush1.bf16.msra.mxu0 %v2951
        %4160 = vmatprep.subr.bf16.mxu0 %v2997
        %4161 = vmatpush1.bf16.msra.mxu0 %v2996
        %4162 = vmatprep.subr.bf16.mxu0 %v3042
        %4163 = vmatpush1.bf16.msra.mxu0 %v3041
        %4164 = vmatprep.subr.bf16.mxu0 0
        %4165 = vmatpush1.bf16.msra.mxu0 0
        %4166 = vmatprep.subr.bf16.mxu0 0
        %4167 = vmatpush1.bf16.msra.mxu0 0
        %4168 = vmatprep.subr.bf16.mxu0 0
        %4169 = vmatpush1.bf16.msra.mxu0 0
        %4170 = vmatprep.subr.bf16.mxu0 0
        %4171 = vmatpush1.bf16.msra.mxu0 0
        %4172 = vmatprep.subr.bf16.mxu0 0
        %4173 = vmatpush1.bf16.msra.mxu0 0
        %4174 = vmatprep.subr.bf16.mxu0 0
        %4175 = vmatpush1.bf16.msra.mxu0 0
        %4176 = vmatprep.subr.bf16.mxu0 0
        %4177 = vmatpush1.bf16.msra.mxu0 0
        %4178 = vmatprep.subr.bf16.mxu0 0
        %4179 = vmatpush1.bf16.msra.mxu0 0
        %4180 = vmatprep.mubr.bf16.mxu0 0
        %4181 = vmatmul.mubr.bf16.gmra.mrb[0].mxu0 %v1364
        %v4182 = vpop.f32.mrb[0].mxu0
        %v4183 = vadd.f32 %v1524, %v4182
        %v4184 = vpop.f32.mrb[0].mxu0
        %v4185 = vadd.f32 %v1528, %v4184
        %v4186 = vpop.f32.mrb[0].mxu0
        %v4187 = vpop.f32.mrb[0].mxu0
        %4188 = vdwg.mxu0
        %4189 = vmatprep.subr.bf16.mxu0 %v2729
        %4190 = vmatpush1.bf16.msra.mxu0 %v2728
        %4191 = vmatprep.subr.bf16.mxu0 %v2774
        %4192 = vmatpush1.bf16.msra.mxu0 %v2773
        %4193 = vmatprep.subr.bf16.mxu0 %v2819
        %4194 = vmatpush1.bf16.msra.mxu0 %v2818
        %4195 = vmatprep.subr.bf16.mxu0 %v2864
        %4196 = vmatpush1.bf16.msra.mxu0 %v2863
        %4197 = vmatprep.subr.bf16.mxu0 %v2909
        %4198 = vmatpush1.bf16.msra.mxu0 %v2908
        %4199 = vmatprep.subr.bf16.mxu0 %v2954
        %4200 = vmatpush1.bf16.msra.mxu0 %v2953
        %4201 = vmatprep.subr.bf16.mxu0 %v2999
        %4202 = vmatpush1.bf16.msra.mxu0 %v2998
        %4203 = vmatprep.subr.bf16.mxu0 %v3044
        %4204 = vmatpush1.bf16.msra.mxu0 %v3043
        %4205 = vmatprep.subr.bf16.mxu0 0
        %4206 = vmatpush1.bf16.msra.mxu0 0
        %4207 = vmatprep.subr.bf16.mxu0 0
        %4208 = vmatpush1.bf16.msra.mxu0 0
        %4209 = vmatprep.subr.bf16.mxu0 0
        %4210 = vmatpush1.bf16.msra.mxu0 0
        %4211 = vmatprep.subr.bf16.mxu0 0
        %4212 = vmatpush1.bf16.msra.mxu0 0
        %4213 = vmatprep.subr.bf16.mxu0 0
        %4214 = vmatpush1.bf16.msra.mxu0 0
        %4215 = vmatprep.subr.bf16.mxu0 0
        %4216 = vmatpush1.bf16.msra.mxu0 0
        %4217 = vmatprep.subr.bf16.mxu0 0
        %4218 = vmatpush1.bf16.msra.mxu0 0
        %4219 = vmatprep.subr.bf16.mxu0 0
        %4220 = vmatpush1.bf16.msra.mxu0 0
        %4221 = vmatprep.mubr.bf16.mxu0 0
        %4222 = vmatmul.mubr.bf16.gmra.mrb[0].mxu0 %v1364
        %v4223 = vpop.f32.mrb[0].mxu0
        %v4224 = vadd.f32 %v1532, %v4223
        %v4225 = vpop.f32.mrb[0].mxu0
        %v4226 = vadd.f32 %v1536, %v4225
        %v4227 = vpop.f32.mrb[0].mxu0
        %v4228 = vpop.f32.mrb[0].mxu0
        %4229 = vdwg.mxu0
        %4230 = vmatprep.subr.bf16.mxu0 %v2731
        %4231 = vmatpush1.bf16.msra.mxu0 %v2730
        %4232 = vmatprep.subr.bf16.mxu0 %v2776
        %4233 = vmatpush1.bf16.msra.mxu0 %v2775
        %4234 = vmatprep.subr.bf16.mxu0 %v2821
        %4235 = vmatpush1.bf16.msra.mxu0 %v2820
        %4236 = vmatprep.subr.bf16.mxu0 %v2866
        %4237 = vmatpush1.bf16.msra.mxu0 %v2865
        %4238 = vmatprep.subr.bf16.mxu0 %v2911
        %4239 = vmatpush1.bf16.msra.mxu0 %v2910
        %4240 = vmatprep.subr.bf16.mxu0 %v2956
        %4241 = vmatpush1.bf16.msra.mxu0 %v2955
        %4242 = vmatprep.subr.bf16.mxu0 %v3001
        %4243 = vmatpush1.bf16.msra.mxu0 %v3000
        %4244 = vmatprep.subr.bf16.mxu0 %v3046
        %4245 = vmatpush1.bf16.msra.mxu0 %v3045
        %4246 = vmatprep.subr.bf16.mxu0 0
        %4247 = vmatpush1.bf16.msra.mxu0 0
        %4248 = vmatprep.subr.bf16.mxu0 0
        %4249 = vmatpush1.bf16.msra.mxu0 0
        %4250 = vmatprep.subr.bf16.mxu0 0
        %4251 = vmatpush1.bf16.msra.mxu0 0
        %4252 = vmatprep.subr.bf16.mxu0 0
        %4253 = vmatpush1.bf16.msra.mxu0 0
        %4254 = vmatprep.subr.bf16.mxu0 0
        %4255 = vmatpush1.bf16.msra.mxu0 0
        %4256 = vmatprep.subr.bf16.mxu0 0
        %4257 = vmatpush1.bf16.msra.mxu0 0
        %4258 = vmatprep.subr.bf16.mxu0 0
        %4259 = vmatpush1.bf16.msra.mxu0 0
        %4260 = vmatprep.subr.bf16.mxu0 0
        %4261 = vmatpush1.bf16.msra.mxu0 0
        %4262 = vmatprep.mubr.bf16.mxu0 0
        %4263 = vmatmul.mubr.bf16.gmra.mrb[0].mxu0 %v1364
        %v4264 = vpop.f32.mrb[0].mxu0
        %v4265 = vadd.f32 %v1540, %v4264
        %v4266 = vpop.f32.mrb[0].mxu0
        %v4267 = vadd.f32 %v1544, %v4266
        %v4268 = vpop.f32.mrb[0].mxu0
        %v4269 = vpop.f32.mrb[0].mxu0
        %4270 = vdwg.mxu0
        %4271 = vmatprep.subr.bf16.mxu0 %v2733
        %4272 = vmatpush1.bf16.msra.mxu0 %v2732
        %4273 = vmatprep.subr.bf16.mxu0 %v2778
        %4274 = vmatpush1.bf16.msra.mxu0 %v2777
        %4275 = vmatprep.subr.bf16.mxu0 %v2823
        %4276 = vmatpush1.bf16.msra.mxu0 %v2822
        %4277 = vmatprep.subr.bf16.mxu0 %v2868
        %4278 = vmatpush1.bf16.msra.mxu0 %v2867
        %4279 = vmatprep.subr.bf16.mxu0 %v2913
        %4280 = vmatpush1.bf16.msra.mxu0 %v2912
        %4281 = vmatprep.subr.bf16.mxu0 %v2958
        %4282 = vmatpush1.bf16.msra.mxu0 %v2957
        %4283 = vmatprep.subr.bf16.mxu0 %v3003
        %4284 = vmatpush1.bf16.msra.mxu0 %v3002
        %4285 = vmatprep.subr.bf16.mxu0 %v3048
        %4286 = vmatpush1.bf16.msra.mxu0 %v3047
        %4287 = vmatprep.subr.bf16.mxu0 0
        %4288 = vmatpush1.bf16.msra.mxu0 0
        %4289 = vmatprep.subr.bf16.mxu0 0
        %4290 = vmatpush1.bf16.msra.mxu0 0
        %4291 = vmatprep.subr.bf16.mxu0 0
        %4292 = vmatpush1.bf16.msra.mxu0 0
        %4293 = vmatprep.subr.bf16.mxu0 0
        %4294 = vmatpush1.bf16.msra.mxu0 0
        %4295 = vmatprep.subr.bf16.mxu0 0
        %4296 = vmatpush1.bf16.msra.mxu0 0
        %4297 = vmatprep.subr.bf16.mxu0 0
        %4298 = vmatpush1.bf16.msra.mxu0 0
        %4299 = vmatprep.subr.bf16.mxu0 0
        %4300 = vmatpush1.bf16.msra.mxu0 0
        %4301 = vmatprep.subr.bf16.mxu0 0
        %4302 = vmatpush1.bf16.msra.mxu0 0
        %4303 = vmatprep.mubr.bf16.mxu0 0
        %4304 = vmatmul.mubr.bf16.gmra.mrb[0].mxu0 %v1364
        %v4305 = vpop.f32.mrb[0].mxu0
        %v4306 = vadd.f32 %v1548, %v4305
        %v4307 = vpop.f32.mrb[0].mxu0
        %v4308 = vadd.f32 %v1552, %v4307
        %v4309 = vpop.f32.mrb[0].mxu0
        %v4310 = vpop.f32.mrb[0].mxu0
        %4311 = vdwg.mxu0
        %4312 = vmatprep.subr.bf16.mxu0 0
        %4313 = vmatpush1.bf16.msra.mxu0 %v2734
        %4314 = vmatprep.subr.bf16.mxu0 0
        %4315 = vmatpush1.bf16.msra.mxu0 %v2779
        %4316 = vmatprep.subr.bf16.mxu0 0
        %4317 = vmatpush1.bf16.msra.mxu0 %v2824
        %4318 = vmatprep.subr.bf16.mxu0 0
        %4319 = vmatpush1.bf16.msra.mxu0 %v2869
        %4320 = vmatprep.subr.bf16.mxu0 0
        %4321 = vmatpush1.bf16.msra.mxu0 %v2914
        %4322 = vmatprep.subr.bf16.mxu0 0
        %4323 = vmatpush1.bf16.msra.mxu0 %v2959
        %4324 = vmatprep.subr.bf16.mxu0 0
        %4325 = vmatpush1.bf16.msra.mxu0 %v3004
        %4326 = vmatprep.subr.bf16.mxu0 0
        %4327 = vmatpush1.bf16.msra.mxu0 %v3049
        %4328 = vmatprep.subr.bf16.mxu0 0
        %4329 = vmatpush1.bf16.msra.mxu0 0
        %4330 = vmatprep.subr.bf16.mxu0 0
        %4331 = vmatpush1.bf16.msra.mxu0 0
        %4332 = vmatprep.subr.bf16.mxu0 0
        %4333 = vmatpush1.bf16.msra.mxu0 0
        %4334 = vmatprep.subr.bf16.mxu0 0
        %4335 = vmatpush1.bf16.msra.mxu0 0
        %4336 = vmatprep.subr.bf16.mxu0 0
        %4337 = vmatpush1.bf16.msra.mxu0 0
        %4338 = vmatprep.subr.bf16.mxu0 0
        %4339 = vmatpush1.bf16.msra.mxu0 0
        %4340 = vmatprep.subr.bf16.mxu0 0
        %4341 = vmatpush1.bf16.msra.mxu0 0
        %4342 = vmatprep.subr.bf16.mxu0 0
        %4343 = vmatpush1.bf16.msra.mxu0 0
        %4344 = vmatprep.mubr.bf16.mxu0 0
        %4345 = vmatmul.mubr.bf16.gmra.mrb[0].mxu0 %v1364
        %v4346 = vpop.f32.mrb[0].mxu0
        %v4347 = vadd.f32 %v1556, %v4346
        %v4348 = vpop.f32.mrb[0].mxu0
        %v4349 = vpop.f32.mrb[0].mxu0
        %v4350 = vpop.f32.mrb[0].mxu0
        %4351 = vdwg.mxu0
        %4352 = vst [vmem:[%s992] sm:$0xff] %v3445
        %4353 = vst [vmem:[%s992 + $0x8] sm:$0xff] %v3447
        %4354 = vst [vmem:[%s992 + $0x10] sm:$0xff] %v3486
        %4355 = vst [vmem:[%s992 + $0x18] sm:$0xff] %v3488
        %4356 = vst [vmem:[%s992 + $0x20] sm:$0xff] %v3527
        %4357 = vst [vmem:[%s992 + $0x28] sm:$0xff] %v3529
        %4358 = vst [vmem:[%s992 + $0x30] sm:$0xff] %v3568
        %4359 = vst [vmem:[%s992 + $0x38] sm:$0xff] %v3570
        %4360 = vst [vmem:[%s992 + $0x40] sm:$0xff] %v3609
        %4361 = vst [vmem:[%s992 + $0x48] sm:$0xff] %v3611
        %4362 = vst [vmem:[%s992 + $0x50] sm:$0xff] %v3650
        %4363 = vst [vmem:[%s992 + $0x58] sm:$0xff] %v3652
        %4364 = vst [vmem:[%s992 + $0x60] sm:$0xff] %v3691
        %4365 = vst [vmem:[%s992 + $0x68] sm:$0xff] %v3693
        %4366 = vst [vmem:[%s992 + $0x70] sm:$0xff] %v3732
        %4367 = vst [vmem:[%s992 + $0x78] sm:$0xff] %v3734
        %4368 = vst [vmem:[%s992 + $0x80] sm:$0xff] %v3773
        %4369 = vst [vmem:[%s992 + $0x88] sm:$0xff] %v3775
        %4370 = vst [vmem:[%s992 + $0x90] sm:$0xff] %v3814
        %4371 = vst [vmem:[%s992 + $0x98] sm:$0xff] %v3816
        %4372 = vst [vmem:[%s992 + $0xa0] sm:$0xff] %v3855
        %4373 = vst [vmem:[%s992 + $0xa8] sm:$0xff] %v3857
        %4374 = vst [vmem:[%s992 + $0xb0] sm:$0xff] %v3896
        %4375 = vst [vmem:[%s992 + $0xb8] sm:$0xff] %v3898
        %4376 = vst [vmem:[%s992 + $0xc0] sm:$0xff] %v3937
        %4377 = vst [vmem:[%s992 + $0xc8] sm:$0xff] %v3939
        %4378 = vst [vmem:[%s992 + $0xd0] sm:$0xff] %v3978
        %4379 = vst [vmem:[%s992 + $0xd8] sm:$0xff] %v3980
        %4380 = vst [vmem:[%s992 + $0xe0] sm:$0xff] %v4019
        %4381 = vst [vmem:[%s992 + $0xe8] sm:$0xff] %v4021
        %4382 = vst [vmem:[%s992 + $0xf0] sm:$0xff] %v4060
        %4383 = vst [vmem:[%s992 + $0xf8] sm:$0xff] %v4062
        %4384 = vst [vmem:[%s992 + $0x100] sm:$0xff] %v4101
        %4385 = vst [vmem:[%s992 + $0x108] sm:$0xff] %v4103
        %4386 = vst [vmem:[%s992 + $0x110] sm:$0xff] %v4142
        %4387 = vst [vmem:[%s992 + $0x118] sm:$0xff] %v4144
        %4388 = vst [vmem:[%s992 + $0x120] sm:$0xff] %v4183
        %4389 = vst [vmem:[%s992 + $0x128] sm:$0xff] %v4185
        %4390 = vst [vmem:[%s992 + $0x130] sm:$0xff] %v4224
        %4391 = vst [vmem:[%s992 + $0x138] sm:$0xff] %v4226
        %4392 = vst [vmem:[%s992 + $0x140] sm:$0xff] %v4265
        %4393 = vst [vmem:[%s992 + $0x148] sm:$0xff] %v4267
        %4394 = vst [vmem:[%s992 + $0x150] sm:$0xff] %v4306
        %4395 = vst [vmem:[%s992 + $0x158] sm:$0xff] %v4308
        %4396 = vst [vmem:[%s992 + $0x160] sm:$0xff] %v4347
        %s4397 = smul.u32 45, %s19
        %p4398 = scmp.lt.s32.totalorder %s18, 0
        %s4399 = scalar_select %p4398, %s18, 0
        %p4400 = scmp.lt.s32.totalorder %s4397, 449
        %s4401 = scalar_select %p4400, %s4397, 449
        %s4402 = smul.addr %s4399, 450
        %s4403 = sadd.s32 %s4401, %s4402
        %s4404 = smul.addr %s4403, 8
        %s4405 = scalar_lea.vmem %s3, %s4404
        // Predicated region
        $region59: #{autoencoder_forward.9} parent=53 // pred_check
          %p4406 = pneg %p124
        $region60: #{autoencoder_forward.9} parent=53 // pred_check_branch
          %4408 = sbr.rel (%p4406) target = $region62
        $region61: #{autoencoder_forward.9} parent=53 // pred_region
          %s4409 = smul.u32 45, %s19
        $region62: #{autoencoder_forward.9} parent=53 // pred_fallthru
          _
      $region54: #{autoencoder_forward.9} parent=5 // pred_fallthru
        _
      %p4410 = scmp.le.s32.totalorder 2, %s9
      // Predicated region
      $region63: #{autoencoder_forward.9} parent=5 // pred_check
        %p4411 = pneg %p4410
      $region64: #{autoencoder_forward.9} parent=5 // pred_check_branch
        %4413 = sbr.rel (%p4411) target = $region66
      $region65: #{autoencoder_forward.9} parent=5 // pred_region
        %s4414 = ssub.s32 %s9, 2
        // Predicated region
        $region67: #{autoencoder_forward.9} parent=65 // pred_check
          %p4415 = pneg %p130
        $region68: #{autoencoder_forward.9} parent=65 // pred_check_branch
          %4417 = sbr.rel (%p4415) target = $region70
        $region69: #{autoencoder_forward.9} parent=65 // pred_region
          %s4418 = smul.u32 45, %s21
          %p4419 = scmp.lt.s32.totalorder %s20, 0
          %s4420 = scalar_select %p4419, %s20, 0
          %p4421 = scmp.lt.s32.totalorder %s4418, 449
          %s4422 = scalar_select %p4421, %s4418, 449
          %s4423 = smul.addr %s4420, 450
          %s4424 = sadd.s32 %s4422, %s4423
          %s4425 = smul.addr %s4424, 8
          %s4426 = scalar_lea.vmem %s3, %s4425
        $region70: #{autoencoder_forward.9} parent=65 // pred_fallthru
          _
      $region66: #{autoencoder_forward.9} parent=5 // pred_fallthru
        _
    $region6: #{autoencoder_forward.9} parent=1 // loop_footer
      %s13 = sadd.s32 1, %s9
    $region7: #{autoencoder_forward.9} parent=1 // loop_footer_branch
      %8 = sbr.rel target = $region3
    $region8: #{autoencoder_forward.9} parent=1 // loop_exit
      _

// kernel: autoencoder_forward.10
$region0: #{autoencoder_forward.10}
  #allocation0 [shape = 'u32[]', space=smem, size = 0x4, offset = 0x4, fixed_abs, tag = 'smem constant byte address 0x4 - core index']
  #allocation1 [shape = 'u32[144,128]{1,0:T(1,128)}', space=vmem, size = 0x12000, scoped, tag = 'internal scratch']
  %s0 = inlined_call_operand.vmem [shape: f32[8,144], index: 0, kind: input, shape index: {}]
  %s1 = inlined_call_operand.vmem [shape: f32[144,8192], index: 1, kind: input, shape index: {}]
  %s2 = inlined_call_operand.vmem [shape: f32[8,1], index: 2, kind: input, shape index: {}]
  %s3 = inlined_call_operand.vmem [shape: f32[8,8192], index: 3, kind: output, shape index: {}]
  %s4 = sld [smem:[#allocation0]]
  $region68: #{autoencoder_forward.10} parent=0
    _
  %s6 = ssub.s32 1, %s4
  %s7 = scalar_select 0, %s6, %s4
  $region1: #{autoencoder_forward.10} parent=0
    #allocation2 [shape = 'u8[1179648]{0}', space=vmem, size = 0x120000, scoped, tag = 'input window, operand 1']
    loop: start=0, step=1, limit=10
    $region2: #{autoencoder_forward.10} parent=1 // loop_pre_header
      _
    $region3: #{autoencoder_forward.10} parent=1 // loop_header
      %s9 = sphi 0, %s13
      %p10 = scmp.ge.s32.totalorder %s9, 10
      %s16 = sphi 0, %s28
      %s17 = sphi 0, %s24
      %s18 = sphi 0, %s16
      %s19 = sphi 0, %s17
      %s20 = sphi 0, %s18
      %s21 = sphi 0, %s19
      %s31 = sphi 0, %s33
      %s34 = sphi 0, %s31
      %s35 = sphi 0, %s34
      %s51 = sphi 0, %s35
      %s57 = sphi 0, %s59
      %s60 = sphi 0, %s57
      %s61 = sphi 0, %s60
      %s77 = sphi 0, %s61
      %s83 = sphi 0, %s85
      %s86 = sphi 0, %s83
      %s87 = sphi 0, %s86
      %s103 = sphi 0, %s87
      %s111 = sphi 0, %s113
      %s114 = sphi 0, %s111
      %s115 = sphi 0, %s114
      %s131 = sphi 0, %s115
    $region4: #{autoencoder_forward.10} parent=1 // loop_header_branch
      %12 = sbr.rel (%p10) target = $region8
    $region5: #{autoencoder_forward.10} parent=1 // loop_body
      %s14 = ssub.s32 %s9, 1
      %s15 = ssub.s32 %s9, 2
      %s22 = sadd.s32 1, %s17
      %p23 = scmp.ge.s32.totalorder %s22, 8
      %s24 = scalar_select %p23, 0, %s22
      %s25 = sadd.s32 1, %s16
      %s26 = scalar_select %p23, %s25, %s16
      %p27 = scmp.ge.s32.totalorder %s26, 1
      %s28 = scalar_select %p27, 0, %s26
      %s29 = ssub.s32 %s16, %s28
      %p30 = scmp.eq.s32.totalorder %s29, 0
      %s32 = sadd.s32 %s31, 1
      %s33 = scalar_select %p30, %s31, %s32
      %p36 = pneg %p30
      %p37 = scmp.eq.s32.totalorder %s9, 7
      %p38 = por %p36, %p37
      %p39 = scmp.ne.s32.totalorder %s31, %s34
      %p40 = scmp.eq.s32.totalorder %s9, 0
      %p41 = por %p39, %p40
      %p42 = scmp.ne.s32.totalorder %s31, %s34
      %p43 = scmp.eq.s32.totalorder %s14, 7
      %p44 = por %p42, %p43
      %p45 = scmp.ne.s32.totalorder %s34, %s35
      %p46 = scmp.eq.s32.totalorder %s14, 0
      %p47 = por %p45, %p46
      %p48 = scmp.ne.s32.totalorder %s34, %s35
      %p49 = scmp.eq.s32.totalorder %s15, 7
      %p50 = por %p48, %p49
      %p52 = scmp.ne.s32.totalorder %s35, %s51
      %p53 = scmp.eq.s32.totalorder %s15, 0
      %p54 = por %p52, %p53
      %s55 = ssub.s32 %s17, %s24
      %p56 = scmp.eq.s32.totalorder %s55, 0
      %s58 = sadd.s32 %s57, 1
      %s59 = scalar_select %p56, %s57, %s58
      %p62 = pneg %p56
      %p63 = scmp.eq.s32.totalorder %s9, 7
      %p64 = por %p62, %p63
      %p65 = scmp.ne.s32.totalorder %s57, %s60
      %p66 = scmp.eq.s32.totalorder %s9, 0
      %p67 = por %p65, %p66
      %p68 = scmp.ne.s32.totalorder %s57, %s60
      %p69 = scmp.eq.s32.totalorder %s14, 7
      %p70 = por %p68, %p69
      %p71 = scmp.ne.s32.totalorder %s60, %s61
      %p72 = scmp.eq.s32.totalorder %s14, 0
      %p73 = por %p71, %p72
      %p74 = scmp.ne.s32.totalorder %s60, %s61
      %p75 = scmp.eq.s32.totalorder %s15, 7
      %p76 = por %p74, %p75
      %p78 = scmp.ne.s32.totalorder %s61, %s77
      %p79 = scmp.eq.s32.totalorder %s15, 0
      %p80 = por %p78, %p79
      %s81 = ssub.s32 %s16, %s28
      %p82 = scmp.eq.s32.totalorder %s81, 0
      %s84 = sadd.s32 %s83, 1
      %s85 = scalar_select %p82, %s83, %s84
      %p88 = pneg %p82
      %p89 = scmp.eq.s32.totalorder %s9, 7
      %p90 = por %p88, %p89
      %p91 = scmp.ne.s32.totalorder %s83, %s86
      %p92 = scmp.eq.s32.totalorder %s9, 0
      %p93 = por %p91, %p92
      %p94 = scmp.ne.s32.totalorder %s83, %s86
      %p95 = scmp.eq.s32.totalorder %s14, 7
      %p96 = por %p94, %p95
      %p97 = scmp.ne.s32.totalorder %s86, %s87
      %p98 = scmp.eq.s32.totalorder %s14, 0
      %p99 = por %p97, %p98
      %p100 = scmp.ne.s32.totalorder %s86, %s87
      %p101 = scmp.eq.s32.totalorder %s15, 7
      %p102 = por %p100, %p101
      %p104 = scmp.ne.s32.totalorder %s87, %s103
      %p105 = scmp.eq.s32.totalorder %s15, 0
      %p106 = por %p104, %p105
      %s107 = ssub.s32 %s16, %s28
      %s108 = ssub.s32 %s17, %s24
      %s109 = sor.u32 %s107, %s108
      %p110 = scmp.eq.s32.totalorder %s109, 0
      %s112 = sadd.s32 %s111, 1
      %s113 = scalar_select %p110, %s111, %s112
      %p116 = pneg %p110
      %p117 = scmp.eq.s32.totalorder %s9, 7
      %p118 = por %p116, %p117
      %p119 = scmp.ne.s32.totalorder %s111, %s114
      %p120 = scmp.eq.s32.totalorder %s9, 0
      %p121 = por %p119, %p120
      %p122 = scmp.ne.s32.totalorder %s111, %s114
      %p123 = scmp.eq.s32.totalorder %s14, 7
      %p124 = por %p122, %p123
      %p125 = scmp.ne.s32.totalorder %s114, %s115
      %p126 = scmp.eq.s32.totalorder %s14, 0
      %p127 = por %p125, %p126
      %p128 = scmp.ne.s32.totalorder %s114, %s115
      %p129 = scmp.eq.s32.totalorder %s15, 7
      %p130 = por %p128, %p129
      %p132 = scmp.ne.s32.totalorder %s115, %s131
      %p133 = scmp.eq.s32.totalorder %s15, 0
      %p134 = por %p132, %p133
      %p135 = scmp.le.s32.totalorder 1, %s9
      %p136 = scmp.lt.s32.totalorder %s9, 9
      %p137 = pnand %p135, %p136
      %p138 = pneg %p137
      // Predicated region
      $region9: #{autoencoder_forward.10} parent=5 // pred_check
        _
      $region10: #{autoencoder_forward.10} parent=5 // pred_check_branch
        %140 = sbr.rel (%p137) target = $region12
      $region11: #{autoencoder_forward.10} parent=5 // pred_region
        %s141 = ssub.s32 %s9, 1
        // Predicated region
        $region13: #{autoencoder_forward.10} parent=11 // pred_check
          %p142 = pneg %p47
        $region14: #{autoencoder_forward.10} parent=11 // pred_check_branch
          %144 = sbr.rel (%p142) target = $region16
        $region15: #{autoencoder_forward.10} parent=11 // pred_region
          %p145 = scmp.lt.s32.totalorder %s18, 0
          %s146 = scalar_select %p145, %s18, 0
          %s147 = smul.addr %s146, 2
          %s148 = smul.addr %s147, 8
          %s149 = scalar_lea.vmem %s0, %s148
        $region16: #{autoencoder_forward.10} parent=11 // pred_fallthru
          _
        // Predicated region
        $region17: #{autoencoder_forward.10} parent=11 // pred_check
          %p150 = pneg %p99
        $region18: #{autoencoder_forward.10} parent=11 // pred_check_branch
          %152 = sbr.rel (%p150) target = $region20
        $region19: #{autoencoder_forward.10} parent=11 // pred_region
          %p153 = scmp.lt.s32.totalorder %s18, 0
          %s154 = scalar_select %p153, %s18, 0
          %s155 = smul.addr %s154, 8
          %s156 = scalar_lea.vmem %s2, %s155
        $region20: #{autoencoder_forward.10} parent=11 // pred_fallthru
          _
      $region12: #{autoencoder_forward.10} parent=5 // pred_fallthru
        _
      %p157 = scmp.lt.s32.totalorder %s9, 8
      // Predicated region
      $region21: #{autoencoder_forward.10} parent=5 // pred_check
        %p158 = pneg %p157
      $region22: #{autoencoder_forward.10} parent=5 // pred_check_branch
        %160 = sbr.rel (%p158) target = $region24
      $region23: #{autoencoder_forward.10} parent=5 // pred_region
        // Predicated region
        $region25: #{autoencoder_forward.10} parent=23 // pred_check
          %p161 = pneg %p67
        $region26: #{autoencoder_forward.10} parent=23 // pred_check_branch
          %163 = sbr.rel (%p161) target = $region28
        $region27: #{autoencoder_forward.10} parent=23 // pred_region
          %s164 = sand.u32 %s57, 1
          %s165 = sand.u32 %s57, 1
          %s166 = smul.addr %s165, 1152
          %s167 = scalar_lea.vmem [#allocation2], %s166
          %s168 = smul.u32 8, %s17
          %s169 = smul.addr %s168, 8
          %s170 = scalar_lea.vmem %s1, %s169
          // Predicated region
          $region29: #{autoencoder_forward.10} parent=27 // pred_check
            _
          $region30: #{autoencoder_forward.10} parent=27 // pred_check_branch
            %172 = sbr.rel (0) target = $region32
          $region31: #{autoencoder_forward.10} parent=27 // pred_region
            // Predicated region
            $region33: #{autoencoder_forward.10} parent=31 // pred_check
              _
            $region34: #{autoencoder_forward.10} parent=31 // pred_check_branch
              %174 = sbr.rel (0) target = $region36
            $region35: #{autoencoder_forward.10} parent=31 // pred_region
              loop: start=0, step=1, limit=1
              $region37: #{autoencoder_forward.10} parent=35 // loop_pre_header
                _
              $region38: #{autoencoder_forward.10} parent=35 // loop_header
                %s176 = sphi 0, %s180
                %p177 = scmp.ge.s32.totalorder %s176, 1
                %s181 = sphi %s170, %s170
                %s182 = sphi %s167, %s167
              $region39: #{autoencoder_forward.10} parent=35 // loop_header_branch
                %179 = sbr.rel (%p177) target = $region43
              $region40: #{autoencoder_forward.10} parent=35 // loop_body
                %v183 = vld [vmem:[%s181] sm:$0xff]
                %184 = vst [vmem:[%s182] sm:$0xff] %v183
                %v185 = vld [vmem:[%s181 + $0x8] sm:$0xff]
                %186 = vst [vmem:[%s182 + $0x8] sm:$0xff] %v185
                %v187 = vld [vmem:[%s181 + $0x10] sm:$0xff]
                %188 = vst [vmem:[%s182 + $0x10] sm:$0xff] %v187
                %v189 = vld [vmem:[%s181 + $0x18] sm:$0xff]
                %190 = vst [vmem:[%s182 + $0x18] sm:$0xff] %v189
                %v191 = vld [vmem:[%s181 + $0x20] sm:$0xff]
                %192 = vst [vmem:[%s182 + $0x20] sm:$0xff] %v191
                %v193 = vld [vmem:[%s181 + $0x28] sm:$0xff]
                %194 = vst [vmem:[%s182 + $0x28] sm:$0xff] %v193
                %v195 = vld [vmem:[%s181 + $0x30] sm:$0xff]
                %196 = vst [vmem:[%s182 + $0x30] sm:$0xff] %v195
                %v197 = vld [vmem:[%s181 + $0x38] sm:$0xff]
                %198 = vst [vmem:[%s182 + $0x38] sm:$0xff] %v197
                %v199 = vld [vmem:[%s181 + $0x200] sm:$0xff]
                %200 = vst [vmem:[%s182 + $0x40] sm:$0xff] %v199
                %v201 = vld [vmem:[%s181 + $0x208] sm:$0xff]
                %202 = vst [vmem:[%s182 + $0x48] sm:$0xff] %v201
                %v203 = vld [vmem:[%s181 + $0x210] sm:$0xff]
                %204 = vst [vmem:[%s182 + $0x50] sm:$0xff] %v203
                %v205 = vld [vmem:[%s181 + $0x218] sm:$0xff]
                %206 = vst [vmem:[%s182 + $0x58] sm:$0xff] %v205
                %v207 = vld [vmem:[%s181 + $0x220] sm:$0xff]
                %208 = vst [vmem:[%s182 + $0x60] sm:$0xff] %v207
                %v209 = vld [vmem:[%s181 + $0x228] sm:$0xff]
                %210 = vst [vmem:[%s182 + $0x68] sm:$0xff] %v209
                %v211 = vld [vmem:[%s181 + $0x230] sm:$0xff]
                %212 = vst [vmem:[%s182 + $0x70] sm:$0xff] %v211
                %v213 = vld [vmem:[%s181 + $0x238] sm:$0xff]
                %214 = vst [vmem:[%s182 + $0x78] sm:$0xff] %v213
                %v215 = vld [vmem:[%s181 + $0x400] sm:$0xff]
                %216 = vst [vmem:[%s182 + $0x80] sm:$0xff] %v215
                %v217 = vld [vmem:[%s181 + $0x408] sm:$0xff]
                %218 = vst [vmem:[%s182 + $0x88] sm:$0xff] %v217
                %v219 = vld [vmem:[%s181 + $0x410] sm:$0xff]
                %220 = vst [vmem:[%s182 + $0x90] sm:$0xff] %v219
                %v221 = vld [vmem:[%s181 + $0x418] sm:$0xff]
                %222 = vst [vmem:[%s182 + $0x98] sm:$0xff] %v221
                %v223 = vld [vmem:[%s181 + $0x420] sm:$0xff]
                %224 = vst [vmem:[%s182 + $0xa0] sm:$0xff] %v223
                %v225 = vld [vmem:[%s181 + $0x428] sm:$0xff]
                %226 = vst [vmem:[%s182 + $0xa8] sm:$0xff] %v225
                %v227 = vld [vmem:[%s181 + $0x430] sm:$0xff]
                %228 = vst [vmem:[%s182 + $0xb0] sm:$0xff] %v227
                %v229 = vld [vmem:[%s181 + $0x438] sm:$0xff]
                %230 = vst [vmem:[%s182 + $0xb8] sm:$0xff] %v229
                %v231 = vld [vmem:[%s181 + $0x600] sm:$0xff]
                %232 = vst [vmem:[%s182 + $0xc0] sm:$0xff] %v231
                %v233 = vld [vmem:[%s181 + $0x608] sm:$0xff]
                %234 = vst [vmem:[%s182 + $0xc8] sm:$0xff] %v233
                %v235 = vld [vmem:[%s181 + $0x610] sm:$0xff]
                %236 = vst [vmem:[%s182 + $0xd0] sm:$0xff] %v235
                %v237 = vld [vmem:[%s181 + $0x618] sm:$0xff]
                %238 = vst [vmem:[%s182 + $0xd8] sm:$0xff] %v237
                %v239 = vld [vmem:[%s181 + $0x620] sm:$0xff]
                %240 = vst [vmem:[%s182 + $0xe0] sm:$0xff] %v239
                %v241 = vld [vmem:[%s181 + $0x628] sm:$0xff]
                %242 = vst [vmem:[%s182 + $0xe8] sm:$0xff] %v241
                %v243 = vld [vmem:[%s181 + $0x630] sm:$0xff]
                %244 = vst [vmem:[%s182 + $0xf0] sm:$0xff] %v243
                %v245 = vld [vmem:[%s181 + $0x638] sm:$0xff]
                %246 = vst [vmem:[%s182 + $0xf8] sm:$0xff] %v245
                %v247 = vld [vmem:[%s181 + $0x800] sm:$0xff]
                %248 = vst [vmem:[%s182 + $0x100] sm:$0xff] %v247
                %v249 = vld [vmem:[%s181 + $0x808] sm:$0xff]
                %250 = vst [vmem:[%s182 + $0x108] sm:$0xff] %v249
                %v251 = vld [vmem:[%s181 + $0x810] sm:$0xff]
                %252 = vst [vmem:[%s182 + $0x110] sm:$0xff] %v251
                %v253 = vld [vmem:[%s181 + $0x818] sm:$0xff]
                %254 = vst [vmem:[%s182 + $0x118] sm:$0xff] %v253
                %v255 = vld [vmem:[%s181 + $0x820] sm:$0xff]
                %256 = vst [vmem:[%s182 + $0x120] sm:$0xff] %v255
                %v257 = vld [vmem:[%s181 + $0x828] sm:$0xff]
                %258 = vst [vmem:[%s182 + $0x128] sm:$0xff] %v257
                %v259 = vld [vmem:[%s181 + $0x830] sm:$0xff]
                %260 = vst [vmem:[%s182 + $0x130] sm:$0xff] %v259
                %v261 = vld [vmem:[%s181 + $0x838] sm:$0xff]
                %262 = vst [vmem:[%s182 + $0x138] sm:$0xff] %v261
                %v263 = vld [vmem:[%s181 + $0xa00] sm:$0xff]
                %264 = vst [vmem:[%s182 + $0x140] sm:$0xff] %v263
                %v265 = vld [vmem:[%s181 + $0xa08] sm:$0xff]
                %266 = vst [vmem:[%s182 + $0x148] sm:$0xff] %v265
                %v267 = vld [vmem:[%s181 + $0xa10] sm:$0xff]
                %268 = vst [vmem:[%s182 + $0x150] sm:$0xff] %v267
                %v269 = vld [vmem:[%s181 + $0xa18] sm:$0xff]
                %270 = vst [vmem:[%s182 + $0x158] sm:$0xff] %v269
                %v271 = vld [vmem:[%s181 + $0xa20] sm:$0xff]
                %272 = vst [vmem:[%s182 + $0x160] sm:$0xff] %v271
                %v273 = vld [vmem:[%s181 + $0xa28] sm:$0xff]
                %274 = vst [vmem:[%s182 + $0x168] sm:$0xff] %v273
                %v275 = vld [vmem:[%s181 + $0xa30] sm:$0xff]
                %276 = vst [vmem:[%s182 + $0x170] sm:$0xff] %v275
                %v277 = vld [vmem:[%s181 + $0xa38] sm:$0xff]
                %278 = vst [vmem:[%s182 + $0x178] sm:$0xff] %v277
                %v279 = vld [vmem:[%s181 + $0xc00] sm:$0xff]
                %280 = vst [vmem:[%s182 + $0x180] sm:$0xff] %v279
                %v281 = vld [vmem:[%s181 + $0xc08] sm:$0xff]
                %282 = vst [vmem:[%s182 + $0x188] sm:$0xff] %v281
                %v283 = vld [vmem:[%s181 + $0xc10] sm:$0xff]
                %284 = vst [vmem:[%s182 + $0x190] sm:$0xff] %v283
                %v285 = vld [vmem:[%s181 + $0xc18] sm:$0xff]
                %286 = vst [vmem:[%s182 + $0x198] sm:$0xff] %v285
                %v287 = vld [vmem:[%s181 + $0xc20] sm:$0xff]
                %288 = vst [vmem:[%s182 + $0x1a0] sm:$0xff] %v287
                %v289 = vld [vmem:[%s181 + $0xc28] sm:$0xff]
                %290 = vst [vmem:[%s182 + $0x1a8] sm:$0xff] %v289
                %v291 = vld [vmem:[%s181 + $0xc30] sm:$0xff]
                %292 = vst [vmem:[%s182 + $0x1b0] sm:$0xff] %v291
                %v293 = vld [vmem:[%s181 + $0xc38] sm:$0xff]
                %294 = vst [vmem:[%s182 + $0x1b8] sm:$0xff] %v293
                %v295 = vld [vmem:[%s181 + $0xe00] sm:$0xff]
                %296 = vst [vmem:[%s182 + $0x1c0] sm:$0xff] %v295
                %v297 = vld [vmem:[%s181 + $0xe08] sm:$0xff]
                %298 = vst [vmem:[%s182 + $0x1c8] sm:$0xff] %v297
                %v299 = vld [vmem:[%s181 + $0xe10] sm:$0xff]
                %300 = vst [vmem:[%s182 + $0x1d0] sm:$0xff] %v299
                %v301 = vld [vmem:[%s181 + $0xe18] sm:$0xff]
                %302 = vst [vmem:[%s182 + $0x1d8] sm:$0xff] %v301
                %v303 = vld [vmem:[%s181 + $0xe20] sm:$0xff]
                %304 = vst [vmem:[%s182 + $0x1e0] sm:$0xff] %v303
                %v305 = vld [vmem:[%s181 + $0xe28] sm:$0xff]
                %306 = vst [vmem:[%s182 + $0x1e8] sm:$0xff] %v305
                %v307 = vld [vmem:[%s181 + $0xe30] sm:$0xff]
                %308 = vst [vmem:[%s182 + $0x1f0] sm:$0xff] %v307
                %v309 = vld [vmem:[%s181 + $0xe38] sm:$0xff]
                %310 = vst [vmem:[%s182 + $0x1f8] sm:$0xff] %v309
                %v311 = vld [vmem:[%s181 + $0x1000] sm:$0xff]
                %312 = vst [vmem:[%s182 + $0x200] sm:$0xff] %v311
                %v313 = vld [vmem:[%s181 + $0x1008] sm:$0xff]
                %314 = vst [vmem:[%s182 + $0x208] sm:$0xff] %v313
                %v315 = vld [vmem:[%s181 + $0x1010] sm:$0xff]
                %316 = vst [vmem:[%s182 + $0x210] sm:$0xff] %v315
                %v317 = vld [vmem:[%s181 + $0x1018] sm:$0xff]
                %318 = vst [vmem:[%s182 + $0x218] sm:$0xff] %v317
                %v319 = vld [vmem:[%s181 + $0x1020] sm:$0xff]
                %320 = vst [vmem:[%s182 + $0x220] sm:$0xff] %v319
                %v321 = vld [vmem:[%s181 + $0x1028] sm:$0xff]
                %322 = vst [vmem:[%s182 + $0x228] sm:$0xff] %v321
                %v323 = vld [vmem:[%s181 + $0x1030] sm:$0xff]
                %324 = vst [vmem:[%s182 + $0x230] sm:$0xff] %v323
                %v325 = vld [vmem:[%s181 + $0x1038] sm:$0xff]
                %326 = vst [vmem:[%s182 + $0x238] sm:$0xff] %v325
                %v327 = vld [vmem:[%s181 + $0x1200] sm:$0xff]
                %328 = vst [vmem:[%s182 + $0x240] sm:$0xff] %v327
                %v329 = vld [vmem:[%s181 + $0x1208] sm:$0xff]
                %330 = vst [vmem:[%s182 + $0x248] sm:$0xff] %v329
                %v331 = vld [vmem:[%s181 + $0x1210] sm:$0xff]
                %332 = vst [vmem:[%s182 + $0x250] sm:$0xff] %v331
                %v333 = vld [vmem:[%s181 + $0x1218] sm:$0xff]
                %334 = vst [vmem:[%s182 + $0x258] sm:$0xff] %v333
                %v335 = vld [vmem:[%s181 + $0x1220] sm:$0xff]
                %336 = vst [vmem:[%s182 + $0x260] sm:$0xff] %v335
                %v337 = vld [vmem:[%s181 + $0x1228] sm:$0xff]
                %338 = vst [vmem:[%s182 + $0x268] sm:$0xff] %v337
                %v339 = vld [vmem:[%s181 + $0x1230] sm:$0xff]
                %340 = vst [vmem:[%s182 + $0x270] sm:$0xff] %v339
                %v341 = vld [vmem:[%s181 + $0x1238] sm:$0xff]
                %342 = vst [vmem:[%s182 + $0x278] sm:$0xff] %v341
                %v343 = vld [vmem:[%s181 + $0x1400] sm:$0xff]
                %344 = vst [vmem:[%s182 + $0x280] sm:$0xff] %v343
                %v345 = vld [vmem:[%s181 + $0x1408] sm:$0xff]
                %346 = vst [vmem:[%s182 + $0x288] sm:$0xff] %v345
                %v347 = vld [vmem:[%s181 + $0x1410] sm:$0xff]
                %348 = vst [vmem:[%s182 + $0x290] sm:$0xff] %v347
                %v349 = vld [vmem:[%s181 + $0x1418] sm:$0xff]
                %350 = vst [vmem:[%s182 + $0x298] sm:$0xff] %v349
                %v351 = vld [vmem:[%s181 + $0x1420] sm:$0xff]
                %352 = vst [vmem:[%s182 + $0x2a0] sm:$0xff] %v351
                %v353 = vld [vmem:[%s181 + $0x1428] sm:$0xff]
                %354 = vst [vmem:[%s182 + $0x2a8] sm:$0xff] %v353
                %v355 = vld [vmem:[%s181 + $0x1430] sm:$0xff]
                %356 = vst [vmem:[%s182 + $0x2b0] sm:$0xff] %v355
                %v357 = vld [vmem:[%s181 + $0x1438] sm:$0xff]
                %358 = vst [vmem:[%s182 + $0x2b8] sm:$0xff] %v357
                %v359 = vld [vmem:[%s181 + $0x1600] sm:$0xff]
                %360 = vst [vmem:[%s182 + $0x2c0] sm:$0xff] %v359
                %v361 = vld [vmem:[%s181 + $0x1608] sm:$0xff]
                %362 = vst [vmem:[%s182 + $0x2c8] sm:$0xff] %v361
                %v363 = vld [vmem:[%s181 + $0x1610] sm:$0xff]
                %364 = vst [vmem:[%s182 + $0x2d0] sm:$0xff] %v363
                %v365 = vld [vmem:[%s181 + $0x1618] sm:$0xff]
                %366 = vst [vmem:[%s182 + $0x2d8] sm:$0xff] %v365
                %v367 = vld [vmem:[%s181 + $0x1620] sm:$0xff]
                %368 = vst [vmem:[%s182 + $0x2e0] sm:$0xff] %v367
                %v369 = vld [vmem:[%s181 + $0x1628] sm:$0xff]
                %370 = vst [vmem:[%s182 + $0x2e8] sm:$0xff] %v369
                %v371 = vld [vmem:[%s181 + $0x1630] sm:$0xff]
                %372 = vst [vmem:[%s182 + $0x2f0] sm:$0xff] %v371
                %v373 = vld [vmem:[%s181 + $0x1638] sm:$0xff]
                %374 = vst [vmem:[%s182 + $0x2f8] sm:$0xff] %v373
                %v375 = vld [vmem:[%s181 + $0x1800] sm:$0xff]
                %376 = vst [vmem:[%s182 + $0x300] sm:$0xff] %v375
                %v377 = vld [vmem:[%s181 + $0x1808] sm:$0xff]
                %378 = vst [vmem:[%s182 + $0x308] sm:$0xff] %v377
                %v379 = vld [vmem:[%s181 + $0x1810] sm:$0xff]
                %380 = vst [vmem:[%s182 + $0x310] sm:$0xff] %v379
                %v381 = vld [vmem:[%s181 + $0x1818] sm:$0xff]
                %382 = vst [vmem:[%s182 + $0x318] sm:$0xff] %v381
                %v383 = vld [vmem:[%s181 + $0x1820] sm:$0xff]
                %384 = vst [vmem:[%s182 + $0x320] sm:$0xff] %v383
                %v385 = vld [vmem:[%s181 + $0x1828] sm:$0xff]
                %386 = vst [vmem:[%s182 + $0x328] sm:$0xff] %v385
                %v387 = vld [vmem:[%s181 + $0x1830] sm:$0xff]
                %388 = vst [vmem:[%s182 + $0x330] sm:$0xff] %v387
                %v389 = vld [vmem:[%s181 + $0x1838] sm:$0xff]
                %390 = vst [vmem:[%s182 + $0x338] sm:$0xff] %v389
                %v391 = vld [vmem:[%s181 + $0x1a00] sm:$0xff]
                %392 = vst [vmem:[%s182 + $0x340] sm:$0xff] %v391
                %v393 = vld [vmem:[%s181 + $0x1a08] sm:$0xff]
                %394 = vst [vmem:[%s182 + $0x348] sm:$0xff] %v393
                %v395 = vld [vmem:[%s181 + $0x1a10] sm:$0xff]
                %396 = vst [vmem:[%s182 + $0x350] sm:$0xff] %v395
                %v397 = vld [vmem:[%s181 + $0x1a18] sm:$0xff]
                %398 = vst [vmem:[%s182 + $0x358] sm:$0xff] %v397
                %v399 = vld [vmem:[%s181 + $0x1a20] sm:$0xff]
                %400 = vst [vmem:[%s182 + $0x360] sm:$0xff] %v399
                %v401 = vld [vmem:[%s181 + $0x1a28] sm:$0xff]
                %402 = vst [vmem:[%s182 + $0x368] sm:$0xff] %v401
                %v403 = vld [vmem:[%s181 + $0x1a30] sm:$0xff]
                %404 = vst [vmem:[%s182 + $0x370] sm:$0xff] %v403
                %v405 = vld [vmem:[%s181 + $0x1a38] sm:$0xff]
                %406 = vst [vmem:[%s182 + $0x378] sm:$0xff] %v405
                %v407 = vld [vmem:[%s181 + $0x1c00] sm:$0xff]
                %408 = vst [vmem:[%s182 + $0x380] sm:$0xff] %v407
                %v409 = vld [vmem:[%s181 + $0x1c08] sm:$0xff]
                %410 = vst [vmem:[%s182 + $0x388] sm:$0xff] %v409
                %v411 = vld [vmem:[%s181 + $0x1c10] sm:$0xff]
                %412 = vst [vmem:[%s182 + $0x390] sm:$0xff] %v411
                %v413 = vld [vmem:[%s181 + $0x1c18] sm:$0xff]
                %414 = vst [vmem:[%s182 + $0x398] sm:$0xff] %v413
                %v415 = vld [vmem:[%s181 + $0x1c20] sm:$0xff]
                %416 = vst [vmem:[%s182 + $0x3a0] sm:$0xff] %v415
                %v417 = vld [vmem:[%s181 + $0x1c28] sm:$0xff]
                %418 = vst [vmem:[%s182 + $0x3a8] sm:$0xff] %v417
                %v419 = vld [vmem:[%s181 + $0x1c30] sm:$0xff]
                %420 = vst [vmem:[%s182 + $0x3b0] sm:$0xff] %v419
                %v421 = vld [vmem:[%s181 + $0x1c38] sm:$0xff]
                %422 = vst [vmem:[%s182 + $0x3b8] sm:$0xff] %v421
                %v423 = vld [vmem:[%s181 + $0x1e00] sm:$0xff]
                %424 = vst [vmem:[%s182 + $0x3c0] sm:$0xff] %v423
                %v425 = vld [vmem:[%s181 + $0x1e08] sm:$0xff]
                %426 = vst [vmem:[%s182 + $0x3c8] sm:$0xff] %v425
                %v427 = vld [vmem:[%s181 + $0x1e10] sm:$0xff]
                %428 = vst [vmem:[%s182 + $0x3d0] sm:$0xff] %v427
                %v429 = vld [vmem:[%s181 + $0x1e18] sm:$0xff]
                %430 = vst [vmem:[%s182 + $0x3d8] sm:$0xff] %v429
                %v431 = vld [vmem:[%s181 + $0x1e20] sm:$0xff]
                %432 = vst [vmem:[%s182 + $0x3e0] sm:$0xff] %v431
                %v433 = vld [vmem:[%s181 + $0x1e28] sm:$0xff]
                %434 = vst [vmem:[%s182 + $0x3e8] sm:$0xff] %v433
                %v435 = vld [vmem:[%s181 + $0x1e30] sm:$0xff]
                %436 = vst [vmem:[%s182 + $0x3f0] sm:$0xff] %v435
                %v437 = vld [vmem:[%s181 + $0x1e38] sm:$0xff]
                %438 = vst [vmem:[%s182 + $0x3f8] sm:$0xff] %v437
                %v439 = vld [vmem:[%s181 + $0x2000] sm:$0xff]
                %440 = vst [vmem:[%s182 + $0x400] sm:$0xff] %v439
                %v441 = vld [vmem:[%s181 + $0x2008] sm:$0xff]
                %442 = vst [vmem:[%s182 + $0x408] sm:$0xff] %v441
                %v443 = vld [vmem:[%s181 + $0x2010] sm:$0xff]
                %444 = vst [vmem:[%s182 + $0x410] sm:$0xff] %v443
                %v445 = vld [vmem:[%s181 + $0x2018] sm:$0xff]
                %446 = vst [vmem:[%s182 + $0x418] sm:$0xff] %v445
                %v447 = vld [vmem:[%s181 + $0x2020] sm:$0xff]
                %448 = vst [vmem:[%s182 + $0x420] sm:$0xff] %v447
                %v449 = vld [vmem:[%s181 + $0x2028] sm:$0xff]
                %450 = vst [vmem:[%s182 + $0x428] sm:$0xff] %v449
                %v451 = vld [vmem:[%s181 + $0x2030] sm:$0xff]
                %452 = vst [vmem:[%s182 + $0x430] sm:$0xff] %v451
                %v453 = vld [vmem:[%s181 + $0x2038] sm:$0xff]
                %454 = vst [vmem:[%s182 + $0x438] sm:$0xff] %v453
                %v455 = vld [vmem:[%s181 + $0x2200] sm:$0xff]
                %456 = vst [vmem:[%s182 + $0x440] sm:$0xff] %v455
                %v457 = vld [vmem:[%s181 + $0x2208] sm:$0xff]
                %458 = vst [vmem:[%s182 + $0x448] sm:$0xff] %v457
                %v459 = vld [vmem:[%s181 + $0x2210] sm:$0xff]
                %460 = vst [vmem:[%s182 + $0x450] sm:$0xff] %v459
                %v461 = vld [vmem:[%s181 + $0x2218] sm:$0xff]
                %462 = vst [vmem:[%s182 + $0x458] sm:$0xff] %v461
                %v463 = vld [vmem:[%s181 + $0x2220] sm:$0xff]
                %464 = vst [vmem:[%s182 + $0x460] sm:$0xff] %v463
                %v465 = vld [vmem:[%s181 + $0x2228] sm:$0xff]
                %466 = vst [vmem:[%s182 + $0x468] sm:$0xff] %v465
                %v467 = vld [vmem:[%s181 + $0x2230] sm:$0xff]
                %468 = vst [vmem:[%s182 + $0x470] sm:$0xff] %v467
                %v469 = vld [vmem:[%s181 + $0x2238] sm:$0xff]
                %470 = vst [vmem:[%s182 + $0x478] sm:$0xff] %v469
              $region41: #{autoencoder_forward.10} parent=35 // loop_footer
                %s180 = sadd.s32 1, %s176
              $region42: #{autoencoder_forward.10} parent=35 // loop_footer_branch
                %175 = sbr.rel target = $region38
              $region43: #{autoencoder_forward.10} parent=35 // loop_exit
                _
            $region36: #{autoencoder_forward.10} parent=31 // pred_fallthru
              _
            // Predicated region
            $region44: #{autoencoder_forward.10} parent=31 // pred_check
              _
            $region45: #{autoencoder_forward.10} parent=31 // pred_check_branch
              %472 = sbr.rel target = $region47
            $region46: #{autoencoder_forward.10} parent=31 // pred_region
              _
            $region47: #{autoencoder_forward.10} parent=31 // pred_fallthru
              _
          $region32: #{autoencoder_forward.10} parent=27 // pred_fallthru
            _
          %473 = vnop
        $region28: #{autoencoder_forward.10} parent=23 // pred_fallthru
          _
      $region24: #{autoencoder_forward.10} parent=5 // pred_fallthru
        _
      %p474 = scmp.le.s32.totalorder 1, %s9
      %p475 = scmp.lt.s32.totalorder %s9, 9
      %p476 = pnand %p474, %p475
      %p477 = pneg %p476
      // Predicated region
      $region48: #{autoencoder_forward.10} parent=5 // pred_check
        _
      $region49: #{autoencoder_forward.10} parent=5 // pred_check_branch
        %479 = sbr.rel (%p476) target = $region51
      $region50: #{autoencoder_forward.10} parent=5 // pred_region
        %s480 = ssub.s32 %s9, 1
        %s481 = sand.u32 %s60, 1
        %s482 = sand.u32 %s60, 1
        %s483 = smul.addr %s482, 1152
        %s484 = scalar_lea.vmem [#allocation2], %s483
        // Predicated region
        $region52: #{autoencoder_forward.10} parent=50 // pred_check
          %p485 = pneg %p73
        $region53: #{autoencoder_forward.10} parent=50 // pred_check_branch
          %487 = sbr.rel (%p485) target = $region55
        $region54: #{autoencoder_forward.10} parent=50 // pred_region
          _
        $region55: #{autoencoder_forward.10} parent=50 // pred_fallthru
          _
        %p488 = scmp.lt.s32.totalorder %s18, 0
        %s489 = scalar_select %p488, %s18, 0
        %s490 = smul.addr %s489, 2
        %s491 = smul.addr %s490, 8
        %s492 = scalar_lea.vmem %s0, %s491
        %p493 = pneg %p47
        %p494 = pneg %p44
        %s495 = sand.u32 %s60, 1
        %s496 = sand.u32 %s60, 1
        %s497 = smul.addr %s496, 1152
        %s498 = scalar_lea.vmem [#allocation2], %s497
        %p499 = pneg %p73
        %p500 = pneg %p70
        %p501 = scmp.lt.s32.totalorder %s18, 0
        %s502 = scalar_select %p501, %s18, 0
        %s503 = smul.addr %s502, 8
        %s504 = scalar_lea.vmem %s2, %s503
        %p505 = pneg %p99
        %p506 = pneg %p96
        %p507 = pneg %p127
        %p508 = pneg %p124
        %s509 = smul.u32 8, %s19
        %p510 = scmp.lt.s32.totalorder %s18, 0
        %s511 = scalar_select %p510, %s18, 0
        %p512 = scmp.lt.s32.totalorder %s509, 63
        %s513 = scalar_select %p512, %s509, 63
        %s514 = smul.addr %s511, 64
        %s515 = sadd.s32 %s513, %s514
        %s516 = smul.addr %s515, 8
        %s517 = scalar_lea.vmem %s3, %s516
        %p518 = scmp.lt.s32.totalorder %s18, 0
        %s519 = scalar_select %p518, %s18, 0
        %s520 = smul.addr %s519, 2
        %s521 = smul.addr %s520, 8
        %s522 = scalar_lea.vmem %s0, %s521
        %s523 = smul.u32 8, %s19
        %p524 = scmp.lt.s32.totalorder %s18, 0
        %s525 = scalar_select %p524, %s18, 0
        %s526 = smul.addr %s525, 8
        %s527 = scalar_lea.vmem %s2, %s526
        %s528 = smul.u32 8, %s19
        %p529 = scmp.lt.s32.totalorder %s18, 0
        %s530 = scalar_select %p529, %s18, 0
        %p531 = scmp.lt.s32.totalorder %s528, 63
        %s532 = scalar_select %p531, %s528, 63
        %s533 = smul.addr %s530, 64
        %s534 = sadd.s32 %s532, %s533
        %s535 = smul.addr %s534, 8
        %s536 = scalar_lea.vmem %s3, %s535
        %s537 = smul.u32 8, %s19
        %v538 = vld [vmem:[%s522] sm:$0xff]
        %v539 = vld [vmem:[%s522 + $0x8] sm:$0xff]
        %v540 = vld [vmem:[%s484] sm:$0xff]
        %v541 = vld [vmem:[%s484 + $0x8] sm:$0xff]
        %v542 = vld [vmem:[%s484 + $0x10] sm:$0xff]
        %v543 = vld [vmem:[%s484 + $0x18] sm:$0xff]
        %v544 = vld [vmem:[%s484 + $0x20] sm:$0xff]
        %v545 = vld [vmem:[%s484 + $0x28] sm:$0xff]
        %v546 = vld [vmem:[%s484 + $0x30] sm:$0xff]
        %v547 = vld [vmem:[%s484 + $0x38] sm:$0xff]
        %v548 = vld [vmem:[%s484 + $0x40] sm:$0xff]
        %v549 = vld [vmem:[%s484 + $0x48] sm:$0xff]
        %v550 = vld [vmem:[%s484 + $0x50] sm:$0xff]
        %v551 = vld [vmem:[%s484 + $0x58] sm:$0xff]
        %v552 = vld [vmem:[%s484 + $0x60] sm:$0xff]
        %v553 = vld [vmem:[%s484 + $0x68] sm:$0xff]
        %v554 = vld [vmem:[%s484 + $0x70] sm:$0xff]
        %v555 = vld [vmem:[%s484 + $0x78] sm:$0xff]
        %v556 = vld [vmem:[%s484 + $0x80] sm:$0xff]
        %v557 = vld [vmem:[%s484 + $0x88] sm:$0xff]
        %v558 = vld [vmem:[%s484 + $0x90] sm:$0xff]
        %v559 = vld [vmem:[%s484 + $0x98] sm:$0xff]
        %v560 = vld [vmem:[%s484 + $0xa0] sm:$0xff]
        %v561 = vld [vmem:[%s484 + $0xa8] sm:$0xff]
        %v562 = vld [vmem:[%s484 + $0xb0] sm:$0xff]
        %v563 = vld [vmem:[%s484 + $0xb8] sm:$0xff]
        %v564 = vld [vmem:[%s484 + $0xc0] sm:$0xff]
        %v565 = vld [vmem:[%s484 + $0xc8] sm:$0xff]
        %v566 = vld [vmem:[%s484 + $0xd0] sm:$0xff]
        %v567 = vld [vmem:[%s484 + $0xd8] sm:$0xff]
        %v568 = vld [vmem:[%s484 + $0xe0] sm:$0xff]
        %v569 = vld [vmem:[%s484 + $0xe8] sm:$0xff]
        %v570 = vld [vmem:[%s484 + $0xf0] sm:$0xff]
        %v571 = vld [vmem:[%s484 + $0xf8] sm:$0xff]
        %v572 = vld [vmem:[%s484 + $0x100] sm:$0xff]
        %v573 = vld [vmem:[%s484 + $0x108] sm:$0xff]
        %v574 = vld [vmem:[%s484 + $0x110] sm:$0xff]
        %v575 = vld [vmem:[%s484 + $0x118] sm:$0xff]
        %v576 = vld [vmem:[%s484 + $0x120] sm:$0xff]
        %v577 = vld [vmem:[%s484 + $0x128] sm:$0xff]
        %v578 = vld [vmem:[%s484 + $0x130] sm:$0xff]
        %v579 = vld [vmem:[%s484 + $0x138] sm:$0xff]
        %v580 = vld [vmem:[%s484 + $0x140] sm:$0xff]
        %v581 = vld [vmem:[%s484 + $0x148] sm:$0xff]
        %v582 = vld [vmem:[%s484 + $0x150] sm:$0xff]
        %v583 = vld [vmem:[%s484 + $0x158] sm:$0xff]
        %v584 = vld [vmem:[%s484 + $0x160] sm:$0xff]
        %v585 = vld [vmem:[%s484 + $0x168] sm:$0xff]
        %v586 = vld [vmem:[%s484 + $0x170] sm:$0xff]
        %v587 = vld [vmem:[%s484 + $0x178] sm:$0xff]
        %v588 = vld [vmem:[%s484 + $0x180] sm:$0xff]
        %v589 = vld [vmem:[%s484 + $0x188] sm:$0xff]
        %v590 = vld [vmem:[%s484 + $0x190] sm:$0xff]
        %v591 = vld [vmem:[%s484 + $0x198] sm:$0xff]
        %v592 = vld [vmem:[%s484 + $0x1a0] sm:$0xff]
        %v593 = vld [vmem:[%s484 + $0x1a8] sm:$0xff]
        %v594 = vld [vmem:[%s484 + $0x1b0] sm:$0xff]
        %v595 = vld [vmem:[%s484 + $0x1b8] sm:$0xff]
        %v596 = vld [vmem:[%s484 + $0x1c0] sm:$0xff]
        %v597 = vld [vmem:[%s484 + $0x1c8] sm:$0xff]
        %v598 = vld [vmem:[%s484 + $0x1d0] sm:$0xff]
        %v599 = vld [vmem:[%s484 + $0x1d8] sm:$0xff]
        %v600 = vld [vmem:[%s484 + $0x1e0] sm:$0xff]
        %v601 = vld [vmem:[%s484 + $0x1e8] sm:$0xff]
        %v602 = vld [vmem:[%s484 + $0x1f0] sm:$0xff]
        %v603 = vld [vmem:[%s484 + $0x1f8] sm:$0xff]
        %v604 = vld [vmem:[%s484 + $0x200] sm:$0xff]
        %v605 = vld [vmem:[%s484 + $0x208] sm:$0xff]
        %v606 = vld [vmem:[%s484 + $0x210] sm:$0xff]
        %v607 = vld [vmem:[%s484 + $0x218] sm:$0xff]
        %v608 = vld [vmem:[%s484 + $0x220] sm:$0xff]
        %v609 = vld [vmem:[%s484 + $0x228] sm:$0xff]
        %v610 = vld [vmem:[%s484 + $0x230] sm:$0xff]
        %v611 = vld [vmem:[%s484 + $0x238] sm:$0xff]
        %v612 = vld [vmem:[%s484 + $0x240] sm:$0xff]
        %v613 = vld [vmem:[%s484 + $0x248] sm:$0xff]
        %v614 = vld [vmem:[%s484 + $0x250] sm:$0xff]
        %v615 = vld [vmem:[%s484 + $0x258] sm:$0xff]
        %v616 = vld [vmem:[%s484 + $0x260] sm:$0xff]
        %v617 = vld [vmem:[%s484 + $0x268] sm:$0xff]
        %v618 = vld [vmem:[%s484 + $0x270] sm:$0xff]
        %v619 = vld [vmem:[%s484 + $0x278] sm:$0xff]
        %v620 = vld [vmem:[%s484 + $0x280] sm:$0xff]
        %v621 = vld [vmem:[%s484 + $0x288] sm:$0xff]
        %v622 = vld [vmem:[%s484 + $0x290] sm:$0xff]
        %v623 = vld [vmem:[%s484 + $0x298] sm:$0xff]
        %v624 = vld [vmem:[%s484 + $0x2a0] sm:$0xff]
        %v625 = vld [vmem:[%s484 + $0x2a8] sm:$0xff]
        %v626 = vld [vmem:[%s484 + $0x2b0] sm:$0xff]
        %v627 = vld [vmem:[%s484 + $0x2b8] sm:$0xff]
        %v628 = vld [vmem:[%s484 + $0x2c0] sm:$0xff]
        %v629 = vld [vmem:[%s484 + $0x2c8] sm:$0xff]
        %v630 = vld [vmem:[%s484 + $0x2d0] sm:$0xff]
        %v631 = vld [vmem:[%s484 + $0x2d8] sm:$0xff]
        %v632 = vld [vmem:[%s484 + $0x2e0] sm:$0xff]
        %v633 = vld [vmem:[%s484 + $0x2e8] sm:$0xff]
        %v634 = vld [vmem:[%s484 + $0x2f0] sm:$0xff]
        %v635 = vld [vmem:[%s484 + $0x2f8] sm:$0xff]
        %v636 = vld [vmem:[%s484 + $0x300] sm:$0xff]
        %v637 = vld [vmem:[%s484 + $0x308] sm:$0xff]
        %v638 = vld [vmem:[%s484 + $0x310] sm:$0xff]
        %v639 = vld [vmem:[%s484 + $0x318] sm:$0xff]
        %v640 = vld [vmem:[%s484 + $0x320] sm:$0xff]
        %v641 = vld [vmem:[%s484 + $0x328] sm:$0xff]
        %v642 = vld [vmem:[%s484 + $0x330] sm:$0xff]
        %v643 = vld [vmem:[%s484 + $0x338] sm:$0xff]
        %v644 = vld [vmem:[%s484 + $0x340] sm:$0xff]
        %v645 = vld [vmem:[%s484 + $0x348] sm:$0xff]
        %v646 = vld [vmem:[%s484 + $0x350] sm:$0xff]
        %v647 = vld [vmem:[%s484 + $0x358] sm:$0xff]
        %v648 = vld [vmem:[%s484 + $0x360] sm:$0xff]
        %v649 = vld [vmem:[%s484 + $0x368] sm:$0xff]
        %v650 = vld [vmem:[%s484 + $0x370] sm:$0xff]
        %v651 = vld [vmem:[%s484 + $0x378] sm:$0xff]
        %v652 = vld [vmem:[%s484 + $0x380] sm:$0xff]
        %v653 = vld [vmem:[%s484 + $0x388] sm:$0xff]
        %v654 = vld [vmem:[%s484 + $0x390] sm:$0xff]
        %v655 = vld [vmem:[%s484 + $0x398] sm:$0xff]
        %v656 = vld [vmem:[%s484 + $0x3a0] sm:$0xff]
        %v657 = vld [vmem:[%s484 + $0x3a8] sm:$0xff]
        %v658 = vld [vmem:[%s484 + $0x3b0] sm:$0xff]
        %v659 = vld [vmem:[%s484 + $0x3b8] sm:$0xff]
        %v660 = vld [vmem:[%s484 + $0x3c0] sm:$0xff]
        %v661 = vld [vmem:[%s484 + $0x3c8] sm:$0xff]
        %v662 = vld [vmem:[%s484 + $0x3d0] sm:$0xff]
        %v663 = vld [vmem:[%s484 + $0x3d8] sm:$0xff]
        %v664 = vld [vmem:[%s484 + $0x3e0] sm:$0xff]
        %v665 = vld [vmem:[%s484 + $0x3e8] sm:$0xff]
        %v666 = vld [vmem:[%s484 + $0x3f0] sm:$0xff]
        %v667 = vld [vmem:[%s484 + $0x3f8] sm:$0xff]
        %v668 = vld [vmem:[%s484 + $0x400] sm:$0xff]
        %v669 = vld [vmem:[%s484 + $0x408] sm:$0xff]
        %v670 = vld [vmem:[%s484 + $0x410] sm:$0xff]
        %v671 = vld [vmem:[%s484 + $0x418] sm:$0xff]
        %v672 = vld [vmem:[%s484 + $0x420] sm:$0xff]
        %v673 = vld [vmem:[%s484 + $0x428] sm:$0xff]
        %v674 = vld [vmem:[%s484 + $0x430] sm:$0xff]
        %v675 = vld [vmem:[%s484 + $0x438] sm:$0xff]
        %v676 = vld [vmem:[%s484 + $0x440] sm:$0xff]
        %v677 = vld [vmem:[%s484 + $0x448] sm:$0xff]
        %v678 = vld [vmem:[%s484 + $0x450] sm:$0xff]
        %v679 = vld [vmem:[%s484 + $0x458] sm:$0xff]
        %v680 = vld [vmem:[%s484 + $0x460] sm:$0xff]
        %v681 = vld [vmem:[%s484 + $0x468] sm:$0xff]
        %v682 = vld [vmem:[%s484 + $0x470] sm:$0xff]
        %v683 = vld [vmem:[%s484 + $0x478] sm:$0xff]
        %v684 = vld [vmem:[%s527] sm:$0xff]
        %686 = vset.pattern.permute.xlu0 0
        %687 = vperm.xlu0 %686, %v684
        %v688 = vpop.permute.xlu0 %687
        %vm690 = vcmask 130048
        %v692 = vsel %vm690, %v539, 0
        %694 = vmatprep.subr.mxu0 %v541
        %695 = vmatpush1.msra.mxu0 %v540
        %696 = vmatprep.subr.mxu0 %v549
        %697 = vmatpush1.msra.mxu0 %v548
        %698 = vmatprep.subr.mxu0 %v557
        %699 = vmatpush1.msra.mxu0 %v556
        %700 = vmatprep.subr.mxu0 %v565
        %701 = vmatpush1.msra.mxu0 %v564
        %702 = vmatprep.subr.mxu0 %v573
        %703 = vmatpush1.msra.mxu0 %v572
        %704 = vmatprep.subr.mxu0 %v581
        %705 = vmatpush1.msra.mxu0 %v580
        %706 = vmatprep.subr.mxu0 %v589
        %707 = vmatpush1.msra.mxu0 %v588
        %708 = vmatprep.subr.mxu0 %v597
        %709 = vmatpush1.msra.mxu0 %v596
        %710 = vmatprep.subr.mxu0 %v605
        %711 = vmatpush1.msra.mxu0 %v604
        %712 = vmatprep.subr.mxu0 %v613
        %713 = vmatpush1.msra.mxu0 %v612
        %714 = vmatprep.subr.mxu0 %v621
        %715 = vmatpush1.msra.mxu0 %v620
        %716 = vmatprep.subr.mxu0 %v629
        %717 = vmatpush1.msra.mxu0 %v628
        %718 = vmatprep.subr.mxu0 %v637
        %719 = vmatpush1.msra.mxu0 %v636
        %720 = vmatprep.subr.mxu0 %v645
        %721 = vmatpush1.msra.mxu0 %v644
        %722 = vmatprep.subr.mxu0 %v653
        %723 = vmatpush1.msra.mxu0 %v652
        %724 = vmatprep.subr.mxu0 %v661
        %725 = vmatpush1.msra.mxu0 %v660
        %726 = vmatprep.subr.mxu0 %v669
        %727 = vmatpush1.msra.mxu0 %v668
        %728 = vmatprep.subr.mxu0 %v677
        %729 = vmatpush1.msra.mxu0 %v676
        %730 = vmatprep.subr.mxu0 0.0
        %731 = vmatpush1.msra.mxu0 0.0
        %732 = vmatprep.subr.mxu0 0.0
        %733 = vmatpush1.msra.mxu0 0.0
        %734 = vmatprep.subr.mxu0 0.0
        %735 = vmatpush1.msra.mxu0 0.0
        %736 = vmatprep.subr.mxu0 0.0
        %737 = vmatpush1.msra.mxu0 0.0
        %738 = vmatprep.subr.mxu0 0.0
        %739 = vmatpush1.msra.mxu0 0.0
        %740 = vmatprep.subr.mxu0 0.0
        %741 = vmatpush1.msra.mxu0 0.0
        %742 = vmatprep.subr.mxu0 0.0
        %743 = vmatpush1.msra.mxu0 0.0
        %744 = vmatprep.subr.mxu0 0.0
        %745 = vmatpush1.msra.mxu0 0.0
        %746 = vmatprep.subr.mxu0 0.0
        %747 = vmatpush1.msra.mxu0 0.0
        %748 = vmatprep.subr.mxu0 0.0
        %749 = vmatpush1.msra.mxu0 0.0
        %750 = vmatprep.subr.mxu0 0.0
        %751 = vmatpush1.msra.mxu0 0.0
        %752 = vmatprep.subr.mxu0 0.0
        %753 = vmatpush1.msra.mxu0 0.0
        %754 = vmatprep.subr.mxu0 0.0
        %755 = vmatpush1.msra.mxu0 0.0
        %756 = vmatprep.subr.mxu0 0.0
        %757 = vmatpush1.msra.mxu0 0.0
        %758 = vmatprep.mubr.f32.mxu0 %v692
        %759 = vmatmul.mubr.f32.gmra.mrb[0].mxu0 %v538
        %v760 = vpop.f32.mrb[0].mxu0
        %v761 = vadd.f32 %v688, %v760
        %v762 = vpop.f32.mrb[0].mxu0
        %v763 = vadd.f32 %v688, %v762
        %764 = vdwg.mxu0
        %765 = vmatprep.subr.mxu0 %v543
        %766 = vmatpush1.msra.mxu0 %v542
        %767 = vmatprep.subr.mxu0 %v551
        %768 = vmatpush1.msra.mxu0 %v550
        %769 = vmatprep.subr.mxu0 %v559
        %770 = vmatpush1.msra.mxu0 %v558
        %771 = vmatprep.subr.mxu0 %v567
        %772 = vmatpush1.msra.mxu0 %v566
        %773 = vmatprep.subr.mxu0 %v575
        %774 = vmatpush1.msra.mxu0 %v574
        %775 = vmatprep.subr.mxu0 %v583
        %776 = vmatpush1.msra.mxu0 %v582
        %777 = vmatprep.subr.mxu0 %v591
        %778 = vmatpush1.msra.mxu0 %v590
        %779 = vmatprep.subr.mxu0 %v599
        %780 = vmatpush1.msra.mxu0 %v598
        %781 = vmatprep.subr.mxu0 %v607
        %782 = vmatpush1.msra.mxu0 %v606
        %783 = vmatprep.subr.mxu0 %v615
        %784 = vmatpush1.msra.mxu0 %v614
        %785 = vmatprep.subr.mxu0 %v623
        %786 = vmatpush1.msra.mxu0 %v622
        %787 = vmatprep.subr.mxu0 %v631
        %788 = vmatpush1.msra.mxu0 %v630
        %789 = vmatprep.subr.mxu0 %v639
        %790 = vmatpush1.msra.mxu0 %v638
        %791 = vmatprep.subr.mxu0 %v647
        %792 = vmatpush1.msra.mxu0 %v646
        %793 = vmatprep.subr.mxu0 %v655
        %794 = vmatpush1.msra.mxu0 %v654
        %795 = vmatprep.subr.mxu0 %v663
        %796 = vmatpush1.msra.mxu0 %v662
        %797 = vmatprep.subr.mxu0 %v671
        %798 = vmatpush1.msra.mxu0 %v670
        %799 = vmatprep.subr.mxu0 %v679
        %800 = vmatpush1.msra.mxu0 %v678
        %801 = vmatprep.subr.mxu0 0.0
        %802 = vmatpush1.msra.mxu0 0.0
        %803 = vmatprep.subr.mxu0 0.0
        %804 = vmatpush1.msra.mxu0 0.0
        %805 = vmatprep.subr.mxu0 0.0
        %806 = vmatpush1.msra.mxu0 0.0
        %807 = vmatprep.subr.mxu0 0.0
        %808 = vmatpush1.msra.mxu0 0.0
        %809 = vmatprep.subr.mxu0 0.0
        %810 = vmatpush1.msra.mxu0 0.0
        %811 = vmatprep.subr.mxu0 0.0
        %812 = vmatpush1.msra.mxu0 0.0
        %813 = vmatprep.subr.mxu0 0.0
        %814 = vmatpush1.msra.mxu0 0.0
        %815 = vmatprep.subr.mxu0 0.0
        %816 = vmatpush1.msra.mxu0 0.0
        %817 = vmatprep.subr.mxu0 0.0
        %818 = vmatpush1.msra.mxu0 0.0
        %819 = vmatprep.subr.mxu0 0.0
        %820 = vmatpush1.msra.mxu0 0.0
        %821 = vmatprep.subr.mxu0 0.0
        %822 = vmatpush1.msra.mxu0 0.0
        %823 = vmatprep.subr.mxu0 0.0
        %824 = vmatpush1.msra.mxu0 0.0
        %825 = vmatprep.subr.mxu0 0.0
        %826 = vmatpush1.msra.mxu0 0.0
        %827 = vmatprep.subr.mxu0 0.0
        %828 = vmatpush1.msra.mxu0 0.0
        %829 = vmatprep.mubr.f32.mxu0 %v692
        %830 = vmatmul.mubr.f32.gmra.mrb[0].mxu0 %v538
        %v831 = vpop.f32.mrb[0].mxu0
        %v832 = vadd.f32 %v688, %v831
        %v833 = vpop.f32.mrb[0].mxu0
        %v834 = vadd.f32 %v688, %v833
        %835 = vdwg.mxu0
        %836 = vmatprep.subr.mxu0 %v545
        %837 = vmatpush1.msra.mxu0 %v544
        %838 = vmatprep.subr.mxu0 %v553
        %839 = vmatpush1.msra.mxu0 %v552
        %840 = vmatprep.subr.mxu0 %v561
        %841 = vmatpush1.msra.mxu0 %v560
        %842 = vmatprep.subr.mxu0 %v569
        %843 = vmatpush1.msra.mxu0 %v568
        %844 = vmatprep.subr.mxu0 %v577
        %845 = vmatpush1.msra.mxu0 %v576
        %846 = vmatprep.subr.mxu0 %v585
        %847 = vmatpush1.msra.mxu0 %v584
        %848 = vmatprep.subr.mxu0 %v593
        %849 = vmatpush1.msra.mxu0 %v592
        %850 = vmatprep.subr.mxu0 %v601
        %851 = vmatpush1.msra.mxu0 %v600
        %852 = vmatprep.subr.mxu0 %v609
        %853 = vmatpush1.msra.mxu0 %v608
        %854 = vmatprep.subr.mxu0 %v617
        %855 = vmatpush1.msra.mxu0 %v616
        %856 = vmatprep.subr.mxu0 %v625
        %857 = vmatpush1.msra.mxu0 %v624
        %858 = vmatprep.subr.mxu0 %v633
        %859 = vmatpush1.msra.mxu0 %v632
        %860 = vmatprep.subr.mxu0 %v641
        %861 = vmatpush1.msra.mxu0 %v640
        %862 = vmatprep.subr.mxu0 %v649
        %863 = vmatpush1.msra.mxu0 %v648
        %864 = vmatprep.subr.mxu0 %v657
        %865 = vmatpush1.msra.mxu0 %v656
        %866 = vmatprep.subr.mxu0 %v665
        %867 = vmatpush1.msra.mxu0 %v664
        %868 = vmatprep.subr.mxu0 %v673
        %869 = vmatpush1.msra.mxu0 %v672
        %870 = vmatprep.subr.mxu0 %v681
        %871 = vmatpush1.msra.mxu0 %v680
        %872 = vmatprep.subr.mxu0 0.0
        %873 = vmatpush1.msra.mxu0 0.0
        %874 = vmatprep.subr.mxu0 0.0
        %875 = vmatpush1.msra.mxu0 0.0
        %876 = vmatprep.subr.mxu0 0.0
        %877 = vmatpush1.msra.mxu0 0.0
        %878 = vmatprep.subr.mxu0 0.0
        %879 = vmatpush1.msra.mxu0 0.0
        %880 = vmatprep.subr.mxu0 0.0
        %881 = vmatpush1.msra.mxu0 0.0
        %882 = vmatprep.subr.mxu0 0.0
        %883 = vmatpush1.msra.mxu0 0.0
        %884 = vmatprep.subr.mxu0 0.0
        %885 = vmatpush1.msra.mxu0 0.0
        %886 = vmatprep.subr.mxu0 0.0
        %887 = vmatpush1.msra.mxu0 0.0
        %888 = vmatprep.subr.mxu0 0.0
        %889 = vmatpush1.msra.mxu0 0.0
        %890 = vmatprep.subr.mxu0 0.0
        %891 = vmatpush1.msra.mxu0 0.0
        %892 = vmatprep.subr.mxu0 0.0
        %893 = vmatpush1.msra.mxu0 0.0
        %894 = vmatprep.subr.mxu0 0.0
        %895 = vmatpush1.msra.mxu0 0.0
        %896 = vmatprep.subr.mxu0 0.0
        %897 = vmatpush1.msra.mxu0 0.0
        %898 = vmatprep.subr.mxu0 0.0
        %899 = vmatpush1.msra.mxu0 0.0
        %900 = vmatprep.mubr.f32.mxu0 %v692
        %901 = vmatmul.mubr.f32.gmra.mrb[0].mxu0 %v538
        %v902 = vpop.f32.mrb[0].mxu0
        %v903 = vadd.f32 %v688, %v902
        %v904 = vpop.f32.mrb[0].mxu0
        %v905 = vadd.f32 %v688, %v904
        %906 = vdwg.mxu0
        %907 = vmatprep.subr.mxu0 %v547
        %908 = vmatpush1.msra.mxu0 %v546
        %909 = vmatprep.subr.mxu0 %v555
        %910 = vmatpush1.msra.mxu0 %v554
        %911 = vmatprep.subr.mxu0 %v563
        %912 = vmatpush1.msra.mxu0 %v562
        %913 = vmatprep.subr.mxu0 %v571
        %914 = vmatpush1.msra.mxu0 %v570
        %915 = vmatprep.subr.mxu0 %v579
        %916 = vmatpush1.msra.mxu0 %v578
        %917 = vmatprep.subr.mxu0 %v587
        %918 = vmatpush1.msra.mxu0 %v586
        %919 = vmatprep.subr.mxu0 %v595
        %920 = vmatpush1.msra.mxu0 %v594
        %921 = vmatprep.subr.mxu0 %v603
        %922 = vmatpush1.msra.mxu0 %v602
        %923 = vmatprep.subr.mxu0 %v611
        %924 = vmatpush1.msra.mxu0 %v610
        %925 = vmatprep.subr.mxu0 %v619
        %926 = vmatpush1.msra.mxu0 %v618
        %927 = vmatprep.subr.mxu0 %v627
        %928 = vmatpush1.msra.mxu0 %v626
        %929 = vmatprep.subr.mxu0 %v635
        %930 = vmatpush1.msra.mxu0 %v634
        %931 = vmatprep.subr.mxu0 %v643
        %932 = vmatpush1.msra.mxu0 %v642
        %933 = vmatprep.subr.mxu0 %v651
        %934 = vmatpush1.msra.mxu0 %v650
        %935 = vmatprep.subr.mxu0 %v659
        %936 = vmatpush1.msra.mxu0 %v658
        %937 = vmatprep.subr.mxu0 %v667
        %938 = vmatpush1.msra.mxu0 %v666
        %939 = vmatprep.subr.mxu0 %v675
        %940 = vmatpush1.msra.mxu0 %v674
        %941 = vmatprep.subr.mxu0 %v683
        %942 = vmatpush1.msra.mxu0 %v682
        %943 = vmatprep.subr.mxu0 0.0
        %944 = vmatpush1.msra.mxu0 0.0
        %945 = vmatprep.subr.mxu0 0.0
        %946 = vmatpush1.msra.mxu0 0.0
        %947 = vmatprep.subr.mxu0 0.0
        %948 = vmatpush1.msra.mxu0 0.0
        %949 = vmatprep.subr.mxu0 0.0
        %950 = vmatpush1.msra.mxu0 0.0
        %951 = vmatprep.subr.mxu0 0.0
        %952 = vmatpush1.msra.mxu0 0.0
        %953 = vmatprep.subr.mxu0 0.0
        %954 = vmatpush1.msra.mxu0 0.0
        %955 = vmatprep.subr.mxu0 0.0
        %956 = vmatpush1.msra.mxu0 0.0
        %957 = vmatprep.subr.mxu0 0.0
        %958 = vmatpush1.msra.mxu0 0.0
        %959 = vmatprep.subr.mxu0 0.0
        %960 = vmatpush1.msra.mxu0 0.0
        %961 = vmatprep.subr.mxu0 0.0
        %962 = vmatpush1.msra.mxu0 0.0
        %963 = vmatprep.subr.mxu0 0.0
        %964 = vmatpush1.msra.mxu0 0.0
        %965 = vmatprep.subr.mxu0 0.0
        %966 = vmatpush1.msra.mxu0 0.0
        %967 = vmatprep.subr.mxu0 0.0
        %968 = vmatpush1.msra.mxu0 0.0
        %969 = vmatprep.subr.mxu0 0.0
        %970 = vmatpush1.msra.mxu0 0.0
        %971 = vmatprep.mubr.f32.mxu0 %v692
        %972 = vmatmul.mubr.f32.gmra.mrb[0].mxu0 %v538
        %v973 = vpop.f32.mrb[0].mxu0
        %v974 = vadd.f32 %v688, %v973
        %v975 = vpop.f32.mrb[0].mxu0
        %v976 = vadd.f32 %v688, %v975
        %977 = vdwg.mxu0
        %v978 = vmax.f32 %v761, 0.0
        %v979 = vmax.f32 %v763, 0.0
        %v980 = vmax.f32 %v832, 0.0
        %v981 = vmax.f32 %v834, 0.0
        %v982 = vmax.f32 %v903, 0.0
        %v983 = vmax.f32 %v905, 0.0
        %v984 = vmax.f32 %v974, 0.0
        %v985 = vmax.f32 %v976, 0.0
        %986 = vst [vmem:[%s536] sm:$0xff] %v978
        %987 = vst [vmem:[%s536 + $0x8] sm:$0xff] %v979
        %988 = vst [vmem:[%s536 + $0x10] sm:$0xff] %v980
        %989 = vst [vmem:[%s536 + $0x18] sm:$0xff] %v981
        %990 = vst [vmem:[%s536 + $0x20] sm:$0xff] %v982
        %991 = vst [vmem:[%s536 + $0x28] sm:$0xff] %v983
        %992 = vst [vmem:[%s536 + $0x30] sm:$0xff] %v984
        %993 = vst [vmem:[%s536 + $0x38] sm:$0xff] %v985
        %s994 = smul.u32 8, %s19
        %p995 = scmp.lt.s32.totalorder %s18, 0
        %s996 = scalar_select %p995, %s18, 0
        %p997 = scmp.lt.s32.totalorder %s994, 63
        %s998 = scalar_select %p997, %s994, 63
        %s999 = smul.addr %s996, 64
        %s1000 = sadd.s32 %s998, %s999
        %s1001 = smul.addr %s1000, 8
        %s1002 = scalar_lea.vmem %s3, %s1001
        // Predicated region
        $region56: #{autoencoder_forward.10} parent=50 // pred_check
          %p1003 = pneg %p124
        $region57: #{autoencoder_forward.10} parent=50 // pred_check_branch
          %1005 = sbr.rel (%p1003) target = $region59
        $region58: #{autoencoder_forward.10} parent=50 // pred_region
          %s1006 = smul.u32 8, %s19
        $region59: #{autoencoder_forward.10} parent=50 // pred_fallthru
          _
      $region51: #{autoencoder_forward.10} parent=5 // pred_fallthru
        _
      %p1007 = scmp.le.s32.totalorder 2, %s9
      // Predicated region
      $region60: #{autoencoder_forward.10} parent=5 // pred_check
        %p1008 = pneg %p1007
      $region61: #{autoencoder_forward.10} parent=5 // pred_check_branch
        %1010 = sbr.rel (%p1008) target = $region63
      $region62: #{autoencoder_forward.10} parent=5 // pred_region
        %s1011 = ssub.s32 %s9, 2
        // Predicated region
        $region64: #{autoencoder_forward.10} parent=62 // pred_check
          %p1012 = pneg %p130
        $region65: #{autoencoder_forward.10} parent=62 // pred_check_branch
          %1014 = sbr.rel (%p1012) target = $region67
        $region66: #{autoencoder_forward.10} parent=62 // pred_region
          %s1015 = smul.u32 8, %s21
          %p1016 = scmp.lt.s32.totalorder %s20, 0
          %s1017 = scalar_select %p1016, %s20, 0
          %p1018 = scmp.lt.s32.totalorder %s1015, 63
          %s1019 = scalar_select %p1018, %s1015, 63
          %s1020 = smul.addr %s1017, 64
          %s1021 = sadd.s32 %s1019, %s1020
          %s1022 = smul.addr %s1021, 8
          %s1023 = scalar_lea.vmem %s3, %s1022
        $region67: #{autoencoder_forward.10} parent=62 // pred_fallthru
          _
      $region63: #{autoencoder_forward.10} parent=5 // pred_fallthru
        _
    $region6: #{autoencoder_forward.10} parent=1 // loop_footer
      %s13 = sadd.s32 1, %s9
    $region7: #{autoencoder_forward.10} parent=1 // loop_footer_branch
      %8 = sbr.rel target = $region3
    $region8: #{autoencoder_forward.10} parent=1 // loop_exit
      _

// kernel: autoencoder_forward.11
$region0: #{autoencoder_forward.11}
  #allocation0 [shape = 'u32[]', space=smem, size = 0x4, offset = 0x4, fixed_abs, tag = 'smem constant byte address 0x4 - core index']
  #allocation1 [shape = 'u32[144,128]{1,0:T(1,128)}', space=vmem, size = 0x12000, scoped, tag = 'internal scratch']
  %s0 = inlined_call_operand.vmem [shape: f32[8,54], index: 0, kind: input, shape index: {}]
  %s1 = inlined_call_operand.vmem [shape: f32[54,8192], index: 1, kind: input, shape index: {}]
  %s2 = inlined_call_operand.vmem [shape: f32[8,1], index: 2, kind: input, shape index: {}]
  %s3 = inlined_call_operand.vmem [shape: f32[8,8192], index: 3, kind: output, shape index: {}]
  %s4 = sld [smem:[#allocation0]]
  $region68: #{autoencoder_forward.11} parent=0
    _
  %s6 = ssub.s32 1, %s4
  %s7 = scalar_select 0, %s6, %s4
  $region1: #{autoencoder_forward.11} parent=0
    #allocation2 [shape = 'u8[458752]{0}', space=vmem, size = 0x70000, scoped, tag = 'input window, operand 1']
    loop: start=0, step=1, limit=10
    $region2: #{autoencoder_forward.11} parent=1 // loop_pre_header
      _
    $region3: #{autoencoder_forward.11} parent=1 // loop_header
      %s9 = sphi 0, %s13
      %p10 = scmp.ge.s32.totalorder %s9, 10
      %s16 = sphi 0, %s28
      %s17 = sphi 0, %s24
      %s18 = sphi 0, %s16
      %s19 = sphi 0, %s17
      %s20 = sphi 0, %s18
      %s21 = sphi 0, %s19
      %s31 = sphi 0, %s33
      %s34 = sphi 0, %s31
      %s35 = sphi 0, %s34
      %s51 = sphi 0, %s35
      %s57 = sphi 0, %s59
      %s60 = sphi 0, %s57
      %s61 = sphi 0, %s60
      %s77 = sphi 0, %s61
      %s83 = sphi 0, %s85
      %s86 = sphi 0, %s83
      %s87 = sphi 0, %s86
      %s103 = sphi 0, %s87
      %s111 = sphi 0, %s113
      %s114 = sphi 0, %s111
      %s115 = sphi 0, %s114
      %s131 = sphi 0, %s115
    $region4: #{autoencoder_forward.11} parent=1 // loop_header_branch
      %12 = sbr.rel (%p10) target = $region8
    $region5: #{autoencoder_forward.11} parent=1 // loop_body
      %s14 = ssub.s32 %s9, 1
      %s15 = ssub.s32 %s9, 2
      %s22 = sadd.s32 1, %s17
      %p23 = scmp.ge.s32.totalorder %s22, 8
      %s24 = scalar_select %p23, 0, %s22
      %s25 = sadd.s32 1, %s16
      %s26 = scalar_select %p23, %s25, %s16
      %p27 = scmp.ge.s32.totalorder %s26, 1
      %s28 = scalar_select %p27, 0, %s26
      %s29 = ssub.s32 %s16, %s28
      %p30 = scmp.eq.s32.totalorder %s29, 0
      %s32 = sadd.s32 %s31, 1
      %s33 = scalar_select %p30, %s31, %s32
      %p36 = pneg %p30
      %p37 = scmp.eq.s32.totalorder %s9, 7
      %p38 = por %p36, %p37
      %p39 = scmp.ne.s32.totalorder %s31, %s34
      %p40 = scmp.eq.s32.totalorder %s9, 0
      %p41 = por %p39, %p40
      %p42 = scmp.ne.s32.totalorder %s31, %s34
      %p43 = scmp.eq.s32.totalorder %s14, 7
      %p44 = por %p42, %p43
      %p45 = scmp.ne.s32.totalorder %s34, %s35
      %p46 = scmp.eq.s32.totalorder %s14, 0
      %p47 = por %p45, %p46
      %p48 = scmp.ne.s32.totalorder %s34, %s35
      %p49 = scmp.eq.s32.totalorder %s15, 7
      %p50 = por %p48, %p49
      %p52 = scmp.ne.s32.totalorder %s35, %s51
      %p53 = scmp.eq.s32.totalorder %s15, 0
      %p54 = por %p52, %p53
      %s55 = ssub.s32 %s17, %s24
      %p56 = scmp.eq.s32.totalorder %s55, 0
      %s58 = sadd.s32 %s57, 1
      %s59 = scalar_select %p56, %s57, %s58
      %p62 = pneg %p56
      %p63 = scmp.eq.s32.totalorder %s9, 7
      %p64 = por %p62, %p63
      %p65 = scmp.ne.s32.totalorder %s57, %s60
      %p66 = scmp.eq.s32.totalorder %s9, 0
      %p67 = por %p65, %p66
      %p68 = scmp.ne.s32.totalorder %s57, %s60
      %p69 = scmp.eq.s32.totalorder %s14, 7
      %p70 = por %p68, %p69
      %p71 = scmp.ne.s32.totalorder %s60, %s61
      %p72 = scmp.eq.s32.totalorder %s14, 0
      %p73 = por %p71, %p72
      %p74 = scmp.ne.s32.totalorder %s60, %s61
      %p75 = scmp.eq.s32.totalorder %s15, 7
      %p76 = por %p74, %p75
      %p78 = scmp.ne.s32.totalorder %s61, %s77
      %p79 = scmp.eq.s32.totalorder %s15, 0
      %p80 = por %p78, %p79
      %s81 = ssub.s32 %s16, %s28
      %p82 = scmp.eq.s32.totalorder %s81, 0
      %s84 = sadd.s32 %s83, 1
      %s85 = scalar_select %p82, %s83, %s84
      %p88 = pneg %p82
      %p89 = scmp.eq.s32.totalorder %s9, 7
      %p90 = por %p88, %p89
      %p91 = scmp.ne.s32.totalorder %s83, %s86
      %p92 = scmp.eq.s32.totalorder %s9, 0
      %p93 = por %p91, %p92
      %p94 = scmp.ne.s32.totalorder %s83, %s86
      %p95 = scmp.eq.s32.totalorder %s14, 7
      %p96 = por %p94, %p95
      %p97 = scmp.ne.s32.totalorder %s86, %s87
      %p98 = scmp.eq.s32.totalorder %s14, 0
      %p99 = por %p97, %p98
      %p100 = scmp.ne.s32.totalorder %s86, %s87
      %p101 = scmp.eq.s32.totalorder %s15, 7
      %p102 = por %p100, %p101
      %p104 = scmp.ne.s32.totalorder %s87, %s103
      %p105 = scmp.eq.s32.totalorder %s15, 0
      %p106 = por %p104, %p105
      %s107 = ssub.s32 %s16, %s28
      %s108 = ssub.s32 %s17, %s24
      %s109 = sor.u32 %s107, %s108
      %p110 = scmp.eq.s32.totalorder %s109, 0
      %s112 = sadd.s32 %s111, 1
      %s113 = scalar_select %p110, %s111, %s112
      %p116 = pneg %p110
      %p117 = scmp.eq.s32.totalorder %s9, 7
      %p118 = por %p116, %p117
      %p119 = scmp.ne.s32.totalorder %s111, %s114
      %p120 = scmp.eq.s32.totalorder %s9, 0
      %p121 = por %p119, %p120
      %p122 = scmp.ne.s32.totalorder %s111, %s114
      %p123 = scmp.eq.s32.totalorder %s14, 7
      %p124 = por %p122, %p123
      %p125 = scmp.ne.s32.totalorder %s114, %s115
      %p126 = scmp.eq.s32.totalorder %s14, 0
      %p127 = por %p125, %p126
      %p128 = scmp.ne.s32.totalorder %s114, %s115
      %p129 = scmp.eq.s32.totalorder %s15, 7
      %p130 = por %p128, %p129
      %p132 = scmp.ne.s32.totalorder %s115, %s131
      %p133 = scmp.eq.s32.totalorder %s15, 0
      %p134 = por %p132, %p133
      %p135 = scmp.le.s32.totalorder 1, %s9
      %p136 = scmp.lt.s32.totalorder %s9, 9
      %p137 = pnand %p135, %p136
      %p138 = pneg %p137
      // Predicated region
      $region9: #{autoencoder_forward.11} parent=5 // pred_check
        _
      $region10: #{autoencoder_forward.11} parent=5 // pred_check_branch
        %140 = sbr.rel (%p137) target = $region12
      $region11: #{autoencoder_forward.11} parent=5 // pred_region
        %s141 = ssub.s32 %s9, 1
        // Predicated region
        $region13: #{autoencoder_forward.11} parent=11 // pred_check
          %p142 = pneg %p47
        $region14: #{autoencoder_forward.11} parent=11 // pred_check_branch
          %144 = sbr.rel (%p142) target = $region16
        $region15: #{autoencoder_forward.11} parent=11 // pred_region
          %p145 = scmp.lt.s32.totalorder %s18, 0
          %s146 = scalar_select %p145, %s18, 0
          %s147 = smul.addr %s146, 8
          %s148 = scalar_lea.vmem %s0, %s147
        $region16: #{autoencoder_forward.11} parent=11 // pred_fallthru
          _
        // Predicated region
        $region17: #{autoencoder_forward.11} parent=11 // pred_check
          %p149 = pneg %p99
        $region18: #{autoencoder_forward.11} parent=11 // pred_check_branch
          %151 = sbr.rel (%p149) target = $region20
        $region19: #{autoencoder_forward.11} parent=11 // pred_region
          %p152 = scmp.lt.s32.totalorder %s18, 0
          %s153 = scalar_select %p152, %s18, 0
          %s154 = smul.addr %s153, 8
          %s155 = scalar_lea.vmem %s2, %s154
        $region20: #{autoencoder_forward.11} parent=11 // pred_fallthru
          _
      $region12: #{autoencoder_forward.11} parent=5 // pred_fallthru
        _
      %p156 = scmp.lt.s32.totalorder %s9, 8
      // Predicated region
      $region21: #{autoencoder_forward.11} parent=5 // pred_check
        %p157 = pneg %p156
      $region22: #{autoencoder_forward.11} parent=5 // pred_check_branch
        %159 = sbr.rel (%p157) target = $region24
      $region23: #{autoencoder_forward.11} parent=5 // pred_region
        // Predicated region
        $region25: #{autoencoder_forward.11} parent=23 // pred_check
          %p160 = pneg %p67
        $region26: #{autoencoder_forward.11} parent=23 // pred_check_branch
          %162 = sbr.rel (%p160) target = $region28
        $region27: #{autoencoder_forward.11} parent=23 // pred_region
          %s163 = sand.u32 %s57, 1
          %s164 = sand.u32 %s57, 1
          %s165 = smul.addr %s164, 448
          %s166 = scalar_lea.vmem [#allocation2], %s165
          %s167 = smul.u32 8, %s17
          %s168 = smul.addr %s167, 8
          %s169 = scalar_lea.vmem %s1, %s168
          // Predicated region
          $region29: #{autoencoder_forward.11} parent=27 // pred_check
            _
          $region30: #{autoencoder_forward.11} parent=27 // pred_check_branch
            %171 = sbr.rel (0) target = $region32
          $region31: #{autoencoder_forward.11} parent=27 // pred_region
            // Predicated region
            $region33: #{autoencoder_forward.11} parent=31 // pred_check
              _
            $region34: #{autoencoder_forward.11} parent=31 // pred_check_branch
              %173 = sbr.rel (0) target = $region36
            $region35: #{autoencoder_forward.11} parent=31 // pred_region
              loop: start=0, step=1, limit=1
              $region37: #{autoencoder_forward.11} parent=35 // loop_pre_header
                _
              $region38: #{autoencoder_forward.11} parent=35 // loop_header
                %s175 = sphi 0, %s179
                %p176 = scmp.ge.s32.totalorder %s175, 1
                %s180 = sphi %s169, %s169
                %s181 = sphi %s166, %s166
              $region39: #{autoencoder_forward.11} parent=35 // loop_header_branch
                %178 = sbr.rel (%p176) target = $region43
              $region40: #{autoencoder_forward.11} parent=35 // loop_body
                %v182 = vld [vmem:[%s180] sm:$0xff]
                %183 = vst [vmem:[%s181] sm:$0xff] %v182
                %v184 = vld [vmem:[%s180 + $0x8] sm:$0xff]
                %185 = vst [vmem:[%s181 + $0x8] sm:$0xff] %v184
                %v186 = vld [vmem:[%s180 + $0x10] sm:$0xff]
                %187 = vst [vmem:[%s181 + $0x10] sm:$0xff] %v186
                %v188 = vld [vmem:[%s180 + $0x18] sm:$0xff]
                %189 = vst [vmem:[%s181 + $0x18] sm:$0xff] %v188
                %v190 = vld [vmem:[%s180 + $0x20] sm:$0xff]
                %191 = vst [vmem:[%s181 + $0x20] sm:$0xff] %v190
                %v192 = vld [vmem:[%s180 + $0x28] sm:$0xff]
                %193 = vst [vmem:[%s181 + $0x28] sm:$0xff] %v192
                %v194 = vld [vmem:[%s180 + $0x30] sm:$0xff]
                %195 = vst [vmem:[%s181 + $0x30] sm:$0xff] %v194
                %v196 = vld [vmem:[%s180 + $0x38] sm:$0xff]
                %197 = vst [vmem:[%s181 + $0x38] sm:$0xff] %v196
                %v198 = vld [vmem:[%s180 + $0x200] sm:$0xff]
                %199 = vst [vmem:[%s181 + $0x40] sm:$0xff] %v198
                %v200 = vld [vmem:[%s180 + $0x208] sm:$0xff]
                %201 = vst [vmem:[%s181 + $0x48] sm:$0xff] %v200
                %v202 = vld [vmem:[%s180 + $0x210] sm:$0xff]
                %203 = vst [vmem:[%s181 + $0x50] sm:$0xff] %v202
                %v204 = vld [vmem:[%s180 + $0x218] sm:$0xff]
                %205 = vst [vmem:[%s181 + $0x58] sm:$0xff] %v204
                %v206 = vld [vmem:[%s180 + $0x220] sm:$0xff]
                %207 = vst [vmem:[%s181 + $0x60] sm:$0xff] %v206
                %v208 = vld [vmem:[%s180 + $0x228] sm:$0xff]
                %209 = vst [vmem:[%s181 + $0x68] sm:$0xff] %v208
                %v210 = vld [vmem:[%s180 + $0x230] sm:$0xff]
                %211 = vst [vmem:[%s181 + $0x70] sm:$0xff] %v210
                %v212 = vld [vmem:[%s180 + $0x238] sm:$0xff]
                %213 = vst [vmem:[%s181 + $0x78] sm:$0xff] %v212
                %v214 = vld [vmem:[%s180 + $0x400] sm:$0xff]
                %215 = vst [vmem:[%s181 + $0x80] sm:$0xff] %v214
                %v216 = vld [vmem:[%s180 + $0x408] sm:$0xff]
                %217 = vst [vmem:[%s181 + $0x88] sm:$0xff] %v216
                %v218 = vld [vmem:[%s180 + $0x410] sm:$0xff]
                %219 = vst [vmem:[%s181 + $0x90] sm:$0xff] %v218
                %v220 = vld [vmem:[%s180 + $0x418] sm:$0xff]
                %221 = vst [vmem:[%s181 + $0x98] sm:$0xff] %v220
                %v222 = vld [vmem:[%s180 + $0x420] sm:$0xff]
                %223 = vst [vmem:[%s181 + $0xa0] sm:$0xff] %v222
                %v224 = vld [vmem:[%s180 + $0x428] sm:$0xff]
                %225 = vst [vmem:[%s181 + $0xa8] sm:$0xff] %v224
                %v226 = vld [vmem:[%s180 + $0x430] sm:$0xff]
                %227 = vst [vmem:[%s181 + $0xb0] sm:$0xff] %v226
                %v228 = vld [vmem:[%s180 + $0x438] sm:$0xff]
                %229 = vst [vmem:[%s181 + $0xb8] sm:$0xff] %v228
                %v230 = vld [vmem:[%s180 + $0x600] sm:$0xff]
                %231 = vst [vmem:[%s181 + $0xc0] sm:$0xff] %v230
                %v232 = vld [vmem:[%s180 + $0x608] sm:$0xff]
                %233 = vst [vmem:[%s181 + $0xc8] sm:$0xff] %v232
                %v234 = vld [vmem:[%s180 + $0x610] sm:$0xff]
                %235 = vst [vmem:[%s181 + $0xd0] sm:$0xff] %v234
                %v236 = vld [vmem:[%s180 + $0x618] sm:$0xff]
                %237 = vst [vmem:[%s181 + $0xd8] sm:$0xff] %v236
                %v238 = vld [vmem:[%s180 + $0x620] sm:$0xff]
                %239 = vst [vmem:[%s181 + $0xe0] sm:$0xff] %v238
                %v240 = vld [vmem:[%s180 + $0x628] sm:$0xff]
                %241 = vst [vmem:[%s181 + $0xe8] sm:$0xff] %v240
                %v242 = vld [vmem:[%s180 + $0x630] sm:$0xff]
                %243 = vst [vmem:[%s181 + $0xf0] sm:$0xff] %v242
                %v244 = vld [vmem:[%s180 + $0x638] sm:$0xff]
                %245 = vst [vmem:[%s181 + $0xf8] sm:$0xff] %v244
                %v246 = vld [vmem:[%s180 + $0x800] sm:$0xff]
                %247 = vst [vmem:[%s181 + $0x100] sm:$0xff] %v246
                %v248 = vld [vmem:[%s180 + $0x808] sm:$0xff]
                %249 = vst [vmem:[%s181 + $0x108] sm:$0xff] %v248
                %v250 = vld [vmem:[%s180 + $0x810] sm:$0xff]
                %251 = vst [vmem:[%s181 + $0x110] sm:$0xff] %v250
                %v252 = vld [vmem:[%s180 + $0x818] sm:$0xff]
                %253 = vst [vmem:[%s181 + $0x118] sm:$0xff] %v252
                %v254 = vld [vmem:[%s180 + $0x820] sm:$0xff]
                %255 = vst [vmem:[%s181 + $0x120] sm:$0xff] %v254
                %v256 = vld [vmem:[%s180 + $0x828] sm:$0xff]
                %257 = vst [vmem:[%s181 + $0x128] sm:$0xff] %v256
                %v258 = vld [vmem:[%s180 + $0x830] sm:$0xff]
                %259 = vst [vmem:[%s181 + $0x130] sm:$0xff] %v258
                %v260 = vld [vmem:[%s180 + $0x838] sm:$0xff]
                %261 = vst [vmem:[%s181 + $0x138] sm:$0xff] %v260
                %v262 = vld [vmem:[%s180 + $0xa00] sm:$0xff]
                %263 = vst [vmem:[%s181 + $0x140] sm:$0xff] %v262
                %v264 = vld [vmem:[%s180 + $0xa08] sm:$0xff]
                %265 = vst [vmem:[%s181 + $0x148] sm:$0xff] %v264
                %v266 = vld [vmem:[%s180 + $0xa10] sm:$0xff]
                %267 = vst [vmem:[%s181 + $0x150] sm:$0xff] %v266
                %v268 = vld [vmem:[%s180 + $0xa18] sm:$0xff]
                %269 = vst [vmem:[%s181 + $0x158] sm:$0xff] %v268
                %v270 = vld [vmem:[%s180 + $0xa20] sm:$0xff]
                %271 = vst [vmem:[%s181 + $0x160] sm:$0xff] %v270
                %v272 = vld [vmem:[%s180 + $0xa28] sm:$0xff]
                %273 = vst [vmem:[%s181 + $0x168] sm:$0xff] %v272
                %v274 = vld [vmem:[%s180 + $0xa30] sm:$0xff]
                %275 = vst [vmem:[%s181 + $0x170] sm:$0xff] %v274
                %v276 = vld [vmem:[%s180 + $0xa38] sm:$0xff]
                %277 = vst [vmem:[%s181 + $0x178] sm:$0xff] %v276
                %v278 = vld [vmem:[%s180 + $0xc00] sm:$0xff]
                %279 = vst [vmem:[%s181 + $0x180] sm:$0xff] %v278
                %v280 = vld [vmem:[%s180 + $0xc08] sm:$0xff]
                %281 = vst [vmem:[%s181 + $0x188] sm:$0xff] %v280
                %v282 = vld [vmem:[%s180 + $0xc10] sm:$0xff]
                %283 = vst [vmem:[%s181 + $0x190] sm:$0xff] %v282
                %v284 = vld [vmem:[%s180 + $0xc18] sm:$0xff]
                %285 = vst [vmem:[%s181 + $0x198] sm:$0xff] %v284
                %v286 = vld [vmem:[%s180 + $0xc20] sm:$0xff]
                %287 = vst [vmem:[%s181 + $0x1a0] sm:$0xff] %v286
                %v288 = vld [vmem:[%s180 + $0xc28] sm:$0xff]
                %289 = vst [vmem:[%s181 + $0x1a8] sm:$0xff] %v288
                %v290 = vld [vmem:[%s180 + $0xc30] sm:$0xff]
                %291 = vst [vmem:[%s181 + $0x1b0] sm:$0xff] %v290
                %v292 = vld [vmem:[%s180 + $0xc38] sm:$0xff]
                %293 = vst [vmem:[%s181 + $0x1b8] sm:$0xff] %v292
              $region41: #{autoencoder_forward.11} parent=35 // loop_footer
                %s179 = sadd.s32 1, %s175
              $region42: #{autoencoder_forward.11} parent=35 // loop_footer_branch
                %174 = sbr.rel target = $region38
              $region43: #{autoencoder_forward.11} parent=35 // loop_exit
                _
            $region36: #{autoencoder_forward.11} parent=31 // pred_fallthru
              _
            // Predicated region
            $region44: #{autoencoder_forward.11} parent=31 // pred_check
              _
            $region45: #{autoencoder_forward.11} parent=31 // pred_check_branch
              %295 = sbr.rel target = $region47
            $region46: #{autoencoder_forward.11} parent=31 // pred_region
              _
            $region47: #{autoencoder_forward.11} parent=31 // pred_fallthru
              _
          $region32: #{autoencoder_forward.11} parent=27 // pred_fallthru
            _
          %296 = vnop
        $region28: #{autoencoder_forward.11} parent=23 // pred_fallthru
          _
      $region24: #{autoencoder_forward.11} parent=5 // pred_fallthru
        _
      %p297 = scmp.le.s32.totalorder 1, %s9
      %p298 = scmp.lt.s32.totalorder %s9, 9
      %p299 = pnand %p297, %p298
      %p300 = pneg %p299
      // Predicated region
      $region48: #{autoencoder_forward.11} parent=5 // pred_check
        _
      $region49: #{autoencoder_forward.11} parent=5 // pred_check_branch
        %302 = sbr.rel (%p299) target = $region51
      $region50: #{autoencoder_forward.11} parent=5 // pred_region
        %s303 = ssub.s32 %s9, 1
        %s304 = sand.u32 %s60, 1
        %s305 = sand.u32 %s60, 1
        %s306 = smul.addr %s305, 448
        %s307 = scalar_lea.vmem [#allocation2], %s306
        // Predicated region
        $region52: #{autoencoder_forward.11} parent=50 // pred_check
          %p308 = pneg %p73
        $region53: #{autoencoder_forward.11} parent=50 // pred_check_branch
          %310 = sbr.rel (%p308) target = $region55
        $region54: #{autoencoder_forward.11} parent=50 // pred_region
          _
        $region55: #{autoencoder_forward.11} parent=50 // pred_fallthru
          _
        %p311 = scmp.lt.s32.totalorder %s18, 0
        %s312 = scalar_select %p311, %s18, 0
        %s313 = smul.addr %s312, 8
        %s314 = scalar_lea.vmem %s0, %s313
        %p315 = pneg %p47
        %p316 = pneg %p44
        %s317 = sand.u32 %s60, 1
        %s318 = sand.u32 %s60, 1
        %s319 = smul.addr %s318, 448
        %s320 = scalar_lea.vmem [#allocation2], %s319
        %p321 = pneg %p73
        %p322 = pneg %p70
        %p323 = scmp.lt.s32.totalorder %s18, 0
        %s324 = scalar_select %p323, %s18, 0
        %s325 = smul.addr %s324, 8
        %s326 = scalar_lea.vmem %s2, %s325
        %p327 = pneg %p99
        %p328 = pneg %p96
        %p329 = pneg %p127
        %p330 = pneg %p124
        %s331 = smul.u32 8, %s19
        %p332 = scmp.lt.s32.totalorder %s18, 0
        %s333 = scalar_select %p332, %s18, 0
        %p334 = scmp.lt.s32.totalorder %s331, 63
        %s335 = scalar_select %p334, %s331, 63
        %s336 = smul.addr %s333, 64
        %s337 = sadd.s32 %s335, %s336
        %s338 = smul.addr %s337, 8
        %s339 = scalar_lea.vmem %s3, %s338
        %p340 = scmp.lt.s32.totalorder %s18, 0
        %s341 = scalar_select %p340, %s18, 0
        %s342 = smul.addr %s341, 8
        %s343 = scalar_lea.vmem %s0, %s342
        %s344 = smul.u32 8, %s19
        %p345 = scmp.lt.s32.totalorder %s18, 0
        %s346 = scalar_select %p345, %s18, 0
        %s347 = smul.addr %s346, 8
        %s348 = scalar_lea.vmem %s2, %s347
        %s349 = smul.u32 8, %s19
        %p350 = scmp.lt.s32.totalorder %s18, 0
        %s351 = scalar_select %p350, %s18, 0
        %p352 = scmp.lt.s32.totalorder %s349, 63
        %s353 = scalar_select %p352, %s349, 63
        %s354 = smul.addr %s351, 64
        %s355 = sadd.s32 %s353, %s354
        %s356 = smul.addr %s355, 8
        %s357 = scalar_lea.vmem %s3, %s356
        %s358 = smul.u32 8, %s19
        %v359 = vld [vmem:[%s343] sm:$0xff]
        %v360 = vld [vmem:[%s307] sm:$0xff]
        %v361 = vld [vmem:[%s307 + $0x8] sm:$0xff]
        %v362 = vld [vmem:[%s307 + $0x10] sm:$0xff]
        %v363 = vld [vmem:[%s307 + $0x18] sm:$0xff]
        %v364 = vld [vmem:[%s307 + $0x20] sm:$0xff]
        %v365 = vld [vmem:[%s307 + $0x28] sm:$0xff]
        %v366 = vld [vmem:[%s307 + $0x30] sm:$0xff]
        %v367 = vld [vmem:[%s307 + $0x38] sm:$0xff]
        %v368 = vld [vmem:[%s307 + $0x40] sm:$0xff]
        %v369 = vld [vmem:[%s307 + $0x48] sm:$0xff]
        %v370 = vld [vmem:[%s307 + $0x50] sm:$0xff]
        %v371 = vld [vmem:[%s307 + $0x58] sm:$0xff]
        %v372 = vld [vmem:[%s307 + $0x60] sm:$0xff]
        %v373 = vld [vmem:[%s307 + $0x68] sm:$0xff]
        %v374 = vld [vmem:[%s307 + $0x70] sm:$0xff]
        %v375 = vld [vmem:[%s307 + $0x78] sm:$0xff]
        %v376 = vld [vmem:[%s307 + $0x80] sm:$0xff]
        %v377 = vld [vmem:[%s307 + $0x88] sm:$0xff]
        %v378 = vld [vmem:[%s307 + $0x90] sm:$0xff]
        %v379 = vld [vmem:[%s307 + $0x98] sm:$0xff]
        %v380 = vld [vmem:[%s307 + $0xa0] sm:$0xff]
        %v381 = vld [vmem:[%s307 + $0xa8] sm:$0xff]
        %v382 = vld [vmem:[%s307 + $0xb0] sm:$0xff]
        %v383 = vld [vmem:[%s307 + $0xb8] sm:$0xff]
        %v384 = vld [vmem:[%s307 + $0xc0] sm:$0xff]
        %v385 = vld [vmem:[%s307 + $0xc8] sm:$0xff]
        %v386 = vld [vmem:[%s307 + $0xd0] sm:$0xff]
        %v387 = vld [vmem:[%s307 + $0xd8] sm:$0xff]
        %v388 = vld [vmem:[%s307 + $0xe0] sm:$0xff]
        %v389 = vld [vmem:[%s307 + $0xe8] sm:$0xff]
        %v390 = vld [vmem:[%s307 + $0xf0] sm:$0xff]
        %v391 = vld [vmem:[%s307 + $0xf8] sm:$0xff]
        %v392 = vld [vmem:[%s307 + $0x100] sm:$0xff]
        %v393 = vld [vmem:[%s307 + $0x108] sm:$0xff]
        %v394 = vld [vmem:[%s307 + $0x110] sm:$0xff]
        %v395 = vld [vmem:[%s307 + $0x118] sm:$0xff]
        %v396 = vld [vmem:[%s307 + $0x120] sm:$0xff]
        %v397 = vld [vmem:[%s307 + $0x128] sm:$0xff]
        %v398 = vld [vmem:[%s307 + $0x130] sm:$0xff]
        %v399 = vld [vmem:[%s307 + $0x138] sm:$0xff]
        %v400 = vld [vmem:[%s307 + $0x140] sm:$0xff]
        %v401 = vld [vmem:[%s307 + $0x148] sm:$0xff]
        %v402 = vld [vmem:[%s307 + $0x150] sm:$0xff]
        %v403 = vld [vmem:[%s307 + $0x158] sm:$0xff]
        %v404 = vld [vmem:[%s307 + $0x160] sm:$0xff]
        %v405 = vld [vmem:[%s307 + $0x168] sm:$0xff]
        %v406 = vld [vmem:[%s307 + $0x170] sm:$0xff]
        %v407 = vld [vmem:[%s307 + $0x178] sm:$0xff]
        %v408 = vld [vmem:[%s307 + $0x180] sm:$0x3f]
        %v409 = vld [vmem:[%s307 + $0x188] sm:$0x3f]
        %v410 = vld [vmem:[%s307 + $0x190] sm:$0x3f]
        %v411 = vld [vmem:[%s307 + $0x198] sm:$0x3f]
        %v412 = vld [vmem:[%s307 + $0x1a0] sm:$0x3f]
        %v413 = vld [vmem:[%s307 + $0x1a8] sm:$0x3f]
        %v414 = vld [vmem:[%s307 + $0x1b0] sm:$0x3f]
        %v415 = vld [vmem:[%s307 + $0x1b8] sm:$0x3f]
        %v416 = vld [vmem:[%s348] sm:$0xff]
        %418 = vset.pattern.permute.xlu0 0
        %419 = vperm.xlu0 %418, %v416
        %v420 = vpop.permute.xlu0 %419
        %vm422 = vcmask 441344
        %v424 = vsel %vm422, %v359, 0
        %vm426 = vcmask 1045504
        %v428 = vsel %vm426, %v408, 0
        %v431 = vsel %vm426, %v409, 0
        %v434 = vsel %vm426, %v410, 0
        %v437 = vsel %vm426, %v411, 0
        %v440 = vsel %vm426, %v412, 0
        %v443 = vsel %vm426, %v413, 0
        %v446 = vsel %vm426, %v414, 0
        %v449 = vsel %vm426, %v415, 0
        %451 = vmatprep.subr.mxu0 %v361
        %452 = vmatpush1.msra.mxu0 %v360
        %453 = vmatprep.subr.mxu0 %v369
        %454 = vmatpush1.msra.mxu0 %v368
        %455 = vmatprep.subr.mxu0 %v377
        %456 = vmatpush1.msra.mxu0 %v376
        %457 = vmatprep.subr.mxu0 %v385
        %458 = vmatpush1.msra.mxu0 %v384
        %459 = vmatprep.subr.mxu0 %v393
        %460 = vmatpush1.msra.mxu0 %v392
        %461 = vmatprep.subr.mxu0 %v401
        %462 = vmatpush1.msra.mxu0 %v400
        %463 = vmatprep.subr.mxu0 %v431
        %464 = vmatpush1.msra.mxu0 %v428
        %465 = vmatprep.subr.mxu0 0.0
        %466 = vmatpush1.msra.mxu0 0.0
        %467 = vmatprep.subr.mxu0 0.0
        %468 = vmatpush1.msra.mxu0 0.0
        %469 = vmatprep.subr.mxu0 0.0
        %470 = vmatpush1.msra.mxu0 0.0
        %471 = vmatprep.subr.mxu0 0.0
        %472 = vmatpush1.msra.mxu0 0.0
        %473 = vmatprep.subr.mxu0 0.0
        %474 = vmatpush1.msra.mxu0 0.0
        %475 = vmatprep.subr.mxu0 0.0
        %476 = vmatpush1.msra.mxu0 0.0
        %477 = vmatprep.subr.mxu0 0.0
        %478 = vmatpush1.msra.mxu0 0.0
        %479 = vmatprep.subr.mxu0 0.0
        %480 = vmatpush1.msra.mxu0 0.0
        %481 = vmatprep.subr.mxu0 0.0
        %482 = vmatpush1.msra.mxu0 0.0
        %483 = vmatprep.subr.mxu0 0.0
        %484 = vmatpush1.msra.mxu0 0.0
        %485 = vmatprep.subr.mxu0 0.0
        %486 = vmatpush1.msra.mxu0 0.0
        %487 = vmatprep.subr.mxu0 0.0
        %488 = vmatpush1.msra.mxu0 0.0
        %489 = vmatprep.subr.mxu0 0.0
        %490 = vmatpush1.msra.mxu0 0.0
        %491 = vmatprep.subr.mxu0 0.0
        %492 = vmatpush1.msra.mxu0 0.0
        %493 = vmatprep.subr.mxu0 0.0
        %494 = vmatpush1.msra.mxu0 0.0
        %495 = vmatprep.subr.mxu0 0.0
        %496 = vmatpush1.msra.mxu0 0.0
        %497 = vmatprep.subr.mxu0 0.0
        %498 = vmatpush1.msra.mxu0 0.0
        %499 = vmatprep.subr.mxu0 0.0
        %500 = vmatpush1.msra.mxu0 0.0
        %501 = vmatprep.subr.mxu0 0.0
        %502 = vmatpush1.msra.mxu0 0.0
        %503 = vmatprep.subr.mxu0 0.0
        %504 = vmatpush1.msra.mxu0 0.0
        %505 = vmatprep.subr.mxu0 0.0
        %506 = vmatpush1.msra.mxu0 0.0
        %507 = vmatprep.subr.mxu0 0.0
        %508 = vmatpush1.msra.mxu0 0.0
        %509 = vmatprep.subr.mxu0 0.0
        %510 = vmatpush1.msra.mxu0 0.0
        %511 = vmatprep.subr.mxu0 0.0
        %512 = vmatpush1.msra.mxu0 0.0
        %513 = vmatprep.subr.mxu0 0.0
        %514 = vmatpush1.msra.mxu0 0.0
        %515 = vmatprep.mubr.f32.mxu0 0.0
        %516 = vmatmul.mubr.f32.gmra.mrb[0].mxu0 %v424
        %v517 = vpop.f32.mrb[0].mxu0
        %v518 = vadd.f32 %v420, %v517
        %v519 = vpop.f32.mrb[0].mxu0
        %v520 = vadd.f32 %v420, %v519
        %521 = vdwg.mxu0
        %522 = vmatprep.subr.mxu0 %v363
        %523 = vmatpush1.msra.mxu0 %v362
        %524 = vmatprep.subr.mxu0 %v371
        %525 = vmatpush1.msra.mxu0 %v370
        %526 = vmatprep.subr.mxu0 %v379
        %527 = vmatpush1.msra.mxu0 %v378
        %528 = vmatprep.subr.mxu0 %v387
        %529 = vmatpush1.msra.mxu0 %v386
        %530 = vmatprep.subr.mxu0 %v395
        %531 = vmatpush1.msra.mxu0 %v394
        %532 = vmatprep.subr.mxu0 %v403
        %533 = vmatpush1.msra.mxu0 %v402
        %534 = vmatprep.subr.mxu0 %v437
        %535 = vmatpush1.msra.mxu0 %v434
        %536 = vmatprep.subr.mxu0 0.0
        %537 = vmatpush1.msra.mxu0 0.0
        %538 = vmatprep.subr.mxu0 0.0
        %539 = vmatpush1.msra.mxu0 0.0
        %540 = vmatprep.subr.mxu0 0.0
        %541 = vmatpush1.msra.mxu0 0.0
        %542 = vmatprep.subr.mxu0 0.0
        %543 = vmatpush1.msra.mxu0 0.0
        %544 = vmatprep.subr.mxu0 0.0
        %545 = vmatpush1.msra.mxu0 0.0
        %546 = vmatprep.subr.mxu0 0.0
        %547 = vmatpush1.msra.mxu0 0.0
        %548 = vmatprep.subr.mxu0 0.0
        %549 = vmatpush1.msra.mxu0 0.0
        %550 = vmatprep.subr.mxu0 0.0
        %551 = vmatpush1.msra.mxu0 0.0
        %552 = vmatprep.subr.mxu0 0.0
        %553 = vmatpush1.msra.mxu0 0.0
        %554 = vmatprep.subr.mxu0 0.0
        %555 = vmatpush1.msra.mxu0 0.0
        %556 = vmatprep.subr.mxu0 0.0
        %557 = vmatpush1.msra.mxu0 0.0
        %558 = vmatprep.subr.mxu0 0.0
        %559 = vmatpush1.msra.mxu0 0.0
        %560 = vmatprep.subr.mxu0 0.0
        %561 = vmatpush1.msra.mxu0 0.0
        %562 = vmatprep.subr.mxu0 0.0
        %563 = vmatpush1.msra.mxu0 0.0
        %564 = vmatprep.subr.mxu0 0.0
        %565 = vmatpush1.msra.mxu0 0.0
        %566 = vmatprep.subr.mxu0 0.0
        %567 = vmatpush1.msra.mxu0 0.0
        %568 = vmatprep.subr.mxu0 0.0
        %569 = vmatpush1.msra.mxu0 0.0
        %570 = vmatprep.subr.mxu0 0.0
        %571 = vmatpush1.msra.mxu0 0.0
        %572 = vmatprep.subr.mxu0 0.0
        %573 = vmatpush1.msra.mxu0 0.0
        %574 = vmatprep.subr.mxu0 0.0
        %575 = vmatpush1.msra.mxu0 0.0
        %576 = vmatprep.subr.mxu0 0.0
        %577 = vmatpush1.msra.mxu0 0.0
        %578 = vmatprep.subr.mxu0 0.0
        %579 = vmatpush1.msra.mxu0 0.0
        %580 = vmatprep.subr.mxu0 0.0
        %581 = vmatpush1.msra.mxu0 0.0
        %582 = vmatprep.subr.mxu0 0.0
        %583 = vmatpush1.msra.mxu0 0.0
        %584 = vmatprep.subr.mxu0 0.0
        %585 = vmatpush1.msra.mxu0 0.0
        %586 = vmatprep.mubr.f32.mxu0 0.0
        %587 = vmatmul.mubr.f32.gmra.mrb[0].mxu0 %v424
        %v588 = vpop.f32.mrb[0].mxu0
        %v589 = vadd.f32 %v420, %v588
        %v590 = vpop.f32.mrb[0].mxu0
        %v591 = vadd.f32 %v420, %v590
        %592 = vdwg.mxu0
        %593 = vmatprep.subr.mxu0 %v365
        %594 = vmatpush1.msra.mxu0 %v364
        %595 = vmatprep.subr.mxu0 %v373
        %596 = vmatpush1.msra.mxu0 %v372
        %597 = vmatprep.subr.mxu0 %v381
        %598 = vmatpush1.msra.mxu0 %v380
        %599 = vmatprep.subr.mxu0 %v389
        %600 = vmatpush1.msra.mxu0 %v388
        %601 = vmatprep.subr.mxu0 %v397
        %602 = vmatpush1.msra.mxu0 %v396
        %603 = vmatprep.subr.mxu0 %v405
        %604 = vmatpush1.msra.mxu0 %v404
        %605 = vmatprep.subr.mxu0 %v443
        %606 = vmatpush1.msra.mxu0 %v440
        %607 = vmatprep.subr.mxu0 0.0
        %608 = vmatpush1.msra.mxu0 0.0
        %609 = vmatprep.subr.mxu0 0.0
        %610 = vmatpush1.msra.mxu0 0.0
        %611 = vmatprep.subr.mxu0 0.0
        %612 = vmatpush1.msra.mxu0 0.0
        %613 = vmatprep.subr.mxu0 0.0
        %614 = vmatpush1.msra.mxu0 0.0
        %615 = vmatprep.subr.mxu0 0.0
        %616 = vmatpush1.msra.mxu0 0.0
        %617 = vmatprep.subr.mxu0 0.0
        %618 = vmatpush1.msra.mxu0 0.0
        %619 = vmatprep.subr.mxu0 0.0
        %620 = vmatpush1.msra.mxu0 0.0
        %621 = vmatprep.subr.mxu0 0.0
        %622 = vmatpush1.msra.mxu0 0.0
        %623 = vmatprep.subr.mxu0 0.0
        %624 = vmatpush1.msra.mxu0 0.0
        %625 = vmatprep.subr.mxu0 0.0
        %626 = vmatpush1.msra.mxu0 0.0
        %627 = vmatprep.subr.mxu0 0.0
        %628 = vmatpush1.msra.mxu0 0.0
        %629 = vmatprep.subr.mxu0 0.0
        %630 = vmatpush1.msra.mxu0 0.0
        %631 = vmatprep.subr.mxu0 0.0
        %632 = vmatpush1.msra.mxu0 0.0
        %633 = vmatprep.subr.mxu0 0.0
        %634 = vmatpush1.msra.mxu0 0.0
        %635 = vmatprep.subr.mxu0 0.0
        %636 = vmatpush1.msra.mxu0 0.0
        %637 = vmatprep.subr.mxu0 0.0
        %638 = vmatpush1.msra.mxu0 0.0
        %639 = vmatprep.subr.mxu0 0.0
        %640 = vmatpush1.msra.mxu0 0.0
        %641 = vmatprep.subr.mxu0 0.0
        %642 = vmatpush1.msra.mxu0 0.0
        %643 = vmatprep.subr.mxu0 0.0
        %644 = vmatpush1.msra.mxu0 0.0
        %645 = vmatprep.subr.mxu0 0.0
        %646 = vmatpush1.msra.mxu0 0.0
        %647 = vmatprep.subr.mxu0 0.0
        %648 = vmatpush1.msra.mxu0 0.0
        %649 = vmatprep.subr.mxu0 0.0
        %650 = vmatpush1.msra.mxu0 0.0
        %651 = vmatprep.subr.mxu0 0.0
        %652 = vmatpush1.msra.mxu0 0.0
        %653 = vmatprep.subr.mxu0 0.0
        %654 = vmatpush1.msra.mxu0 0.0
        %655 = vmatprep.subr.mxu0 0.0
        %656 = vmatpush1.msra.mxu0 0.0
        %657 = vmatprep.mubr.f32.mxu0 0.0
        %658 = vmatmul.mubr.f32.gmra.mrb[0].mxu0 %v424
        %v659 = vpop.f32.mrb[0].mxu0
        %v660 = vadd.f32 %v420, %v659
        %v661 = vpop.f32.mrb[0].mxu0
        %v662 = vadd.f32 %v420, %v661
        %663 = vdwg.mxu0
        %664 = vmatprep.subr.mxu0 %v367
        %665 = vmatpush1.msra.mxu0 %v366
        %666 = vmatprep.subr.mxu0 %v375
        %667 = vmatpush1.msra.mxu0 %v374
        %668 = vmatprep.subr.mxu0 %v383
        %669 = vmatpush1.msra.mxu0 %v382
        %670 = vmatprep.subr.mxu0 %v391
        %671 = vmatpush1.msra.mxu0 %v390
        %672 = vmatprep.subr.mxu0 %v399
        %673 = vmatpush1.msra.mxu0 %v398
        %674 = vmatprep.subr.mxu0 %v407
        %675 = vmatpush1.msra.mxu0 %v406
        %676 = vmatprep.subr.mxu0 %v449
        %677 = vmatpush1.msra.mxu0 %v446
        %678 = vmatprep.subr.mxu0 0.0
        %679 = vmatpush1.msra.mxu0 0.0
        %680 = vmatprep.subr.mxu0 0.0
        %681 = vmatpush1.msra.mxu0 0.0
        %682 = vmatprep.subr.mxu0 0.0
        %683 = vmatpush1.msra.mxu0 0.0
        %684 = vmatprep.subr.mxu0 0.0
        %685 = vmatpush1.msra.mxu0 0.0
        %686 = vmatprep.subr.mxu0 0.0
        %687 = vmatpush1.msra.mxu0 0.0
        %688 = vmatprep.subr.mxu0 0.0
        %689 = vmatpush1.msra.mxu0 0.0
        %690 = vmatprep.subr.mxu0 0.0
        %691 = vmatpush1.msra.mxu0 0.0
        %692 = vmatprep.subr.mxu0 0.0
        %693 = vmatpush1.msra.mxu0 0.0
        %694 = vmatprep.subr.mxu0 0.0
        %695 = vmatpush1.msra.mxu0 0.0
        %696 = vmatprep.subr.mxu0 0.0
        %697 = vmatpush1.msra.mxu0 0.0
        %698 = vmatprep.subr.mxu0 0.0
        %699 = vmatpush1.msra.mxu0 0.0
        %700 = vmatprep.subr.mxu0 0.0
        %701 = vmatpush1.msra.mxu0 0.0
        %702 = vmatprep.subr.mxu0 0.0
        %703 = vmatpush1.msra.mxu0 0.0
        %704 = vmatprep.subr.mxu0 0.0
        %705 = vmatpush1.msra.mxu0 0.0
        %706 = vmatprep.subr.mxu0 0.0
        %707 = vmatpush1.msra.mxu0 0.0
        %708 = vmatprep.subr.mxu0 0.0
        %709 = vmatpush1.msra.mxu0 0.0
        %710 = vmatprep.subr.mxu0 0.0
        %711 = vmatpush1.msra.mxu0 0.0
        %712 = vmatprep.subr.mxu0 0.0
        %713 = vmatpush1.msra.mxu0 0.0
        %714 = vmatprep.subr.mxu0 0.0
        %715 = vmatpush1.msra.mxu0 0.0
        %716 = vmatprep.subr.mxu0 0.0
        %717 = vmatpush1.msra.mxu0 0.0
        %718 = vmatprep.subr.mxu0 0.0
        %719 = vmatpush1.msra.mxu0 0.0
        %720 = vmatprep.subr.mxu0 0.0
        %721 = vmatpush1.msra.mxu0 0.0
        %722 = vmatprep.subr.mxu0 0.0
        %723 = vmatpush1.msra.mxu0 0.0
        %724 = vmatprep.subr.mxu0 0.0
        %725 = vmatpush1.msra.mxu0 0.0
        %726 = vmatprep.subr.mxu0 0.0
        %727 = vmatpush1.msra.mxu0 0.0
        %728 = vmatprep.mubr.f32.mxu0 0.0
        %729 = vmatmul.mubr.f32.gmra.mrb[0].mxu0 %v424
        %v730 = vpop.f32.mrb[0].mxu0
        %v731 = vadd.f32 %v420, %v730
        %v732 = vpop.f32.mrb[0].mxu0
        %v733 = vadd.f32 %v420, %v732
        %734 = vdwg.mxu0
        %v735 = vmax.f32 %v518, 0.0
        %v736 = vmax.f32 %v520, 0.0
        %v737 = vmax.f32 %v589, 0.0
        %v738 = vmax.f32 %v591, 0.0
        %v739 = vmax.f32 %v660, 0.0
        %v740 = vmax.f32 %v662, 0.0
        %v741 = vmax.f32 %v731, 0.0
        %v742 = vmax.f32 %v733, 0.0
        %743 = vst [vmem:[%s357] sm:$0xff] %v735
        %744 = vst [vmem:[%s357 + $0x8] sm:$0xff] %v736
        %745 = vst [vmem:[%s357 + $0x10] sm:$0xff] %v737
        %746 = vst [vmem:[%s357 + $0x18] sm:$0xff] %v738
        %747 = vst [vmem:[%s357 + $0x20] sm:$0xff] %v739
        %748 = vst [vmem:[%s357 + $0x28] sm:$0xff] %v740
        %749 = vst [vmem:[%s357 + $0x30] sm:$0xff] %v741
        %750 = vst [vmem:[%s357 + $0x38] sm:$0xff] %v742
        %s751 = smul.u32 8, %s19
        %p752 = scmp.lt.s32.totalorder %s18, 0
        %s753 = scalar_select %p752, %s18, 0
        %p754 = scmp.lt.s32.totalorder %s751, 63
        %s755 = scalar_select %p754, %s751, 63
        %s756 = smul.addr %s753, 64
        %s757 = sadd.s32 %s755, %s756
        %s758 = smul.addr %s757, 8
        %s759 = scalar_lea.vmem %s3, %s758
        // Predicated region
        $region56: #{autoencoder_forward.11} parent=50 // pred_check
          %p760 = pneg %p124
        $region57: #{autoencoder_forward.11} parent=50 // pred_check_branch
          %762 = sbr.rel (%p760) target = $region59
        $region58: #{autoencoder_forward.11} parent=50 // pred_region
          %s763 = smul.u32 8, %s19
        $region59: #{autoencoder_forward.11} parent=50 // pred_fallthru
          _
      $region51: #{autoencoder_forward.11} parent=5 // pred_fallthru
        _
      %p764 = scmp.le.s32.totalorder 2, %s9
      // Predicated region
      $region60: #{autoencoder_forward.11} parent=5 // pred_check
        %p765 = pneg %p764
      $region61: #{autoencoder_forward.11} parent=5 // pred_check_branch
        %767 = sbr.rel (%p765) target = $region63
      $region62: #{autoencoder_forward.11} parent=5 // pred_region
        %s768 = ssub.s32 %s9, 2
        // Predicated region
        $region64: #{autoencoder_forward.11} parent=62 // pred_check
          %p769 = pneg %p130
        $region65: #{autoencoder_forward.11} parent=62 // pred_check_branch
          %771 = sbr.rel (%p769) target = $region67
        $region66: #{autoencoder_forward.11} parent=62 // pred_region
          %s772 = smul.u32 8, %s21
          %p773 = scmp.lt.s32.totalorder %s20, 0
          %s774 = scalar_select %p773, %s20, 0
          %p775 = scmp.lt.s32.totalorder %s772, 63
          %s776 = scalar_select %p775, %s772, 63
          %s777 = smul.addr %s774, 64
          %s778 = sadd.s32 %s776, %s777
          %s779 = smul.addr %s778, 8
          %s780 = scalar_lea.vmem %s3, %s779
        $region67: #{autoencoder_forward.11} parent=62 // pred_fallthru
          _
      $region63: #{autoencoder_forward.11} parent=5 // pred_fallthru
        _
    $region6: #{autoencoder_forward.11} parent=1 // loop_footer
      %s13 = sadd.s32 1, %s9
    $region7: #{autoencoder_forward.11} parent=1 // loop_footer_branch
      %8 = sbr.rel target = $region3
    $region8: #{autoencoder_forward.11} parent=1 // loop_exit
      _

</llo_original>
